<compile_context>
chip_gen: v5e
topology: v5e:2x2
jax: 0.10.0
libtpu: 0.0.40
codegen_flags: <defaults>
</compile_context>

<pallas_src>
import functools

import jax
import jax.numpy as jnp
from jax import lax
from jax.experimental import pallas as pl
from jax.experimental.pallas import tpu as pltpu

LANE = 128


# ----------------------------------------------------------------------------------
# small helpers
# ----------------------------------------------------------------------------------
def _round_up(n, m):
    return -(-n // m) * m


def _pad_last(a, target):
    d = target - a.shape[-1]
    if d == 0:
        return a
    return jnp.pad(a, [(0, 0)] * (a.ndim - 1) + [(0, d)])


def _pad_axis(a, axis, target):
    d = target - a.shape[axis]
    if d == 0:
        return a
    cfg = [(0, 0)] * a.ndim
    cfg[axis] = (0, d)
    return jnp.pad(a, cfg)


def _phase_split(u, stride, pad=1):
    """Zero-pad spatially by `pad` and split into stride x stride phase planes.

    (N, H, W, C) -> (N*s*s, Hq, Wq, C), so a 3x3 tap (di, dj) at the given stride
    becomes a *static unit-stride* slice of phase (di % s, dj % s) inside the kernel.
    For stride == 1 this is just the spatial zero-pad (no data reshuffle).
    """
    N, H, W, C = u.shape
    s = stride
    Hp = _round_up(H + 2 * pad, s)
    Wp = _round_up(W + 2 * pad, s)
    up = jnp.pad(u, ((0, 0), (pad, Hp - H - pad), (pad, Wp - W - pad), (0, 0)))
    Hq, Wq = Hp // s, Wp // s
    if s == 1:
        return up, Hq, Wq
    up = up.reshape(N, Hq, s, Wq, s, C)
    up = jnp.transpose(up, (0, 2, 4, 1, 3, 5))
    return up.reshape(N * s * s, Hq, Wq, C), Hq, Wq


# ----------------------------------------------------------------------------------
# the fused Pallas kernel:  BN+ReLU -> 3x3 conv -> +bias [-> +shortcut]
# ----------------------------------------------------------------------------------
def _fused_conv_kernel(*refs, stride, Ho, Wo, sc_mode):
    if sc_mode == "none":
        x_ref, m_ref, w_ref, scale_ref, shift_ref, b_ref, o_ref, acc_ref = refs
        xsc_ref = scw_ref = None
    elif sc_mode == "identity":
        x_ref, m_ref, w_ref, scale_ref, shift_ref, b_ref, xsc_ref, o_ref, acc_ref = refs
        scw_ref = None
    else:  # "conv"
        (x_ref, m_ref, w_ref, scale_ref, shift_ref, b_ref,
         xsc_ref, scw_ref, o_ref, acc_ref) = refs

    k = pl.program_id(1)
    nk = pl.num_programs(1)
    s = stride

    @pl.when(k == 0)
    def _init():
        acc_ref[...] = jnp.zeros_like(acc_ref)

    scale = scale_ref[...]          # (1, 1, Ct) f32
    shift = shift_ref[...]

    # 3x3 conv = 9 shifted-window MXU dots.  BN+ReLU fused per window (free VPU
    # filler under the MXU); the mask zeroes positions coming from the zero-padding
    # ring (padding is applied *after* BN+ReLU in the original module).
    for di in range(3):
        for dj in range(3):
            p = (di % s) * s + (dj % s)        # phase plane
            r0, c0 = di // s, dj // s          # static offsets within the phase
            xw = x_ref[p, r0:r0 + Ho, c0:c0 + Wo, :]       # (Ho, Wo, Ct) f32
            mw = m_ref[p, r0:r0 + Ho, c0:c0 + Wo, :]       # (Ho, Wo, 1)  f32
            a = jnp.maximum(xw * scale + shift, 0.0) * mw  # fused BN + ReLU + pad mask
            a = a.reshape(Ho * Wo, a.shape[-1]).astype(jnp.bfloat16)
            acc_ref[...] += jnp.dot(a, w_ref[di, dj],
                                    preferred_element_type=jnp.float32)

    if sc_mode == "conv":
        # fused 1x1 projection shortcut (raw x, no BN) - only once, on the first K step
        @pl.when(k == 0)
        def _proj():
            acc_ref[...] += jnp.dot(xsc_ref[0].astype(jnp.bfloat16), scw_ref[...],
                                    preferred_element_type=jnp.float32)

    @pl.when(k == nk - 1)
    def _finalize():
        res = acc_ref[...] + b_ref[...]
        if sc_mode == "identity":
            res = res + xsc_ref[0]             # fused identity shortcut
        o_ref[0] = res


def fused_conv3x3(xsrc, w, scale, shift, bias, *, stride, sc_mode="none",
                  xsc=None, scw=None):
    """Fused (BN+ReLU) -> 3x3 conv (pad=1) -> +bias [-> +shortcut] as one pallas_call.

    xsrc : (N, H, W, Cp)   f32 pre-BN input (channels padded to a 128-multiple)
    w    : (3, 3, Cp, Cop) bf16 weights;  scale/shift: (1, 1, Cp) f32;  bias: (1, Cop)
    xsc  : (N, Ho*Wo, Csc) f32 shortcut source (already stride-subsampled)
    scw  : (Csc, Cop) bf16 1x1 projection weights (sc_mode == "conv")
    returns (N, Ho, Wo, Cop) f32
    """
    N, H, W, Cp = xsrc.shape
    Cop = w.shape[-1]
    s = stride
    Ho = (H - 1) // s + 1
    Wo = (W - 1) // s + 1
    M = Ho * Wo

    xph, Hq, Wq = _phase_split(xsrc, s)
    msk, _, _ = _phase_split(jnp.ones((1, H, W, 1), jnp.float32), s)

    Ct = LANE if Cp % LANE == 0 else Cp        # K tile over input channels
    nk = Cp // Ct

    in_specs = [
        pl.BlockSpec((s * s, Hq, Wq, Ct), lambda n, k: (n, 0, 0, k)),
        pl.BlockSpec((s * s, Hq, Wq, 1), lambda n, k: (0, 0, 0, 0)),
        pl.BlockSpec((3, 3, Ct, Cop), lambda n, k: (0, 0, k, 0)),
        pl.BlockSpec((1, 1, Ct), lambda n, k: (0, 0, k)),
        pl.BlockSpec((1, 1, Ct), lambda n, k: (0, 0, k)),
        pl.BlockSpec((1, Cop), lambda n, k: (0, 0)),
    ]
    args = [xph, msk, w, scale, shift, bias]
    if sc_mode != "none":
        assert xsc is not None and xsc.shape[1] == M
        if sc_mode == "identity":
            assert xsc.shape[-1] == Cop
        in_specs.append(pl.BlockSpec((1, M, xsc.shape[-1]), lambda n, k: (n, 0, 0)))
        args.append(xsc)
    if sc_mode == "conv":
        in_specs.append(pl.BlockSpec((xsc.shape[-1], Cop), lambda n, k: (0, 0)))
        args.append(scw)

    kernel = functools.partial(_fused_conv_kernel, stride=s, Ho=Ho, Wo=Wo,
                               sc_mode=sc_mode)

    out = pl.pallas_call(
        kernel,
        out_shape=jax.ShapeDtypeStruct((N, M, Cop), jnp.float32),
        grid=(N, nk),
        in_specs=in_specs,
        out_specs=pl.BlockSpec((1, M, Cop), lambda n, k: (n, 0, 0)),
        scratch_shapes=[pltpu.VMEM((M, Cop), jnp.float32)],
        compiler_params=pltpu.CompilerParams(
            dimension_semantics=("parallel", "arbitrary"),
            vmem_limit_bytes=32 * 1024 * 1024,
        ),
    )(*args)
    return out.reshape(N, Ho, Wo, Cop)


# ----------------------------------------------------------------------------------
# one-time parameter preparation (hoisted out of the forward path)
# ----------------------------------------------------------------------------------
def fold_bn(gamma, beta, mean, var, eps=1e-5):
    scale = gamma / jnp.sqrt(var + eps)
    shift = beta - mean * scale
    return scale, shift


def spectral_normalize(w_oihw, norm_bound, n_power_iterations, key):
    # soft spectral normalisation (SNGP-style): scale weight by norm_bound/sigma if sigma > bound
    cout = w_oihw.shape[0]
    w_mat = w_oihw.reshape(cout, -1)
    u = jax.random.normal(key, (cout,), dtype=jnp.float32)
    u = u / (jnp.linalg.norm(u) + 1e-12)
    v = None
    for _ in range(n_power_iterations):
        v = w_mat.T @ u
        v = v / (jnp.linalg.norm(v) + 1e-12)
        u = w_mat @ v
        u = u / (jnp.linalg.norm(u) + 1e-12)
    sigma = u @ (w_mat @ v)
    factor = jnp.where(norm_bound < sigma, norm_bound / sigma, 1.0)
    return w_oihw * factor


def prepare_params(raw, in_planes, planes, stride):
    """PyTorch-layout params -> padded, laid-out, bf16-cast kernel params (done once)."""
    Cpi, Cpo = _round_up(in_planes, LANE), _round_up(planes, LANE)
    s1, t1 = fold_bn(*raw["bn1"])
    s2, t2 = fold_bn(*raw["bn2"])

    def conv_mat(w_oihw, ci, co):
        m = jnp.transpose(w_oihw, (2, 3, 1, 0))            # (kh, kw, Cin, Cout)
        m = _pad_axis(_pad_axis(m, 2, ci), 3, co)
        return m.astype(jnp.bfloat16)

    arrays = dict(
        scale1=_pad_last(s1, Cpi).reshape(1, 1, Cpi),
        shift1=_pad_last(t1, Cpi).reshape(1, 1, Cpi),
        scale2=_pad_last(s2, Cpo).reshape(1, 1, Cpo),
        shift2=_pad_last(t2, Cpo).reshape(1, 1, Cpo),
        w1=conv_mat(raw["conv1_w"], Cpi, Cpo),
        b1=_pad_last(raw["conv1_b"], Cpo).reshape(1, Cpo),
        w2=conv_mat(raw["conv2_w"], Cpo, Cpo),
    )
    has_proj = (stride != 1) or (in_planes != planes)
    b2 = _pad_last(raw["conv2_b"], Cpo)
    if has_proj:
        scw = jnp.transpose(raw["sc_w"][:, :, 0, 0])       # (Cin, Cout)
        arrays["scw"] = _pad_axis(_pad_axis(scw, 0, Cpi), 1, Cpo).astype(jnp.bfloat16)
        b2 = b2 + _pad_last(raw["sc_b"], Cpo)              # fold shortcut bias in
    arrays["b2"] = b2.reshape(1, Cpo)

    cfg = dict(in_planes=in_planes, planes=planes, stride=stride,
               Cpi=Cpi, Cpo=Cpo, has_proj=has_proj)
    return arrays, cfg


# ----------------------------------------------------------------------------------
# WideBasic forward (two fused pallas_calls)
# ----------------------------------------------------------------------------------
def build_forward(cfg):
    s = cfg["stride"]
    Cpi, Cpo = cfg["Cpi"], cfg["Cpo"]
    planes = cfg["planes"]
    has_proj = cfg["has_proj"]

    def fwd(x_nchw, p):
        x = jnp.transpose(x_nchw, (0, 2, 3, 1)).astype(jnp.float32)   # NCHW -> NHWC
        N = x.shape[0]
        xcp = _pad_last(x, Cpi)                                       # lane-pad channels

        # conv1: fused bn1+relu -> 3x3 stride-1 conv -> +bias
        o1 = fused_conv3x3(xcp, p["w1"], p["scale1"], p["shift1"], p["b1"], stride=1)

        # dropout: identity in eval mode.
        # TODO(synk): training-mode dropout (pltpu.prng_random_bits mask) not implemented.

        # conv2: fused bn2+relu -> 3x3 stride-s conv -> +bias + fused shortcut
        xsc = xcp[:, ::s, ::s, :].reshape(N, -1, Cpi)   # 1x1-conv / identity samples
        if has_proj:
            out = fused_conv3x3(o1, p["w2"], p["scale2"], p["shift2"], p["b2"],
                                stride=s, sc_mode="conv", xsc=xsc, scw=p["scw"])
        else:
            out = fused_conv3x3(o1, p["w2"], p["scale2"], p["shift2"], p["b2"],
                                stride=s, sc_mode="identity", xsc=xsc)

        out = out[..., :planes]                          # drop lane padding
        return jnp.transpose(out, (0, 3, 1, 2))          # NHWC -> NCHW

    return jax.jit(fwd)


# ----------------------------------------------------------------------------------
# Pure-JAX reference (for correctness check)
# ----------------------------------------------------------------------------------
def ref_forward(x_nchw, raw, stride):
    def bn(x, gamma, beta, mean, var, eps=1e-5):
        sc = gamma / jnp.sqrt(var + eps)
        sh = beta - mean * sc
        return x * sc[None, :, None, None] + sh[None, :, None, None]

    def conv(x, w, b, st, pad):
        y = lax.conv_general_dilated(
            x, w, (st, st), ((pad, pad), (pad, pad)),
            dimension_numbers=("NCHW", "OIHW", "NCHW"))
        return y + b[None, :, None, None]

    h = jax.nn.relu(bn(x_nchw, *raw["bn1"]))
    o = conv(h, raw["conv1_w"], raw["conv1_b"], 1, 1)
    h2 = jax.nn.relu(bn(o, *raw["bn2"]))
    o2 = conv(h2, raw["conv2_w"], raw["conv2_b"], stride, 1)
    if "sc_w" in raw:
        sc = conv(x_nchw, raw["sc_w"], raw["sc_b"], stride, 0)
    else:
        sc = x_nchw
    return o2 + sc


# ----------------------------------------------------------------------------------
def make_params(key, in_planes, planes, stride, norm_bound=1.0, n_power_iterations=1):
    ks = jax.random.split(key, 12)
    f32 = jnp.float32
    w1 = jax.random.normal(ks[0], (planes, in_planes, 3, 3), f32) * 0.1
    w2 = jax.random.normal(ks[1], (planes, planes, 3, 3), f32) * 0.1
    params = {
        "bn1": (
            jax.random.uniform(ks[3], (in_planes,), f32, 0.5, 1.5),   # gamma
            jax.random.normal(ks[4], (in_planes,), f32) * 0.1,        # beta
            jax.random.normal(ks[5], (in_planes,), f32) * 0.1,        # running_mean
            jax.random.uniform(ks[6], (in_planes,), f32, 0.5, 1.5),   # running_var
        ),
        "bn2": (
            jax.random.uniform(ks[7], (planes,), f32, 0.5, 1.5),
            jax.random.normal(ks[8], (planes,), f32) * 0.1,
            jax.random.normal(ks[9], (planes,), f32) * 0.1,
            jax.random.uniform(ks[10], (planes,), f32, 0.5, 1.5),
        ),
        "conv1_w": spectral_normalize(w1, norm_bound, n_power_iterations, ks[11]),
        "conv1_b": jnp.linspace(-0.1, 0.1, planes, dtype=f32),
        "conv2_w": spectral_normalize(w2, norm_bound, n_power_iterations, ks[11]),
        "conv2_b": jnp.linspace(-0.05, 0.05, planes, dtype=f32),
    }
    if stride != 1 or in_planes != planes:
        ws = jax.random.normal(ks[2], (planes, in_planes, 1, 1), f32) * 0.1
        params["sc_w"] = spectral_normalize(ws, norm_bound, n_power_iterations, ks[11])
        params["sc_b"] = jnp.linspace(-0.02, 0.02, planes, dtype=f32)
    return params


if __name__ == "__main__":
    key = jax.random.PRNGKey(0)
    N, H, W = 2, 16, 16

    # config A: projection shortcut (stride 2, Cin != planes)
    # config B: identity shortcut (stride 1, Cin == planes) -- previously untested path
    for (in_planes, planes, stride) in [(4, 8, 2), (8, 8, 1)]:
        key, kx, kp = jax.random.split(key, 3)
        x = jax.random.normal(kx, (N, in_planes, H, W), jnp.float32)
        raw = make_params(kp, in_planes, planes, stride)

        arrays, cfg = prepare_params(raw, in_planes, planes, stride)
        fwd = build_forward(cfg)

        out = jax.block_until_ready(fwd(x, arrays))
        ref = jax.block_until_ready(ref_forward(x, raw, stride))

        Ho = (H - 1) // stride + 1
        assert out.shape == ref.shape == (N, planes, Ho, Ho), (out.shape, ref.shape)
        max_err = float(jnp.max(jnp.abs(out - ref)))
        # bf16 MXU inputs (f32 accumulation) -> slightly looser tolerance than pure f32
        assert jnp.allclose(out, ref, atol=3e-2, rtol=3e-2), max_err

    print("KERNEL_OK")
</pallas_src>

<mosaic_0001>
module attributes {stable_mosaic.version = 11 : i64} {
  func.func @_fused_conv_kernel(%arg0: i32, %arg1: i32, %arg2: memref<1x18x18x128xf32, #tpu.memory_space<vmem>>, %arg3: memref<1x18x18x1xf32, #tpu.memory_space<vmem>>, %arg4: memref<3x3x128x128xbf16, #tpu.memory_space<vmem>>, %arg5: memref<1x1x128xf32, #tpu.memory_space<vmem>>, %arg6: memref<1x1x128xf32, #tpu.memory_space<vmem>>, %arg7: memref<1x128xf32, #tpu.memory_space<vmem>>, %arg8: memref<1x256x128xf32, #tpu.memory_space<vmem>>, %arg9: memref<256x128xf32, #tpu.memory_space<vmem>>) attributes {dimension_semantics = [#tpu.dimension_semantics<parallel>, #tpu.dimension_semantics<arbitrary>], iteration_bounds = array<i64: 2, 1>, scalar_prefetch = 0 : i64, scratch_operands = 1 : i64, tpu.core_type = #tpu.core_type<tc>, window_params = [{transform_indices = @transform_0, window_bounds = array<i64: 1, 18, 18, 128>}, {pipeline_mode = #tpu.pipeline_mode<synchronous>, transform_indices = @transform_1, window_bounds = array<i64: 1, 18, 18, 1>}, {transform_indices = @transform_2, window_bounds = array<i64: 3, 3, 128, 128>}, {transform_indices = @transform_3, window_bounds = array<i64: 1, 1, 128>}, {transform_indices = @transform_4, window_bounds = array<i64: 1, 1, 128>}, {pipeline_mode = #tpu.pipeline_mode<synchronous>, transform_indices = @transform_5, window_bounds = array<i64: 1, 128>}, {transform_indices = @transform_6, window_bounds = array<i64: 1, 256, 128>}]} {
    %c0_i32 = arith.constant 0 : i32
    %0 = arith.cmpi eq, %arg1, %c0_i32 : i32
    %1 = arith.extui %0 : i1 to i32
    %c0_i32_0 = arith.constant 0 : i32
    %2 = arith.cmpi ne, %1, %c0_i32_0 : i32
    scf.if %2 {
      %cst_167 = arith.constant 0.000000e+00 : f32
      %188 = vector.broadcast %cst_167 : f32 to vector<256x128xf32>
      %c0_168 = arith.constant 0 : index
      %c0_169 = arith.constant 0 : index
      %189 = vector.load %arg9[%c0_168, %c0_169] : memref<256x128xf32, #tpu.memory_space<vmem>>, vector<256x128xf32>
      tpu.vector_store %arg9[%c0_168, %c0_169], %188 {strides = array<i32>} : memref<256x128xf32, #tpu.memory_space<vmem>>, vector<256x128xf32>,
    } else {
    }
    %c0 = arith.constant 0 : index
    %c0_1 = arith.constant 0 : index
    %c0_2 = arith.constant 0 : index
    %3 = vector.load %arg5[%c0, %c0_1, %c0_2] : memref<1x1x128xf32, #tpu.memory_space<vmem>>, vector<1x1x128xf32>
    %c0_3 = arith.constant 0 : index
    %c0_4 = arith.constant 0 : index
    %c0_5 = arith.constant 0 : index
    %4 = vector.load %arg6[%c0_3, %c0_4, %c0_5] : memref<1x1x128xf32, #tpu.memory_space<vmem>>, vector<1x1x128xf32>
    %c0_6 = arith.constant 0 : index
    %c0_7 = arith.constant 0 : index
    %c0_8 = arith.constant 0 : index
    %c0_9 = arith.constant 0 : index
    %5 = vector.load %arg2[%c0_6, %c0_7, %c0_8, %c0_9] : memref<1x18x18x128xf32, #tpu.memory_space<vmem>>, vector<1x16x16x128xf32>
    %6 = vector.shape_cast %5 : vector<1x16x16x128xf32> to vector<16x16x128xf32>
    %c0_10 = arith.constant 0 : index
    %c0_11 = arith.constant 0 : index
    %c0_12 = arith.constant 0 : index
    %c0_13 = arith.constant 0 : index
    %7 = vector.load %arg3[%c0_10, %c0_11, %c0_12, %c0_13] : memref<1x18x18x1xf32, #tpu.memory_space<vmem>>, vector<1x16x16x1xf32>
    %8 = vector.shape_cast %7 : vector<1x16x16x1xf32> to vector<16x16x1xf32>
    %9 = vector.broadcast %3 : vector<1x1x128xf32> to vector<16x16x128xf32>
    %10 = arith.mulf %6, %9 : vector<16x16x128xf32>
    %11 = vector.broadcast %4 : vector<1x1x128xf32> to vector<16x16x128xf32>
    %12 = arith.addf %10, %11 : vector<16x16x128xf32>
    %cst = arith.constant 0.000000e+00 : f32
    %13 = vector.broadcast %cst : f32 to vector<16x16x128xf32>
    %14 = arith.maximumf %12, %13 : vector<16x16x128xf32>
    %15 = vector.broadcast %8 : vector<16x16x1xf32> to vector<16x16x128xf32>
    %16 = arith.mulf %14, %15 : vector<16x16x128xf32>
    %17 = vector.shape_cast %16 : vector<16x16x128xf32> to vector<256x128xf32>
    %18 = arith.truncf %17 : vector<256x128xf32> to vector<256x128xbf16>
    %c0_14 = arith.constant 0 : index
    %c0_15 = arith.constant 0 : index
    %19 = vector.load %arg9[%c0_14, %c0_15] : memref<256x128xf32, #tpu.memory_space<vmem>>, vector<256x128xf32>
    %c0_16 = arith.constant 0 : index
    %c0_17 = arith.constant 0 : index
    %c0_18 = arith.constant 0 : index
    %c0_19 = arith.constant 0 : index
    %20 = vector.load %arg4[%c0_16, %c0_17, %c0_18, %c0_19] : memref<3x3x128x128xbf16, #tpu.memory_space<vmem>>, vector<1x1x128x128xbf16>
    %21 = vector.shape_cast %20 : vector<1x1x128x128xbf16> to vector<128x128xbf16>
    %cst_20 = arith.constant dense<0.000000e+00> : vector<256x128xf32>
    %22 = tpu.matmul %18, %21, %cst_20 {dimension_numbers = #tpu.dot_dimension_numbers<[1], [0], [0], [1], [0, 0, 1, 1], [], []>} : vector<256x128xbf16>, vector<128x128xbf16>, vector<256x128xf32> -> vector<256x128xf32>
    %23 = arith.addf %19, %22 : vector<256x128xf32>
    %c0_21 = arith.constant 0 : index
    %c0_22 = arith.constant 0 : index
    %24 = vector.load %arg9[%c0_21, %c0_22] : memref<256x128xf32, #tpu.memory_space<vmem>>, vector<256x128xf32>
    tpu.vector_store %arg9[%c0_21, %c0_22], %23 {strides = array<i32>} : memref<256x128xf32, #tpu.memory_space<vmem>>, vector<256x128xf32>,
    %c0_23 = arith.constant 0 : index
    %c0_24 = arith.constant 0 : index
    %c1 = arith.constant 1 : index
    %c0_25 = arith.constant 0 : index
    %25 = vector.load %arg2[%c0_23, %c0_24, %c1, %c0_25] : memref<1x18x18x128xf32, #tpu.memory_space<vmem>>, vector<1x16x16x128xf32>
    %26 = vector.shape_cast %25 : vector<1x16x16x128xf32> to vector<16x16x128xf32>
    %c0_26 = arith.constant 0 : index
    %c0_27 = arith.constant 0 : index
    %c1_28 = arith.constant 1 : index
    %c0_29 = arith.constant 0 : index
    %27 = vector.load %arg3[%c0_26, %c0_27, %c1_28, %c0_29] : memref<1x18x18x1xf32, #tpu.memory_space<vmem>>, vector<1x16x16x1xf32>
    %28 = vector.shape_cast %27 : vector<1x16x16x1xf32> to vector<16x16x1xf32>
    %29 = vector.broadcast %3 : vector<1x1x128xf32> to vector<16x16x128xf32>
    %30 = arith.mulf %26, %29 : vector<16x16x128xf32>
    %31 = vector.broadcast %4 : vector<1x1x128xf32> to vector<16x16x128xf32>
    %32 = arith.addf %30, %31 : vector<16x16x128xf32>
    %cst_30 = arith.constant 0.000000e+00 : f32
    %33 = vector.broadcast %cst_30 : f32 to vector<16x16x128xf32>
    %34 = arith.maximumf %32, %33 : vector<16x16x128xf32>
    %35 = vector.broadcast %28 : vector<16x16x1xf32> to vector<16x16x128xf32>
    %36 = arith.mulf %34, %35 : vector<16x16x128xf32>
    %37 = vector.shape_cast %36 : vector<16x16x128xf32> to vector<256x128xf32>
    %38 = arith.truncf %37 : vector<256x128xf32> to vector<256x128xbf16>
    %c0_31 = arith.constant 0 : index
    %c0_32 = arith.constant 0 : index
    %39 = vector.load %arg9[%c0_31, %c0_32] : memref<256x128xf32, #tpu.memory_space<vmem>>, vector<256x128xf32>
    %c0_33 = arith.constant 0 : index
    %c1_34 = arith.constant 1 : index
    %c0_35 = arith.constant 0 : index
    %c0_36 = arith.constant 0 : index
    %40 = vector.load %arg4[%c0_33, %c1_34, %c0_35, %c0_36] : memref<3x3x128x128xbf16, #tpu.memory_space<vmem>>, vector<1x1x128x128xbf16>
    %41 = vector.shape_cast %40 : vector<1x1x128x128xbf16> to vector<128x128xbf16>
    %cst_37 = arith.constant dense<0.000000e+00> : vector<256x128xf32>
    %42 = tpu.matmul %38, %41, %cst_37 {dimension_numbers = #tpu.dot_dimension_numbers<[1], [0], [0], [1], [0, 0, 1, 1], [], []>} : vector<256x128xbf16>, vector<128x128xbf16>, vector<256x128xf32> -> vector<256x128xf32>
    %43 = arith.addf %39, %42 : vector<256x128xf32>
    %c0_38 = arith.constant 0 : index
    %c0_39 = arith.constant 0 : index
    %44 = vector.load %arg9[%c0_38, %c0_39] : memref<256x128xf32, #tpu.memory_space<vmem>>, vector<256x128xf32>
    tpu.vector_store %arg9[%c0_38, %c0_39], %43 {strides = array<i32>} : memref<256x128xf32, #tpu.memory_space<vmem>>, vector<256x128xf32>,
    %c0_40 = arith.constant 0 : index
    %c0_41 = arith.constant 0 : index
    %c2 = arith.constant 2 : index
    %c0_42 = arith.constant 0 : index
    %45 = vector.load %arg2[%c0_40, %c0_41, %c2, %c0_42] : memref<1x18x18x128xf32, #tpu.memory_space<vmem>>, vector<1x16x16x128xf32>
    %46 = vector.shape_cast %45 : vector<1x16x16x128xf32> to vector<16x16x128xf32>
    %c0_43 = arith.constant 0 : index
    %c0_44 = arith.constant 0 : index
    %c2_45 = arith.constant 2 : index
    %c0_46 = arith.constant 0 : index
    %47 = vector.load %arg3[%c0_43, %c0_44, %c2_45, %c0_46] : memref<1x18x18x1xf32, #tpu.memory_space<vmem>>, vector<1x16x16x1xf32>
    %48 = vector.shape_cast %47 : vector<1x16x16x1xf32> to vector<16x16x1xf32>
    %49 = vector.broadcast %3 : vector<1x1x128xf32> to vector<16x16x128xf32>
    %50 = arith.mulf %46, %49 : vector<16x16x128xf32>
    %51 = vector.broadcast %4 : vector<1x1x128xf32> to vector<16x16x128xf32>
    %52 = arith.addf %50, %51 : vector<16x16x128xf32>
    %cst_47 = arith.constant 0.000000e+00 : f32
    %53 = vector.broadcast %cst_47 : f32 to vector<16x16x128xf32>
    %54 = arith.maximumf %52, %53 : vector<16x16x128xf32>
    %55 = vector.broadcast %48 : vector<16x16x1xf32> to vector<16x16x128xf32>
    %56 = arith.mulf %54, %55 : vector<16x16x128xf32>
    %57 = vector.shape_cast %56 : vector<16x16x128xf32> to vector<256x128xf32>
    %58 = arith.truncf %57 : vector<256x128xf32> to vector<256x128xbf16>
    %c0_48 = arith.constant 0 : index
    %c0_49 = arith.constant 0 : index
    %59 = vector.load %arg9[%c0_48, %c0_49] : memref<256x128xf32, #tpu.memory_space<vmem>>, vector<256x128xf32>
    %c0_50 = arith.constant 0 : index
    %c2_51 = arith.constant 2 : index
    %c0_52 = arith.constant 0 : index
    %c0_53 = arith.constant 0 : index
    %60 = vector.load %arg4[%c0_50, %c2_51, %c0_52, %c0_53] : memref<3x3x128x128xbf16, #tpu.memory_space<vmem>>, vector<1x1x128x128xbf16>
    %61 = vector.shape_cast %60 : vector<1x1x128x128xbf16> to vector<128x128xbf16>
    %cst_54 = arith.constant dense<0.000000e+00> : vector<256x128xf32>
    %62 = tpu.matmul %58, %61, %cst_54 {dimension_numbers = #tpu.dot_dimension_numbers<[1], [0], [0], [1], [0, 0, 1, 1], [], []>} : vector<256x128xbf16>, vector<128x128xbf16>, vector<256x128xf32> -> vector<256x128xf32>
    %63 = arith.addf %59, %62 : vector<256x128xf32>
    %c0_55 = arith.constant 0 : index
    %c0_56 = arith.constant 0 : index
    %64 = vector.load %arg9[%c0_55, %c0_56] : memref<256x128xf32, #tpu.memory_space<vmem>>, vector<256x128xf32>
    tpu.vector_store %arg9[%c0_55, %c0_56], %63 {strides = array<i32>} : memref<256x128xf32, #tpu.memory_space<vmem>>, vector<256x128xf32>,
    %c0_57 = arith.constant 0 : index
    %c1_58 = arith.constant 1 : index
    %c0_59 = arith.constant 0 : index
    %c0_60 = arith.constant 0 : index
    %65 = vector.load %arg2[%c0_57, %c1_58, %c0_59, %c0_60] : memref<1x18x18x128xf32, #tpu.memory_space<vmem>>, vector<1x16x16x128xf32>
    %66 = vector.shape_cast %65 : vector<1x16x16x128xf32> to vector<16x16x128xf32>
    %c0_61 = arith.constant 0 : index
    %c1_62 = arith.constant 1 : index
    %c0_63 = arith.constant 0 : index
    %c0_64 = arith.constant 0 : index
    %67 = vector.load %arg3[%c0_61, %c1_62, %c0_63, %c0_64] : memref<1x18x18x1xf32, #tpu.memory_space<vmem>>, vector<1x16x16x1xf32>
    %68 = vector.shape_cast %67 : vector<1x16x16x1xf32> to vector<16x16x1xf32>
    %69 = vector.broadcast %3 : vector<1x1x128xf32> to vector<16x16x128xf32>
    %70 = arith.mulf %66, %69 : vector<16x16x128xf32>
    %71 = vector.broadcast %4 : vector<1x1x128xf32> to vector<16x16x128xf32>
    %72 = arith.addf %70, %71 : vector<16x16x128xf32>
    %cst_65 = arith.constant 0.000000e+00 : f32
    %73 = vector.broadcast %cst_65 : f32 to vector<16x16x128xf32>
    %74 = arith.maximumf %72, %73 : vector<16x16x128xf32>
    %75 = vector.broadcast %68 : vector<16x16x1xf32> to vector<16x16x128xf32>
    %76 = arith.mulf %74, %75 : vector<16x16x128xf32>
    %77 = vector.shape_cast %76 : vector<16x16x128xf32> to vector<256x128xf32>
    %78 = arith.truncf %77 : vector<256x128xf32> to vector<256x128xbf16>
    %c0_66 = arith.constant 0 : index
    %c0_67 = arith.constant 0 : index
    %79 = vector.load %arg9[%c0_66, %c0_67] : memref<256x128xf32, #tpu.memory_space<vmem>>, vector<256x128xf32>
    %c1_68 = arith.constant 1 : index
    %c0_69 = arith.constant 0 : index
    %c0_70 = arith.constant 0 : index
    %c0_71 = arith.constant 0 : index
    %80 = vector.load %arg4[%c1_68, %c0_69, %c0_70, %c0_71] : memref<3x3x128x128xbf16, #tpu.memory_space<vmem>>, vector<1x1x128x128xbf16>
    %81 = vector.shape_cast %80 : vector<1x1x128x128xbf16> to vector<128x128xbf16>
    %cst_72 = arith.constant dense<0.000000e+00> : vector<256x128xf32>
    %82 = tpu.matmul %78, %81, %cst_72 {dimension_numbers = #tpu.dot_dimension_numbers<[1], [0], [0], [1], [0, 0, 1, 1], [], []>} : vector<256x128xbf16>, vector<128x128xbf16>, vector<256x128xf32> -> vector<256x128xf32>
    %83 = arith.addf %79, %82 : vector<256x128xf32>
    %c0_73 = arith.constant 0 : index
    %c0_74 = arith.constant 0 : index
    %84 = vector.load %arg9[%c0_73, %c0_74] : memref<256x128xf32, #tpu.memory_space<vmem>>, vector<256x128xf32>
    tpu.vector_store %arg9[%c0_73, %c0_74], %83 {strides = array<i32>} : memref<256x128xf32, #tpu.memory_space<vmem>>, vector<256x128xf32>,
    %c0_75 = arith.constant 0 : index
    %c1_76 = arith.constant 1 : index
    %c1_77 = arith.constant 1 : index
    %c0_78 = arith.constant 0 : index
    %85 = vector.load %arg2[%c0_75, %c1_76, %c1_77, %c0_78] : memref<1x18x18x128xf32, #tpu.memory_space<vmem>>, vector<1x16x16x128xf32>
    %86 = vector.shape_cast %85 : vector<1x16x16x128xf32> to vector<16x16x128xf32>
    %c0_79 = arith.constant 0 : index
    %c1_80 = arith.constant 1 : index
    %c1_81 = arith.constant 1 : index
    %c0_82 = arith.constant 0 : index
    %87 = vector.load %arg3[%c0_79, %c1_80, %c1_81, %c0_82] : memref<1x18x18x1xf32, #tpu.memory_space<vmem>>, vector<1x16x16x1xf32>
    %88 = vector.shape_cast %87 : vector<1x16x16x1xf32> to vector<16x16x1xf32>
    %89 = vector.broadcast %3 : vector<1x1x128xf32> to vector<16x16x128xf32>
    %90 = arith.mulf %86, %89 : vector<16x16x128xf32>
    %91 = vector.broadcast %4 : vector<1x1x128xf32> to vector<16x16x128xf32>
    %92 = arith.addf %90, %91 : vector<16x16x128xf32>
    %cst_83 = arith.constant 0.000000e+00 : f32
    %93 = vector.broadcast %cst_83 : f32 to vector<16x16x128xf32>
    %94 = arith.maximumf %92, %93 : vector<16x16x128xf32>
    %95 = vector.broadcast %88 : vector<16x16x1xf32> to vector<16x16x128xf32>
    %96 = arith.mulf %94, %95 : vector<16x16x128xf32>
    %97 = vector.shape_cast %96 : vector<16x16x128xf32> to vector<256x128xf32>
    %98 = arith.truncf %97 : vector<256x128xf32> to vector<256x128xbf16>
    %c0_84 = arith.constant 0 : index
    %c0_85 = arith.constant 0 : index
    %99 = vector.load %arg9[%c0_84, %c0_85] : memref<256x128xf32, #tpu.memory_space<vmem>>, vector<256x128xf32>
    %c1_86 = arith.constant 1 : index
    %c1_87 = arith.constant 1 : index
    %c0_88 = arith.constant 0 : index
    %c0_89 = arith.constant 0 : index
    %100 = vector.load %arg4[%c1_86, %c1_87, %c0_88, %c0_89] : memref<3x3x128x128xbf16, #tpu.memory_space<vmem>>, vector<1x1x128x128xbf16>
    %101 = vector.shape_cast %100 : vector<1x1x128x128xbf16> to vector<128x128xbf16>
    %cst_90 = arith.constant dense<0.000000e+00> : vector<256x128xf32>
    %102 = tpu.matmul %98, %101, %cst_90 {dimension_numbers = #tpu.dot_dimension_numbers<[1], [0], [0], [1], [0, 0, 1, 1], [], []>} : vector<256x128xbf16>, vector<128x128xbf16>, vector<256x128xf32> -> vector<256x128xf32>
    %103 = arith.addf %99, %102 : vector<256x128xf32>
    %c0_91 = arith.constant 0 : index
    %c0_92 = arith.constant 0 : index
    %104 = vector.load %arg9[%c0_91, %c0_92] : memref<256x128xf32, #tpu.memory_space<vmem>>, vector<256x128xf32>
    tpu.vector_store %arg9[%c0_91, %c0_92], %103 {strides = array<i32>} : memref<256x128xf32, #tpu.memory_space<vmem>>, vector<256x128xf32>,
    %c0_93 = arith.constant 0 : index
    %c1_94 = arith.constant 1 : index
    %c2_95 = arith.constant 2 : index
    %c0_96 = arith.constant 0 : index
    %105 = vector.load %arg2[%c0_93, %c1_94, %c2_95, %c0_96] : memref<1x18x18x128xf32, #tpu.memory_space<vmem>>, vector<1x16x16x128xf32>
    %106 = vector.shape_cast %105 : vector<1x16x16x128xf32> to vector<16x16x128xf32>
    %c0_97 = arith.constant 0 : index
    %c1_98 = arith.constant 1 : index
    %c2_99 = arith.constant 2 : index
    %c0_100 = arith.constant 0 : index
    %107 = vector.load %arg3[%c0_97, %c1_98, %c2_99, %c0_100] : memref<1x18x18x1xf32, #tpu.memory_space<vmem>>, vector<1x16x16x1xf32>
    %108 = vector.shape_cast %107 : vector<1x16x16x1xf32> to vector<16x16x1xf32>
    %109 = vector.broadcast %3 : vector<1x1x128xf32> to vector<16x16x128xf32>
    %110 = arith.mulf %106, %109 : vector<16x16x128xf32>
    %111 = vector.broadcast %4 : vector<1x1x128xf32> to vector<16x16x128xf32>
    %112 = arith.addf %110, %111 : vector<16x16x128xf32>
    %cst_101 = arith.constant 0.000000e+00 : f32
    %113 = vector.broadcast %cst_101 : f32 to vector<16x16x128xf32>
    %114 = arith.maximumf %112, %113 : vector<16x16x128xf32>
    %115 = vector.broadcast %108 : vector<16x16x1xf32> to vector<16x16x128xf32>
    %116 = arith.mulf %114, %115 : vector<16x16x128xf32>
    %117 = vector.shape_cast %116 : vector<16x16x128xf32> to vector<256x128xf32>
    %118 = arith.truncf %117 : vector<256x128xf32> to vector<256x128xbf16>
    %c0_102 = arith.constant 0 : index
    %c0_103 = arith.constant 0 : index
    %119 = vector.load %arg9[%c0_102, %c0_103] : memref<256x128xf32, #tpu.memory_space<vmem>>, vector<256x128xf32>
    %c1_104 = arith.constant 1 : index
    %c2_105 = arith.constant 2 : index
    %c0_106 = arith.constant 0 : index
    %c0_107 = arith.constant 0 : index
    %120 = vector.load %arg4[%c1_104, %c2_105, %c0_106, %c0_107] : memref<3x3x128x128xbf16, #tpu.memory_space<vmem>>, vector<1x1x128x128xbf16>
    %121 = vector.shape_cast %120 : vector<1x1x128x128xbf16> to vector<128x128xbf16>
    %cst_108 = arith.constant dense<0.000000e+00> : vector<256x128xf32>
    %122 = tpu.matmul %118, %121, %cst_108 {dimension_numbers = #tpu.dot_dimension_numbers<[1], [0], [0], [1], [0, 0, 1, 1], [], []>} : vector<256x128xbf16>, vector<128x128xbf16>, vector<256x128xf32> -> vector<256x128xf32>
    %123 = arith.addf %119, %122 : vector<256x128xf32>
    %c0_109 = arith.constant 0 : index
    %c0_110 = arith.constant 0 : index
    %124 = vector.load %arg9[%c0_109, %c0_110] : memref<256x128xf32, #tpu.memory_space<vmem>>, vector<256x128xf32>
    tpu.vector_store %arg9[%c0_109, %c0_110], %123 {strides = array<i32>} : memref<256x128xf32, #tpu.memory_space<vmem>>, vector<256x128xf32>,
    %c0_111 = arith.constant 0 : index
    %c2_112 = arith.constant 2 : index
    %c0_113 = arith.constant 0 : index
    %c0_114 = arith.constant 0 : index
    %125 = vector.load %arg2[%c0_111, %c2_112, %c0_113, %c0_114] : memref<1x18x18x128xf32, #tpu.memory_space<vmem>>, vector<1x16x16x128xf32>
    %126 = vector.shape_cast %125 : vector<1x16x16x128xf32> to vector<16x16x128xf32>
    %c0_115 = arith.constant 0 : index
    %c2_116 = arith.constant 2 : index
    %c0_117 = arith.constant 0 : index
    %c0_118 = arith.constant 0 : index
    %127 = vector.load %arg3[%c0_115, %c2_116, %c0_117, %c0_118] : memref<1x18x18x1xf32, #tpu.memory_space<vmem>>, vector<1x16x16x1xf32>
    %128 = vector.shape_cast %127 : vector<1x16x16x1xf32> to vector<16x16x1xf32>
    %129 = vector.broadcast %3 : vector<1x1x128xf32> to vector<16x16x128xf32>
    %130 = arith.mulf %126, %129 : vector<16x16x128xf32>
    %131 = vector.broadcast %4 : vector<1x1x128xf32> to vector<16x16x128xf32>
    %132 = arith.addf %130, %131 : vector<16x16x128xf32>
    %cst_119 = arith.constant 0.000000e+00 : f32
    %133 = vector.broadcast %cst_119 : f32 to vector<16x16x128xf32>
    %134 = arith.maximumf %132, %133 : vector<16x16x128xf32>
    %135 = vector.broadcast %128 : vector<16x16x1xf32> to vector<16x16x128xf32>
    %136 = arith.mulf %134, %135 : vector<16x16x128xf32>
    %137 = vector.shape_cast %136 : vector<16x16x128xf32> to vector<256x128xf32>
    %138 = arith.truncf %137 : vector<256x128xf32> to vector<256x128xbf16>
    %c0_120 = arith.constant 0 : index
    %c0_121 = arith.constant 0 : index
    %139 = vector.load %arg9[%c0_120, %c0_121] : memref<256x128xf32, #tpu.memory_space<vmem>>, vector<256x128xf32>
    %c2_122 = arith.constant 2 : index
    %c0_123 = arith.constant 0 : index
    %c0_124 = arith.constant 0 : index
    %c0_125 = arith.constant 0 : index
    %140 = vector.load %arg4[%c2_122, %c0_123, %c0_124, %c0_125] : memref<3x3x128x128xbf16, #tpu.memory_space<vmem>>, vector<1x1x128x128xbf16>
    %141 = vector.shape_cast %140 : vector<1x1x128x128xbf16> to vector<128x128xbf16>
    %cst_126 = arith.constant dense<0.000000e+00> : vector<256x128xf32>
    %142 = tpu.matmul %138, %141, %cst_126 {dimension_numbers = #tpu.dot_dimension_numbers<[1], [0], [0], [1], [0, 0, 1, 1], [], []>} : vector<256x128xbf16>, vector<128x128xbf16>, vector<256x128xf32> -> vector<256x128xf32>
    %143 = arith.addf %139, %142 : vector<256x128xf32>
    %c0_127 = arith.constant 0 : index
    %c0_128 = arith.constant 0 : index
    %144 = vector.load %arg9[%c0_127, %c0_128] : memref<256x128xf32, #tpu.memory_space<vmem>>, vector<256x128xf32>
    tpu.vector_store %arg9[%c0_127, %c0_128], %143 {strides = array<i32>} : memref<256x128xf32, #tpu.memory_space<vmem>>, vector<256x128xf32>,
    %c0_129 = arith.constant 0 : index
    %c2_130 = arith.constant 2 : index
    %c1_131 = arith.constant 1 : index
    %c0_132 = arith.constant 0 : index
    %145 = vector.load %arg2[%c0_129, %c2_130, %c1_131, %c0_132] : memref<1x18x18x128xf32, #tpu.memory_space<vmem>>, vector<1x16x16x128xf32>
    %146 = vector.shape_cast %145 : vector<1x16x16x128xf32> to vector<16x16x128xf32>
    %c0_133 = arith.constant 0 : index
    %c2_134 = arith.constant 2 : index
    %c1_135 = arith.constant 1 : index
    %c0_136 = arith.constant 0 : index
    %147 = vector.load %arg3[%c0_133, %c2_134, %c1_135, %c0_136] : memref<1x18x18x1xf32, #tpu.memory_space<vmem>>, vector<1x16x16x1xf32>
    %148 = vector.shape_cast %147 : vector<1x16x16x1xf32> to vector<16x16x1xf32>
    %149 = vector.broadcast %3 : vector<1x1x128xf32> to vector<16x16x128xf32>
    %150 = arith.mulf %146, %149 : vector<16x16x128xf32>
    %151 = vector.broadcast %4 : vector<1x1x128xf32> to vector<16x16x128xf32>
    %152 = arith.addf %150, %151 : vector<16x16x128xf32>
    %cst_137 = arith.constant 0.000000e+00 : f32
    %153 = vector.broadcast %cst_137 : f32 to vector<16x16x128xf32>
    %154 = arith.maximumf %152, %153 : vector<16x16x128xf32>
    %155 = vector.broadcast %148 : vector<16x16x1xf32> to vector<16x16x128xf32>
    %156 = arith.mulf %154, %155 : vector<16x16x128xf32>
    %157 = vector.shape_cast %156 : vector<16x16x128xf32> to vector<256x128xf32>
    %158 = arith.truncf %157 : vector<256x128xf32> to vector<256x128xbf16>
    %c0_138 = arith.constant 0 : index
    %c0_139 = arith.constant 0 : index
    %159 = vector.load %arg9[%c0_138, %c0_139] : memref<256x128xf32, #tpu.memory_space<vmem>>, vector<256x128xf32>
    %c2_140 = arith.constant 2 : index
    %c1_141 = arith.constant 1 : index
    %c0_142 = arith.constant 0 : index
    %c0_143 = arith.constant 0 : index
    %160 = vector.load %arg4[%c2_140, %c1_141, %c0_142, %c0_143] : memref<3x3x128x128xbf16, #tpu.memory_space<vmem>>, vector<1x1x128x128xbf16>
    %161 = vector.shape_cast %160 : vector<1x1x128x128xbf16> to vector<128x128xbf16>
    %cst_144 = arith.constant dense<0.000000e+00> : vector<256x128xf32>
    %162 = tpu.matmul %158, %161, %cst_144 {dimension_numbers = #tpu.dot_dimension_numbers<[1], [0], [0], [1], [0, 0, 1, 1], [], []>} : vector<256x128xbf16>, vector<128x128xbf16>, vector<256x128xf32> -> vector<256x128xf32>
    %163 = arith.addf %159, %162 : vector<256x128xf32>
    %c0_145 = arith.constant 0 : index
    %c0_146 = arith.constant 0 : index
    %164 = vector.load %arg9[%c0_145, %c0_146] : memref<256x128xf32, #tpu.memory_space<vmem>>, vector<256x128xf32>
    tpu.vector_store %arg9[%c0_145, %c0_146], %163 {strides = array<i32>} : memref<256x128xf32, #tpu.memory_space<vmem>>, vector<256x128xf32>,
    %c0_147 = arith.constant 0 : index
    %c2_148 = arith.constant 2 : index
    %c2_149 = arith.constant 2 : index
    %c0_150 = arith.constant 0 : index
    %165 = vector.load %arg2[%c0_147, %c2_148, %c2_149, %c0_150] : memref<1x18x18x128xf32, #tpu.memory_space<vmem>>, vector<1x16x16x128xf32>
    %166 = vector.shape_cast %165 : vector<1x16x16x128xf32> to vector<16x16x128xf32>
    %c0_151 = arith.constant 0 : index
    %c2_152 = arith.constant 2 : index
    %c2_153 = arith.constant 2 : index
    %c0_154 = arith.constant 0 : index
    %167 = vector.load %arg3[%c0_151, %c2_152, %c2_153, %c0_154] : memref<1x18x18x1xf32, #tpu.memory_space<vmem>>, vector<1x16x16x1xf32>
    %168 = vector.shape_cast %167 : vector<1x16x16x1xf32> to vector<16x16x1xf32>
    %169 = vector.broadcast %3 : vector<1x1x128xf32> to vector<16x16x128xf32>
    %170 = arith.mulf %166, %169 : vector<16x16x128xf32>
    %171 = vector.broadcast %4 : vector<1x1x128xf32> to vector<16x16x128xf32>
    %172 = arith.addf %170, %171 : vector<16x16x128xf32>
    %cst_155 = arith.constant 0.000000e+00 : f32
    %173 = vector.broadcast %cst_155 : f32 to vector<16x16x128xf32>
    %174 = arith.maximumf %172, %173 : vector<16x16x128xf32>
    %175 = vector.broadcast %168 : vector<16x16x1xf32> to vector<16x16x128xf32>
    %176 = arith.mulf %174, %175 : vector<16x16x128xf32>
    %177 = vector.shape_cast %176 : vector<16x16x128xf32> to vector<256x128xf32>
    %178 = arith.truncf %177 : vector<256x128xf32> to vector<256x128xbf16>
    %c0_156 = arith.constant 0 : index
    %c0_157 = arith.constant 0 : index
    %179 = vector.load %arg9[%c0_156, %c0_157] : memref<256x128xf32, #tpu.memory_space<vmem>>, vector<256x128xf32>
    %c2_158 = arith.constant 2 : index
    %c2_159 = arith.constant 2 : index
    %c0_160 = arith.constant 0 : index
    %c0_161 = arith.constant 0 : index
    %180 = vector.load %arg4[%c2_158, %c2_159, %c0_160, %c0_161] : memref<3x3x128x128xbf16, #tpu.memory_space<vmem>>, vector<1x1x128x128xbf16>
    %181 = vector.shape_cast %180 : vector<1x1x128x128xbf16> to vector<128x128xbf16>
    %cst_162 = arith.constant dense<0.000000e+00> : vector<256x128xf32>
    %182 = tpu.matmul %178, %181, %cst_162 {dimension_numbers = #tpu.dot_dimension_numbers<[1], [0], [0], [1], [0, 0, 1, 1], [], []>} : vector<256x128xbf16>, vector<128x128xbf16>, vector<256x128xf32> -> vector<256x128xf32>
    %183 = arith.addf %179, %182 : vector<256x128xf32>
    %c0_163 = arith.constant 0 : index
    %c0_164 = arith.constant 0 : index
    %184 = vector.load %arg9[%c0_163, %c0_164] : memref<256x128xf32, #tpu.memory_space<vmem>>, vector<256x128xf32>
    tpu.vector_store %arg9[%c0_163, %c0_164], %183 {strides = array<i32>} : memref<256x128xf32, #tpu.memory_space<vmem>>, vector<256x128xf32>,
    %c0_i32_165 = arith.constant 0 : i32
    %185 = arith.cmpi eq, %arg1, %c0_i32_165 : i32
    %186 = arith.extui %185 : i1 to i32
    %c0_i32_166 = arith.constant 0 : i32
    %187 = arith.cmpi ne, %186, %c0_i32_166 : i32
    scf.if %187 {
      %c0_167 = arith.constant 0 : index
      %c0_168 = arith.constant 0 : index
      %188 = vector.load %arg9[%c0_167, %c0_168] : memref<256x128xf32, #tpu.memory_space<vmem>>, vector<256x128xf32>
      %c0_169 = arith.constant 0 : index
      %c0_170 = arith.constant 0 : index
      %189 = vector.load %arg7[%c0_169, %c0_170] : memref<1x128xf32, #tpu.memory_space<vmem>>, vector<1x128xf32>
      %190 = vector.broadcast %189 : vector<1x128xf32> to vector<256x128xf32>
      %191 = arith.addf %188, %190 : vector<256x128xf32>
      %c0_171 = arith.constant 0 : index
      %c0_172 = arith.constant 0 : index
      %c0_173 = arith.constant 0 : index
      %192 = vector.load %arg8[%c0_171, %c0_172, %c0_173] : memref<1x256x128xf32, #tpu.memory_space<vmem>>, vector<1x256x128xf32>
      %193 = vector.shape_cast %192 : vector<1x256x128xf32> to vector<256x128xf32>
      %194 = vector.shape_cast %191 : vector<256x128xf32> to vector<1x256x128xf32>
      tpu.vector_store %arg8[%c0_171, %c0_172, %c0_173], %194 {strides = array<i32>} : memref<1x256x128xf32, #tpu.memory_space<vmem>>, vector<1x256x128xf32>,
    } else {
    }
    return
  }
  func.func @transform_0(%arg0: i32, %arg1: i32) -> (i32, i32, i32, i32) {
    %c0_i32 = arith.constant 0 : i32
    %c0_i32_0 = arith.constant 0 : i32
    %c0_i32_1 = arith.constant 0 : i32
    return %arg0, %c0_i32, %c0_i32_0, %arg1 : i32, i32, i32, i32
  }
  func.func @transform_1(%arg0: i32, %arg1: i32) -> (i32, i32, i32, i32) {
    %c0_i32 = arith.constant 0 : i32
    %c0_i32_0 = arith.constant 0 : i32
    %c0_i32_1 = arith.constant 0 : i32
    %c0_i32_2 = arith.constant 0 : i32
    %c0_i32_3 = arith.constant 0 : i32
    return %c0_i32, %c0_i32_0, %c0_i32_1, %c0_i32_2 : i32, i32, i32, i32
  }
  func.func @transform_2(%arg0: i32, %arg1: i32) -> (i32, i32, i32, i32) {
    %c0_i32 = arith.constant 0 : i32
    %c0_i32_0 = arith.constant 0 : i32
    %c0_i32_1 = arith.constant 0 : i32
    %c0_i32_2 = arith.constant 0 : i32
    return %c0_i32, %c0_i32_0, %arg1, %c0_i32_1 : i32, i32, i32, i32
  }
  func.func @transform_3(%arg0: i32, %arg1: i32) -> (i32, i32, i32) {
    %c0_i32 = arith.constant 0 : i32
    %c0_i32_0 = arith.constant 0 : i32
    %c0_i32_1 = arith.constant 0 : i32
    return %c0_i32, %c0_i32_0, %arg1 : i32, i32, i32
  }
  func.func @transform_4(%arg0: i32, %arg1: i32) -> (i32, i32, i32) {
    %c0_i32 = arith.constant 0 : i32
    %c0_i32_0 = arith.constant 0 : i32
    %c0_i32_1 = arith.constant 0 : i32
    return %c0_i32, %c0_i32_0, %arg1 : i32, i32, i32
  }
  func.func @transform_5(%arg0: i32, %arg1: i32) -> (i32, i32) {
    %c0_i32 = arith.constant 0 : i32
    %c0_i32_0 = arith.constant 0 : i32
    %c0_i32_1 = arith.constant 0 : i32
    return %c0_i32, %c0_i32_0 : i32, i32
  }
  func.func @transform_6(%arg0: i32, %arg1: i32) -> (i32, i32, i32) {
    %c0_i32 = arith.constant 0 : i32
    %c0_i32_0 = arith.constant 0 : i32
    %c0_i32_1 = arith.constant 0 : i32
    return %arg0, %c0_i32, %c0_i32_0 : i32, i32, i32
  }
}

module attributes {stable_mosaic.version = 11 : i64} {
  func.func @_fused_conv_kernel(%arg0: i32, %arg1: i32, %arg2: memref<4x9x9x128xf32, #tpu.memory_space<vmem>>, %arg3: memref<4x9x9x1xf32, #tpu.memory_space<vmem>>, %arg4: memref<3x3x128x128xbf16, #tpu.memory_space<vmem>>, %arg5: memref<1x1x128xf32, #tpu.memory_space<vmem>>, %arg6: memref<1x1x128xf32, #tpu.memory_space<vmem>>, %arg7: memref<1x128xf32, #tpu.memory_space<vmem>>, %arg8: memref<1x64x128xf32, #tpu.memory_space<vmem>>, %arg9: memref<128x128xbf16, #tpu.memory_space<vmem>>, %arg10: memref<1x64x128xf32, #tpu.memory_space<vmem>>, %arg11: memref<64x128xf32, #tpu.memory_space<vmem>>) attributes {dimension_semantics = [#tpu.dimension_semantics<parallel>, #tpu.dimension_semantics<arbitrary>], iteration_bounds = array<i64: 2, 1>, scalar_prefetch = 0 : i64, scratch_operands = 1 : i64, tpu.core_type = #tpu.core_type<tc>, window_params = [{transform_indices = @transform_0, window_bounds = array<i64: 4, 9, 9, 128>}, {pipeline_mode = #tpu.pipeline_mode<synchronous>, transform_indices = @transform_1, window_bounds = array<i64: 4, 9, 9, 1>}, {transform_indices = @transform_2, window_bounds = array<i64: 3, 3, 128, 128>}, {transform_indices = @transform_3, window_bounds = array<i64: 1, 1, 128>}, {transform_indices = @transform_4, window_bounds = array<i64: 1, 1, 128>}, {pipeline_mode = #tpu.pipeline_mode<synchronous>, transform_indices = @transform_5, window_bounds = array<i64: 1, 128>}, {transform_indices = @transform_6, window_bounds = array<i64: 1, 64, 128>}, {pipeline_mode = #tpu.pipeline_mode<synchronous>, transform_indices = @transform_7, window_bounds = array<i64: 128, 128>}, {transform_indices = @transform_8, window_bounds = array<i64: 1, 64, 128>}]} {
    %c0_i32 = arith.constant 0 : i32
    %0 = arith.cmpi eq, %arg1, %c0_i32 : i32
    %1 = arith.extui %0 : i1 to i32
    %c0_i32_0 = arith.constant 0 : i32
    %2 = arith.cmpi ne, %1, %c0_i32_0 : i32
    scf.if %2 {
      %cst_168 = arith.constant 0.000000e+00 : f32
      %191 = vector.broadcast %cst_168 : f32 to vector<64x128xf32>
      %c0_169 = arith.constant 0 : index
      %c0_170 = arith.constant 0 : index
      %192 = vector.load %arg11[%c0_169, %c0_170] : memref<64x128xf32, #tpu.memory_space<vmem>>, vector<64x128xf32>
      tpu.vector_store %arg11[%c0_169, %c0_170], %191 {strides = array<i32>} : memref<64x128xf32, #tpu.memory_space<vmem>>, vector<64x128xf32>,
    } else {
    }
    %c0 = arith.constant 0 : index
    %c0_1 = arith.constant 0 : index
    %c0_2 = arith.constant 0 : index
    %3 = vector.load %arg5[%c0, %c0_1, %c0_2] : memref<1x1x128xf32, #tpu.memory_space<vmem>>, vector<1x1x128xf32>
    %c0_3 = arith.constant 0 : index
    %c0_4 = arith.constant 0 : index
    %c0_5 = arith.constant 0 : index
    %4 = vector.load %arg6[%c0_3, %c0_4, %c0_5] : memref<1x1x128xf32, #tpu.memory_space<vmem>>, vector<1x1x128xf32>
    %c0_6 = arith.constant 0 : index
    %c0_7 = arith.constant 0 : index
    %c0_8 = arith.constant 0 : index
    %c0_9 = arith.constant 0 : index
    %5 = vector.load %arg2[%c0_6, %c0_7, %c0_8, %c0_9] : memref<4x9x9x128xf32, #tpu.memory_space<vmem>>, vector<1x8x8x128xf32>
    %6 = vector.shape_cast %5 : vector<1x8x8x128xf32> to vector<8x8x128xf32>
    %c0_10 = arith.constant 0 : index
    %c0_11 = arith.constant 0 : index
    %c0_12 = arith.constant 0 : index
    %c0_13 = arith.constant 0 : index
    %7 = vector.load %arg3[%c0_10, %c0_11, %c0_12, %c0_13] : memref<4x9x9x1xf32, #tpu.memory_space<vmem>>, vector<1x8x8x1xf32>
    %8 = vector.shape_cast %7 : vector<1x8x8x1xf32> to vector<8x8x1xf32>
    %9 = vector.broadcast %3 : vector<1x1x128xf32> to vector<8x8x128xf32>
    %10 = arith.mulf %6, %9 : vector<8x8x128xf32>
    %11 = vector.broadcast %4 : vector<1x1x128xf32> to vector<8x8x128xf32>
    %12 = arith.addf %10, %11 : vector<8x8x128xf32>
    %cst = arith.constant 0.000000e+00 : f32
    %13 = vector.broadcast %cst : f32 to vector<8x8x128xf32>
    %14 = arith.maximumf %12, %13 : vector<8x8x128xf32>
    %15 = vector.broadcast %8 : vector<8x8x1xf32> to vector<8x8x128xf32>
    %16 = arith.mulf %14, %15 : vector<8x8x128xf32>
    %17 = vector.shape_cast %16 : vector<8x8x128xf32> to vector<64x128xf32>
    %18 = arith.truncf %17 : vector<64x128xf32> to vector<64x128xbf16>
    %c0_14 = arith.constant 0 : index
    %c0_15 = arith.constant 0 : index
    %19 = vector.load %arg11[%c0_14, %c0_15] : memref<64x128xf32, #tpu.memory_space<vmem>>, vector<64x128xf32>
    %c0_16 = arith.constant 0 : index
    %c0_17 = arith.constant 0 : index
    %c0_18 = arith.constant 0 : index
    %c0_19 = arith.constant 0 : index
    %20 = vector.load %arg4[%c0_16, %c0_17, %c0_18, %c0_19] : memref<3x3x128x128xbf16, #tpu.memory_space<vmem>>, vector<1x1x128x128xbf16>
    %21 = vector.shape_cast %20 : vector<1x1x128x128xbf16> to vector<128x128xbf16>
    %cst_20 = arith.constant dense<0.000000e+00> : vector<64x128xf32>
    %22 = tpu.matmul %18, %21, %cst_20 {dimension_numbers = #tpu.dot_dimension_numbers<[1], [0], [0], [1], [0, 0, 1, 1], [], []>} : vector<64x128xbf16>, vector<128x128xbf16>, vector<64x128xf32> -> vector<64x128xf32>
    %23 = arith.addf %19, %22 : vector<64x128xf32>
    %c0_21 = arith.constant 0 : index
    %c0_22 = arith.constant 0 : index
    %24 = vector.load %arg11[%c0_21, %c0_22] : memref<64x128xf32, #tpu.memory_space<vmem>>, vector<64x128xf32>
    tpu.vector_store %arg11[%c0_21, %c0_22], %23 {strides = array<i32>} : memref<64x128xf32, #tpu.memory_space<vmem>>, vector<64x128xf32>,
    %c1 = arith.constant 1 : index
    %c0_23 = arith.constant 0 : index
    %c0_24 = arith.constant 0 : index
    %c0_25 = arith.constant 0 : index
    %25 = vector.load %arg2[%c1, %c0_23, %c0_24, %c0_25] : memref<4x9x9x128xf32, #tpu.memory_space<vmem>>, vector<1x8x8x128xf32>
    %26 = vector.shape_cast %25 : vector<1x8x8x128xf32> to vector<8x8x128xf32>
    %c1_26 = arith.constant 1 : index
    %c0_27 = arith.constant 0 : index
    %c0_28 = arith.constant 0 : index
    %c0_29 = arith.constant 0 : index
    %27 = vector.load %arg3[%c1_26, %c0_27, %c0_28, %c0_29] : memref<4x9x9x1xf32, #tpu.memory_space<vmem>>, vector<1x8x8x1xf32>
    %28 = vector.shape_cast %27 : vector<1x8x8x1xf32> to vector<8x8x1xf32>
    %29 = vector.broadcast %3 : vector<1x1x128xf32> to vector<8x8x128xf32>
    %30 = arith.mulf %26, %29 : vector<8x8x128xf32>
    %31 = vector.broadcast %4 : vector<1x1x128xf32> to vector<8x8x128xf32>
    %32 = arith.addf %30, %31 : vector<8x8x128xf32>
    %cst_30 = arith.constant 0.000000e+00 : f32
    %33 = vector.broadcast %cst_30 : f32 to vector<8x8x128xf32>
    %34 = arith.maximumf %32, %33 : vector<8x8x128xf32>
    %35 = vector.broadcast %28 : vector<8x8x1xf32> to vector<8x8x128xf32>
    %36 = arith.mulf %34, %35 : vector<8x8x128xf32>
    %37 = vector.shape_cast %36 : vector<8x8x128xf32> to vector<64x128xf32>
    %38 = arith.truncf %37 : vector<64x128xf32> to vector<64x128xbf16>
    %c0_31 = arith.constant 0 : index
    %c0_32 = arith.constant 0 : index
    %39 = vector.load %arg11[%c0_31, %c0_32] : memref<64x128xf32, #tpu.memory_space<vmem>>, vector<64x128xf32>
    %c0_33 = arith.constant 0 : index
    %c1_34 = arith.constant 1 : index
    %c0_35 = arith.constant 0 : index
    %c0_36 = arith.constant 0 : index
    %40 = vector.load %arg4[%c0_33, %c1_34, %c0_35, %c0_36] : memref<3x3x128x128xbf16, #tpu.memory_space<vmem>>, vector<1x1x128x128xbf16>
    %41 = vector.shape_cast %40 : vector<1x1x128x128xbf16> to vector<128x128xbf16>
    %cst_37 = arith.constant dense<0.000000e+00> : vector<64x128xf32>
    %42 = tpu.matmul %38, %41, %cst_37 {dimension_numbers = #tpu.dot_dimension_numbers<[1], [0], [0], [1], [0, 0, 1, 1], [], []>} : vector<64x128xbf16>, vector<128x128xbf16>, vector<64x128xf32> -> vector<64x128xf32>
    %43 = arith.addf %39, %42 : vector<64x128xf32>
    %c0_38 = arith.constant 0 : index
    %c0_39 = arith.constant 0 : index
    %44 = vector.load %arg11[%c0_38, %c0_39] : memref<64x128xf32, #tpu.memory_space<vmem>>, vector<64x128xf32>
    tpu.vector_store %arg11[%c0_38, %c0_39], %43 {strides = array<i32>} : memref<64x128xf32, #tpu.memory_space<vmem>>, vector<64x128xf32>,
    %c0_40 = arith.constant 0 : index
    %c0_41 = arith.constant 0 : index
    %c1_42 = arith.constant 1 : index
    %c0_43 = arith.constant 0 : index
    %45 = vector.load %arg2[%c0_40, %c0_41, %c1_42, %c0_43] : memref<4x9x9x128xf32, #tpu.memory_space<vmem>>, vector<1x8x8x128xf32>
    %46 = vector.shape_cast %45 : vector<1x8x8x128xf32> to vector<8x8x128xf32>
    %c0_44 = arith.constant 0 : index
    %c0_45 = arith.constant 0 : index
    %c1_46 = arith.constant 1 : index
    %c0_47 = arith.constant 0 : index
    %47 = vector.load %arg3[%c0_44, %c0_45, %c1_46, %c0_47] : memref<4x9x9x1xf32, #tpu.memory_space<vmem>>, vector<1x8x8x1xf32>
    %48 = vector.shape_cast %47 : vector<1x8x8x1xf32> to vector<8x8x1xf32>
    %49 = vector.broadcast %3 : vector<1x1x128xf32> to vector<8x8x128xf32>
    %50 = arith.mulf %46, %49 : vector<8x8x128xf32>
    %51 = vector.broadcast %4 : vector<1x1x128xf32> to vector<8x8x128xf32>
    %52 = arith.addf %50, %51 : vector<8x8x128xf32>
    %cst_48 = arith.constant 0.000000e+00 : f32
    %53 = vector.broadcast %cst_48 : f32 to vector<8x8x128xf32>
    %54 = arith.maximumf %52, %53 : vector<8x8x128xf32>
    %55 = vector.broadcast %48 : vector<8x8x1xf32> to vector<8x8x128xf32>
    %56 = arith.mulf %54, %55 : vector<8x8x128xf32>
    %57 = vector.shape_cast %56 : vector<8x8x128xf32> to vector<64x128xf32>
    %58 = arith.truncf %57 : vector<64x128xf32> to vector<64x128xbf16>
    %c0_49 = arith.constant 0 : index
    %c0_50 = arith.constant 0 : index
    %59 = vector.load %arg11[%c0_49, %c0_50] : memref<64x128xf32, #tpu.memory_space<vmem>>, vector<64x128xf32>
    %c0_51 = arith.constant 0 : index
    %c2 = arith.constant 2 : index
    %c0_52 = arith.constant 0 : index
    %c0_53 = arith.constant 0 : index
    %60 = vector.load %arg4[%c0_51, %c2, %c0_52, %c0_53] : memref<3x3x128x128xbf16, #tpu.memory_space<vmem>>, vector<1x1x128x128xbf16>
    %61 = vector.shape_cast %60 : vector<1x1x128x128xbf16> to vector<128x128xbf16>
    %cst_54 = arith.constant dense<0.000000e+00> : vector<64x128xf32>
    %62 = tpu.matmul %58, %61, %cst_54 {dimension_numbers = #tpu.dot_dimension_numbers<[1], [0], [0], [1], [0, 0, 1, 1], [], []>} : vector<64x128xbf16>, vector<128x128xbf16>, vector<64x128xf32> -> vector<64x128xf32>
    %63 = arith.addf %59, %62 : vector<64x128xf32>
    %c0_55 = arith.constant 0 : index
    %c0_56 = arith.constant 0 : index
    %64 = vector.load %arg11[%c0_55, %c0_56] : memref<64x128xf32, #tpu.memory_space<vmem>>, vector<64x128xf32>
    tpu.vector_store %arg11[%c0_55, %c0_56], %63 {strides = array<i32>} : memref<64x128xf32, #tpu.memory_space<vmem>>, vector<64x128xf32>,
    %c2_57 = arith.constant 2 : index
    %c0_58 = arith.constant 0 : index
    %c0_59 = arith.constant 0 : index
    %c0_60 = arith.constant 0 : index
    %65 = vector.load %arg2[%c2_57, %c0_58, %c0_59, %c0_60] : memref<4x9x9x128xf32, #tpu.memory_space<vmem>>, vector<1x8x8x128xf32>
    %66 = vector.shape_cast %65 : vector<1x8x8x128xf32> to vector<8x8x128xf32>
    %c2_61 = arith.constant 2 : index
    %c0_62 = arith.constant 0 : index
    %c0_63 = arith.constant 0 : index
    %c0_64 = arith.constant 0 : index
    %67 = vector.load %arg3[%c2_61, %c0_62, %c0_63, %c0_64] : memref<4x9x9x1xf32, #tpu.memory_space<vmem>>, vector<1x8x8x1xf32>
    %68 = vector.shape_cast %67 : vector<1x8x8x1xf32> to vector<8x8x1xf32>
    %69 = vector.broadcast %3 : vector<1x1x128xf32> to vector<8x8x128xf32>
    %70 = arith.mulf %66, %69 : vector<8x8x128xf32>
    %71 = vector.broadcast %4 : vector<1x1x128xf32> to vector<8x8x128xf32>
    %72 = arith.addf %70, %71 : vector<8x8x128xf32>
    %cst_65 = arith.constant 0.000000e+00 : f32
    %73 = vector.broadcast %cst_65 : f32 to vector<8x8x128xf32>
    %74 = arith.maximumf %72, %73 : vector<8x8x128xf32>
    %75 = vector.broadcast %68 : vector<8x8x1xf32> to vector<8x8x128xf32>
    %76 = arith.mulf %74, %75 : vector<8x8x128xf32>
    %77 = vector.shape_cast %76 : vector<8x8x128xf32> to vector<64x128xf32>
    %78 = arith.truncf %77 : vector<64x128xf32> to vector<64x128xbf16>
    %c0_66 = arith.constant 0 : index
    %c0_67 = arith.constant 0 : index
    %79 = vector.load %arg11[%c0_66, %c0_67] : memref<64x128xf32, #tpu.memory_space<vmem>>, vector<64x128xf32>
    %c1_68 = arith.constant 1 : index
    %c0_69 = arith.constant 0 : index
    %c0_70 = arith.constant 0 : index
    %c0_71 = arith.constant 0 : index
    %80 = vector.load %arg4[%c1_68, %c0_69, %c0_70, %c0_71] : memref<3x3x128x128xbf16, #tpu.memory_space<vmem>>, vector<1x1x128x128xbf16>
    %81 = vector.shape_cast %80 : vector<1x1x128x128xbf16> to vector<128x128xbf16>
    %cst_72 = arith.constant dense<0.000000e+00> : vector<64x128xf32>
    %82 = tpu.matmul %78, %81, %cst_72 {dimension_numbers = #tpu.dot_dimension_numbers<[1], [0], [0], [1], [0, 0, 1, 1], [], []>} : vector<64x128xbf16>, vector<128x128xbf16>, vector<64x128xf32> -> vector<64x128xf32>
    %83 = arith.addf %79, %82 : vector<64x128xf32>
    %c0_73 = arith.constant 0 : index
    %c0_74 = arith.constant 0 : index
    %84 = vector.load %arg11[%c0_73, %c0_74] : memref<64x128xf32, #tpu.memory_space<vmem>>, vector<64x128xf32>
    tpu.vector_store %arg11[%c0_73, %c0_74], %83 {strides = array<i32>} : memref<64x128xf32, #tpu.memory_space<vmem>>, vector<64x128xf32>,
    %c3 = arith.constant 3 : index
    %c0_75 = arith.constant 0 : index
    %c0_76 = arith.constant 0 : index
    %c0_77 = arith.constant 0 : index
    %85 = vector.load %arg2[%c3, %c0_75, %c0_76, %c0_77] : memref<4x9x9x128xf32, #tpu.memory_space<vmem>>, vector<1x8x8x128xf32>
    %86 = vector.shape_cast %85 : vector<1x8x8x128xf32> to vector<8x8x128xf32>
    %c3_78 = arith.constant 3 : index
    %c0_79 = arith.constant 0 : index
    %c0_80 = arith.constant 0 : index
    %c0_81 = arith.constant 0 : index
    %87 = vector.load %arg3[%c3_78, %c0_79, %c0_80, %c0_81] : memref<4x9x9x1xf32, #tpu.memory_space<vmem>>, vector<1x8x8x1xf32>
    %88 = vector.shape_cast %87 : vector<1x8x8x1xf32> to vector<8x8x1xf32>
    %89 = vector.broadcast %3 : vector<1x1x128xf32> to vector<8x8x128xf32>
    %90 = arith.mulf %86, %89 : vector<8x8x128xf32>
    %91 = vector.broadcast %4 : vector<1x1x128xf32> to vector<8x8x128xf32>
    %92 = arith.addf %90, %91 : vector<8x8x128xf32>
    %cst_82 = arith.constant 0.000000e+00 : f32
    %93 = vector.broadcast %cst_82 : f32 to vector<8x8x128xf32>
    %94 = arith.maximumf %92, %93 : vector<8x8x128xf32>
    %95 = vector.broadcast %88 : vector<8x8x1xf32> to vector<8x8x128xf32>
    %96 = arith.mulf %94, %95 : vector<8x8x128xf32>
    %97 = vector.shape_cast %96 : vector<8x8x128xf32> to vector<64x128xf32>
    %98 = arith.truncf %97 : vector<64x128xf32> to vector<64x128xbf16>
    %c0_83 = arith.constant 0 : index
    %c0_84 = arith.constant 0 : index
    %99 = vector.load %arg11[%c0_83, %c0_84] : memref<64x128xf32, #tpu.memory_space<vmem>>, vector<64x128xf32>
    %c1_85 = arith.constant 1 : index
    %c1_86 = arith.constant 1 : index
    %c0_87 = arith.constant 0 : index
    %c0_88 = arith.constant 0 : index
    %100 = vector.load %arg4[%c1_85, %c1_86, %c0_87, %c0_88] : memref<3x3x128x128xbf16, #tpu.memory_space<vmem>>, vector<1x1x128x128xbf16>
    %101 = vector.shape_cast %100 : vector<1x1x128x128xbf16> to vector<128x128xbf16>
    %cst_89 = arith.constant dense<0.000000e+00> : vector<64x128xf32>
    %102 = tpu.matmul %98, %101, %cst_89 {dimension_numbers = #tpu.dot_dimension_numbers<[1], [0], [0], [1], [0, 0, 1, 1], [], []>} : vector<64x128xbf16>, vector<128x128xbf16>, vector<64x128xf32> -> vector<64x128xf32>
    %103 = arith.addf %99, %102 : vector<64x128xf32>
    %c0_90 = arith.constant 0 : index
    %c0_91 = arith.constant 0 : index
    %104 = vector.load %arg11[%c0_90, %c0_91] : memref<64x128xf32, #tpu.memory_space<vmem>>, vector<64x128xf32>
    tpu.vector_store %arg11[%c0_90, %c0_91], %103 {strides = array<i32>} : memref<64x128xf32, #tpu.memory_space<vmem>>, vector<64x128xf32>,
    %c2_92 = arith.constant 2 : index
    %c0_93 = arith.constant 0 : index
    %c1_94 = arith.constant 1 : index
    %c0_95 = arith.constant 0 : index
    %105 = vector.load %arg2[%c2_92, %c0_93, %c1_94, %c0_95] : memref<4x9x9x128xf32, #tpu.memory_space<vmem>>, vector<1x8x8x128xf32>
    %106 = vector.shape_cast %105 : vector<1x8x8x128xf32> to vector<8x8x128xf32>
    %c2_96 = arith.constant 2 : index
    %c0_97 = arith.constant 0 : index
    %c1_98 = arith.constant 1 : index
    %c0_99 = arith.constant 0 : index
    %107 = vector.load %arg3[%c2_96, %c0_97, %c1_98, %c0_99] : memref<4x9x9x1xf32, #tpu.memory_space<vmem>>, vector<1x8x8x1xf32>
    %108 = vector.shape_cast %107 : vector<1x8x8x1xf32> to vector<8x8x1xf32>
    %109 = vector.broadcast %3 : vector<1x1x128xf32> to vector<8x8x128xf32>
    %110 = arith.mulf %106, %109 : vector<8x8x128xf32>
    %111 = vector.broadcast %4 : vector<1x1x128xf32> to vector<8x8x128xf32>
    %112 = arith.addf %110, %111 : vector<8x8x128xf32>
    %cst_100 = arith.constant 0.000000e+00 : f32
    %113 = vector.broadcast %cst_100 : f32 to vector<8x8x128xf32>
    %114 = arith.maximumf %112, %113 : vector<8x8x128xf32>
    %115 = vector.broadcast %108 : vector<8x8x1xf32> to vector<8x8x128xf32>
    %116 = arith.mulf %114, %115 : vector<8x8x128xf32>
    %117 = vector.shape_cast %116 : vector<8x8x128xf32> to vector<64x128xf32>
    %118 = arith.truncf %117 : vector<64x128xf32> to vector<64x128xbf16>
    %c0_101 = arith.constant 0 : index
    %c0_102 = arith.constant 0 : index
    %119 = vector.load %arg11[%c0_101, %c0_102] : memref<64x128xf32, #tpu.memory_space<vmem>>, vector<64x128xf32>
    %c1_103 = arith.constant 1 : index
    %c2_104 = arith.constant 2 : index
    %c0_105 = arith.constant 0 : index
    %c0_106 = arith.constant 0 : index
    %120 = vector.load %arg4[%c1_103, %c2_104, %c0_105, %c0_106] : memref<3x3x128x128xbf16, #tpu.memory_space<vmem>>, vector<1x1x128x128xbf16>
    %121 = vector.shape_cast %120 : vector<1x1x128x128xbf16> to vector<128x128xbf16>
    %cst_107 = arith.constant dense<0.000000e+00> : vector<64x128xf32>
    %122 = tpu.matmul %118, %121, %cst_107 {dimension_numbers = #tpu.dot_dimension_numbers<[1], [0], [0], [1], [0, 0, 1, 1], [], []>} : vector<64x128xbf16>, vector<128x128xbf16>, vector<64x128xf32> -> vector<64x128xf32>
    %123 = arith.addf %119, %122 : vector<64x128xf32>
    %c0_108 = arith.constant 0 : index
    %c0_109 = arith.constant 0 : index
    %124 = vector.load %arg11[%c0_108, %c0_109] : memref<64x128xf32, #tpu.memory_space<vmem>>, vector<64x128xf32>
    tpu.vector_store %arg11[%c0_108, %c0_109], %123 {strides = array<i32>} : memref<64x128xf32, #tpu.memory_space<vmem>>, vector<64x128xf32>,
    %c0_110 = arith.constant 0 : index
    %c1_111 = arith.constant 1 : index
    %c0_112 = arith.constant 0 : index
    %c0_113 = arith.constant 0 : index
    %125 = vector.load %arg2[%c0_110, %c1_111, %c0_112, %c0_113] : memref<4x9x9x128xf32, #tpu.memory_space<vmem>>, vector<1x8x8x128xf32>
    %126 = vector.shape_cast %125 : vector<1x8x8x128xf32> to vector<8x8x128xf32>
    %c0_114 = arith.constant 0 : index
    %c1_115 = arith.constant 1 : index
    %c0_116 = arith.constant 0 : index
    %c0_117 = arith.constant 0 : index
    %127 = vector.load %arg3[%c0_114, %c1_115, %c0_116, %c0_117] : memref<4x9x9x1xf32, #tpu.memory_space<vmem>>, vector<1x8x8x1xf32>
    %128 = vector.shape_cast %127 : vector<1x8x8x1xf32> to vector<8x8x1xf32>
    %129 = vector.broadcast %3 : vector<1x1x128xf32> to vector<8x8x128xf32>
    %130 = arith.mulf %126, %129 : vector<8x8x128xf32>
    %131 = vector.broadcast %4 : vector<1x1x128xf32> to vector<8x8x128xf32>
    %132 = arith.addf %130, %131 : vector<8x8x128xf32>
    %cst_118 = arith.constant 0.000000e+00 : f32
    %133 = vector.broadcast %cst_118 : f32 to vector<8x8x128xf32>
    %134 = arith.maximumf %132, %133 : vector<8x8x128xf32>
    %135 = vector.broadcast %128 : vector<8x8x1xf32> to vector<8x8x128xf32>
    %136 = arith.mulf %134, %135 : vector<8x8x128xf32>
    %137 = vector.shape_cast %136 : vector<8x8x128xf32> to vector<64x128xf32>
    %138 = arith.truncf %137 : vector<64x128xf32> to vector<64x128xbf16>
    %c0_119 = arith.constant 0 : index
    %c0_120 = arith.constant 0 : index
    %139 = vector.load %arg11[%c0_119, %c0_120] : memref<64x128xf32, #tpu.memory_space<vmem>>, vector<64x128xf32>
    %c2_121 = arith.constant 2 : index
    %c0_122 = arith.constant 0 : index
    %c0_123 = arith.constant 0 : index
    %c0_124 = arith.constant 0 : index
    %140 = vector.load %arg4[%c2_121, %c0_122, %c0_123, %c0_124] : memref<3x3x128x128xbf16, #tpu.memory_space<vmem>>, vector<1x1x128x128xbf16>
    %141 = vector.shape_cast %140 : vector<1x1x128x128xbf16> to vector<128x128xbf16>
    %cst_125 = arith.constant dense<0.000000e+00> : vector<64x128xf32>
    %142 = tpu.matmul %138, %141, %cst_125 {dimension_numbers = #tpu.dot_dimension_numbers<[1], [0], [0], [1], [0, 0, 1, 1], [], []>} : vector<64x128xbf16>, vector<128x128xbf16>, vector<64x128xf32> -> vector<64x128xf32>
    %143 = arith.addf %139, %142 : vector<64x128xf32>
    %c0_126 = arith.constant 0 : index
    %c0_127 = arith.constant 0 : index
    %144 = vector.load %arg11[%c0_126, %c0_127] : memref<64x128xf32, #tpu.memory_space<vmem>>, vector<64x128xf32>
    tpu.vector_store %arg11[%c0_126, %c0_127], %143 {strides = array<i32>} : memref<64x128xf32, #tpu.memory_space<vmem>>, vector<64x128xf32>,
    %c1_128 = arith.constant 1 : index
    %c1_129 = arith.constant 1 : index
    %c0_130 = arith.constant 0 : index
    %c0_131 = arith.constant 0 : index
    %145 = vector.load %arg2[%c1_128, %c1_129, %c0_130, %c0_131] : memref<4x9x9x128xf32, #tpu.memory_space<vmem>>, vector<1x8x8x128xf32>
    %146 = vector.shape_cast %145 : vector<1x8x8x128xf32> to vector<8x8x128xf32>
    %c1_132 = arith.constant 1 : index
    %c1_133 = arith.constant 1 : index
    %c0_134 = arith.constant 0 : index
    %c0_135 = arith.constant 0 : index
    %147 = vector.load %arg3[%c1_132, %c1_133, %c0_134, %c0_135] : memref<4x9x9x1xf32, #tpu.memory_space<vmem>>, vector<1x8x8x1xf32>
    %148 = vector.shape_cast %147 : vector<1x8x8x1xf32> to vector<8x8x1xf32>
    %149 = vector.broadcast %3 : vector<1x1x128xf32> to vector<8x8x128xf32>
    %150 = arith.mulf %146, %149 : vector<8x8x128xf32>
    %151 = vector.broadcast %4 : vector<1x1x128xf32> to vector<8x8x128xf32>
    %152 = arith.addf %150, %151 : vector<8x8x128xf32>
    %cst_136 = arith.constant 0.000000e+00 : f32
    %153 = vector.broadcast %cst_136 : f32 to vector<8x8x128xf32>
    %154 = arith.maximumf %152, %153 : vector<8x8x128xf32>
    %155 = vector.broadcast %148 : vector<8x8x1xf32> to vector<8x8x128xf32>
    %156 = arith.mulf %154, %155 : vector<8x8x128xf32>
    %157 = vector.shape_cast %156 : vector<8x8x128xf32> to vector<64x128xf32>
    %158 = arith.truncf %157 : vector<64x128xf32> to vector<64x128xbf16>
    %c0_137 = arith.constant 0 : index
    %c0_138 = arith.constant 0 : index
    %159 = vector.load %arg11[%c0_137, %c0_138] : memref<64x128xf32, #tpu.memory_space<vmem>>, vector<64x128xf32>
    %c2_139 = arith.constant 2 : index
    %c1_140 = arith.constant 1 : index
    %c0_141 = arith.constant 0 : index
    %c0_142 = arith.constant 0 : index
    %160 = vector.load %arg4[%c2_139, %c1_140, %c0_141, %c0_142] : memref<3x3x128x128xbf16, #tpu.memory_space<vmem>>, vector<1x1x128x128xbf16>
    %161 = vector.shape_cast %160 : vector<1x1x128x128xbf16> to vector<128x128xbf16>
    %cst_143 = arith.constant dense<0.000000e+00> : vector<64x128xf32>
    %162 = tpu.matmul %158, %161, %cst_143 {dimension_numbers = #tpu.dot_dimension_numbers<[1], [0], [0], [1], [0, 0, 1, 1], [], []>} : vector<64x128xbf16>, vector<128x128xbf16>, vector<64x128xf32> -> vector<64x128xf32>
    %163 = arith.addf %159, %162 : vector<64x128xf32>
    %c0_144 = arith.constant 0 : index
    %c0_145 = arith.constant 0 : index
    %164 = vector.load %arg11[%c0_144, %c0_145] : memref<64x128xf32, #tpu.memory_space<vmem>>, vector<64x128xf32>
    tpu.vector_store %arg11[%c0_144, %c0_145], %163 {strides = array<i32>} : memref<64x128xf32, #tpu.memory_space<vmem>>, vector<64x128xf32>,
    %c0_146 = arith.constant 0 : index
    %c1_147 = arith.constant 1 : index
    %c1_148 = arith.constant 1 : index
    %c0_149 = arith.constant 0 : index
    %165 = vector.load %arg2[%c0_146, %c1_147, %c1_148, %c0_149] : memref<4x9x9x128xf32, #tpu.memory_space<vmem>>, vector<1x8x8x128xf32>
    %166 = vector.shape_cast %165 : vector<1x8x8x128xf32> to vector<8x8x128xf32>
    %c0_150 = arith.constant 0 : index
    %c1_151 = arith.constant 1 : index
    %c1_152 = arith.constant 1 : index
    %c0_153 = arith.constant 0 : index
    %167 = vector.load %arg3[%c0_150, %c1_151, %c1_152, %c0_153] : memref<4x9x9x1xf32, #tpu.memory_space<vmem>>, vector<1x8x8x1xf32>
    %168 = vector.shape_cast %167 : vector<1x8x8x1xf32> to vector<8x8x1xf32>
    %169 = vector.broadcast %3 : vector<1x1x128xf32> to vector<8x8x128xf32>
    %170 = arith.mulf %166, %169 : vector<8x8x128xf32>
    %171 = vector.broadcast %4 : vector<1x1x128xf32> to vector<8x8x128xf32>
    %172 = arith.addf %170, %171 : vector<8x8x128xf32>
    %cst_154 = arith.constant 0.000000e+00 : f32
    %173 = vector.broadcast %cst_154 : f32 to vector<8x8x128xf32>
    %174 = arith.maximumf %172, %173 : vector<8x8x128xf32>
    %175 = vector.broadcast %168 : vector<8x8x1xf32> to vector<8x8x128xf32>
    %176 = arith.mulf %174, %175 : vector<8x8x128xf32>
    %177 = vector.shape_cast %176 : vector<8x8x128xf32> to vector<64x128xf32>
    %178 = arith.truncf %177 : vector<64x128xf32> to vector<64x128xbf16>
    %c0_155 = arith.constant 0 : index
    %c0_156 = arith.constant 0 : index
    %179 = vector.load %arg11[%c0_155, %c0_156] : memref<64x128xf32, #tpu.memory_space<vmem>>, vector<64x128xf32>
    %c2_157 = arith.constant 2 : index
    %c2_158 = arith.constant 2 : index
    %c0_159 = arith.constant 0 : index
    %c0_160 = arith.constant 0 : index
    %180 = vector.load %arg4[%c2_157, %c2_158, %c0_159, %c0_160] : memref<3x3x128x128xbf16, #tpu.memory_space<vmem>>, vector<1x1x128x128xbf16>
    %181 = vector.shape_cast %180 : vector<1x1x128x128xbf16> to vector<128x128xbf16>
    %cst_161 = arith.constant dense<0.000000e+00> : vector<64x128xf32>
    %182 = tpu.matmul %178, %181, %cst_161 {dimension_numbers = #tpu.dot_dimension_numbers<[1], [0], [0], [1], [0, 0, 1, 1], [], []>} : vector<64x128xbf16>, vector<128x128xbf16>, vector<64x128xf32> -> vector<64x128xf32>
    %183 = arith.addf %179, %182 : vector<64x128xf32>
    %c0_162 = arith.constant 0 : index
    %c0_163 = arith.constant 0 : index
    %184 = vector.load %arg11[%c0_162, %c0_163] : memref<64x128xf32, #tpu.memory_space<vmem>>, vector<64x128xf32>
    tpu.vector_store %arg11[%c0_162, %c0_163], %183 {strides = array<i32>} : memref<64x128xf32, #tpu.memory_space<vmem>>, vector<64x128xf32>,
    %c0_i32_164 = arith.constant 0 : i32
    %185 = arith.cmpi eq, %arg1, %c0_i32_164 : i32
    %186 = arith.extui %185 : i1 to i32
    %c0_i32_165 = arith.constant 0 : i32
    %187 = arith.cmpi ne, %186, %c0_i32_165 : i32
    scf.if %187 {
      %c0_168 = arith.constant 0 : index
      %c0_169 = arith.constant 0 : index
      %191 = vector.load %arg11[%c0_168, %c0_169] : memref<64x128xf32, #tpu.memory_space<vmem>>, vector<64x128xf32>
      %c0_170 = arith.constant 0 : index
      %c0_171 = arith.constant 0 : index
      %c0_172 = arith.constant 0 : index
      %192 = vector.load %arg8[%c0_170, %c0_171, %c0_172] : memref<1x64x128xf32, #tpu.memory_space<vmem>>, vector<1x64x128xf32>
      %193 = vector.shape_cast %192 : vector<1x64x128xf32> to vector<64x128xf32>
      %194 = arith.truncf %193 : vector<64x128xf32> to vector<64x128xbf16>
      %c0_173 = arith.constant 0 : index
      %c0_174 = arith.constant 0 : index
      %195 = vector.load %arg9[%c0_173, %c0_174] : memref<128x128xbf16, #tpu.memory_space<vmem>>, vector<128x128xbf16>
      %cst_175 = arith.constant dense<0.000000e+00> : vector<64x128xf32>
      %196 = tpu.matmul %194, %195, %cst_175 {dimension_numbers = #tpu.dot_dimension_numbers<[1], [0], [0], [1], [0, 0, 1, 1], [], []>} : vector<64x128xbf16>, vector<128x128xbf16>, vector<64x128xf32> -> vector<64x128xf32>
      %197 = arith.addf %191, %196 : vector<64x128xf32>
      %c0_176 = arith.constant 0 : index
      %c0_177 = arith.constant 0 : index
      %198 = vector.load %arg11[%c0_176, %c0_177] : memref<64x128xf32, #tpu.memory_space<vmem>>, vector<64x128xf32>
      tpu.vector_store %arg11[%c0_176, %c0_177], %197 {strides = array<i32>} : memref<64x128xf32, #tpu.memory_space<vmem>>, vector<64x128xf32>,
    } else {
    }
    %c0_i32_166 = arith.constant 0 : i32
    %188 = arith.cmpi eq, %arg1, %c0_i32_166 : i32
    %189 = arith.extui %188 : i1 to i32
    %c0_i32_167 = arith.constant 0 : i32
    %190 = arith.cmpi ne, %189, %c0_i32_167 : i32
    scf.if %190 {
      %c0_168 = arith.constant 0 : index
      %c0_169 = arith.constant 0 : index
      %191 = vector.load %arg11[%c0_168, %c0_169] : memref<64x128xf32, #tpu.memory_space<vmem>>, vector<64x128xf32>
      %c0_170 = arith.constant 0 : index
      %c0_171 = arith.constant 0 : index
      %192 = vector.load %arg7[%c0_170, %c0_171] : memref<1x128xf32, #tpu.memory_space<vmem>>, vector<1x128xf32>
      %193 = vector.broadcast %192 : vector<1x128xf32> to vector<64x128xf32>
      %194 = arith.addf %191, %193 : vector<64x128xf32>
      %c0_172 = arith.constant 0 : index
      %c0_173 = arith.constant 0 : index
      %c0_174 = arith.constant 0 : index
      %195 = vector.load %arg10[%c0_172, %c0_173, %c0_174] : memref<1x64x128xf32, #tpu.memory_space<vmem>>, vector<1x64x128xf32>
      %196 = vector.shape_cast %195 : vector<1x64x128xf32> to vector<64x128xf32>
      %197 = vector.shape_cast %194 : vector<64x128xf32> to vector<1x64x128xf32>
      tpu.vector_store %arg10[%c0_172, %c0_173, %c0_174], %197 {strides = array<i32>} : memref<1x64x128xf32, #tpu.memory_space<vmem>>, vector<1x64x128xf32>,
    } else {
    }
    return
  }
  func.func @transform_0(%arg0: i32, %arg1: i32) -> (i32, i32, i32, i32) {
    %c0_i32 = arith.constant 0 : i32
    %c0_i32_0 = arith.constant 0 : i32
    %c0_i32_1 = arith.constant 0 : i32
    return %arg0, %c0_i32, %c0_i32_0, %arg1 : i32, i32, i32, i32
  }
  func.func @transform_1(%arg0: i32, %arg1: i32) -> (i32, i32, i32, i32) {
    %c0_i32 = arith.constant 0 : i32
    %c0_i32_0 = arith.constant 0 : i32
    %c0_i32_1 = arith.constant 0 : i32
    %c0_i32_2 = arith.constant 0 : i32
    %c0_i32_3 = arith.constant 0 : i32
    return %c0_i32, %c0_i32_0, %c0_i32_1, %c0_i32_2 : i32, i32, i32, i32
  }
  func.func @transform_2(%arg0: i32, %arg1: i32) -> (i32, i32, i32, i32) {
    %c0_i32 = arith.constant 0 : i32
    %c0_i32_0 = arith.constant 0 : i32
    %c0_i32_1 = arith.constant 0 : i32
    %c0_i32_2 = arith.constant 0 : i32
    return %c0_i32, %c0_i32_0, %arg1, %c0_i32_1 : i32, i32, i32, i32
  }
  func.func @transform_3(%arg0: i32, %arg1: i32) -> (i32, i32, i32) {
    %c0_i32 = arith.constant 0 : i32
    %c0_i32_0 = arith.constant 0 : i32
    %c0_i32_1 = arith.constant 0 : i32
    return %c0_i32, %c0_i32_0, %arg1 : i32, i32, i32
  }
  func.func @transform_4(%arg0: i32, %arg1: i32) -> (i32, i32, i32) {
    %c0_i32 = arith.constant 0 : i32
    %c0_i32_0 = arith.constant 0 : i32
    %c0_i32_1 = arith.constant 0 : i32
    return %c0_i32, %c0_i32_0, %arg1 : i32, i32, i32
  }
  func.func @transform_5(%arg0: i32, %arg1: i32) -> (i32, i32) {
    %c0_i32 = arith.constant 0 : i32
    %c0_i32_0 = arith.constant 0 : i32
    %c0_i32_1 = arith.constant 0 : i32
    return %c0_i32, %c0_i32_0 : i32, i32
  }
  func.func @transform_6(%arg0: i32, %arg1: i32) -> (i32, i32, i32) {
    %c0_i32 = arith.constant 0 : i32
    %c0_i32_0 = arith.constant 0 : i32
    %c0_i32_1 = arith.constant 0 : i32
    return %arg0, %c0_i32, %c0_i32_0 : i32, i32, i32
  }
  func.func @transform_7(%arg0: i32, %arg1: i32) -> (i32, i32) {
    %c0_i32 = arith.constant 0 : i32
    %c0_i32_0 = arith.constant 0 : i32
    %c0_i32_1 = arith.constant 0 : i32
    return %c0_i32, %c0_i32_0 : i32, i32
  }
  func.func @transform_8(%arg0: i32, %arg1: i32) -> (i32, i32, i32) {
    %c0_i32 = arith.constant 0 : i32
    %c0_i32_0 = arith.constant 0 : i32
    %c0_i32_1 = arith.constant 0 : i32
    return %arg0, %c0_i32, %c0_i32_0 : i32, i32, i32
  }
}

</mosaic_0001>

<llo_original>
// kernel: fwd.3
$region0: #{fwd.3}
  #allocation0 [shape = 'u32[]', space=smem, size = 0x4, offset = 0x4, fixed_abs, tag = 'smem constant byte address 0x4 - core index']
  #allocation1 [shape = 'u32[72,128]{1,0:T(1,128)}', space=vmem, size = 0x9000, scoped, tag = 'internal scratch']
  #allocation2 [shape = 'f32[64,128]{1,0:T(8,128)}', space=vmem, size = 0x8000, scoped, tag = 'scratch operand']
  %s0 = inlined_call_operand.vmem [shape: f32[8,9,9,128], index: 0, kind: input, shape index: {}]
  %s1 = inlined_call_operand.vmem [shape: f32[4,9,9,1], index: 1, kind: input, shape index: {}]
  %s2 = inlined_call_operand.vmem [shape: bf16[3,3,128,128], index: 2, kind: input, shape index: {}]
  %s3 = inlined_call_operand.vmem [shape: f32[1,1,128], index: 3, kind: input, shape index: {}]
  %s4 = inlined_call_operand.vmem [shape: f32[1,1,128], index: 4, kind: input, shape index: {}]
  %s5 = inlined_call_operand.vmem [shape: f32[1,128], index: 5, kind: input, shape index: {}]
  %s6 = inlined_call_operand.vmem [shape: f32[2,64,128], index: 6, kind: input, shape index: {}]
  %s7 = inlined_call_operand.vmem [shape: bf16[128,128], index: 7, kind: input, shape index: {}]
  %s8 = inlined_call_operand.vmem [shape: f32[2,64,128], index: 8, kind: output, shape index: {}]
  %s9 = sld [smem:[#allocation0]]
  $region73: #{fwd.3} parent=0
    _
  %s11 = ssub.s32 1, %s9
  %s12 = scalar_select 0, %s11, %s9
  loop: start=0, step=1, limit=4
  $region2: #{fwd.3} parent=0 // loop_pre_header
    _
  $region3: #{fwd.3} parent=0 // loop_header
    %s14 = sphi 0, %s18
    %p15 = scmp.ge.s32.totalorder %s14, 4
    %s21 = sphi 0, %s33
    %s22 = sphi 0, %s29
    %s23 = sphi 0, %s21
    %s24 = sphi 0, %s22
    %s25 = sphi 0, %s23
    %s26 = sphi 0, %s24
    %s38 = sphi 0, %s40
    %s41 = sphi 0, %s38
    %s42 = sphi 0, %s41
    %s58 = sphi 0, %s42
    %s62 = sphi 0, %s62
    %s64 = sphi 0, %s62
    %s65 = sphi 0, %s64
    %s79 = sphi 0, %s65
    %s85 = sphi 0, %s87
    %s88 = sphi 0, %s85
    %s89 = sphi 0, %s88
    %s105 = sphi 0, %s89
    %s111 = sphi 0, %s113
    %s114 = sphi 0, %s111
    %s115 = sphi 0, %s114
    %s131 = sphi 0, %s115
    %s137 = sphi 0, %s139
    %s140 = sphi 0, %s137
    %s141 = sphi 0, %s140
    %s157 = sphi 0, %s141
    %s161 = sphi 0, %s161
    %s163 = sphi 0, %s161
    %s164 = sphi 0, %s163
    %s178 = sphi 0, %s164
    %s184 = sphi 0, %s186
    %s187 = sphi 0, %s184
    %s188 = sphi 0, %s187
    %s204 = sphi 0, %s188
    %s208 = sphi 0, %s208
    %s210 = sphi 0, %s208
    %s211 = sphi 0, %s210
    %s225 = sphi 0, %s211
    %s231 = sphi 0, %s233
    %s234 = sphi 0, %s231
    %s235 = sphi 0, %s234
    %s251 = sphi 0, %s235
  $region4: #{fwd.3} parent=0 // loop_header_branch
    %17 = sbr.rel (%p15) target = $region8
  $region5: #{fwd.3} parent=0 // loop_body
    %s19 = ssub.s32 %s14, 1
    %s20 = ssub.s32 %s14, 2
    %s27 = sadd.s32 1, %s22
    %p28 = scmp.ge.s32.totalorder %s27, 1
    %s29 = scalar_select %p28, 0, %s27
    %s30 = sadd.s32 1, %s21
    %s31 = scalar_select %p28, %s30, %s21
    %p32 = scmp.ge.s32.totalorder %s31, 2
    %s33 = scalar_select %p32, 0, %s31
    %s34 = ssub.s32 %s21, %s33
    %s35 = ssub.s32 %s22, %s29
    %s36 = sor.u32 %s34, %s35
    %p37 = scmp.eq.s32.totalorder %s36, 0
    %s39 = sadd.s32 %s38, 1
    %s40 = scalar_select %p37, %s38, %s39
    %p43 = pneg %p37
    %p44 = scmp.eq.s32.totalorder %s14, 1
    %p45 = por %p43, %p44
    %p46 = scmp.ne.s32.totalorder %s38, %s41
    %p47 = scmp.eq.s32.totalorder %s14, 0
    %p48 = por %p46, %p47
    %p49 = scmp.ne.s32.totalorder %s38, %s41
    %p50 = scmp.eq.s32.totalorder %s19, 1
    %p51 = por %p49, %p50
    %p52 = scmp.ne.s32.totalorder %s41, %s42
    %p53 = scmp.eq.s32.totalorder %s19, 0
    %p54 = por %p52, %p53
    %p55 = scmp.ne.s32.totalorder %s41, %s42
    %p56 = scmp.eq.s32.totalorder %s20, 1
    %p57 = por %p55, %p56
    %p59 = scmp.ne.s32.totalorder %s42, %s58
    %p60 = scmp.eq.s32.totalorder %s20, 0
    %p61 = por %p59, %p60
    %s63 = sadd.s32 %s62, 1
    %p66 = scmp.eq.s32.totalorder %s14, 1
    %p67 = scmp.ne.s32.totalorder %s62, %s64
    %p68 = scmp.eq.s32.totalorder %s14, 0
    %p69 = por %p67, %p68
    %p70 = scmp.ne.s32.totalorder %s62, %s64
    %p71 = scmp.eq.s32.totalorder %s19, 1
    %p72 = por %p70, %p71
    %p73 = scmp.ne.s32.totalorder %s64, %s65
    %p74 = scmp.eq.s32.totalorder %s19, 0
    %p75 = por %p73, %p74
    %p76 = scmp.ne.s32.totalorder %s64, %s65
    %p77 = scmp.eq.s32.totalorder %s20, 1
    %p78 = por %p76, %p77
    %p80 = scmp.ne.s32.totalorder %s65, %s79
    %p81 = scmp.eq.s32.totalorder %s20, 0
    %p82 = por %p80, %p81
    %s83 = ssub.s32 %s22, %s29
    %p84 = scmp.eq.s32.totalorder %s83, 0
    %s86 = sadd.s32 %s85, 1
    %s87 = scalar_select %p84, %s85, %s86
    %p90 = pneg %p84
    %p91 = scmp.eq.s32.totalorder %s14, 1
    %p92 = por %p90, %p91
    %p93 = scmp.ne.s32.totalorder %s85, %s88
    %p94 = scmp.eq.s32.totalorder %s14, 0
    %p95 = por %p93, %p94
    %p96 = scmp.ne.s32.totalorder %s85, %s88
    %p97 = scmp.eq.s32.totalorder %s19, 1
    %p98 = por %p96, %p97
    %p99 = scmp.ne.s32.totalorder %s88, %s89
    %p100 = scmp.eq.s32.totalorder %s19, 0
    %p101 = por %p99, %p100
    %p102 = scmp.ne.s32.totalorder %s88, %s89
    %p103 = scmp.eq.s32.totalorder %s20, 1
    %p104 = por %p102, %p103
    %p106 = scmp.ne.s32.totalorder %s89, %s105
    %p107 = scmp.eq.s32.totalorder %s20, 0
    %p108 = por %p106, %p107
    %s109 = ssub.s32 %s22, %s29
    %p110 = scmp.eq.s32.totalorder %s109, 0
    %s112 = sadd.s32 %s111, 1
    %s113 = scalar_select %p110, %s111, %s112
    %p116 = pneg %p110
    %p117 = scmp.eq.s32.totalorder %s14, 1
    %p118 = por %p116, %p117
    %p119 = scmp.ne.s32.totalorder %s111, %s114
    %p120 = scmp.eq.s32.totalorder %s14, 0
    %p121 = por %p119, %p120
    %p122 = scmp.ne.s32.totalorder %s111, %s114
    %p123 = scmp.eq.s32.totalorder %s19, 1
    %p124 = por %p122, %p123
    %p125 = scmp.ne.s32.totalorder %s114, %s115
    %p126 = scmp.eq.s32.totalorder %s19, 0
    %p127 = por %p125, %p126
    %p128 = scmp.ne.s32.totalorder %s114, %s115
    %p129 = scmp.eq.s32.totalorder %s20, 1
    %p130 = por %p128, %p129
    %p132 = scmp.ne.s32.totalorder %s115, %s131
    %p133 = scmp.eq.s32.totalorder %s20, 0
    %p134 = por %p132, %p133
    %s135 = ssub.s32 %s22, %s29
    %p136 = scmp.eq.s32.totalorder %s135, 0
    %s138 = sadd.s32 %s137, 1
    %s139 = scalar_select %p136, %s137, %s138
    %p142 = pneg %p136
    %p143 = scmp.eq.s32.totalorder %s14, 1
    %p144 = por %p142, %p143
    %p145 = scmp.ne.s32.totalorder %s137, %s140
    %p146 = scmp.eq.s32.totalorder %s14, 0
    %p147 = por %p145, %p146
    %p148 = scmp.ne.s32.totalorder %s137, %s140
    %p149 = scmp.eq.s32.totalorder %s19, 1
    %p150 = por %p148, %p149
    %p151 = scmp.ne.s32.totalorder %s140, %s141
    %p152 = scmp.eq.s32.totalorder %s19, 0
    %p153 = por %p151, %p152
    %p154 = scmp.ne.s32.totalorder %s140, %s141
    %p155 = scmp.eq.s32.totalorder %s20, 1
    %p156 = por %p154, %p155
    %p158 = scmp.ne.s32.totalorder %s141, %s157
    %p159 = scmp.eq.s32.totalorder %s20, 0
    %p160 = por %p158, %p159
    %s162 = sadd.s32 %s161, 1
    %p165 = scmp.eq.s32.totalorder %s14, 1
    %p166 = scmp.ne.s32.totalorder %s161, %s163
    %p167 = scmp.eq.s32.totalorder %s14, 0
    %p168 = por %p166, %p167
    %p169 = scmp.ne.s32.totalorder %s161, %s163
    %p170 = scmp.eq.s32.totalorder %s19, 1
    %p171 = por %p169, %p170
    %p172 = scmp.ne.s32.totalorder %s163, %s164
    %p173 = scmp.eq.s32.totalorder %s19, 0
    %p174 = por %p172, %p173
    %p175 = scmp.ne.s32.totalorder %s163, %s164
    %p176 = scmp.eq.s32.totalorder %s20, 1
    %p177 = por %p175, %p176
    %p179 = scmp.ne.s32.totalorder %s164, %s178
    %p180 = scmp.eq.s32.totalorder %s20, 0
    %p181 = por %p179, %p180
    %s182 = ssub.s32 %s21, %s33
    %p183 = scmp.eq.s32.totalorder %s182, 0
    %s185 = sadd.s32 %s184, 1
    %s186 = scalar_select %p183, %s184, %s185
    %p189 = pneg %p183
    %p190 = scmp.eq.s32.totalorder %s14, 1
    %p191 = por %p189, %p190
    %p192 = scmp.ne.s32.totalorder %s184, %s187
    %p193 = scmp.eq.s32.totalorder %s14, 0
    %p194 = por %p192, %p193
    %p195 = scmp.ne.s32.totalorder %s184, %s187
    %p196 = scmp.eq.s32.totalorder %s19, 1
    %p197 = por %p195, %p196
    %p198 = scmp.ne.s32.totalorder %s187, %s188
    %p199 = scmp.eq.s32.totalorder %s19, 0
    %p200 = por %p198, %p199
    %p201 = scmp.ne.s32.totalorder %s187, %s188
    %p202 = scmp.eq.s32.totalorder %s20, 1
    %p203 = por %p201, %p202
    %p205 = scmp.ne.s32.totalorder %s188, %s204
    %p206 = scmp.eq.s32.totalorder %s20, 0
    %p207 = por %p205, %p206
    %s209 = sadd.s32 %s208, 1
    %p212 = scmp.eq.s32.totalorder %s14, 1
    %p213 = scmp.ne.s32.totalorder %s208, %s210
    %p214 = scmp.eq.s32.totalorder %s14, 0
    %p215 = por %p213, %p214
    %p216 = scmp.ne.s32.totalorder %s208, %s210
    %p217 = scmp.eq.s32.totalorder %s19, 1
    %p218 = por %p216, %p217
    %p219 = scmp.ne.s32.totalorder %s210, %s211
    %p220 = scmp.eq.s32.totalorder %s19, 0
    %p221 = por %p219, %p220
    %p222 = scmp.ne.s32.totalorder %s210, %s211
    %p223 = scmp.eq.s32.totalorder %s20, 1
    %p224 = por %p222, %p223
    %p226 = scmp.ne.s32.totalorder %s211, %s225
    %p227 = scmp.eq.s32.totalorder %s20, 0
    %p228 = por %p226, %p227
    %s229 = ssub.s32 %s21, %s33
    %p230 = scmp.eq.s32.totalorder %s229, 0
    %s232 = sadd.s32 %s231, 1
    %s233 = scalar_select %p230, %s231, %s232
    %p236 = pneg %p230
    %p237 = scmp.eq.s32.totalorder %s14, 1
    %p238 = por %p236, %p237
    %p239 = scmp.ne.s32.totalorder %s231, %s234
    %p240 = scmp.eq.s32.totalorder %s14, 0
    %p241 = por %p239, %p240
    %p242 = scmp.ne.s32.totalorder %s231, %s234
    %p243 = scmp.eq.s32.totalorder %s19, 1
    %p244 = por %p242, %p243
    %p245 = scmp.ne.s32.totalorder %s234, %s235
    %p246 = scmp.eq.s32.totalorder %s19, 0
    %p247 = por %p245, %p246
    %p248 = scmp.ne.s32.totalorder %s234, %s235
    %p249 = scmp.eq.s32.totalorder %s20, 1
    %p250 = por %p248, %p249
    %p252 = scmp.ne.s32.totalorder %s235, %s251
    %p253 = scmp.eq.s32.totalorder %s20, 0
    %p254 = por %p252, %p253
    %p255 = scmp.le.s32.totalorder 1, %s14
    %p256 = scmp.lt.s32.totalorder %s14, 3
    %p257 = pnand %p255, %p256
    %p258 = pneg %p257
    // Predicated region
    $region9: #{fwd.3} parent=5 // pred_check
      _
    $region10: #{fwd.3} parent=5 // pred_check_branch
      %260 = sbr.rel (%p257) target = $region12
    $region11: #{fwd.3} parent=5 // pred_region
      %s261 = ssub.s32 %s14, 1
      // Predicated region
      $region13: #{fwd.3} parent=11 // pred_check
        %p262 = pneg %p75
      $region14: #{fwd.3} parent=11 // pred_check_branch
        %264 = sbr.rel (%p262) target = $region16
      $region15: #{fwd.3} parent=11 // pred_region
        _
      $region16: #{fwd.3} parent=11 // pred_fallthru
        _
      // Predicated region
      $region17: #{fwd.3} parent=11 // pred_check
        %p265 = pneg %p101
      $region18: #{fwd.3} parent=11 // pred_check_branch
        %267 = sbr.rel (%p265) target = $region20
      $region19: #{fwd.3} parent=11 // pred_region
        %s268 = smul.u32 16, %s24
        %p269 = scmp.lt.s32.totalorder %s268, 15
        %s270 = scalar_select %p269, %s268, 15
        %s271 = smul.addr %s270, 4
        %s272 = scalar_lea.vmem %s2, %s271
        %s273 = smul.u32 16, %s24
      $region20: #{fwd.3} parent=11 // pred_fallthru
        _
      // Predicated region
      $region21: #{fwd.3} parent=11 // pred_check
        %p274 = pneg %p127
      $region22: #{fwd.3} parent=11 // pred_check_branch
        %276 = sbr.rel (%p274) target = $region24
      $region23: #{fwd.3} parent=11 // pred_region
        %p277 = scmp.lt.s32.totalorder %s24, 0
        %s278 = scalar_select %p277, %s24, 0
        %s279 = scalar_lea.vmem %s3, %s278
      $region24: #{fwd.3} parent=11 // pred_fallthru
        _
      // Predicated region
      $region25: #{fwd.3} parent=11 // pred_check
        %p280 = pneg %p153
      $region26: #{fwd.3} parent=11 // pred_check_branch
        %282 = sbr.rel (%p280) target = $region28
      $region27: #{fwd.3} parent=11 // pred_region
        %p283 = scmp.lt.s32.totalorder %s24, 0
        %s284 = scalar_select %p283, %s24, 0
        %s285 = scalar_lea.vmem %s4, %s284
      $region28: #{fwd.3} parent=11 // pred_fallthru
        _
      // Predicated region
      $region29: #{fwd.3} parent=11 // pred_check
        %p286 = pneg %p174
      $region30: #{fwd.3} parent=11 // pred_check_branch
        %288 = sbr.rel (%p286) target = $region32
      $region31: #{fwd.3} parent=11 // pred_region
        _
      $region32: #{fwd.3} parent=11 // pred_fallthru
        _
      // Predicated region
      $region33: #{fwd.3} parent=11 // pred_check
        %p289 = pneg %p221
      $region34: #{fwd.3} parent=11 // pred_check_branch
        %291 = sbr.rel (%p289) target = $region36
      $region35: #{fwd.3} parent=11 // pred_region
        _
      $region36: #{fwd.3} parent=11 // pred_fallthru
        _
    $region12: #{fwd.3} parent=5 // pred_fallthru
      _
    %p292 = scmp.lt.s32.totalorder %s14, 2
    // Predicated region
    $region37: #{fwd.3} parent=5 // pred_check
      %p293 = pneg %p292
    $region38: #{fwd.3} parent=5 // pred_check_branch
      %295 = sbr.rel (%p293) target = $region40
    $region39: #{fwd.3} parent=5 // pred_region
      // Predicated region
      $region41: #{fwd.3} parent=39 // pred_check
        %p296 = pneg %p48
      $region42: #{fwd.3} parent=39 // pred_check_branch
        %298 = sbr.rel (%p296) target = $region44
      $region43: #{fwd.3} parent=39 // pred_region
        %s299 = smul.u32 4, %s21
        %p300 = scmp.lt.s32.totalorder %s299, 7
        %s301 = scalar_select %p300, %s299, 7
        %p302 = scmp.lt.s32.totalorder %s22, 0
        %s303 = scalar_select %p302, %s22, 0
        %s304 = smul.addr %s301, 18
        %s305 = sadd.s32 %s303, %s304
        %s306 = smul.addr %s305, 8
        %s307 = scalar_lea.vmem %s0, %s306
        %s308 = smul.u32 4, %s21
      $region44: #{fwd.3} parent=39 // pred_fallthru
        _
      // Predicated region
      $region45: #{fwd.3} parent=39 // pred_check
        %p309 = pneg %p194
      $region46: #{fwd.3} parent=39 // pred_check_branch
        %311 = sbr.rel (%p309) target = $region48
      $region47: #{fwd.3} parent=39 // pred_region
        %p312 = scmp.lt.s32.totalorder %s21, 1
        %s313 = scalar_select %p312, %s21, 1
        %s314 = smul.addr %s313, 8
        %s315 = smul.addr %s314, 8
        %s316 = scalar_lea.vmem %s6, %s315
      $region48: #{fwd.3} parent=39 // pred_fallthru
        _
    $region40: #{fwd.3} parent=5 // pred_fallthru
      _
    %p317 = scmp.le.s32.totalorder 1, %s14
    %p318 = scmp.lt.s32.totalorder %s14, 3
    %p319 = pnand %p317, %p318
    %p320 = pneg %p319
    // Predicated region
    $region49: #{fwd.3} parent=5 // pred_check
      _
    $region50: #{fwd.3} parent=5 // pred_check_branch
      %322 = sbr.rel (%p319) target = $region52
    $region51: #{fwd.3} parent=5 // pred_region
      %s323 = ssub.s32 %s14, 1
      %s324 = smul.u32 4, %s23
      %p325 = scmp.lt.s32.totalorder %s324, 7
      %s326 = scalar_select %p325, %s324, 7
      %p327 = scmp.lt.s32.totalorder %s24, 0
      %s328 = scalar_select %p327, %s24, 0
      %s329 = smul.addr %s326, 18
      %s330 = sadd.s32 %s328, %s329
      %s331 = smul.addr %s330, 8
      %s332 = scalar_lea.vmem %s0, %s331
      %p333 = pneg %p54
      %p334 = pneg %p51
      %p335 = pneg %p75
      %p336 = pneg %p72
      %s337 = smul.u32 16, %s24
      %p338 = scmp.lt.s32.totalorder %s337, 15
      %s339 = scalar_select %p338, %s337, 15
      %s340 = smul.addr %s339, 4
      %s341 = scalar_lea.vmem %s2, %s340
      %p342 = pneg %p101
      %p343 = pneg %p98
      %p344 = scmp.lt.s32.totalorder %s24, 0
      %s345 = scalar_select %p344, %s24, 0
      %s346 = scalar_lea.vmem %s3, %s345
      %p347 = pneg %p127
      %p348 = pneg %p124
      %p349 = scmp.lt.s32.totalorder %s24, 0
      %s350 = scalar_select %p349, %s24, 0
      %s351 = scalar_lea.vmem %s4, %s350
      %p352 = pneg %p153
      %p353 = pneg %p150
      %p354 = pneg %p174
      %p355 = pneg %p171
      %p356 = scmp.lt.s32.totalorder %s23, 1
      %s357 = scalar_select %p356, %s23, 1
      %s358 = smul.addr %s357, 8
      %s359 = smul.addr %s358, 8
      %s360 = scalar_lea.vmem %s6, %s359
      %p361 = pneg %p200
      %p362 = pneg %p197
      %p363 = pneg %p221
      %p364 = pneg %p218
      %p365 = pneg %p247
      %p366 = pneg %p244
      %p367 = scmp.lt.s32.totalorder %s23, 1
      %s368 = scalar_select %p367, %s23, 1
      %s369 = smul.addr %s368, 8
      %s370 = smul.addr %s369, 8
      %s371 = scalar_lea.vmem %s8, %s370
      %s372 = smul.u32 4, %s23
      %p373 = scmp.lt.s32.totalorder %s372, 7
      %s374 = scalar_select %p373, %s372, 7
      %p375 = scmp.lt.s32.totalorder %s24, 0
      %s376 = scalar_select %p375, %s24, 0
      %s377 = smul.addr %s374, 18
      %s378 = sadd.s32 %s376, %s377
      %s379 = smul.addr %s378, 8
      %s380 = scalar_lea.vmem %s0, %s379
      %s381 = smul.u32 4, %s23
      %s382 = smul.u32 16, %s24
      %p383 = scmp.lt.s32.totalorder %s382, 15
      %s384 = scalar_select %p383, %s382, 15
      %s385 = smul.addr %s384, 4
      %s386 = scalar_lea.vmem %s2, %s385
      %s387 = smul.u32 16, %s24
      %p388 = scmp.lt.s32.totalorder %s24, 0
      %s389 = scalar_select %p388, %s24, 0
      %s390 = scalar_lea.vmem %s3, %s389
      %p391 = scmp.lt.s32.totalorder %s24, 0
      %s392 = scalar_select %p391, %s24, 0
      %s393 = scalar_lea.vmem %s4, %s392
      %p394 = scmp.lt.s32.totalorder %s23, 1
      %s395 = scalar_select %p394, %s23, 1
      %s396 = smul.addr %s395, 8
      %s397 = smul.addr %s396, 8
      %s398 = scalar_lea.vmem %s6, %s397
      %p399 = scmp.lt.s32.totalorder %s23, 1
      %s400 = scalar_select %p399, %s23, 1
      %s401 = smul.addr %s400, 8
      %s402 = smul.addr %s401, 8
      %s403 = scalar_lea.vmem %s8, %s402
      %p404 = scmp.eq.s32.totalorder %s24, 0
      // Predicated region
      $region53: #{fwd.3} parent=51 // pred_check
        %p405 = pneg %p404
      $region54: #{fwd.3} parent=51 // pred_check_branch
        %407 = sbr.rel (%p405) target = $region56
      $region55: #{fwd.3} parent=51 // pred_region
        %408 = vst [vmem:[#allocation2] sm:$0xff] 0.0
        %409 = vst [vmem:[#allocation2 + $0x8] sm:$0xff] 0.0
        %410 = vst [vmem:[#allocation2 + $0x10] sm:$0xff] 0.0
        %411 = vst [vmem:[#allocation2 + $0x18] sm:$0xff] 0.0
        %412 = vst [vmem:[#allocation2 + $0x20] sm:$0xff] 0.0
        %413 = vst [vmem:[#allocation2 + $0x28] sm:$0xff] 0.0
        %414 = vst [vmem:[#allocation2 + $0x30] sm:$0xff] 0.0
        %415 = vst [vmem:[#allocation2 + $0x38] sm:$0xff] 0.0
      $region56: #{fwd.3} parent=51 // pred_fallthru
        _
      %v416 = vld [vmem:[%s390] sm:$0x1]
      %v417 = vld [vmem:[%s393] sm:$0x1]
      %v418 = vld [vmem:[%s380] sm:$0xff]
      %v419 = vld [vmem:[%s380 + $0x10] sm:$0xff]
      %v420 = vld [vmem:[%s380 + $0x20] sm:$0xff]
      %v421 = vld [vmem:[%s380 + $0x30] sm:$0xff]
      %v422 = vld [vmem:[%s380 + $0x40] sm:$0xff]
      %v423 = vld [vmem:[%s380 + $0x50] sm:$0xff]
      %v424 = vld [vmem:[%s380 + $0x60] sm:$0xff]
      %v425 = vld [vmem:[%s380 + $0x70] sm:$0xff]
      %v426 = vld [vmem:[%s1] sm:$0xff]
      %v427 = vld [vmem:[%s1 + $0x10] sm:$0xff]
      %v428 = vld [vmem:[%s1 + $0x20] sm:$0xff]
      %v429 = vld [vmem:[%s1 + $0x30] sm:$0xff]
      %v430 = vld [vmem:[%s1 + $0x40] sm:$0xff]
      %v431 = vld [vmem:[%s1 + $0x50] sm:$0xff]
      %v432 = vld [vmem:[%s1 + $0x60] sm:$0xff]
      %v433 = vld [vmem:[%s1 + $0x70] sm:$0xff]
      %v435 = vperm.slane %v416, 0
      %v437 = vmul.f32 %v418, %v435
      %v438 = vmul.f32 %v419, %v435
      %v439 = vmul.f32 %v420, %v435
      %v440 = vmul.f32 %v421, %v435
      %v441 = vmul.f32 %v422, %v435
      %v442 = vmul.f32 %v423, %v435
      %v443 = vmul.f32 %v424, %v435
      %v444 = vmul.f32 %v425, %v435
      %v446 = vperm.slane %v417, 0
      %v448 = vadd.f32 %v437, %v446
      %v449 = vadd.f32 %v438, %v446
      %v450 = vadd.f32 %v439, %v446
      %v451 = vadd.f32 %v440, %v446
      %v452 = vadd.f32 %v441, %v446
      %v453 = vadd.f32 %v442, %v446
      %v454 = vadd.f32 %v443, %v446
      %v455 = vadd.f32 %v444, %v446
      %v456 = vmax.f32 %v448, 0.0
      %v457 = vmax.f32 %v449, 0.0
      %v458 = vmax.f32 %v450, 0.0
      %v459 = vmax.f32 %v451, 0.0
      %v460 = vmax.f32 %v452, 0.0
      %v461 = vmax.f32 %v453, 0.0
      %v462 = vmax.f32 %v454, 0.0
      %v463 = vmax.f32 %v455, 0.0
      %465 = vset.pattern.permute.xlu0 0
      %466 = vperm.xlu0 %465, %v426
      %v467 = vpop.permute.xlu0 %466
      %470 = vset.pattern.permute.xlu0 0
      %471 = vperm.xlu0 %470, %v427
      %v472 = vpop.permute.xlu0 %471
      %475 = vset.pattern.permute.xlu0 0
      %476 = vperm.xlu0 %475, %v428
      %v477 = vpop.permute.xlu0 %476
      %480 = vset.pattern.permute.xlu0 0
      %481 = vperm.xlu0 %480, %v429
      %v482 = vpop.permute.xlu0 %481
      %485 = vset.pattern.permute.xlu0 0
      %486 = vperm.xlu0 %485, %v430
      %v487 = vpop.permute.xlu0 %486
      %490 = vset.pattern.permute.xlu0 0
      %491 = vperm.xlu0 %490, %v431
      %v492 = vpop.permute.xlu0 %491
      %495 = vset.pattern.permute.xlu0 0
      %496 = vperm.xlu0 %495, %v432
      %v497 = vpop.permute.xlu0 %496
      %500 = vset.pattern.permute.xlu0 0
      %501 = vperm.xlu0 %500, %v433
      %v502 = vpop.permute.xlu0 %501
      %v504 = vmul.f32 %v456, %v467
      %v505 = vmul.f32 %v457, %v472
      %v506 = vmul.f32 %v458, %v477
      %v507 = vmul.f32 %v459, %v482
      %v508 = vmul.f32 %v460, %v487
      %v509 = vmul.f32 %v461, %v492
      %v510 = vmul.f32 %v462, %v497
      %v511 = vmul.f32 %v463, %v502
      %v512 = vpack.c.bf16 %v505, %v504
      %v513 = vpack.c.bf16 %v507, %v506
      %v514 = vpack.c.bf16 %v509, %v508
      %v515 = vpack.c.bf16 %v511, %v510
      %v516 = vld [vmem:[#allocation2] sm:$0xff]
      %v517 = vld [vmem:[#allocation2 + $0x8] sm:$0xff]
      %v518 = vld [vmem:[#allocation2 + $0x10] sm:$0xff]
      %v519 = vld [vmem:[#allocation2 + $0x18] sm:$0xff]
      %v520 = vld [vmem:[#allocation2 + $0x20] sm:$0xff]
      %v521 = vld [vmem:[#allocation2 + $0x28] sm:$0xff]
      %v522 = vld [vmem:[#allocation2 + $0x30] sm:$0xff]
      %v523 = vld [vmem:[#allocation2 + $0x38] sm:$0xff]
      %v524 = vld [vmem:[%s386] sm:$0xf]
      %v525 = vld [vmem:[%s386 + $0x4] sm:$0xf]
      %v526 = vld [vmem:[%s386 + $0x8] sm:$0xf]
      %v527 = vld [vmem:[%s386 + $0xc] sm:$0xf]
      %v528 = vld [vmem:[%s386 + $0x10] sm:$0xf]
      %v529 = vld [vmem:[%s386 + $0x14] sm:$0xf]
      %v530 = vld [vmem:[%s386 + $0x18] sm:$0xf]
      %v531 = vld [vmem:[%s386 + $0x1c] sm:$0xf]
      %v532 = vld [vmem:[%s386 + $0x20] sm:$0xf]
      %v533 = vld [vmem:[%s386 + $0x24] sm:$0xf]
      %v534 = vld [vmem:[%s386 + $0x28] sm:$0xf]
      %v535 = vld [vmem:[%s386 + $0x2c] sm:$0xf]
      %v536 = vld [vmem:[%s386 + $0x30] sm:$0xf]
      %v537 = vld [vmem:[%s386 + $0x34] sm:$0xf]
      %v538 = vld [vmem:[%s386 + $0x38] sm:$0xf]
      %v539 = vld [vmem:[%s386 + $0x3c] sm:$0xf]
      %v556 = vunpack.c.l.b16 %v524
      %v557 = vunpack.c.l.b16 %v525
      %v558 = vunpack.c.l.b16 %v526
      %v559 = vunpack.c.l.b16 %v527
      %v560 = vunpack.c.l.b16 %v528
      %v561 = vunpack.c.l.b16 %v529
      %v562 = vunpack.c.l.b16 %v530
      %v563 = vunpack.c.l.b16 %v531
      %v564 = vunpack.c.l.b16 %v532
      %v565 = vunpack.c.l.b16 %v533
      %v566 = vunpack.c.l.b16 %v534
      %v567 = vunpack.c.l.b16 %v535
      %v568 = vunpack.c.l.b16 %v536
      %v569 = vunpack.c.l.b16 %v537
      %v570 = vunpack.c.l.b16 %v538
      %v571 = vunpack.c.l.b16 %v539
      %v572 = vpack.c.b16 %v557, %v556
      %v573 = vpack.c.b16 %v559, %v558
      %v574 = vpack.c.b16 %v561, %v560
      %v575 = vpack.c.b16 %v563, %v562
      %v576 = vpack.c.b16 %v565, %v564
      %v577 = vpack.c.b16 %v567, %v566
      %v578 = vpack.c.b16 %v569, %v568
      %v579 = vpack.c.b16 %v571, %v570
      %588 = vmatpush.bf16.msra.mxu0 %v579
      %589 = vmatpush.bf16.msra.mxu0 %v578
      %590 = vmatpush.bf16.msra.mxu0 %v577
      %591 = vmatpush.bf16.msra.mxu0 %v576
      %592 = vmatpush.bf16.msra.mxu0 %v575
      %593 = vmatpush.bf16.msra.mxu0 %v574
      %594 = vmatpush.bf16.msra.mxu0 %v573
      %595 = vmatpush.bf16.msra.mxu0 %v572
      %596 = vmatmul.bf16.gmra.mxu0 %v512
      %v597 = vpop.f32.mrf.mxu0
      %v598 = vadd.f32 0.0, %v597
      %v599 = vpop.f32.mrf.mxu0
      %v600 = vadd.f32 0.0, %v599
      %601 = vmatmul.bf16.gmra.mxu0 %v513
      %v602 = vpop.f32.mrf.mxu0
      %v603 = vadd.f32 0.0, %v602
      %v604 = vpop.f32.mrf.mxu0
      %v605 = vadd.f32 0.0, %v604
      %606 = vmatmul.bf16.gmra.mxu0 %v514
      %v607 = vpop.f32.mrf.mxu0
      %v608 = vadd.f32 0.0, %v607
      %v609 = vpop.f32.mrf.mxu0
      %v610 = vadd.f32 0.0, %v609
      %611 = vmatmul.bf16.gmra.mxu0 %v515
      %v612 = vpop.f32.mrf.mxu0
      %v613 = vadd.f32 0.0, %v612
      %v614 = vpop.f32.mrf.mxu0
      %v615 = vadd.f32 0.0, %v614
      %616 = vdwg.mxu0
      %v617 = vadd.f32 %v516, %v598
      %v618 = vadd.f32 %v517, %v600
      %v619 = vadd.f32 %v518, %v603
      %v620 = vadd.f32 %v519, %v605
      %v621 = vadd.f32 %v520, %v608
      %v622 = vadd.f32 %v521, %v610
      %v623 = vadd.f32 %v522, %v613
      %v624 = vadd.f32 %v523, %v615
      %625 = vst [vmem:[#allocation2] sm:$0xff] %v617
      %626 = vst [vmem:[#allocation2 + $0x8] sm:$0xff] %v618
      %627 = vst [vmem:[#allocation2 + $0x10] sm:$0xff] %v619
      %628 = vst [vmem:[#allocation2 + $0x18] sm:$0xff] %v620
      %629 = vst [vmem:[#allocation2 + $0x20] sm:$0xff] %v621
      %630 = vst [vmem:[#allocation2 + $0x28] sm:$0xff] %v622
      %631 = vst [vmem:[#allocation2 + $0x30] sm:$0xff] %v623
      %632 = vst [vmem:[#allocation2 + $0x38] sm:$0xff] %v624
      %s633 = scalar_lea.vmem %s380, 144
      %v634 = vld [vmem:[%s633] sm:$0xff]
      %v635 = vld [vmem:[%s633 + $0x10] sm:$0xff]
      %v636 = vld [vmem:[%s633 + $0x20] sm:$0xff]
      %v637 = vld [vmem:[%s633 + $0x30] sm:$0xff]
      %v638 = vld [vmem:[%s633 + $0x40] sm:$0xff]
      %v639 = vld [vmem:[%s633 + $0x50] sm:$0xff]
      %v640 = vld [vmem:[%s633 + $0x60] sm:$0xff]
      %v641 = vld [vmem:[%s633 + $0x70] sm:$0xff]
      %s642 = scalar_lea.vmem %s1, 144
      %v643 = vld [vmem:[%s642] sm:$0xff]
      %v644 = vld [vmem:[%s642 + $0x10] sm:$0xff]
      %v645 = vld [vmem:[%s642 + $0x20] sm:$0xff]
      %v646 = vld [vmem:[%s642 + $0x30] sm:$0xff]
      %v647 = vld [vmem:[%s642 + $0x40] sm:$0xff]
      %v648 = vld [vmem:[%s642 + $0x50] sm:$0xff]
      %v649 = vld [vmem:[%s642 + $0x60] sm:$0xff]
      %v650 = vld [vmem:[%s642 + $0x70] sm:$0xff]
      %v651 = vmul.f32 %v634, %v435
      %v652 = vmul.f32 %v635, %v435
      %v653 = vmul.f32 %v636, %v435
      %v654 = vmul.f32 %v637, %v435
      %v655 = vmul.f32 %v638, %v435
      %v656 = vmul.f32 %v639, %v435
      %v657 = vmul.f32 %v640, %v435
      %v658 = vmul.f32 %v641, %v435
      %v659 = vadd.f32 %v651, %v446
      %v660 = vadd.f32 %v652, %v446
      %v661 = vadd.f32 %v653, %v446
      %v662 = vadd.f32 %v654, %v446
      %v663 = vadd.f32 %v655, %v446
      %v664 = vadd.f32 %v656, %v446
      %v665 = vadd.f32 %v657, %v446
      %v666 = vadd.f32 %v658, %v446
      %v667 = vmax.f32 %v659, 0.0
      %v668 = vmax.f32 %v660, 0.0
      %v669 = vmax.f32 %v661, 0.0
      %v670 = vmax.f32 %v662, 0.0
      %v671 = vmax.f32 %v663, 0.0
      %v672 = vmax.f32 %v664, 0.0
      %v673 = vmax.f32 %v665, 0.0
      %v674 = vmax.f32 %v666, 0.0
      %676 = vset.pattern.permute.xlu0 0
      %677 = vperm.xlu0 %676, %v643
      %v678 = vpop.permute.xlu0 %677
      %681 = vset.pattern.permute.xlu0 0
      %682 = vperm.xlu0 %681, %v644
      %v683 = vpop.permute.xlu0 %682
      %686 = vset.pattern.permute.xlu0 0
      %687 = vperm.xlu0 %686, %v645
      %v688 = vpop.permute.xlu0 %687
      %691 = vset.pattern.permute.xlu0 0
      %692 = vperm.xlu0 %691, %v646
      %v693 = vpop.permute.xlu0 %692
      %696 = vset.pattern.permute.xlu0 0
      %697 = vperm.xlu0 %696, %v647
      %v698 = vpop.permute.xlu0 %697
      %701 = vset.pattern.permute.xlu0 0
      %702 = vperm.xlu0 %701, %v648
      %v703 = vpop.permute.xlu0 %702
      %706 = vset.pattern.permute.xlu0 0
      %707 = vperm.xlu0 %706, %v649
      %v708 = vpop.permute.xlu0 %707
      %711 = vset.pattern.permute.xlu0 0
      %712 = vperm.xlu0 %711, %v650
      %v713 = vpop.permute.xlu0 %712
      %v715 = vmul.f32 %v667, %v678
      %v716 = vmul.f32 %v668, %v683
      %v717 = vmul.f32 %v669, %v688
      %v718 = vmul.f32 %v670, %v693
      %v719 = vmul.f32 %v671, %v698
      %v720 = vmul.f32 %v672, %v703
      %v721 = vmul.f32 %v673, %v708
      %v722 = vmul.f32 %v674, %v713
      %v723 = vpack.c.bf16 %v716, %v715
      %v724 = vpack.c.bf16 %v718, %v717
      %v725 = vpack.c.bf16 %v720, %v719
      %v726 = vpack.c.bf16 %v722, %v721
      %v727 = vld [vmem:[#allocation2] sm:$0xff]
      %v728 = vld [vmem:[#allocation2 + $0x8] sm:$0xff]
      %v729 = vld [vmem:[#allocation2 + $0x10] sm:$0xff]
      %v730 = vld [vmem:[#allocation2 + $0x18] sm:$0xff]
      %v731 = vld [vmem:[#allocation2 + $0x20] sm:$0xff]
      %v732 = vld [vmem:[#allocation2 + $0x28] sm:$0xff]
      %v733 = vld [vmem:[#allocation2 + $0x30] sm:$0xff]
      %v734 = vld [vmem:[#allocation2 + $0x38] sm:$0xff]
      %s735 = scalar_lea.vmem %s386, 64
      %v736 = vld [vmem:[%s735] sm:$0xf]
      %v737 = vld [vmem:[%s735 + $0x4] sm:$0xf]
      %v738 = vld [vmem:[%s735 + $0x8] sm:$0xf]
      %v739 = vld [vmem:[%s735 + $0xc] sm:$0xf]
      %v740 = vld [vmem:[%s735 + $0x10] sm:$0xf]
      %v741 = vld [vmem:[%s735 + $0x14] sm:$0xf]
      %v742 = vld [vmem:[%s735 + $0x18] sm:$0xf]
      %v743 = vld [vmem:[%s735 + $0x1c] sm:$0xf]
      %v744 = vld [vmem:[%s735 + $0x20] sm:$0xf]
      %v745 = vld [vmem:[%s735 + $0x24] sm:$0xf]
      %v746 = vld [vmem:[%s735 + $0x28] sm:$0xf]
      %v747 = vld [vmem:[%s735 + $0x2c] sm:$0xf]
      %v748 = vld [vmem:[%s735 + $0x30] sm:$0xf]
      %v749 = vld [vmem:[%s735 + $0x34] sm:$0xf]
      %v750 = vld [vmem:[%s735 + $0x38] sm:$0xf]
      %v751 = vld [vmem:[%s735 + $0x3c] sm:$0xf]
      %v768 = vunpack.c.l.b16 %v736
      %v769 = vunpack.c.l.b16 %v737
      %v770 = vunpack.c.l.b16 %v738
      %v771 = vunpack.c.l.b16 %v739
      %v772 = vunpack.c.l.b16 %v740
      %v773 = vunpack.c.l.b16 %v741
      %v774 = vunpack.c.l.b16 %v742
      %v775 = vunpack.c.l.b16 %v743
      %v776 = vunpack.c.l.b16 %v744
      %v777 = vunpack.c.l.b16 %v745
      %v778 = vunpack.c.l.b16 %v746
      %v779 = vunpack.c.l.b16 %v747
      %v780 = vunpack.c.l.b16 %v748
      %v781 = vunpack.c.l.b16 %v749
      %v782 = vunpack.c.l.b16 %v750
      %v783 = vunpack.c.l.b16 %v751
      %v784 = vpack.c.b16 %v769, %v768
      %v785 = vpack.c.b16 %v771, %v770
      %v786 = vpack.c.b16 %v773, %v772
      %v787 = vpack.c.b16 %v775, %v774
      %v788 = vpack.c.b16 %v777, %v776
      %v789 = vpack.c.b16 %v779, %v778
      %v790 = vpack.c.b16 %v781, %v780
      %v791 = vpack.c.b16 %v783, %v782
      %800 = vmatpush.bf16.msra.mxu0 %v791
      %801 = vmatpush.bf16.msra.mxu0 %v790
      %802 = vmatpush.bf16.msra.mxu0 %v789
      %803 = vmatpush.bf16.msra.mxu0 %v788
      %804 = vmatpush.bf16.msra.mxu0 %v787
      %805 = vmatpush.bf16.msra.mxu0 %v786
      %806 = vmatpush.bf16.msra.mxu0 %v785
      %807 = vmatpush.bf16.msra.mxu0 %v784
      %808 = vmatmul.bf16.gmra.mxu0 %v723
      %v809 = vpop.f32.mrf.mxu0
      %v810 = vadd.f32 0.0, %v809
      %v811 = vpop.f32.mrf.mxu0
      %v812 = vadd.f32 0.0, %v811
      %813 = vmatmul.bf16.gmra.mxu0 %v724
      %v814 = vpop.f32.mrf.mxu0
      %v815 = vadd.f32 0.0, %v814
      %v816 = vpop.f32.mrf.mxu0
      %v817 = vadd.f32 0.0, %v816
      %818 = vmatmul.bf16.gmra.mxu0 %v725
      %v819 = vpop.f32.mrf.mxu0
      %v820 = vadd.f32 0.0, %v819
      %v821 = vpop.f32.mrf.mxu0
      %v822 = vadd.f32 0.0, %v821
      %823 = vmatmul.bf16.gmra.mxu0 %v726
      %v824 = vpop.f32.mrf.mxu0
      %v825 = vadd.f32 0.0, %v824
      %v826 = vpop.f32.mrf.mxu0
      %v827 = vadd.f32 0.0, %v826
      %828 = vdwg.mxu0
      %v829 = vadd.f32 %v727, %v810
      %v830 = vadd.f32 %v728, %v812
      %v831 = vadd.f32 %v729, %v815
      %v832 = vadd.f32 %v730, %v817
      %v833 = vadd.f32 %v731, %v820
      %v834 = vadd.f32 %v732, %v822
      %v835 = vadd.f32 %v733, %v825
      %v836 = vadd.f32 %v734, %v827
      %837 = vst [vmem:[#allocation2] sm:$0xff] %v829
      %838 = vst [vmem:[#allocation2 + $0x8] sm:$0xff] %v830
      %839 = vst [vmem:[#allocation2 + $0x10] sm:$0xff] %v831
      %840 = vst [vmem:[#allocation2 + $0x18] sm:$0xff] %v832
      %841 = vst [vmem:[#allocation2 + $0x20] sm:$0xff] %v833
      %842 = vst [vmem:[#allocation2 + $0x28] sm:$0xff] %v834
      %843 = vst [vmem:[#allocation2 + $0x30] sm:$0xff] %v835
      %844 = vst [vmem:[#allocation2 + $0x38] sm:$0xff] %v836
      %v845 = vld [vmem:[%s380 + $0x1] sm:$0xff]
      %v846 = vld [vmem:[%s380 + $0x11] sm:$0xff]
      %v847 = vld [vmem:[%s380 + $0x21] sm:$0xff]
      %v848 = vld [vmem:[%s380 + $0x31] sm:$0xff]
      %v849 = vld [vmem:[%s380 + $0x41] sm:$0xff]
      %v850 = vld [vmem:[%s380 + $0x51] sm:$0xff]
      %v851 = vld [vmem:[%s380 + $0x61] sm:$0xff]
      %v852 = vld [vmem:[%s380 + $0x71] sm:$0xff]
      %v853 = vld [vmem:[%s1 + $0x1] sm:$0xff]
      %v854 = vld [vmem:[%s1 + $0x11] sm:$0xff]
      %v855 = vld [vmem:[%s1 + $0x21] sm:$0xff]
      %v856 = vld [vmem:[%s1 + $0x31] sm:$0xff]
      %v857 = vld [vmem:[%s1 + $0x41] sm:$0xff]
      %v858 = vld [vmem:[%s1 + $0x51] sm:$0xff]
      %v859 = vld [vmem:[%s1 + $0x61] sm:$0xff]
      %v860 = vld [vmem:[%s1 + $0x71] sm:$0xff]
      %v861 = vmul.f32 %v845, %v435
      %v862 = vmul.f32 %v846, %v435
      %v863 = vmul.f32 %v847, %v435
      %v864 = vmul.f32 %v848, %v435
      %v865 = vmul.f32 %v849, %v435
      %v866 = vmul.f32 %v850, %v435
      %v867 = vmul.f32 %v851, %v435
      %v868 = vmul.f32 %v852, %v435
      %v869 = vadd.f32 %v861, %v446
      %v870 = vadd.f32 %v862, %v446
      %v871 = vadd.f32 %v863, %v446
      %v872 = vadd.f32 %v864, %v446
      %v873 = vadd.f32 %v865, %v446
      %v874 = vadd.f32 %v866, %v446
      %v875 = vadd.f32 %v867, %v446
      %v876 = vadd.f32 %v868, %v446
      %v877 = vmax.f32 %v869, 0.0
      %v878 = vmax.f32 %v870, 0.0
      %v879 = vmax.f32 %v871, 0.0
      %v880 = vmax.f32 %v872, 0.0
      %v881 = vmax.f32 %v873, 0.0
      %v882 = vmax.f32 %v874, 0.0
      %v883 = vmax.f32 %v875, 0.0
      %v884 = vmax.f32 %v876, 0.0
      %886 = vset.pattern.permute.xlu0 0
      %887 = vperm.xlu0 %886, %v853
      %v888 = vpop.permute.xlu0 %887
      %891 = vset.pattern.permute.xlu0 0
      %892 = vperm.xlu0 %891, %v854
      %v893 = vpop.permute.xlu0 %892
      %896 = vset.pattern.permute.xlu0 0
      %897 = vperm.xlu0 %896, %v855
      %v898 = vpop.permute.xlu0 %897
      %901 = vset.pattern.permute.xlu0 0
      %902 = vperm.xlu0 %901, %v856
      %v903 = vpop.permute.xlu0 %902
      %906 = vset.pattern.permute.xlu0 0
      %907 = vperm.xlu0 %906, %v857
      %v908 = vpop.permute.xlu0 %907
      %911 = vset.pattern.permute.xlu0 0
      %912 = vperm.xlu0 %911, %v858
      %v913 = vpop.permute.xlu0 %912
      %916 = vset.pattern.permute.xlu0 0
      %917 = vperm.xlu0 %916, %v859
      %v918 = vpop.permute.xlu0 %917
      %921 = vset.pattern.permute.xlu0 0
      %922 = vperm.xlu0 %921, %v860
      %v923 = vpop.permute.xlu0 %922
      %v925 = vmul.f32 %v877, %v888
      %v926 = vmul.f32 %v878, %v893
      %v927 = vmul.f32 %v879, %v898
      %v928 = vmul.f32 %v880, %v903
      %v929 = vmul.f32 %v881, %v908
      %v930 = vmul.f32 %v882, %v913
      %v931 = vmul.f32 %v883, %v918
      %v932 = vmul.f32 %v884, %v923
      %v933 = vpack.c.bf16 %v926, %v925
      %v934 = vpack.c.bf16 %v928, %v927
      %v935 = vpack.c.bf16 %v930, %v929
      %v936 = vpack.c.bf16 %v932, %v931
      %v937 = vld [vmem:[#allocation2] sm:$0xff]
      %v938 = vld [vmem:[#allocation2 + $0x8] sm:$0xff]
      %v939 = vld [vmem:[#allocation2 + $0x10] sm:$0xff]
      %v940 = vld [vmem:[#allocation2 + $0x18] sm:$0xff]
      %v941 = vld [vmem:[#allocation2 + $0x20] sm:$0xff]
      %v942 = vld [vmem:[#allocation2 + $0x28] sm:$0xff]
      %v943 = vld [vmem:[#allocation2 + $0x30] sm:$0xff]
      %v944 = vld [vmem:[#allocation2 + $0x38] sm:$0xff]
      %s945 = scalar_lea.vmem %s386, 128
      %v946 = vld [vmem:[%s945] sm:$0xf]
      %v947 = vld [vmem:[%s945 + $0x4] sm:$0xf]
      %v948 = vld [vmem:[%s945 + $0x8] sm:$0xf]
      %v949 = vld [vmem:[%s945 + $0xc] sm:$0xf]
      %v950 = vld [vmem:[%s945 + $0x10] sm:$0xf]
      %v951 = vld [vmem:[%s945 + $0x14] sm:$0xf]
      %v952 = vld [vmem:[%s945 + $0x18] sm:$0xf]
      %v953 = vld [vmem:[%s945 + $0x1c] sm:$0xf]
      %v954 = vld [vmem:[%s945 + $0x20] sm:$0xf]
      %v955 = vld [vmem:[%s945 + $0x24] sm:$0xf]
      %v956 = vld [vmem:[%s945 + $0x28] sm:$0xf]
      %v957 = vld [vmem:[%s945 + $0x2c] sm:$0xf]
      %v958 = vld [vmem:[%s945 + $0x30] sm:$0xf]
      %v959 = vld [vmem:[%s945 + $0x34] sm:$0xf]
      %v960 = vld [vmem:[%s945 + $0x38] sm:$0xf]
      %v961 = vld [vmem:[%s945 + $0x3c] sm:$0xf]
      %v978 = vunpack.c.l.b16 %v946
      %v979 = vunpack.c.l.b16 %v947
      %v980 = vunpack.c.l.b16 %v948
      %v981 = vunpack.c.l.b16 %v949
      %v982 = vunpack.c.l.b16 %v950
      %v983 = vunpack.c.l.b16 %v951
      %v984 = vunpack.c.l.b16 %v952
      %v985 = vunpack.c.l.b16 %v953
      %v986 = vunpack.c.l.b16 %v954
      %v987 = vunpack.c.l.b16 %v955
      %v988 = vunpack.c.l.b16 %v956
      %v989 = vunpack.c.l.b16 %v957
      %v990 = vunpack.c.l.b16 %v958
      %v991 = vunpack.c.l.b16 %v959
      %v992 = vunpack.c.l.b16 %v960
      %v993 = vunpack.c.l.b16 %v961
      %v994 = vpack.c.b16 %v979, %v978
      %v995 = vpack.c.b16 %v981, %v980
      %v996 = vpack.c.b16 %v983, %v982
      %v997 = vpack.c.b16 %v985, %v984
      %v998 = vpack.c.b16 %v987, %v986
      %v999 = vpack.c.b16 %v989, %v988
      %v1000 = vpack.c.b16 %v991, %v990
      %v1001 = vpack.c.b16 %v993, %v992
      %1010 = vmatpush.bf16.msra.mxu0 %v1001
      %1011 = vmatpush.bf16.msra.mxu0 %v1000
      %1012 = vmatpush.bf16.msra.mxu0 %v999
      %1013 = vmatpush.bf16.msra.mxu0 %v998
      %1014 = vmatpush.bf16.msra.mxu0 %v997
      %1015 = vmatpush.bf16.msra.mxu0 %v996
      %1016 = vmatpush.bf16.msra.mxu0 %v995
      %1017 = vmatpush.bf16.msra.mxu0 %v994
      %1018 = vmatmul.bf16.gmra.mxu0 %v933
      %v1019 = vpop.f32.mrf.mxu0
      %v1020 = vadd.f32 0.0, %v1019
      %v1021 = vpop.f32.mrf.mxu0
      %v1022 = vadd.f32 0.0, %v1021
      %1023 = vmatmul.bf16.gmra.mxu0 %v934
      %v1024 = vpop.f32.mrf.mxu0
      %v1025 = vadd.f32 0.0, %v1024
      %v1026 = vpop.f32.mrf.mxu0
      %v1027 = vadd.f32 0.0, %v1026
      %1028 = vmatmul.bf16.gmra.mxu0 %v935
      %v1029 = vpop.f32.mrf.mxu0
      %v1030 = vadd.f32 0.0, %v1029
      %v1031 = vpop.f32.mrf.mxu0
      %v1032 = vadd.f32 0.0, %v1031
      %1033 = vmatmul.bf16.gmra.mxu0 %v936
      %v1034 = vpop.f32.mrf.mxu0
      %v1035 = vadd.f32 0.0, %v1034
      %v1036 = vpop.f32.mrf.mxu0
      %v1037 = vadd.f32 0.0, %v1036
      %1038 = vdwg.mxu0
      %v1039 = vadd.f32 %v937, %v1020
      %v1040 = vadd.f32 %v938, %v1022
      %v1041 = vadd.f32 %v939, %v1025
      %v1042 = vadd.f32 %v940, %v1027
      %v1043 = vadd.f32 %v941, %v1030
      %v1044 = vadd.f32 %v942, %v1032
      %v1045 = vadd.f32 %v943, %v1035
      %v1046 = vadd.f32 %v944, %v1037
      %1047 = vst [vmem:[#allocation2] sm:$0xff] %v1039
      %1048 = vst [vmem:[#allocation2 + $0x8] sm:$0xff] %v1040
      %1049 = vst [vmem:[#allocation2 + $0x10] sm:$0xff] %v1041
      %1050 = vst [vmem:[#allocation2 + $0x18] sm:$0xff] %v1042
      %1051 = vst [vmem:[#allocation2 + $0x20] sm:$0xff] %v1043
      %1052 = vst [vmem:[#allocation2 + $0x28] sm:$0xff] %v1044
      %1053 = vst [vmem:[#allocation2 + $0x30] sm:$0xff] %v1045
      %1054 = vst [vmem:[#allocation2 + $0x38] sm:$0xff] %v1046
      %s1055 = scalar_lea.vmem %s380, 288
      %v1056 = vld [vmem:[%s1055] sm:$0xff]
      %v1057 = vld [vmem:[%s1055 + $0x10] sm:$0xff]
      %v1058 = vld [vmem:[%s1055 + $0x20] sm:$0xff]
      %v1059 = vld [vmem:[%s1055 + $0x30] sm:$0xff]
      %v1060 = vld [vmem:[%s1055 + $0x40] sm:$0xff]
      %v1061 = vld [vmem:[%s1055 + $0x50] sm:$0xff]
      %v1062 = vld [vmem:[%s1055 + $0x60] sm:$0xff]
      %v1063 = vld [vmem:[%s1055 + $0x70] sm:$0xff]
      %s1064 = scalar_lea.vmem %s1, 288
      %v1065 = vld [vmem:[%s1064] sm:$0xff]
      %v1066 = vld [vmem:[%s1064 + $0x10] sm:$0xff]
      %v1067 = vld [vmem:[%s1064 + $0x20] sm:$0xff]
      %v1068 = vld [vmem:[%s1064 + $0x30] sm:$0xff]
      %v1069 = vld [vmem:[%s1064 + $0x40] sm:$0xff]
      %v1070 = vld [vmem:[%s1064 + $0x50] sm:$0xff]
      %v1071 = vld [vmem:[%s1064 + $0x60] sm:$0xff]
      %v1072 = vld [vmem:[%s1064 + $0x70] sm:$0xff]
      %v1073 = vmul.f32 %v1056, %v435
      %v1074 = vmul.f32 %v1057, %v435
      %v1075 = vmul.f32 %v1058, %v435
      %v1076 = vmul.f32 %v1059, %v435
      %v1077 = vmul.f32 %v1060, %v435
      %v1078 = vmul.f32 %v1061, %v435
      %v1079 = vmul.f32 %v1062, %v435
      %v1080 = vmul.f32 %v1063, %v435
      %v1081 = vadd.f32 %v1073, %v446
      %v1082 = vadd.f32 %v1074, %v446
      %v1083 = vadd.f32 %v1075, %v446
      %v1084 = vadd.f32 %v1076, %v446
      %v1085 = vadd.f32 %v1077, %v446
      %v1086 = vadd.f32 %v1078, %v446
      %v1087 = vadd.f32 %v1079, %v446
      %v1088 = vadd.f32 %v1080, %v446
      %v1089 = vmax.f32 %v1081, 0.0
      %v1090 = vmax.f32 %v1082, 0.0
      %v1091 = vmax.f32 %v1083, 0.0
      %v1092 = vmax.f32 %v1084, 0.0
      %v1093 = vmax.f32 %v1085, 0.0
      %v1094 = vmax.f32 %v1086, 0.0
      %v1095 = vmax.f32 %v1087, 0.0
      %v1096 = vmax.f32 %v1088, 0.0
      %1098 = vset.pattern.permute.xlu0 0
      %1099 = vperm.xlu0 %1098, %v1065
      %v1100 = vpop.permute.xlu0 %1099
      %1103 = vset.pattern.permute.xlu0 0
      %1104 = vperm.xlu0 %1103, %v1066
      %v1105 = vpop.permute.xlu0 %1104
      %1108 = vset.pattern.permute.xlu0 0
      %1109 = vperm.xlu0 %1108, %v1067
      %v1110 = vpop.permute.xlu0 %1109
      %1113 = vset.pattern.permute.xlu0 0
      %1114 = vperm.xlu0 %1113, %v1068
      %v1115 = vpop.permute.xlu0 %1114
      %1118 = vset.pattern.permute.xlu0 0
      %1119 = vperm.xlu0 %1118, %v1069
      %v1120 = vpop.permute.xlu0 %1119
      %1123 = vset.pattern.permute.xlu0 0
      %1124 = vperm.xlu0 %1123, %v1070
      %v1125 = vpop.permute.xlu0 %1124
      %1128 = vset.pattern.permute.xlu0 0
      %1129 = vperm.xlu0 %1128, %v1071
      %v1130 = vpop.permute.xlu0 %1129
      %1133 = vset.pattern.permute.xlu0 0
      %1134 = vperm.xlu0 %1133, %v1072
      %v1135 = vpop.permute.xlu0 %1134
      %v1137 = vmul.f32 %v1089, %v1100
      %v1138 = vmul.f32 %v1090, %v1105
      %v1139 = vmul.f32 %v1091, %v1110
      %v1140 = vmul.f32 %v1092, %v1115
      %v1141 = vmul.f32 %v1093, %v1120
      %v1142 = vmul.f32 %v1094, %v1125
      %v1143 = vmul.f32 %v1095, %v1130
      %v1144 = vmul.f32 %v1096, %v1135
      %v1145 = vpack.c.bf16 %v1138, %v1137
      %v1146 = vpack.c.bf16 %v1140, %v1139
      %v1147 = vpack.c.bf16 %v1142, %v1141
      %v1148 = vpack.c.bf16 %v1144, %v1143
      %v1149 = vld [vmem:[#allocation2] sm:$0xff]
      %v1150 = vld [vmem:[#allocation2 + $0x8] sm:$0xff]
      %v1151 = vld [vmem:[#allocation2 + $0x10] sm:$0xff]
      %v1152 = vld [vmem:[#allocation2 + $0x18] sm:$0xff]
      %v1153 = vld [vmem:[#allocation2 + $0x20] sm:$0xff]
      %v1154 = vld [vmem:[#allocation2 + $0x28] sm:$0xff]
      %v1155 = vld [vmem:[#allocation2 + $0x30] sm:$0xff]
      %v1156 = vld [vmem:[#allocation2 + $0x38] sm:$0xff]
      %s1157 = scalar_lea.vmem %s386, 192
      %v1158 = vld [vmem:[%s1157] sm:$0xf]
      %v1159 = vld [vmem:[%s1157 + $0x4] sm:$0xf]
      %v1160 = vld [vmem:[%s1157 + $0x8] sm:$0xf]
      %v1161 = vld [vmem:[%s1157 + $0xc] sm:$0xf]
      %v1162 = vld [vmem:[%s1157 + $0x10] sm:$0xf]
      %v1163 = vld [vmem:[%s1157 + $0x14] sm:$0xf]
      %v1164 = vld [vmem:[%s1157 + $0x18] sm:$0xf]
      %v1165 = vld [vmem:[%s1157 + $0x1c] sm:$0xf]
      %v1166 = vld [vmem:[%s1157 + $0x20] sm:$0xf]
      %v1167 = vld [vmem:[%s1157 + $0x24] sm:$0xf]
      %v1168 = vld [vmem:[%s1157 + $0x28] sm:$0xf]
      %v1169 = vld [vmem:[%s1157 + $0x2c] sm:$0xf]
      %v1170 = vld [vmem:[%s1157 + $0x30] sm:$0xf]
      %v1171 = vld [vmem:[%s1157 + $0x34] sm:$0xf]
      %v1172 = vld [vmem:[%s1157 + $0x38] sm:$0xf]
      %v1173 = vld [vmem:[%s1157 + $0x3c] sm:$0xf]
      %v1190 = vunpack.c.l.b16 %v1158
      %v1191 = vunpack.c.l.b16 %v1159
      %v1192 = vunpack.c.l.b16 %v1160
      %v1193 = vunpack.c.l.b16 %v1161
      %v1194 = vunpack.c.l.b16 %v1162
      %v1195 = vunpack.c.l.b16 %v1163
      %v1196 = vunpack.c.l.b16 %v1164
      %v1197 = vunpack.c.l.b16 %v1165
      %v1198 = vunpack.c.l.b16 %v1166
      %v1199 = vunpack.c.l.b16 %v1167
      %v1200 = vunpack.c.l.b16 %v1168
      %v1201 = vunpack.c.l.b16 %v1169
      %v1202 = vunpack.c.l.b16 %v1170
      %v1203 = vunpack.c.l.b16 %v1171
      %v1204 = vunpack.c.l.b16 %v1172
      %v1205 = vunpack.c.l.b16 %v1173
      %v1206 = vpack.c.b16 %v1191, %v1190
      %v1207 = vpack.c.b16 %v1193, %v1192
      %v1208 = vpack.c.b16 %v1195, %v1194
      %v1209 = vpack.c.b16 %v1197, %v1196
      %v1210 = vpack.c.b16 %v1199, %v1198
      %v1211 = vpack.c.b16 %v1201, %v1200
      %v1212 = vpack.c.b16 %v1203, %v1202
      %v1213 = vpack.c.b16 %v1205, %v1204
      %1222 = vmatpush.bf16.msra.mxu0 %v1213
      %1223 = vmatpush.bf16.msra.mxu0 %v1212
      %1224 = vmatpush.bf16.msra.mxu0 %v1211
      %1225 = vmatpush.bf16.msra.mxu0 %v1210
      %1226 = vmatpush.bf16.msra.mxu0 %v1209
      %1227 = vmatpush.bf16.msra.mxu0 %v1208
      %1228 = vmatpush.bf16.msra.mxu0 %v1207
      %1229 = vmatpush.bf16.msra.mxu0 %v1206
      %1230 = vmatmul.bf16.gmra.mxu0 %v1145
      %v1231 = vpop.f32.mrf.mxu0
      %v1232 = vadd.f32 0.0, %v1231
      %v1233 = vpop.f32.mrf.mxu0
      %v1234 = vadd.f32 0.0, %v1233
      %1235 = vmatmul.bf16.gmra.mxu0 %v1146
      %v1236 = vpop.f32.mrf.mxu0
      %v1237 = vadd.f32 0.0, %v1236
      %v1238 = vpop.f32.mrf.mxu0
      %v1239 = vadd.f32 0.0, %v1238
      %1240 = vmatmul.bf16.gmra.mxu0 %v1147
      %v1241 = vpop.f32.mrf.mxu0
      %v1242 = vadd.f32 0.0, %v1241
      %v1243 = vpop.f32.mrf.mxu0
      %v1244 = vadd.f32 0.0, %v1243
      %1245 = vmatmul.bf16.gmra.mxu0 %v1148
      %v1246 = vpop.f32.mrf.mxu0
      %v1247 = vadd.f32 0.0, %v1246
      %v1248 = vpop.f32.mrf.mxu0
      %v1249 = vadd.f32 0.0, %v1248
      %1250 = vdwg.mxu0
      %v1251 = vadd.f32 %v1149, %v1232
      %v1252 = vadd.f32 %v1150, %v1234
      %v1253 = vadd.f32 %v1151, %v1237
      %v1254 = vadd.f32 %v1152, %v1239
      %v1255 = vadd.f32 %v1153, %v1242
      %v1256 = vadd.f32 %v1154, %v1244
      %v1257 = vadd.f32 %v1155, %v1247
      %v1258 = vadd.f32 %v1156, %v1249
      %1259 = vst [vmem:[#allocation2] sm:$0xff] %v1251
      %1260 = vst [vmem:[#allocation2 + $0x8] sm:$0xff] %v1252
      %1261 = vst [vmem:[#allocation2 + $0x10] sm:$0xff] %v1253
      %1262 = vst [vmem:[#allocation2 + $0x18] sm:$0xff] %v1254
      %1263 = vst [vmem:[#allocation2 + $0x20] sm:$0xff] %v1255
      %1264 = vst [vmem:[#allocation2 + $0x28] sm:$0xff] %v1256
      %1265 = vst [vmem:[#allocation2 + $0x30] sm:$0xff] %v1257
      %1266 = vst [vmem:[#allocation2 + $0x38] sm:$0xff] %v1258
      %s1267 = scalar_lea.vmem %s380, 432
      %v1268 = vld [vmem:[%s1267] sm:$0xff]
      %v1269 = vld [vmem:[%s1267 + $0x10] sm:$0xff]
      %v1270 = vld [vmem:[%s1267 + $0x20] sm:$0xff]
      %v1271 = vld [vmem:[%s1267 + $0x30] sm:$0xff]
      %v1272 = vld [vmem:[%s1267 + $0x40] sm:$0xff]
      %v1273 = vld [vmem:[%s1267 + $0x50] sm:$0xff]
      %v1274 = vld [vmem:[%s1267 + $0x60] sm:$0xff]
      %v1275 = vld [vmem:[%s1267 + $0x70] sm:$0xff]
      %s1276 = scalar_lea.vmem %s1, 432
      %v1277 = vld [vmem:[%s1276] sm:$0xff]
      %v1278 = vld [vmem:[%s1276 + $0x10] sm:$0xff]
      %v1279 = vld [vmem:[%s1276 + $0x20] sm:$0xff]
      %v1280 = vld [vmem:[%s1276 + $0x30] sm:$0xff]
      %v1281 = vld [vmem:[%s1276 + $0x40] sm:$0xff]
      %v1282 = vld [vmem:[%s1276 + $0x50] sm:$0xff]
      %v1283 = vld [vmem:[%s1276 + $0x60] sm:$0xff]
      %v1284 = vld [vmem:[%s1276 + $0x70] sm:$0xff]
      %v1285 = vmul.f32 %v1268, %v435
      %v1286 = vmul.f32 %v1269, %v435
      %v1287 = vmul.f32 %v1270, %v435
      %v1288 = vmul.f32 %v1271, %v435
      %v1289 = vmul.f32 %v1272, %v435
      %v1290 = vmul.f32 %v1273, %v435
      %v1291 = vmul.f32 %v1274, %v435
      %v1292 = vmul.f32 %v1275, %v435
      %v1293 = vadd.f32 %v1285, %v446
      %v1294 = vadd.f32 %v1286, %v446
      %v1295 = vadd.f32 %v1287, %v446
      %v1296 = vadd.f32 %v1288, %v446
      %v1297 = vadd.f32 %v1289, %v446
      %v1298 = vadd.f32 %v1290, %v446
      %v1299 = vadd.f32 %v1291, %v446
      %v1300 = vadd.f32 %v1292, %v446
      %v1301 = vmax.f32 %v1293, 0.0
      %v1302 = vmax.f32 %v1294, 0.0
      %v1303 = vmax.f32 %v1295, 0.0
      %v1304 = vmax.f32 %v1296, 0.0
      %v1305 = vmax.f32 %v1297, 0.0
      %v1306 = vmax.f32 %v1298, 0.0
      %v1307 = vmax.f32 %v1299, 0.0
      %v1308 = vmax.f32 %v1300, 0.0
      %1310 = vset.pattern.permute.xlu0 0
      %1311 = vperm.xlu0 %1310, %v1277
      %v1312 = vpop.permute.xlu0 %1311
      %1315 = vset.pattern.permute.xlu0 0
      %1316 = vperm.xlu0 %1315, %v1278
      %v1317 = vpop.permute.xlu0 %1316
      %1320 = vset.pattern.permute.xlu0 0
      %1321 = vperm.xlu0 %1320, %v1279
      %v1322 = vpop.permute.xlu0 %1321
      %1325 = vset.pattern.permute.xlu0 0
      %1326 = vperm.xlu0 %1325, %v1280
      %v1327 = vpop.permute.xlu0 %1326
      %1330 = vset.pattern.permute.xlu0 0
      %1331 = vperm.xlu0 %1330, %v1281
      %v1332 = vpop.permute.xlu0 %1331
      %1335 = vset.pattern.permute.xlu0 0
      %1336 = vperm.xlu0 %1335, %v1282
      %v1337 = vpop.permute.xlu0 %1336
      %1340 = vset.pattern.permute.xlu0 0
      %1341 = vperm.xlu0 %1340, %v1283
      %v1342 = vpop.permute.xlu0 %1341
      %1345 = vset.pattern.permute.xlu0 0
      %1346 = vperm.xlu0 %1345, %v1284
      %v1347 = vpop.permute.xlu0 %1346
      %v1349 = vmul.f32 %v1301, %v1312
      %v1350 = vmul.f32 %v1302, %v1317
      %v1351 = vmul.f32 %v1303, %v1322
      %v1352 = vmul.f32 %v1304, %v1327
      %v1353 = vmul.f32 %v1305, %v1332
      %v1354 = vmul.f32 %v1306, %v1337
      %v1355 = vmul.f32 %v1307, %v1342
      %v1356 = vmul.f32 %v1308, %v1347
      %v1357 = vpack.c.bf16 %v1350, %v1349
      %v1358 = vpack.c.bf16 %v1352, %v1351
      %v1359 = vpack.c.bf16 %v1354, %v1353
      %v1360 = vpack.c.bf16 %v1356, %v1355
      %v1361 = vld [vmem:[#allocation2] sm:$0xff]
      %v1362 = vld [vmem:[#allocation2 + $0x8] sm:$0xff]
      %v1363 = vld [vmem:[#allocation2 + $0x10] sm:$0xff]
      %v1364 = vld [vmem:[#allocation2 + $0x18] sm:$0xff]
      %v1365 = vld [vmem:[#allocation2 + $0x20] sm:$0xff]
      %v1366 = vld [vmem:[#allocation2 + $0x28] sm:$0xff]
      %v1367 = vld [vmem:[#allocation2 + $0x30] sm:$0xff]
      %v1368 = vld [vmem:[#allocation2 + $0x38] sm:$0xff]
      %s1369 = scalar_lea.vmem %s386, 256
      %v1370 = vld [vmem:[%s1369] sm:$0xf]
      %v1371 = vld [vmem:[%s1369 + $0x4] sm:$0xf]
      %v1372 = vld [vmem:[%s1369 + $0x8] sm:$0xf]
      %v1373 = vld [vmem:[%s1369 + $0xc] sm:$0xf]
      %v1374 = vld [vmem:[%s1369 + $0x10] sm:$0xf]
      %v1375 = vld [vmem:[%s1369 + $0x14] sm:$0xf]
      %v1376 = vld [vmem:[%s1369 + $0x18] sm:$0xf]
      %v1377 = vld [vmem:[%s1369 + $0x1c] sm:$0xf]
      %v1378 = vld [vmem:[%s1369 + $0x20] sm:$0xf]
      %v1379 = vld [vmem:[%s1369 + $0x24] sm:$0xf]
      %v1380 = vld [vmem:[%s1369 + $0x28] sm:$0xf]
      %v1381 = vld [vmem:[%s1369 + $0x2c] sm:$0xf]
      %v1382 = vld [vmem:[%s1369 + $0x30] sm:$0xf]
      %v1383 = vld [vmem:[%s1369 + $0x34] sm:$0xf]
      %v1384 = vld [vmem:[%s1369 + $0x38] sm:$0xf]
      %v1385 = vld [vmem:[%s1369 + $0x3c] sm:$0xf]
      %v1402 = vunpack.c.l.b16 %v1370
      %v1403 = vunpack.c.l.b16 %v1371
      %v1404 = vunpack.c.l.b16 %v1372
      %v1405 = vunpack.c.l.b16 %v1373
      %v1406 = vunpack.c.l.b16 %v1374
      %v1407 = vunpack.c.l.b16 %v1375
      %v1408 = vunpack.c.l.b16 %v1376
      %v1409 = vunpack.c.l.b16 %v1377
      %v1410 = vunpack.c.l.b16 %v1378
      %v1411 = vunpack.c.l.b16 %v1379
      %v1412 = vunpack.c.l.b16 %v1380
      %v1413 = vunpack.c.l.b16 %v1381
      %v1414 = vunpack.c.l.b16 %v1382
      %v1415 = vunpack.c.l.b16 %v1383
      %v1416 = vunpack.c.l.b16 %v1384
      %v1417 = vunpack.c.l.b16 %v1385
      %v1418 = vpack.c.b16 %v1403, %v1402
      %v1419 = vpack.c.b16 %v1405, %v1404
      %v1420 = vpack.c.b16 %v1407, %v1406
      %v1421 = vpack.c.b16 %v1409, %v1408
      %v1422 = vpack.c.b16 %v1411, %v1410
      %v1423 = vpack.c.b16 %v1413, %v1412
      %v1424 = vpack.c.b16 %v1415, %v1414
      %v1425 = vpack.c.b16 %v1417, %v1416
      %1434 = vmatpush.bf16.msra.mxu0 %v1425
      %1435 = vmatpush.bf16.msra.mxu0 %v1424
      %1436 = vmatpush.bf16.msra.mxu0 %v1423
      %1437 = vmatpush.bf16.msra.mxu0 %v1422
      %1438 = vmatpush.bf16.msra.mxu0 %v1421
      %1439 = vmatpush.bf16.msra.mxu0 %v1420
      %1440 = vmatpush.bf16.msra.mxu0 %v1419
      %1441 = vmatpush.bf16.msra.mxu0 %v1418
      %1442 = vmatmul.bf16.gmra.mxu0 %v1357
      %v1443 = vpop.f32.mrf.mxu0
      %v1444 = vadd.f32 0.0, %v1443
      %v1445 = vpop.f32.mrf.mxu0
      %v1446 = vadd.f32 0.0, %v1445
      %1447 = vmatmul.bf16.gmra.mxu0 %v1358
      %v1448 = vpop.f32.mrf.mxu0
      %v1449 = vadd.f32 0.0, %v1448
      %v1450 = vpop.f32.mrf.mxu0
      %v1451 = vadd.f32 0.0, %v1450
      %1452 = vmatmul.bf16.gmra.mxu0 %v1359
      %v1453 = vpop.f32.mrf.mxu0
      %v1454 = vadd.f32 0.0, %v1453
      %v1455 = vpop.f32.mrf.mxu0
      %v1456 = vadd.f32 0.0, %v1455
      %1457 = vmatmul.bf16.gmra.mxu0 %v1360
      %v1458 = vpop.f32.mrf.mxu0
      %v1459 = vadd.f32 0.0, %v1458
      %v1460 = vpop.f32.mrf.mxu0
      %v1461 = vadd.f32 0.0, %v1460
      %1462 = vdwg.mxu0
      %v1463 = vadd.f32 %v1361, %v1444
      %v1464 = vadd.f32 %v1362, %v1446
      %v1465 = vadd.f32 %v1363, %v1449
      %v1466 = vadd.f32 %v1364, %v1451
      %v1467 = vadd.f32 %v1365, %v1454
      %v1468 = vadd.f32 %v1366, %v1456
      %v1469 = vadd.f32 %v1367, %v1459
      %v1470 = vadd.f32 %v1368, %v1461
      %1471 = vst [vmem:[#allocation2] sm:$0xff] %v1463
      %1472 = vst [vmem:[#allocation2 + $0x8] sm:$0xff] %v1464
      %1473 = vst [vmem:[#allocation2 + $0x10] sm:$0xff] %v1465
      %1474 = vst [vmem:[#allocation2 + $0x18] sm:$0xff] %v1466
      %1475 = vst [vmem:[#allocation2 + $0x20] sm:$0xff] %v1467
      %1476 = vst [vmem:[#allocation2 + $0x28] sm:$0xff] %v1468
      %1477 = vst [vmem:[#allocation2 + $0x30] sm:$0xff] %v1469
      %1478 = vst [vmem:[#allocation2 + $0x38] sm:$0xff] %v1470
      %v1479 = vld [vmem:[%s1055 + $0x1] sm:$0xff]
      %v1480 = vld [vmem:[%s1055 + $0x11] sm:$0xff]
      %v1481 = vld [vmem:[%s1055 + $0x21] sm:$0xff]
      %v1482 = vld [vmem:[%s1055 + $0x31] sm:$0xff]
      %v1483 = vld [vmem:[%s1055 + $0x41] sm:$0xff]
      %v1484 = vld [vmem:[%s1055 + $0x51] sm:$0xff]
      %v1485 = vld [vmem:[%s1055 + $0x61] sm:$0xff]
      %v1486 = vld [vmem:[%s1055 + $0x71] sm:$0xff]
      %v1487 = vld [vmem:[%s1064 + $0x1] sm:$0xff]
      %v1488 = vld [vmem:[%s1064 + $0x11] sm:$0xff]
      %v1489 = vld [vmem:[%s1064 + $0x21] sm:$0xff]
      %v1490 = vld [vmem:[%s1064 + $0x31] sm:$0xff]
      %v1491 = vld [vmem:[%s1064 + $0x41] sm:$0xff]
      %v1492 = vld [vmem:[%s1064 + $0x51] sm:$0xff]
      %v1493 = vld [vmem:[%s1064 + $0x61] sm:$0xff]
      %v1494 = vld [vmem:[%s1064 + $0x71] sm:$0xff]
      %v1495 = vmul.f32 %v1479, %v435
      %v1496 = vmul.f32 %v1480, %v435
      %v1497 = vmul.f32 %v1481, %v435
      %v1498 = vmul.f32 %v1482, %v435
      %v1499 = vmul.f32 %v1483, %v435
      %v1500 = vmul.f32 %v1484, %v435
      %v1501 = vmul.f32 %v1485, %v435
      %v1502 = vmul.f32 %v1486, %v435
      %v1503 = vadd.f32 %v1495, %v446
      %v1504 = vadd.f32 %v1496, %v446
      %v1505 = vadd.f32 %v1497, %v446
      %v1506 = vadd.f32 %v1498, %v446
      %v1507 = vadd.f32 %v1499, %v446
      %v1508 = vadd.f32 %v1500, %v446
      %v1509 = vadd.f32 %v1501, %v446
      %v1510 = vadd.f32 %v1502, %v446
      %v1511 = vmax.f32 %v1503, 0.0
      %v1512 = vmax.f32 %v1504, 0.0
      %v1513 = vmax.f32 %v1505, 0.0
      %v1514 = vmax.f32 %v1506, 0.0
      %v1515 = vmax.f32 %v1507, 0.0
      %v1516 = vmax.f32 %v1508, 0.0
      %v1517 = vmax.f32 %v1509, 0.0
      %v1518 = vmax.f32 %v1510, 0.0
      %1520 = vset.pattern.permute.xlu0 0
      %1521 = vperm.xlu0 %1520, %v1487
      %v1522 = vpop.permute.xlu0 %1521
      %1525 = vset.pattern.permute.xlu0 0
      %1526 = vperm.xlu0 %1525, %v1488
      %v1527 = vpop.permute.xlu0 %1526
      %1530 = vset.pattern.permute.xlu0 0
      %1531 = vperm.xlu0 %1530, %v1489
      %v1532 = vpop.permute.xlu0 %1531
      %1535 = vset.pattern.permute.xlu0 0
      %1536 = vperm.xlu0 %1535, %v1490
      %v1537 = vpop.permute.xlu0 %1536
      %1540 = vset.pattern.permute.xlu0 0
      %1541 = vperm.xlu0 %1540, %v1491
      %v1542 = vpop.permute.xlu0 %1541
      %1545 = vset.pattern.permute.xlu0 0
      %1546 = vperm.xlu0 %1545, %v1492
      %v1547 = vpop.permute.xlu0 %1546
      %1550 = vset.pattern.permute.xlu0 0
      %1551 = vperm.xlu0 %1550, %v1493
      %v1552 = vpop.permute.xlu0 %1551
      %1555 = vset.pattern.permute.xlu0 0
      %1556 = vperm.xlu0 %1555, %v1494
      %v1557 = vpop.permute.xlu0 %1556
      %v1559 = vmul.f32 %v1511, %v1522
      %v1560 = vmul.f32 %v1512, %v1527
      %v1561 = vmul.f32 %v1513, %v1532
      %v1562 = vmul.f32 %v1514, %v1537
      %v1563 = vmul.f32 %v1515, %v1542
      %v1564 = vmul.f32 %v1516, %v1547
      %v1565 = vmul.f32 %v1517, %v1552
      %v1566 = vmul.f32 %v1518, %v1557
      %v1567 = vpack.c.bf16 %v1560, %v1559
      %v1568 = vpack.c.bf16 %v1562, %v1561
      %v1569 = vpack.c.bf16 %v1564, %v1563
      %v1570 = vpack.c.bf16 %v1566, %v1565
      %v1571 = vld [vmem:[#allocation2] sm:$0xff]
      %v1572 = vld [vmem:[#allocation2 + $0x8] sm:$0xff]
      %v1573 = vld [vmem:[#allocation2 + $0x10] sm:$0xff]
      %v1574 = vld [vmem:[#allocation2 + $0x18] sm:$0xff]
      %v1575 = vld [vmem:[#allocation2 + $0x20] sm:$0xff]
      %v1576 = vld [vmem:[#allocation2 + $0x28] sm:$0xff]
      %v1577 = vld [vmem:[#allocation2 + $0x30] sm:$0xff]
      %v1578 = vld [vmem:[#allocation2 + $0x38] sm:$0xff]
      %s1579 = scalar_lea.vmem %s386, 320
      %v1580 = vld [vmem:[%s1579] sm:$0xf]
      %v1581 = vld [vmem:[%s1579 + $0x4] sm:$0xf]
      %v1582 = vld [vmem:[%s1579 + $0x8] sm:$0xf]
      %v1583 = vld [vmem:[%s1579 + $0xc] sm:$0xf]
      %v1584 = vld [vmem:[%s1579 + $0x10] sm:$0xf]
      %v1585 = vld [vmem:[%s1579 + $0x14] sm:$0xf]
      %v1586 = vld [vmem:[%s1579 + $0x18] sm:$0xf]
      %v1587 = vld [vmem:[%s1579 + $0x1c] sm:$0xf]
      %v1588 = vld [vmem:[%s1579 + $0x20] sm:$0xf]
      %v1589 = vld [vmem:[%s1579 + $0x24] sm:$0xf]
      %v1590 = vld [vmem:[%s1579 + $0x28] sm:$0xf]
      %v1591 = vld [vmem:[%s1579 + $0x2c] sm:$0xf]
      %v1592 = vld [vmem:[%s1579 + $0x30] sm:$0xf]
      %v1593 = vld [vmem:[%s1579 + $0x34] sm:$0xf]
      %v1594 = vld [vmem:[%s1579 + $0x38] sm:$0xf]
      %v1595 = vld [vmem:[%s1579 + $0x3c] sm:$0xf]
      %v1612 = vunpack.c.l.b16 %v1580
      %v1613 = vunpack.c.l.b16 %v1581
      %v1614 = vunpack.c.l.b16 %v1582
      %v1615 = vunpack.c.l.b16 %v1583
      %v1616 = vunpack.c.l.b16 %v1584
      %v1617 = vunpack.c.l.b16 %v1585
      %v1618 = vunpack.c.l.b16 %v1586
      %v1619 = vunpack.c.l.b16 %v1587
      %v1620 = vunpack.c.l.b16 %v1588
      %v1621 = vunpack.c.l.b16 %v1589
      %v1622 = vunpack.c.l.b16 %v1590
      %v1623 = vunpack.c.l.b16 %v1591
      %v1624 = vunpack.c.l.b16 %v1592
      %v1625 = vunpack.c.l.b16 %v1593
      %v1626 = vunpack.c.l.b16 %v1594
      %v1627 = vunpack.c.l.b16 %v1595
      %v1628 = vpack.c.b16 %v1613, %v1612
      %v1629 = vpack.c.b16 %v1615, %v1614
      %v1630 = vpack.c.b16 %v1617, %v1616
      %v1631 = vpack.c.b16 %v1619, %v1618
      %v1632 = vpack.c.b16 %v1621, %v1620
      %v1633 = vpack.c.b16 %v1623, %v1622
      %v1634 = vpack.c.b16 %v1625, %v1624
      %v1635 = vpack.c.b16 %v1627, %v1626
      %1644 = vmatpush.bf16.msra.mxu0 %v1635
      %1645 = vmatpush.bf16.msra.mxu0 %v1634
      %1646 = vmatpush.bf16.msra.mxu0 %v1633
      %1647 = vmatpush.bf16.msra.mxu0 %v1632
      %1648 = vmatpush.bf16.msra.mxu0 %v1631
      %1649 = vmatpush.bf16.msra.mxu0 %v1630
      %1650 = vmatpush.bf16.msra.mxu0 %v1629
      %1651 = vmatpush.bf16.msra.mxu0 %v1628
      %1652 = vmatmul.bf16.gmra.mxu0 %v1567
      %v1653 = vpop.f32.mrf.mxu0
      %v1654 = vadd.f32 0.0, %v1653
      %v1655 = vpop.f32.mrf.mxu0
      %v1656 = vadd.f32 0.0, %v1655
      %1657 = vmatmul.bf16.gmra.mxu0 %v1568
      %v1658 = vpop.f32.mrf.mxu0
      %v1659 = vadd.f32 0.0, %v1658
      %v1660 = vpop.f32.mrf.mxu0
      %v1661 = vadd.f32 0.0, %v1660
      %1662 = vmatmul.bf16.gmra.mxu0 %v1569
      %v1663 = vpop.f32.mrf.mxu0
      %v1664 = vadd.f32 0.0, %v1663
      %v1665 = vpop.f32.mrf.mxu0
      %v1666 = vadd.f32 0.0, %v1665
      %1667 = vmatmul.bf16.gmra.mxu0 %v1570
      %v1668 = vpop.f32.mrf.mxu0
      %v1669 = vadd.f32 0.0, %v1668
      %v1670 = vpop.f32.mrf.mxu0
      %v1671 = vadd.f32 0.0, %v1670
      %1672 = vdwg.mxu0
      %v1673 = vadd.f32 %v1571, %v1654
      %v1674 = vadd.f32 %v1572, %v1656
      %v1675 = vadd.f32 %v1573, %v1659
      %v1676 = vadd.f32 %v1574, %v1661
      %v1677 = vadd.f32 %v1575, %v1664
      %v1678 = vadd.f32 %v1576, %v1666
      %v1679 = vadd.f32 %v1577, %v1669
      %v1680 = vadd.f32 %v1578, %v1671
      %1681 = vst [vmem:[#allocation2] sm:$0xff] %v1673
      %1682 = vst [vmem:[#allocation2 + $0x8] sm:$0xff] %v1674
      %1683 = vst [vmem:[#allocation2 + $0x10] sm:$0xff] %v1675
      %1684 = vst [vmem:[#allocation2 + $0x18] sm:$0xff] %v1676
      %1685 = vst [vmem:[#allocation2 + $0x20] sm:$0xff] %v1677
      %1686 = vst [vmem:[#allocation2 + $0x28] sm:$0xff] %v1678
      %1687 = vst [vmem:[#allocation2 + $0x30] sm:$0xff] %v1679
      %1688 = vst [vmem:[#allocation2 + $0x38] sm:$0xff] %v1680
      %s1689 = scalar_lea.vmem %s380, 16
      %v1690 = vld [vmem:[%s1689] sm:$0xff]
      %v1691 = vld [vmem:[%s1689 + $0x10] sm:$0xff]
      %v1692 = vld [vmem:[%s1689 + $0x20] sm:$0xff]
      %v1693 = vld [vmem:[%s1689 + $0x30] sm:$0xff]
      %v1694 = vld [vmem:[%s1689 + $0x40] sm:$0xff]
      %v1695 = vld [vmem:[%s1689 + $0x50] sm:$0xff]
      %v1696 = vld [vmem:[%s1689 + $0x60] sm:$0xff]
      %v1697 = vld [vmem:[%s1689 + $0x70] sm:$0xff]
      %s1698 = scalar_lea.vmem %s1, 16
      %v1699 = vld [vmem:[%s1698] sm:$0xff]
      %v1700 = vld [vmem:[%s1698 + $0x10] sm:$0xff]
      %v1701 = vld [vmem:[%s1698 + $0x20] sm:$0xff]
      %v1702 = vld [vmem:[%s1698 + $0x30] sm:$0xff]
      %v1703 = vld [vmem:[%s1698 + $0x40] sm:$0xff]
      %v1704 = vld [vmem:[%s1698 + $0x50] sm:$0xff]
      %v1705 = vld [vmem:[%s1698 + $0x60] sm:$0xff]
      %v1706 = vld [vmem:[%s1698 + $0x70] sm:$0xff]
      %v1707 = vmul.f32 %v1690, %v435
      %v1708 = vmul.f32 %v1691, %v435
      %v1709 = vmul.f32 %v1692, %v435
      %v1710 = vmul.f32 %v1693, %v435
      %v1711 = vmul.f32 %v1694, %v435
      %v1712 = vmul.f32 %v1695, %v435
      %v1713 = vmul.f32 %v1696, %v435
      %v1714 = vmul.f32 %v1697, %v435
      %v1715 = vadd.f32 %v1707, %v446
      %v1716 = vadd.f32 %v1708, %v446
      %v1717 = vadd.f32 %v1709, %v446
      %v1718 = vadd.f32 %v1710, %v446
      %v1719 = vadd.f32 %v1711, %v446
      %v1720 = vadd.f32 %v1712, %v446
      %v1721 = vadd.f32 %v1713, %v446
      %v1722 = vadd.f32 %v1714, %v446
      %v1723 = vmax.f32 %v1715, 0.0
      %v1724 = vmax.f32 %v1716, 0.0
      %v1725 = vmax.f32 %v1717, 0.0
      %v1726 = vmax.f32 %v1718, 0.0
      %v1727 = vmax.f32 %v1719, 0.0
      %v1728 = vmax.f32 %v1720, 0.0
      %v1729 = vmax.f32 %v1721, 0.0
      %v1730 = vmax.f32 %v1722, 0.0
      %1732 = vset.pattern.permute.xlu0 0
      %1733 = vperm.xlu0 %1732, %v1699
      %v1734 = vpop.permute.xlu0 %1733
      %1737 = vset.pattern.permute.xlu0 0
      %1738 = vperm.xlu0 %1737, %v1700
      %v1739 = vpop.permute.xlu0 %1738
      %1742 = vset.pattern.permute.xlu0 0
      %1743 = vperm.xlu0 %1742, %v1701
      %v1744 = vpop.permute.xlu0 %1743
      %1747 = vset.pattern.permute.xlu0 0
      %1748 = vperm.xlu0 %1747, %v1702
      %v1749 = vpop.permute.xlu0 %1748
      %1752 = vset.pattern.permute.xlu0 0
      %1753 = vperm.xlu0 %1752, %v1703
      %v1754 = vpop.permute.xlu0 %1753
      %1757 = vset.pattern.permute.xlu0 0
      %1758 = vperm.xlu0 %1757, %v1704
      %v1759 = vpop.permute.xlu0 %1758
      %1762 = vset.pattern.permute.xlu0 0
      %1763 = vperm.xlu0 %1762, %v1705
      %v1764 = vpop.permute.xlu0 %1763
      %1767 = vset.pattern.permute.xlu0 0
      %1768 = vperm.xlu0 %1767, %v1706
      %v1769 = vpop.permute.xlu0 %1768
      %v1771 = vmul.f32 %v1723, %v1734
      %v1772 = vmul.f32 %v1724, %v1739
      %v1773 = vmul.f32 %v1725, %v1744
      %v1774 = vmul.f32 %v1726, %v1749
      %v1775 = vmul.f32 %v1727, %v1754
      %v1776 = vmul.f32 %v1728, %v1759
      %v1777 = vmul.f32 %v1729, %v1764
      %v1778 = vmul.f32 %v1730, %v1769
      %v1779 = vpack.c.bf16 %v1772, %v1771
      %v1780 = vpack.c.bf16 %v1774, %v1773
      %v1781 = vpack.c.bf16 %v1776, %v1775
      %v1782 = vpack.c.bf16 %v1778, %v1777
      %v1783 = vld [vmem:[#allocation2] sm:$0xff]
      %v1784 = vld [vmem:[#allocation2 + $0x8] sm:$0xff]
      %v1785 = vld [vmem:[#allocation2 + $0x10] sm:$0xff]
      %v1786 = vld [vmem:[#allocation2 + $0x18] sm:$0xff]
      %v1787 = vld [vmem:[#allocation2 + $0x20] sm:$0xff]
      %v1788 = vld [vmem:[#allocation2 + $0x28] sm:$0xff]
      %v1789 = vld [vmem:[#allocation2 + $0x30] sm:$0xff]
      %v1790 = vld [vmem:[#allocation2 + $0x38] sm:$0xff]
      %s1791 = scalar_lea.vmem %s386, 384
      %v1792 = vld [vmem:[%s1791] sm:$0xf]
      %v1793 = vld [vmem:[%s1791 + $0x4] sm:$0xf]
      %v1794 = vld [vmem:[%s1791 + $0x8] sm:$0xf]
      %v1795 = vld [vmem:[%s1791 + $0xc] sm:$0xf]
      %v1796 = vld [vmem:[%s1791 + $0x10] sm:$0xf]
      %v1797 = vld [vmem:[%s1791 + $0x14] sm:$0xf]
      %v1798 = vld [vmem:[%s1791 + $0x18] sm:$0xf]
      %v1799 = vld [vmem:[%s1791 + $0x1c] sm:$0xf]
      %v1800 = vld [vmem:[%s1791 + $0x20] sm:$0xf]
      %v1801 = vld [vmem:[%s1791 + $0x24] sm:$0xf]
      %v1802 = vld [vmem:[%s1791 + $0x28] sm:$0xf]
      %v1803 = vld [vmem:[%s1791 + $0x2c] sm:$0xf]
      %v1804 = vld [vmem:[%s1791 + $0x30] sm:$0xf]
      %v1805 = vld [vmem:[%s1791 + $0x34] sm:$0xf]
      %v1806 = vld [vmem:[%s1791 + $0x38] sm:$0xf]
      %v1807 = vld [vmem:[%s1791 + $0x3c] sm:$0xf]
      %v1824 = vunpack.c.l.b16 %v1792
      %v1825 = vunpack.c.l.b16 %v1793
      %v1826 = vunpack.c.l.b16 %v1794
      %v1827 = vunpack.c.l.b16 %v1795
      %v1828 = vunpack.c.l.b16 %v1796
      %v1829 = vunpack.c.l.b16 %v1797
      %v1830 = vunpack.c.l.b16 %v1798
      %v1831 = vunpack.c.l.b16 %v1799
      %v1832 = vunpack.c.l.b16 %v1800
      %v1833 = vunpack.c.l.b16 %v1801
      %v1834 = vunpack.c.l.b16 %v1802
      %v1835 = vunpack.c.l.b16 %v1803
      %v1836 = vunpack.c.l.b16 %v1804
      %v1837 = vunpack.c.l.b16 %v1805
      %v1838 = vunpack.c.l.b16 %v1806
      %v1839 = vunpack.c.l.b16 %v1807
      %v1840 = vpack.c.b16 %v1825, %v1824
      %v1841 = vpack.c.b16 %v1827, %v1826
      %v1842 = vpack.c.b16 %v1829, %v1828
      %v1843 = vpack.c.b16 %v1831, %v1830
      %v1844 = vpack.c.b16 %v1833, %v1832
      %v1845 = vpack.c.b16 %v1835, %v1834
      %v1846 = vpack.c.b16 %v1837, %v1836
      %v1847 = vpack.c.b16 %v1839, %v1838
      %1856 = vmatpush.bf16.msra.mxu0 %v1847
      %1857 = vmatpush.bf16.msra.mxu0 %v1846
      %1858 = vmatpush.bf16.msra.mxu0 %v1845
      %1859 = vmatpush.bf16.msra.mxu0 %v1844
      %1860 = vmatpush.bf16.msra.mxu0 %v1843
      %1861 = vmatpush.bf16.msra.mxu0 %v1842
      %1862 = vmatpush.bf16.msra.mxu0 %v1841
      %1863 = vmatpush.bf16.msra.mxu0 %v1840
      %1864 = vmatmul.bf16.gmra.mxu0 %v1779
      %v1865 = vpop.f32.mrf.mxu0
      %v1866 = vadd.f32 0.0, %v1865
      %v1867 = vpop.f32.mrf.mxu0
      %v1868 = vadd.f32 0.0, %v1867
      %1869 = vmatmul.bf16.gmra.mxu0 %v1780
      %v1870 = vpop.f32.mrf.mxu0
      %v1871 = vadd.f32 0.0, %v1870
      %v1872 = vpop.f32.mrf.mxu0
      %v1873 = vadd.f32 0.0, %v1872
      %1874 = vmatmul.bf16.gmra.mxu0 %v1781
      %v1875 = vpop.f32.mrf.mxu0
      %v1876 = vadd.f32 0.0, %v1875
      %v1877 = vpop.f32.mrf.mxu0
      %v1878 = vadd.f32 0.0, %v1877
      %1879 = vmatmul.bf16.gmra.mxu0 %v1782
      %v1880 = vpop.f32.mrf.mxu0
      %v1881 = vadd.f32 0.0, %v1880
      %v1882 = vpop.f32.mrf.mxu0
      %v1883 = vadd.f32 0.0, %v1882
      %1884 = vdwg.mxu0
      %v1885 = vadd.f32 %v1783, %v1866
      %v1886 = vadd.f32 %v1784, %v1868
      %v1887 = vadd.f32 %v1785, %v1871
      %v1888 = vadd.f32 %v1786, %v1873
      %v1889 = vadd.f32 %v1787, %v1876
      %v1890 = vadd.f32 %v1788, %v1878
      %v1891 = vadd.f32 %v1789, %v1881
      %v1892 = vadd.f32 %v1790, %v1883
      %1893 = vst [vmem:[#allocation2] sm:$0xff] %v1885
      %1894 = vst [vmem:[#allocation2 + $0x8] sm:$0xff] %v1886
      %1895 = vst [vmem:[#allocation2 + $0x10] sm:$0xff] %v1887
      %1896 = vst [vmem:[#allocation2 + $0x18] sm:$0xff] %v1888
      %1897 = vst [vmem:[#allocation2 + $0x20] sm:$0xff] %v1889
      %1898 = vst [vmem:[#allocation2 + $0x28] sm:$0xff] %v1890
      %1899 = vst [vmem:[#allocation2 + $0x30] sm:$0xff] %v1891
      %1900 = vst [vmem:[#allocation2 + $0x38] sm:$0xff] %v1892
      %s1901 = scalar_lea.vmem %s380, 160
      %v1902 = vld [vmem:[%s1901] sm:$0xff]
      %v1903 = vld [vmem:[%s1901 + $0x10] sm:$0xff]
      %v1904 = vld [vmem:[%s1901 + $0x20] sm:$0xff]
      %v1905 = vld [vmem:[%s1901 + $0x30] sm:$0xff]
      %v1906 = vld [vmem:[%s1901 + $0x40] sm:$0xff]
      %v1907 = vld [vmem:[%s1901 + $0x50] sm:$0xff]
      %v1908 = vld [vmem:[%s1901 + $0x60] sm:$0xff]
      %v1909 = vld [vmem:[%s1901 + $0x70] sm:$0xff]
      %s1910 = scalar_lea.vmem %s1, 160
      %v1911 = vld [vmem:[%s1910] sm:$0xff]
      %v1912 = vld [vmem:[%s1910 + $0x10] sm:$0xff]
      %v1913 = vld [vmem:[%s1910 + $0x20] sm:$0xff]
      %v1914 = vld [vmem:[%s1910 + $0x30] sm:$0xff]
      %v1915 = vld [vmem:[%s1910 + $0x40] sm:$0xff]
      %v1916 = vld [vmem:[%s1910 + $0x50] sm:$0xff]
      %v1917 = vld [vmem:[%s1910 + $0x60] sm:$0xff]
      %v1918 = vld [vmem:[%s1910 + $0x70] sm:$0xff]
      %v1919 = vmul.f32 %v1902, %v435
      %v1920 = vmul.f32 %v1903, %v435
      %v1921 = vmul.f32 %v1904, %v435
      %v1922 = vmul.f32 %v1905, %v435
      %v1923 = vmul.f32 %v1906, %v435
      %v1924 = vmul.f32 %v1907, %v435
      %v1925 = vmul.f32 %v1908, %v435
      %v1926 = vmul.f32 %v1909, %v435
      %v1927 = vadd.f32 %v1919, %v446
      %v1928 = vadd.f32 %v1920, %v446
      %v1929 = vadd.f32 %v1921, %v446
      %v1930 = vadd.f32 %v1922, %v446
      %v1931 = vadd.f32 %v1923, %v446
      %v1932 = vadd.f32 %v1924, %v446
      %v1933 = vadd.f32 %v1925, %v446
      %v1934 = vadd.f32 %v1926, %v446
      %v1935 = vmax.f32 %v1927, 0.0
      %v1936 = vmax.f32 %v1928, 0.0
      %v1937 = vmax.f32 %v1929, 0.0
      %v1938 = vmax.f32 %v1930, 0.0
      %v1939 = vmax.f32 %v1931, 0.0
      %v1940 = vmax.f32 %v1932, 0.0
      %v1941 = vmax.f32 %v1933, 0.0
      %v1942 = vmax.f32 %v1934, 0.0
      %1944 = vset.pattern.permute.xlu0 0
      %1945 = vperm.xlu0 %1944, %v1911
      %v1946 = vpop.permute.xlu0 %1945
      %1949 = vset.pattern.permute.xlu0 0
      %1950 = vperm.xlu0 %1949, %v1912
      %v1951 = vpop.permute.xlu0 %1950
      %1954 = vset.pattern.permute.xlu0 0
      %1955 = vperm.xlu0 %1954, %v1913
      %v1956 = vpop.permute.xlu0 %1955
      %1959 = vset.pattern.permute.xlu0 0
      %1960 = vperm.xlu0 %1959, %v1914
      %v1961 = vpop.permute.xlu0 %1960
      %1964 = vset.pattern.permute.xlu0 0
      %1965 = vperm.xlu0 %1964, %v1915
      %v1966 = vpop.permute.xlu0 %1965
      %1969 = vset.pattern.permute.xlu0 0
      %1970 = vperm.xlu0 %1969, %v1916
      %v1971 = vpop.permute.xlu0 %1970
      %1974 = vset.pattern.permute.xlu0 0
      %1975 = vperm.xlu0 %1974, %v1917
      %v1976 = vpop.permute.xlu0 %1975
      %1979 = vset.pattern.permute.xlu0 0
      %1980 = vperm.xlu0 %1979, %v1918
      %v1981 = vpop.permute.xlu0 %1980
      %v1983 = vmul.f32 %v1935, %v1946
      %v1984 = vmul.f32 %v1936, %v1951
      %v1985 = vmul.f32 %v1937, %v1956
      %v1986 = vmul.f32 %v1938, %v1961
      %v1987 = vmul.f32 %v1939, %v1966
      %v1988 = vmul.f32 %v1940, %v1971
      %v1989 = vmul.f32 %v1941, %v1976
      %v1990 = vmul.f32 %v1942, %v1981
      %v1991 = vpack.c.bf16 %v1984, %v1983
      %v1992 = vpack.c.bf16 %v1986, %v1985
      %v1993 = vpack.c.bf16 %v1988, %v1987
      %v1994 = vpack.c.bf16 %v1990, %v1989
      %v1995 = vld [vmem:[#allocation2] sm:$0xff]
      %v1996 = vld [vmem:[#allocation2 + $0x8] sm:$0xff]
      %v1997 = vld [vmem:[#allocation2 + $0x10] sm:$0xff]
      %v1998 = vld [vmem:[#allocation2 + $0x18] sm:$0xff]
      %v1999 = vld [vmem:[#allocation2 + $0x20] sm:$0xff]
      %v2000 = vld [vmem:[#allocation2 + $0x28] sm:$0xff]
      %v2001 = vld [vmem:[#allocation2 + $0x30] sm:$0xff]
      %v2002 = vld [vmem:[#allocation2 + $0x38] sm:$0xff]
      %s2003 = scalar_lea.vmem %s386, 448
      %v2004 = vld [vmem:[%s2003] sm:$0xf]
      %v2005 = vld [vmem:[%s2003 + $0x4] sm:$0xf]
      %v2006 = vld [vmem:[%s2003 + $0x8] sm:$0xf]
      %v2007 = vld [vmem:[%s2003 + $0xc] sm:$0xf]
      %v2008 = vld [vmem:[%s2003 + $0x10] sm:$0xf]
      %v2009 = vld [vmem:[%s2003 + $0x14] sm:$0xf]
      %v2010 = vld [vmem:[%s2003 + $0x18] sm:$0xf]
      %v2011 = vld [vmem:[%s2003 + $0x1c] sm:$0xf]
      %v2012 = vld [vmem:[%s2003 + $0x20] sm:$0xf]
      %v2013 = vld [vmem:[%s2003 + $0x24] sm:$0xf]
      %v2014 = vld [vmem:[%s2003 + $0x28] sm:$0xf]
      %v2015 = vld [vmem:[%s2003 + $0x2c] sm:$0xf]
      %v2016 = vld [vmem:[%s2003 + $0x30] sm:$0xf]
      %v2017 = vld [vmem:[%s2003 + $0x34] sm:$0xf]
      %v2018 = vld [vmem:[%s2003 + $0x38] sm:$0xf]
      %v2019 = vld [vmem:[%s2003 + $0x3c] sm:$0xf]
      %v2036 = vunpack.c.l.b16 %v2004
      %v2037 = vunpack.c.l.b16 %v2005
      %v2038 = vunpack.c.l.b16 %v2006
      %v2039 = vunpack.c.l.b16 %v2007
      %v2040 = vunpack.c.l.b16 %v2008
      %v2041 = vunpack.c.l.b16 %v2009
      %v2042 = vunpack.c.l.b16 %v2010
      %v2043 = vunpack.c.l.b16 %v2011
      %v2044 = vunpack.c.l.b16 %v2012
      %v2045 = vunpack.c.l.b16 %v2013
      %v2046 = vunpack.c.l.b16 %v2014
      %v2047 = vunpack.c.l.b16 %v2015
      %v2048 = vunpack.c.l.b16 %v2016
      %v2049 = vunpack.c.l.b16 %v2017
      %v2050 = vunpack.c.l.b16 %v2018
      %v2051 = vunpack.c.l.b16 %v2019
      %v2052 = vpack.c.b16 %v2037, %v2036
      %v2053 = vpack.c.b16 %v2039, %v2038
      %v2054 = vpack.c.b16 %v2041, %v2040
      %v2055 = vpack.c.b16 %v2043, %v2042
      %v2056 = vpack.c.b16 %v2045, %v2044
      %v2057 = vpack.c.b16 %v2047, %v2046
      %v2058 = vpack.c.b16 %v2049, %v2048
      %v2059 = vpack.c.b16 %v2051, %v2050
      %2068 = vmatpush.bf16.msra.mxu0 %v2059
      %2069 = vmatpush.bf16.msra.mxu0 %v2058
      %2070 = vmatpush.bf16.msra.mxu0 %v2057
      %2071 = vmatpush.bf16.msra.mxu0 %v2056
      %2072 = vmatpush.bf16.msra.mxu0 %v2055
      %2073 = vmatpush.bf16.msra.mxu0 %v2054
      %2074 = vmatpush.bf16.msra.mxu0 %v2053
      %2075 = vmatpush.bf16.msra.mxu0 %v2052
      %2076 = vmatmul.bf16.gmra.mxu0 %v1991
      %v2077 = vpop.f32.mrf.mxu0
      %v2078 = vadd.f32 0.0, %v2077
      %v2079 = vpop.f32.mrf.mxu0
      %v2080 = vadd.f32 0.0, %v2079
      %2081 = vmatmul.bf16.gmra.mxu0 %v1992
      %v2082 = vpop.f32.mrf.mxu0
      %v2083 = vadd.f32 0.0, %v2082
      %v2084 = vpop.f32.mrf.mxu0
      %v2085 = vadd.f32 0.0, %v2084
      %2086 = vmatmul.bf16.gmra.mxu0 %v1993
      %v2087 = vpop.f32.mrf.mxu0
      %v2088 = vadd.f32 0.0, %v2087
      %v2089 = vpop.f32.mrf.mxu0
      %v2090 = vadd.f32 0.0, %v2089
      %2091 = vmatmul.bf16.gmra.mxu0 %v1994
      %v2092 = vpop.f32.mrf.mxu0
      %v2093 = vadd.f32 0.0, %v2092
      %v2094 = vpop.f32.mrf.mxu0
      %v2095 = vadd.f32 0.0, %v2094
      %2096 = vdwg.mxu0
      %v2097 = vadd.f32 %v1995, %v2078
      %v2098 = vadd.f32 %v1996, %v2080
      %v2099 = vadd.f32 %v1997, %v2083
      %v2100 = vadd.f32 %v1998, %v2085
      %v2101 = vadd.f32 %v1999, %v2088
      %v2102 = vadd.f32 %v2000, %v2090
      %v2103 = vadd.f32 %v2001, %v2093
      %v2104 = vadd.f32 %v2002, %v2095
      %2105 = vst [vmem:[#allocation2] sm:$0xff] %v2097
      %2106 = vst [vmem:[#allocation2 + $0x8] sm:$0xff] %v2098
      %2107 = vst [vmem:[#allocation2 + $0x10] sm:$0xff] %v2099
      %2108 = vst [vmem:[#allocation2 + $0x18] sm:$0xff] %v2100
      %2109 = vst [vmem:[#allocation2 + $0x20] sm:$0xff] %v2101
      %2110 = vst [vmem:[#allocation2 + $0x28] sm:$0xff] %v2102
      %2111 = vst [vmem:[#allocation2 + $0x30] sm:$0xff] %v2103
      %2112 = vst [vmem:[#allocation2 + $0x38] sm:$0xff] %v2104
      %v2113 = vld [vmem:[%s1689 + $0x1] sm:$0xff]
      %v2114 = vld [vmem:[%s1689 + $0x11] sm:$0xff]
      %v2115 = vld [vmem:[%s1689 + $0x21] sm:$0xff]
      %v2116 = vld [vmem:[%s1689 + $0x31] sm:$0xff]
      %v2117 = vld [vmem:[%s1689 + $0x41] sm:$0xff]
      %v2118 = vld [vmem:[%s1689 + $0x51] sm:$0xff]
      %v2119 = vld [vmem:[%s1689 + $0x61] sm:$0xff]
      %v2120 = vld [vmem:[%s1689 + $0x71] sm:$0xff]
      %v2121 = vld [vmem:[%s1698 + $0x1] sm:$0xff]
      %v2122 = vld [vmem:[%s1698 + $0x11] sm:$0xff]
      %v2123 = vld [vmem:[%s1698 + $0x21] sm:$0xff]
      %v2124 = vld [vmem:[%s1698 + $0x31] sm:$0xff]
      %v2125 = vld [vmem:[%s1698 + $0x41] sm:$0xff]
      %v2126 = vld [vmem:[%s1698 + $0x51] sm:$0xff]
      %v2127 = vld [vmem:[%s1698 + $0x61] sm:$0xff]
      %v2128 = vld [vmem:[%s1698 + $0x71] sm:$0xff]
      %v2129 = vmul.f32 %v2113, %v435
      %v2130 = vmul.f32 %v2114, %v435
      %v2131 = vmul.f32 %v2115, %v435
      %v2132 = vmul.f32 %v2116, %v435
      %v2133 = vmul.f32 %v2117, %v435
      %v2134 = vmul.f32 %v2118, %v435
      %v2135 = vmul.f32 %v2119, %v435
      %v2136 = vmul.f32 %v2120, %v435
      %v2137 = vadd.f32 %v2129, %v446
      %v2138 = vadd.f32 %v2130, %v446
      %v2139 = vadd.f32 %v2131, %v446
      %v2140 = vadd.f32 %v2132, %v446
      %v2141 = vadd.f32 %v2133, %v446
      %v2142 = vadd.f32 %v2134, %v446
      %v2143 = vadd.f32 %v2135, %v446
      %v2144 = vadd.f32 %v2136, %v446
      %v2145 = vmax.f32 %v2137, 0.0
      %v2146 = vmax.f32 %v2138, 0.0
      %v2147 = vmax.f32 %v2139, 0.0
      %v2148 = vmax.f32 %v2140, 0.0
      %v2149 = vmax.f32 %v2141, 0.0
      %v2150 = vmax.f32 %v2142, 0.0
      %v2151 = vmax.f32 %v2143, 0.0
      %v2152 = vmax.f32 %v2144, 0.0
      %2154 = vset.pattern.permute.xlu0 0
      %2155 = vperm.xlu0 %2154, %v2121
      %v2156 = vpop.permute.xlu0 %2155
      %2159 = vset.pattern.permute.xlu0 0
      %2160 = vperm.xlu0 %2159, %v2122
      %v2161 = vpop.permute.xlu0 %2160
      %2164 = vset.pattern.permute.xlu0 0
      %2165 = vperm.xlu0 %2164, %v2123
      %v2166 = vpop.permute.xlu0 %2165
      %2169 = vset.pattern.permute.xlu0 0
      %2170 = vperm.xlu0 %2169, %v2124
      %v2171 = vpop.permute.xlu0 %2170
      %2174 = vset.pattern.permute.xlu0 0
      %2175 = vperm.xlu0 %2174, %v2125
      %v2176 = vpop.permute.xlu0 %2175
      %2179 = vset.pattern.permute.xlu0 0
      %2180 = vperm.xlu0 %2179, %v2126
      %v2181 = vpop.permute.xlu0 %2180
      %2184 = vset.pattern.permute.xlu0 0
      %2185 = vperm.xlu0 %2184, %v2127
      %v2186 = vpop.permute.xlu0 %2185
      %2189 = vset.pattern.permute.xlu0 0
      %2190 = vperm.xlu0 %2189, %v2128
      %v2191 = vpop.permute.xlu0 %2190
      %v2193 = vmul.f32 %v2145, %v2156
      %v2194 = vmul.f32 %v2146, %v2161
      %v2195 = vmul.f32 %v2147, %v2166
      %v2196 = vmul.f32 %v2148, %v2171
      %v2197 = vmul.f32 %v2149, %v2176
      %v2198 = vmul.f32 %v2150, %v2181
      %v2199 = vmul.f32 %v2151, %v2186
      %v2200 = vmul.f32 %v2152, %v2191
      %v2201 = vpack.c.bf16 %v2194, %v2193
      %v2202 = vpack.c.bf16 %v2196, %v2195
      %v2203 = vpack.c.bf16 %v2198, %v2197
      %v2204 = vpack.c.bf16 %v2200, %v2199
      %v2205 = vld [vmem:[#allocation2] sm:$0xff]
      %v2206 = vld [vmem:[#allocation2 + $0x8] sm:$0xff]
      %v2207 = vld [vmem:[#allocation2 + $0x10] sm:$0xff]
      %v2208 = vld [vmem:[#allocation2 + $0x18] sm:$0xff]
      %v2209 = vld [vmem:[#allocation2 + $0x20] sm:$0xff]
      %v2210 = vld [vmem:[#allocation2 + $0x28] sm:$0xff]
      %v2211 = vld [vmem:[#allocation2 + $0x30] sm:$0xff]
      %v2212 = vld [vmem:[#allocation2 + $0x38] sm:$0xff]
      %s2213 = scalar_lea.vmem %s386, 512
      %v2214 = vld [vmem:[%s2213] sm:$0xf]
      %v2215 = vld [vmem:[%s2213 + $0x4] sm:$0xf]
      %v2216 = vld [vmem:[%s2213 + $0x8] sm:$0xf]
      %v2217 = vld [vmem:[%s2213 + $0xc] sm:$0xf]
      %v2218 = vld [vmem:[%s2213 + $0x10] sm:$0xf]
      %v2219 = vld [vmem:[%s2213 + $0x14] sm:$0xf]
      %v2220 = vld [vmem:[%s2213 + $0x18] sm:$0xf]
      %v2221 = vld [vmem:[%s2213 + $0x1c] sm:$0xf]
      %v2222 = vld [vmem:[%s2213 + $0x20] sm:$0xf]
      %v2223 = vld [vmem:[%s2213 + $0x24] sm:$0xf]
      %v2224 = vld [vmem:[%s2213 + $0x28] sm:$0xf]
      %v2225 = vld [vmem:[%s2213 + $0x2c] sm:$0xf]
      %v2226 = vld [vmem:[%s2213 + $0x30] sm:$0xf]
      %v2227 = vld [vmem:[%s2213 + $0x34] sm:$0xf]
      %v2228 = vld [vmem:[%s2213 + $0x38] sm:$0xf]
      %v2229 = vld [vmem:[%s2213 + $0x3c] sm:$0xf]
      %v2246 = vunpack.c.l.b16 %v2214
      %v2247 = vunpack.c.l.b16 %v2215
      %v2248 = vunpack.c.l.b16 %v2216
      %v2249 = vunpack.c.l.b16 %v2217
      %v2250 = vunpack.c.l.b16 %v2218
      %v2251 = vunpack.c.l.b16 %v2219
      %v2252 = vunpack.c.l.b16 %v2220
      %v2253 = vunpack.c.l.b16 %v2221
      %v2254 = vunpack.c.l.b16 %v2222
      %v2255 = vunpack.c.l.b16 %v2223
      %v2256 = vunpack.c.l.b16 %v2224
      %v2257 = vunpack.c.l.b16 %v2225
      %v2258 = vunpack.c.l.b16 %v2226
      %v2259 = vunpack.c.l.b16 %v2227
      %v2260 = vunpack.c.l.b16 %v2228
      %v2261 = vunpack.c.l.b16 %v2229
      %v2262 = vpack.c.b16 %v2247, %v2246
      %v2263 = vpack.c.b16 %v2249, %v2248
      %v2264 = vpack.c.b16 %v2251, %v2250
      %v2265 = vpack.c.b16 %v2253, %v2252
      %v2266 = vpack.c.b16 %v2255, %v2254
      %v2267 = vpack.c.b16 %v2257, %v2256
      %v2268 = vpack.c.b16 %v2259, %v2258
      %v2269 = vpack.c.b16 %v2261, %v2260
      %2278 = vmatpush.bf16.msra.mxu0 %v2269
      %2279 = vmatpush.bf16.msra.mxu0 %v2268
      %2280 = vmatpush.bf16.msra.mxu0 %v2267
      %2281 = vmatpush.bf16.msra.mxu0 %v2266
      %2282 = vmatpush.bf16.msra.mxu0 %v2265
      %2283 = vmatpush.bf16.msra.mxu0 %v2264
      %2284 = vmatpush.bf16.msra.mxu0 %v2263
      %2285 = vmatpush.bf16.msra.mxu0 %v2262
      %2286 = vmatmul.bf16.gmra.mxu0 %v2201
      %v2287 = vpop.f32.mrf.mxu0
      %v2288 = vadd.f32 0.0, %v2287
      %v2289 = vpop.f32.mrf.mxu0
      %v2290 = vadd.f32 0.0, %v2289
      %2291 = vmatmul.bf16.gmra.mxu0 %v2202
      %v2292 = vpop.f32.mrf.mxu0
      %v2293 = vadd.f32 0.0, %v2292
      %v2294 = vpop.f32.mrf.mxu0
      %v2295 = vadd.f32 0.0, %v2294
      %2296 = vmatmul.bf16.gmra.mxu0 %v2203
      %v2297 = vpop.f32.mrf.mxu0
      %v2298 = vadd.f32 0.0, %v2297
      %v2299 = vpop.f32.mrf.mxu0
      %v2300 = vadd.f32 0.0, %v2299
      %2301 = vmatmul.bf16.gmra.mxu0 %v2204
      %v2302 = vpop.f32.mrf.mxu0
      %v2303 = vadd.f32 0.0, %v2302
      %v2304 = vpop.f32.mrf.mxu0
      %v2305 = vadd.f32 0.0, %v2304
      %2306 = vdwg.mxu0
      %v2307 = vadd.f32 %v2205, %v2288
      %v2308 = vadd.f32 %v2206, %v2290
      %v2309 = vadd.f32 %v2207, %v2293
      %v2310 = vadd.f32 %v2208, %v2295
      %v2311 = vadd.f32 %v2209, %v2298
      %v2312 = vadd.f32 %v2210, %v2300
      %v2313 = vadd.f32 %v2211, %v2303
      %v2314 = vadd.f32 %v2212, %v2305
      %2315 = vst [vmem:[#allocation2] sm:$0xff] %v2307
      %2316 = vst [vmem:[#allocation2 + $0x8] sm:$0xff] %v2308
      %2317 = vst [vmem:[#allocation2 + $0x10] sm:$0xff] %v2309
      %2318 = vst [vmem:[#allocation2 + $0x18] sm:$0xff] %v2310
      %2319 = vst [vmem:[#allocation2 + $0x20] sm:$0xff] %v2311
      %2320 = vst [vmem:[#allocation2 + $0x28] sm:$0xff] %v2312
      %2321 = vst [vmem:[#allocation2 + $0x30] sm:$0xff] %v2313
      %2322 = vst [vmem:[#allocation2 + $0x38] sm:$0xff] %v2314
      // Predicated region
      $region57: #{fwd.3} parent=51 // pred_check
        %p2323 = pneg %p404
      $region58: #{fwd.3} parent=51 // pred_check_branch
        %2325 = sbr.rel (%p2323) target = $region60
      $region59: #{fwd.3} parent=51 // pred_region
        %v2326 = vld [vmem:[#allocation2] sm:$0xff]
        %v2327 = vld [vmem:[#allocation2 + $0x8] sm:$0xff]
        %v2328 = vld [vmem:[#allocation2 + $0x10] sm:$0xff]
        %v2329 = vld [vmem:[#allocation2 + $0x18] sm:$0xff]
        %v2330 = vld [vmem:[#allocation2 + $0x20] sm:$0xff]
        %v2331 = vld [vmem:[#allocation2 + $0x28] sm:$0xff]
        %v2332 = vld [vmem:[#allocation2 + $0x30] sm:$0xff]
        %v2333 = vld [vmem:[#allocation2 + $0x38] sm:$0xff]
        %v2334 = vld [vmem:[%s398] sm:$0xff]
        %v2335 = vld [vmem:[%s398 + $0x8] sm:$0xff]
        %v2336 = vld [vmem:[%s398 + $0x10] sm:$0xff]
        %v2337 = vld [vmem:[%s398 + $0x18] sm:$0xff]
        %v2338 = vld [vmem:[%s398 + $0x20] sm:$0xff]
        %v2339 = vld [vmem:[%s398 + $0x28] sm:$0xff]
        %v2340 = vld [vmem:[%s398 + $0x30] sm:$0xff]
        %v2341 = vld [vmem:[%s398 + $0x38] sm:$0xff]
        %v2342 = vpack.c.bf16 %v2335, %v2334
        %v2343 = vpack.c.bf16 %v2337, %v2336
        %v2344 = vpack.c.bf16 %v2339, %v2338
        %v2345 = vpack.c.bf16 %v2341, %v2340
        %v2346 = vld [vmem:[%s7] sm:$0xf]
        %v2347 = vld [vmem:[%s7 + $0x4] sm:$0xf]
        %v2348 = vld [vmem:[%s7 + $0x8] sm:$0xf]
        %v2349 = vld [vmem:[%s7 + $0xc] sm:$0xf]
        %v2350 = vld [vmem:[%s7 + $0x10] sm:$0xf]
        %v2351 = vld [vmem:[%s7 + $0x14] sm:$0xf]
        %v2352 = vld [vmem:[%s7 + $0x18] sm:$0xf]
        %v2353 = vld [vmem:[%s7 + $0x1c] sm:$0xf]
        %v2354 = vld [vmem:[%s7 + $0x20] sm:$0xf]
        %v2355 = vld [vmem:[%s7 + $0x24] sm:$0xf]
        %v2356 = vld [vmem:[%s7 + $0x28] sm:$0xf]
        %v2357 = vld [vmem:[%s7 + $0x2c] sm:$0xf]
        %v2358 = vld [vmem:[%s7 + $0x30] sm:$0xf]
        %v2359 = vld [vmem:[%s7 + $0x34] sm:$0xf]
        %v2360 = vld [vmem:[%s7 + $0x38] sm:$0xf]
        %v2361 = vld [vmem:[%s7 + $0x3c] sm:$0xf]
        %v2378 = vunpack.c.l.b16 %v2346
        %v2379 = vunpack.c.l.b16 %v2347
        %v2380 = vunpack.c.l.b16 %v2348
        %v2381 = vunpack.c.l.b16 %v2349
        %v2382 = vunpack.c.l.b16 %v2350
        %v2383 = vunpack.c.l.b16 %v2351
        %v2384 = vunpack.c.l.b16 %v2352
        %v2385 = vunpack.c.l.b16 %v2353
        %v2386 = vunpack.c.l.b16 %v2354
        %v2387 = vunpack.c.l.b16 %v2355
        %v2388 = vunpack.c.l.b16 %v2356
        %v2389 = vunpack.c.l.b16 %v2357
        %v2390 = vunpack.c.l.b16 %v2358
        %v2391 = vunpack.c.l.b16 %v2359
        %v2392 = vunpack.c.l.b16 %v2360
        %v2393 = vunpack.c.l.b16 %v2361
        %v2394 = vpack.c.b16 %v2379, %v2378
        %v2395 = vpack.c.b16 %v2381, %v2380
        %v2396 = vpack.c.b16 %v2383, %v2382
        %v2397 = vpack.c.b16 %v2385, %v2384
        %v2398 = vpack.c.b16 %v2387, %v2386
        %v2399 = vpack.c.b16 %v2389, %v2388
        %v2400 = vpack.c.b16 %v2391, %v2390
        %v2401 = vpack.c.b16 %v2393, %v2392
        %2410 = vmatpush.bf16.msra.mxu0 %v2401
        %2411 = vmatpush.bf16.msra.mxu0 %v2400
        %2412 = vmatpush.bf16.msra.mxu0 %v2399
        %2413 = vmatpush.bf16.msra.mxu0 %v2398
        %2414 = vmatpush.bf16.msra.mxu0 %v2397
        %2415 = vmatpush.bf16.msra.mxu0 %v2396
        %2416 = vmatpush.bf16.msra.mxu0 %v2395
        %2417 = vmatpush.bf16.msra.mxu0 %v2394
        %2418 = vmatmul.bf16.gmra.mxu0 %v2342
        %v2419 = vpop.f32.mrf.mxu0
        %v2420 = vadd.f32 0.0, %v2419
        %v2421 = vpop.f32.mrf.mxu0
        %v2422 = vadd.f32 0.0, %v2421
        %2423 = vmatmul.bf16.gmra.mxu0 %v2343
        %v2424 = vpop.f32.mrf.mxu0
        %v2425 = vadd.f32 0.0, %v2424
        %v2426 = vpop.f32.mrf.mxu0
        %v2427 = vadd.f32 0.0, %v2426
        %2428 = vmatmul.bf16.gmra.mxu0 %v2344
        %v2429 = vpop.f32.mrf.mxu0
        %v2430 = vadd.f32 0.0, %v2429
        %v2431 = vpop.f32.mrf.mxu0
        %v2432 = vadd.f32 0.0, %v2431
        %2433 = vmatmul.bf16.gmra.mxu0 %v2345
        %v2434 = vpop.f32.mrf.mxu0
        %v2435 = vadd.f32 0.0, %v2434
        %v2436 = vpop.f32.mrf.mxu0
        %v2437 = vadd.f32 0.0, %v2436
        %2438 = vdwg.mxu0
        %v2439 = vadd.f32 %v2326, %v2420
        %v2440 = vadd.f32 %v2327, %v2422
        %v2441 = vadd.f32 %v2328, %v2425
        %v2442 = vadd.f32 %v2329, %v2427
        %v2443 = vadd.f32 %v2330, %v2430
        %v2444 = vadd.f32 %v2331, %v2432
        %v2445 = vadd.f32 %v2332, %v2435
        %v2446 = vadd.f32 %v2333, %v2437
        %2447 = vst [vmem:[#allocation2] sm:$0xff] %v2439
        %2448 = vst [vmem:[#allocation2 + $0x8] sm:$0xff] %v2440
        %2449 = vst [vmem:[#allocation2 + $0x10] sm:$0xff] %v2441
        %2450 = vst [vmem:[#allocation2 + $0x18] sm:$0xff] %v2442
        %2451 = vst [vmem:[#allocation2 + $0x20] sm:$0xff] %v2443
        %2452 = vst [vmem:[#allocation2 + $0x28] sm:$0xff] %v2444
        %2453 = vst [vmem:[#allocation2 + $0x30] sm:$0xff] %v2445
        %2454 = vst [vmem:[#allocation2 + $0x38] sm:$0xff] %v2446
        %v2455 = vld [vmem:[#allocation2] sm:$0xff]
        %v2456 = vld [vmem:[#allocation2 + $0x8] sm:$0xff]
        %v2457 = vld [vmem:[#allocation2 + $0x10] sm:$0xff]
        %v2458 = vld [vmem:[#allocation2 + $0x18] sm:$0xff]
        %v2459 = vld [vmem:[#allocation2 + $0x20] sm:$0xff]
        %v2460 = vld [vmem:[#allocation2 + $0x28] sm:$0xff]
        %v2461 = vld [vmem:[#allocation2 + $0x30] sm:$0xff]
        %v2462 = vld [vmem:[#allocation2 + $0x38] sm:$0xff]
        %v2463 = vld [vmem:[%s5] sm:$0x1]
        %v2465 = vperm.slane %v2463, 0
        %v2467 = vadd.f32 %v2455, %v2465
        %v2468 = vadd.f32 %v2456, %v2465
        %v2469 = vadd.f32 %v2457, %v2465
        %v2470 = vadd.f32 %v2458, %v2465
        %v2471 = vadd.f32 %v2459, %v2465
        %v2472 = vadd.f32 %v2460, %v2465
        %v2473 = vadd.f32 %v2461, %v2465
        %v2474 = vadd.f32 %v2462, %v2465
        %2475 = vst [vmem:[%s403] sm:$0xff] %v2467
        %2476 = vst [vmem:[%s403 + $0x8] sm:$0xff] %v2468
        %2477 = vst [vmem:[%s403 + $0x10] sm:$0xff] %v2469
        %2478 = vst [vmem:[%s403 + $0x18] sm:$0xff] %v2470
        %2479 = vst [vmem:[%s403 + $0x20] sm:$0xff] %v2471
        %2480 = vst [vmem:[%s403 + $0x28] sm:$0xff] %v2472
        %2481 = vst [vmem:[%s403 + $0x30] sm:$0xff] %v2473
        %2482 = vst [vmem:[%s403 + $0x38] sm:$0xff] %v2474
      $region60: #{fwd.3} parent=51 // pred_fallthru
        _
      %p2483 = scmp.lt.s32.totalorder %s23, 1
      %s2484 = scalar_select %p2483, %s23, 1
      %s2485 = smul.addr %s2484, 8
      %s2486 = smul.addr %s2485, 8
      %s2487 = scalar_lea.vmem %s8, %s2486
      // Predicated region
      $region61: #{fwd.3} parent=51 // pred_check
        %p2488 = pneg %p244
      $region62: #{fwd.3} parent=51 // pred_check_branch
        %2490 = sbr.rel (%p2488) target = $region64
      $region63: #{fwd.3} parent=51 // pred_region
        _
      $region64: #{fwd.3} parent=51 // pred_fallthru
        _
    $region52: #{fwd.3} parent=5 // pred_fallthru
      _
    %p2491 = scmp.le.s32.totalorder 2, %s14
    // Predicated region
    $region65: #{fwd.3} parent=5 // pred_check
      %p2492 = pneg %p2491
    $region66: #{fwd.3} parent=5 // pred_check_branch
      %2494 = sbr.rel (%p2492) target = $region68
    $region67: #{fwd.3} parent=5 // pred_region
      %s2495 = ssub.s32 %s14, 2
      // Predicated region
      $region69: #{fwd.3} parent=67 // pred_check
        %p2496 = pneg %p250
      $region70: #{fwd.3} parent=67 // pred_check_branch
        %2498 = sbr.rel (%p2496) target = $region72
      $region71: #{fwd.3} parent=67 // pred_region
        %p2499 = scmp.lt.s32.totalorder %s25, 1
        %s2500 = scalar_select %p2499, %s25, 1
        %s2501 = smul.addr %s2500, 8
        %s2502 = smul.addr %s2501, 8
        %s2503 = scalar_lea.vmem %s8, %s2502
      $region72: #{fwd.3} parent=67 // pred_fallthru
        _
    $region68: #{fwd.3} parent=5 // pred_fallthru
      _
  $region6: #{fwd.3} parent=0 // loop_footer
    %s18 = sadd.s32 1, %s14
  $region7: #{fwd.3} parent=0 // loop_footer_branch
    %13 = sbr.rel target = $region3
  $region8: #{fwd.3} parent=0 // loop_exit
    _

// kernel: fwd.2
$region0: #{fwd.2}
  #allocation0 [shape = 'u32[]', space=smem, size = 0x4, offset = 0x4, fixed_abs, tag = 'smem constant byte address 0x4 - core index']
  #allocation1 [shape = 'u32[72,128]{1,0:T(1,128)}', space=vmem, size = 0x9000, scoped, tag = 'internal scratch']
  #allocation2 [shape = 'f32[256,128]{1,0:T(8,128)}', space=vmem, size = 0x20000, scoped, tag = 'scratch operand']
  %s0 = inlined_call_operand.vmem [shape: f32[2,18,18,128], index: 0, kind: input, shape index: {}]
  %s1 = inlined_call_operand.vmem [shape: f32[1,18,18,1], index: 1, kind: input, shape index: {}]
  %s2 = inlined_call_operand.vmem [shape: bf16[3,3,128,128], index: 2, kind: input, shape index: {}]
  %s3 = inlined_call_operand.vmem [shape: f32[1,1,128], index: 3, kind: input, shape index: {}]
  %s4 = inlined_call_operand.vmem [shape: f32[1,1,128], index: 4, kind: input, shape index: {}]
  %s5 = inlined_call_operand.vmem [shape: f32[1,128], index: 5, kind: input, shape index: {}]
  %s6 = inlined_call_operand.vmem [shape: f32[2,256,128], index: 6, kind: output, shape index: {}]
  %s7 = sld [smem:[#allocation0]]
  $region65: #{fwd.2} parent=0
    _
  %s9 = ssub.s32 1, %s7
  %s10 = scalar_select 0, %s9, %s7
  loop: start=0, step=1, limit=4
  $region2: #{fwd.2} parent=0 // loop_pre_header
    _
  $region3: #{fwd.2} parent=0 // loop_header
    %s12 = sphi 0, %s16
    %p13 = scmp.ge.s32.totalorder %s12, 4
    %s19 = sphi 0, %s31
    %s20 = sphi 0, %s27
    %s21 = sphi 0, %s19
    %s22 = sphi 0, %s20
    %s23 = sphi 0, %s21
    %s24 = sphi 0, %s22
    %s36 = sphi 0, %s38
    %s39 = sphi 0, %s36
    %s40 = sphi 0, %s39
    %s56 = sphi 0, %s40
    %s60 = sphi 0, %s60
    %s62 = sphi 0, %s60
    %s63 = sphi 0, %s62
    %s77 = sphi 0, %s63
    %s83 = sphi 0, %s85
    %s86 = sphi 0, %s83
    %s87 = sphi 0, %s86
    %s103 = sphi 0, %s87
    %s109 = sphi 0, %s111
    %s112 = sphi 0, %s109
    %s113 = sphi 0, %s112
    %s129 = sphi 0, %s113
    %s135 = sphi 0, %s137
    %s138 = sphi 0, %s135
    %s139 = sphi 0, %s138
    %s155 = sphi 0, %s139
    %s159 = sphi 0, %s159
    %s161 = sphi 0, %s159
    %s162 = sphi 0, %s161
    %s176 = sphi 0, %s162
    %s182 = sphi 0, %s184
    %s185 = sphi 0, %s182
    %s186 = sphi 0, %s185
    %s202 = sphi 0, %s186
  $region4: #{fwd.2} parent=0 // loop_header_branch
    %15 = sbr.rel (%p13) target = $region8
  $region5: #{fwd.2} parent=0 // loop_body
    %s17 = ssub.s32 %s12, 1
    %s18 = ssub.s32 %s12, 2
    %s25 = sadd.s32 1, %s20
    %p26 = scmp.ge.s32.totalorder %s25, 1
    %s27 = scalar_select %p26, 0, %s25
    %s28 = sadd.s32 1, %s19
    %s29 = scalar_select %p26, %s28, %s19
    %p30 = scmp.ge.s32.totalorder %s29, 2
    %s31 = scalar_select %p30, 0, %s29
    %s32 = ssub.s32 %s19, %s31
    %s33 = ssub.s32 %s20, %s27
    %s34 = sor.u32 %s32, %s33
    %p35 = scmp.eq.s32.totalorder %s34, 0
    %s37 = sadd.s32 %s36, 1
    %s38 = scalar_select %p35, %s36, %s37
    %p41 = pneg %p35
    %p42 = scmp.eq.s32.totalorder %s12, 1
    %p43 = por %p41, %p42
    %p44 = scmp.ne.s32.totalorder %s36, %s39
    %p45 = scmp.eq.s32.totalorder %s12, 0
    %p46 = por %p44, %p45
    %p47 = scmp.ne.s32.totalorder %s36, %s39
    %p48 = scmp.eq.s32.totalorder %s17, 1
    %p49 = por %p47, %p48
    %p50 = scmp.ne.s32.totalorder %s39, %s40
    %p51 = scmp.eq.s32.totalorder %s17, 0
    %p52 = por %p50, %p51
    %p53 = scmp.ne.s32.totalorder %s39, %s40
    %p54 = scmp.eq.s32.totalorder %s18, 1
    %p55 = por %p53, %p54
    %p57 = scmp.ne.s32.totalorder %s40, %s56
    %p58 = scmp.eq.s32.totalorder %s18, 0
    %p59 = por %p57, %p58
    %s61 = sadd.s32 %s60, 1
    %p64 = scmp.eq.s32.totalorder %s12, 1
    %p65 = scmp.ne.s32.totalorder %s60, %s62
    %p66 = scmp.eq.s32.totalorder %s12, 0
    %p67 = por %p65, %p66
    %p68 = scmp.ne.s32.totalorder %s60, %s62
    %p69 = scmp.eq.s32.totalorder %s17, 1
    %p70 = por %p68, %p69
    %p71 = scmp.ne.s32.totalorder %s62, %s63
    %p72 = scmp.eq.s32.totalorder %s17, 0
    %p73 = por %p71, %p72
    %p74 = scmp.ne.s32.totalorder %s62, %s63
    %p75 = scmp.eq.s32.totalorder %s18, 1
    %p76 = por %p74, %p75
    %p78 = scmp.ne.s32.totalorder %s63, %s77
    %p79 = scmp.eq.s32.totalorder %s18, 0
    %p80 = por %p78, %p79
    %s81 = ssub.s32 %s20, %s27
    %p82 = scmp.eq.s32.totalorder %s81, 0
    %s84 = sadd.s32 %s83, 1
    %s85 = scalar_select %p82, %s83, %s84
    %p88 = pneg %p82
    %p89 = scmp.eq.s32.totalorder %s12, 1
    %p90 = por %p88, %p89
    %p91 = scmp.ne.s32.totalorder %s83, %s86
    %p92 = scmp.eq.s32.totalorder %s12, 0
    %p93 = por %p91, %p92
    %p94 = scmp.ne.s32.totalorder %s83, %s86
    %p95 = scmp.eq.s32.totalorder %s17, 1
    %p96 = por %p94, %p95
    %p97 = scmp.ne.s32.totalorder %s86, %s87
    %p98 = scmp.eq.s32.totalorder %s17, 0
    %p99 = por %p97, %p98
    %p100 = scmp.ne.s32.totalorder %s86, %s87
    %p101 = scmp.eq.s32.totalorder %s18, 1
    %p102 = por %p100, %p101
    %p104 = scmp.ne.s32.totalorder %s87, %s103
    %p105 = scmp.eq.s32.totalorder %s18, 0
    %p106 = por %p104, %p105
    %s107 = ssub.s32 %s20, %s27
    %p108 = scmp.eq.s32.totalorder %s107, 0
    %s110 = sadd.s32 %s109, 1
    %s111 = scalar_select %p108, %s109, %s110
    %p114 = pneg %p108
    %p115 = scmp.eq.s32.totalorder %s12, 1
    %p116 = por %p114, %p115
    %p117 = scmp.ne.s32.totalorder %s109, %s112
    %p118 = scmp.eq.s32.totalorder %s12, 0
    %p119 = por %p117, %p118
    %p120 = scmp.ne.s32.totalorder %s109, %s112
    %p121 = scmp.eq.s32.totalorder %s17, 1
    %p122 = por %p120, %p121
    %p123 = scmp.ne.s32.totalorder %s112, %s113
    %p124 = scmp.eq.s32.totalorder %s17, 0
    %p125 = por %p123, %p124
    %p126 = scmp.ne.s32.totalorder %s112, %s113
    %p127 = scmp.eq.s32.totalorder %s18, 1
    %p128 = por %p126, %p127
    %p130 = scmp.ne.s32.totalorder %s113, %s129
    %p131 = scmp.eq.s32.totalorder %s18, 0
    %p132 = por %p130, %p131
    %s133 = ssub.s32 %s20, %s27
    %p134 = scmp.eq.s32.totalorder %s133, 0
    %s136 = sadd.s32 %s135, 1
    %s137 = scalar_select %p134, %s135, %s136
    %p140 = pneg %p134
    %p141 = scmp.eq.s32.totalorder %s12, 1
    %p142 = por %p140, %p141
    %p143 = scmp.ne.s32.totalorder %s135, %s138
    %p144 = scmp.eq.s32.totalorder %s12, 0
    %p145 = por %p143, %p144
    %p146 = scmp.ne.s32.totalorder %s135, %s138
    %p147 = scmp.eq.s32.totalorder %s17, 1
    %p148 = por %p146, %p147
    %p149 = scmp.ne.s32.totalorder %s138, %s139
    %p150 = scmp.eq.s32.totalorder %s17, 0
    %p151 = por %p149, %p150
    %p152 = scmp.ne.s32.totalorder %s138, %s139
    %p153 = scmp.eq.s32.totalorder %s18, 1
    %p154 = por %p152, %p153
    %p156 = scmp.ne.s32.totalorder %s139, %s155
    %p157 = scmp.eq.s32.totalorder %s18, 0
    %p158 = por %p156, %p157
    %s160 = sadd.s32 %s159, 1
    %p163 = scmp.eq.s32.totalorder %s12, 1
    %p164 = scmp.ne.s32.totalorder %s159, %s161
    %p165 = scmp.eq.s32.totalorder %s12, 0
    %p166 = por %p164, %p165
    %p167 = scmp.ne.s32.totalorder %s159, %s161
    %p168 = scmp.eq.s32.totalorder %s17, 1
    %p169 = por %p167, %p168
    %p170 = scmp.ne.s32.totalorder %s161, %s162
    %p171 = scmp.eq.s32.totalorder %s17, 0
    %p172 = por %p170, %p171
    %p173 = scmp.ne.s32.totalorder %s161, %s162
    %p174 = scmp.eq.s32.totalorder %s18, 1
    %p175 = por %p173, %p174
    %p177 = scmp.ne.s32.totalorder %s162, %s176
    %p178 = scmp.eq.s32.totalorder %s18, 0
    %p179 = por %p177, %p178
    %s180 = ssub.s32 %s19, %s31
    %p181 = scmp.eq.s32.totalorder %s180, 0
    %s183 = sadd.s32 %s182, 1
    %s184 = scalar_select %p181, %s182, %s183
    %p187 = pneg %p181
    %p188 = scmp.eq.s32.totalorder %s12, 1
    %p189 = por %p187, %p188
    %p190 = scmp.ne.s32.totalorder %s182, %s185
    %p191 = scmp.eq.s32.totalorder %s12, 0
    %p192 = por %p190, %p191
    %p193 = scmp.ne.s32.totalorder %s182, %s185
    %p194 = scmp.eq.s32.totalorder %s17, 1
    %p195 = por %p193, %p194
    %p196 = scmp.ne.s32.totalorder %s185, %s186
    %p197 = scmp.eq.s32.totalorder %s17, 0
    %p198 = por %p196, %p197
    %p199 = scmp.ne.s32.totalorder %s185, %s186
    %p200 = scmp.eq.s32.totalorder %s18, 1
    %p201 = por %p199, %p200
    %p203 = scmp.ne.s32.totalorder %s186, %s202
    %p204 = scmp.eq.s32.totalorder %s18, 0
    %p205 = por %p203, %p204
    %p206 = scmp.le.s32.totalorder 1, %s12
    %p207 = scmp.lt.s32.totalorder %s12, 3
    %p208 = pnand %p206, %p207
    %p209 = pneg %p208
    // Predicated region
    $region9: #{fwd.2} parent=5 // pred_check
      _
    $region10: #{fwd.2} parent=5 // pred_check_branch
      %211 = sbr.rel (%p208) target = $region12
    $region11: #{fwd.2} parent=5 // pred_region
      %s212 = ssub.s32 %s12, 1
      // Predicated region
      $region13: #{fwd.2} parent=11 // pred_check
        %p213 = pneg %p73
      $region14: #{fwd.2} parent=11 // pred_check_branch
        %215 = sbr.rel (%p213) target = $region16
      $region15: #{fwd.2} parent=11 // pred_region
        _
      $region16: #{fwd.2} parent=11 // pred_fallthru
        _
      // Predicated region
      $region17: #{fwd.2} parent=11 // pred_check
        %p216 = pneg %p99
      $region18: #{fwd.2} parent=11 // pred_check_branch
        %218 = sbr.rel (%p216) target = $region20
      $region19: #{fwd.2} parent=11 // pred_region
        %s219 = smul.u32 16, %s22
        %p220 = scmp.lt.s32.totalorder %s219, 15
        %s221 = scalar_select %p220, %s219, 15
        %s222 = smul.addr %s221, 4
        %s223 = scalar_lea.vmem %s2, %s222
        %s224 = smul.u32 16, %s22
      $region20: #{fwd.2} parent=11 // pred_fallthru
        _
      // Predicated region
      $region21: #{fwd.2} parent=11 // pred_check
        %p225 = pneg %p125
      $region22: #{fwd.2} parent=11 // pred_check_branch
        %227 = sbr.rel (%p225) target = $region24
      $region23: #{fwd.2} parent=11 // pred_region
        %p228 = scmp.lt.s32.totalorder %s22, 0
        %s229 = scalar_select %p228, %s22, 0
        %s230 = scalar_lea.vmem %s3, %s229
      $region24: #{fwd.2} parent=11 // pred_fallthru
        _
      // Predicated region
      $region25: #{fwd.2} parent=11 // pred_check
        %p231 = pneg %p151
      $region26: #{fwd.2} parent=11 // pred_check_branch
        %233 = sbr.rel (%p231) target = $region28
      $region27: #{fwd.2} parent=11 // pred_region
        %p234 = scmp.lt.s32.totalorder %s22, 0
        %s235 = scalar_select %p234, %s22, 0
        %s236 = scalar_lea.vmem %s4, %s235
      $region28: #{fwd.2} parent=11 // pred_fallthru
        _
      // Predicated region
      $region29: #{fwd.2} parent=11 // pred_check
        %p237 = pneg %p172
      $region30: #{fwd.2} parent=11 // pred_check_branch
        %239 = sbr.rel (%p237) target = $region32
      $region31: #{fwd.2} parent=11 // pred_region
        _
      $region32: #{fwd.2} parent=11 // pred_fallthru
        _
    $region12: #{fwd.2} parent=5 // pred_fallthru
      _
    %p240 = scmp.lt.s32.totalorder %s12, 2
    // Predicated region
    $region33: #{fwd.2} parent=5 // pred_check
      %p241 = pneg %p240
    $region34: #{fwd.2} parent=5 // pred_check_branch
      %243 = sbr.rel (%p241) target = $region36
    $region35: #{fwd.2} parent=5 // pred_region
      // Predicated region
      $region37: #{fwd.2} parent=35 // pred_check
        %p244 = pneg %p46
      $region38: #{fwd.2} parent=35 // pred_check_branch
        %246 = sbr.rel (%p244) target = $region40
      $region39: #{fwd.2} parent=35 // pred_region
        %p247 = scmp.lt.s32.totalorder %s19, 1
        %s248 = scalar_select %p247, %s19, 1
        %p249 = scmp.lt.s32.totalorder %s20, 0
        %s250 = scalar_select %p249, %s20, 0
        %s251 = smul.addr %s248, 54
        %s252 = sadd.s32 %s250, %s251
        %s253 = smul.addr %s252, 8
        %s254 = scalar_lea.vmem %s0, %s253
      $region40: #{fwd.2} parent=35 // pred_fallthru
        _
    $region36: #{fwd.2} parent=5 // pred_fallthru
      _
    %p255 = scmp.le.s32.totalorder 1, %s12
    %p256 = scmp.lt.s32.totalorder %s12, 3
    %p257 = pnand %p255, %p256
    %p258 = pneg %p257
    // Predicated region
    $region41: #{fwd.2} parent=5 // pred_check
      _
    $region42: #{fwd.2} parent=5 // pred_check_branch
      %260 = sbr.rel (%p257) target = $region44
    $region43: #{fwd.2} parent=5 // pred_region
      %s261 = ssub.s32 %s12, 1
      %p262 = scmp.lt.s32.totalorder %s21, 1
      %s263 = scalar_select %p262, %s21, 1
      %p264 = scmp.lt.s32.totalorder %s22, 0
      %s265 = scalar_select %p264, %s22, 0
      %s266 = smul.addr %s263, 54
      %s267 = sadd.s32 %s265, %s266
      %s268 = smul.addr %s267, 8
      %s269 = scalar_lea.vmem %s0, %s268
      %p270 = pneg %p52
      %p271 = pneg %p49
      %p272 = pneg %p73
      %p273 = pneg %p70
      %s274 = smul.u32 16, %s22
      %p275 = scmp.lt.s32.totalorder %s274, 15
      %s276 = scalar_select %p275, %s274, 15
      %s277 = smul.addr %s276, 4
      %s278 = scalar_lea.vmem %s2, %s277
      %p279 = pneg %p99
      %p280 = pneg %p96
      %p281 = scmp.lt.s32.totalorder %s22, 0
      %s282 = scalar_select %p281, %s22, 0
      %s283 = scalar_lea.vmem %s3, %s282
      %p284 = pneg %p125
      %p285 = pneg %p122
      %p286 = scmp.lt.s32.totalorder %s22, 0
      %s287 = scalar_select %p286, %s22, 0
      %s288 = scalar_lea.vmem %s4, %s287
      %p289 = pneg %p151
      %p290 = pneg %p148
      %p291 = pneg %p172
      %p292 = pneg %p169
      %p293 = pneg %p198
      %p294 = pneg %p195
      %p295 = scmp.lt.s32.totalorder %s21, 1
      %s296 = scalar_select %p295, %s21, 1
      %s297 = smul.addr %s296, 32
      %s298 = smul.addr %s297, 8
      %s299 = scalar_lea.vmem %s6, %s298
      %p300 = scmp.lt.s32.totalorder %s21, 1
      %s301 = scalar_select %p300, %s21, 1
      %p302 = scmp.lt.s32.totalorder %s22, 0
      %s303 = scalar_select %p302, %s22, 0
      %s304 = smul.addr %s301, 54
      %s305 = sadd.s32 %s303, %s304
      %s306 = smul.addr %s305, 8
      %s307 = scalar_lea.vmem %s0, %s306
      %s308 = smul.u32 16, %s22
      %p309 = scmp.lt.s32.totalorder %s308, 15
      %s310 = scalar_select %p309, %s308, 15
      %s311 = smul.addr %s310, 4
      %s312 = scalar_lea.vmem %s2, %s311
      %s313 = smul.u32 16, %s22
      %p314 = scmp.lt.s32.totalorder %s22, 0
      %s315 = scalar_select %p314, %s22, 0
      %s316 = scalar_lea.vmem %s3, %s315
      %p317 = scmp.lt.s32.totalorder %s22, 0
      %s318 = scalar_select %p317, %s22, 0
      %s319 = scalar_lea.vmem %s4, %s318
      %p320 = scmp.lt.s32.totalorder %s21, 1
      %s321 = scalar_select %p320, %s21, 1
      %s322 = smul.addr %s321, 32
      %s323 = smul.addr %s322, 8
      %s324 = scalar_lea.vmem %s6, %s323
      %p325 = scmp.eq.s32.totalorder %s22, 0
      // Predicated region
      $region45: #{fwd.2} parent=43 // pred_check
        %p326 = pneg %p325
      $region46: #{fwd.2} parent=43 // pred_check_branch
        %328 = sbr.rel (%p326) target = $region48
      $region47: #{fwd.2} parent=43 // pred_region
        %329 = vst [vmem:[#allocation2] sm:$0xff] 0.0
        %330 = vst [vmem:[#allocation2 + $0x8] sm:$0xff] 0.0
        %331 = vst [vmem:[#allocation2 + $0x10] sm:$0xff] 0.0
        %332 = vst [vmem:[#allocation2 + $0x18] sm:$0xff] 0.0
        %333 = vst [vmem:[#allocation2 + $0x20] sm:$0xff] 0.0
        %334 = vst [vmem:[#allocation2 + $0x28] sm:$0xff] 0.0
        %335 = vst [vmem:[#allocation2 + $0x30] sm:$0xff] 0.0
        %336 = vst [vmem:[#allocation2 + $0x38] sm:$0xff] 0.0
        %337 = vst [vmem:[#allocation2 + $0x40] sm:$0xff] 0.0
        %338 = vst [vmem:[#allocation2 + $0x48] sm:$0xff] 0.0
        %339 = vst [vmem:[#allocation2 + $0x50] sm:$0xff] 0.0
        %340 = vst [vmem:[#allocation2 + $0x58] sm:$0xff] 0.0
        %341 = vst [vmem:[#allocation2 + $0x60] sm:$0xff] 0.0
        %342 = vst [vmem:[#allocation2 + $0x68] sm:$0xff] 0.0
        %343 = vst [vmem:[#allocation2 + $0x70] sm:$0xff] 0.0
        %344 = vst [vmem:[#allocation2 + $0x78] sm:$0xff] 0.0
        %345 = vst [vmem:[#allocation2 + $0x80] sm:$0xff] 0.0
        %346 = vst [vmem:[#allocation2 + $0x88] sm:$0xff] 0.0
        %347 = vst [vmem:[#allocation2 + $0x90] sm:$0xff] 0.0
        %348 = vst [vmem:[#allocation2 + $0x98] sm:$0xff] 0.0
        %349 = vst [vmem:[#allocation2 + $0xa0] sm:$0xff] 0.0
        %350 = vst [vmem:[#allocation2 + $0xa8] sm:$0xff] 0.0
        %351 = vst [vmem:[#allocation2 + $0xb0] sm:$0xff] 0.0
        %352 = vst [vmem:[#allocation2 + $0xb8] sm:$0xff] 0.0
        %353 = vst [vmem:[#allocation2 + $0xc0] sm:$0xff] 0.0
        %354 = vst [vmem:[#allocation2 + $0xc8] sm:$0xff] 0.0
        %355 = vst [vmem:[#allocation2 + $0xd0] sm:$0xff] 0.0
        %356 = vst [vmem:[#allocation2 + $0xd8] sm:$0xff] 0.0
        %357 = vst [vmem:[#allocation2 + $0xe0] sm:$0xff] 0.0
        %358 = vst [vmem:[#allocation2 + $0xe8] sm:$0xff] 0.0
        %359 = vst [vmem:[#allocation2 + $0xf0] sm:$0xff] 0.0
        %360 = vst [vmem:[#allocation2 + $0xf8] sm:$0xff] 0.0
      $region48: #{fwd.2} parent=43 // pred_fallthru
        _
      %v361 = vld [vmem:[%s316] sm:$0x1]
      %v362 = vld [vmem:[%s319] sm:$0x1]
      %v363 = vld [vmem:[%s307] sm:$0xff]
      %v364 = vld [vmem:[%s307 + $0x8] sm:$0xff]
      %v365 = vld [vmem:[%s307 + $0x18] sm:$0xff]
      %v366 = vld [vmem:[%s307 + $0x20] sm:$0xff]
      %v367 = vld [vmem:[%s307 + $0x30] sm:$0xff]
      %v368 = vld [vmem:[%s307 + $0x38] sm:$0xff]
      %v369 = vld [vmem:[%s307 + $0x48] sm:$0xff]
      %v370 = vld [vmem:[%s307 + $0x50] sm:$0xff]
      %v371 = vld [vmem:[%s307 + $0x60] sm:$0xff]
      %v372 = vld [vmem:[%s307 + $0x68] sm:$0xff]
      %v373 = vld [vmem:[%s307 + $0x78] sm:$0xff]
      %v374 = vld [vmem:[%s307 + $0x80] sm:$0xff]
      %v375 = vld [vmem:[%s307 + $0x90] sm:$0xff]
      %v376 = vld [vmem:[%s307 + $0x98] sm:$0xff]
      %v377 = vld [vmem:[%s307 + $0xa8] sm:$0xff]
      %v378 = vld [vmem:[%s307 + $0xb0] sm:$0xff]
      %v379 = vld [vmem:[%s307 + $0xc0] sm:$0xff]
      %v380 = vld [vmem:[%s307 + $0xc8] sm:$0xff]
      %v381 = vld [vmem:[%s307 + $0xd8] sm:$0xff]
      %v382 = vld [vmem:[%s307 + $0xe0] sm:$0xff]
      %v383 = vld [vmem:[%s307 + $0xf0] sm:$0xff]
      %v384 = vld [vmem:[%s307 + $0xf8] sm:$0xff]
      %v385 = vld [vmem:[%s307 + $0x108] sm:$0xff]
      %v386 = vld [vmem:[%s307 + $0x110] sm:$0xff]
      %v387 = vld [vmem:[%s307 + $0x120] sm:$0xff]
      %v388 = vld [vmem:[%s307 + $0x128] sm:$0xff]
      %v389 = vld [vmem:[%s307 + $0x138] sm:$0xff]
      %v390 = vld [vmem:[%s307 + $0x140] sm:$0xff]
      %v391 = vld [vmem:[%s307 + $0x150] sm:$0xff]
      %v392 = vld [vmem:[%s307 + $0x158] sm:$0xff]
      %v393 = vld [vmem:[%s307 + $0x168] sm:$0xff]
      %v394 = vld [vmem:[%s307 + $0x170] sm:$0xff]
      %v395 = vld [vmem:[%s1] sm:$0xff]
      %v396 = vld [vmem:[%s1 + $0x8] sm:$0xff]
      %v397 = vld [vmem:[%s1 + $0x18] sm:$0xff]
      %v398 = vld [vmem:[%s1 + $0x20] sm:$0xff]
      %v399 = vld [vmem:[%s1 + $0x30] sm:$0xff]
      %v400 = vld [vmem:[%s1 + $0x38] sm:$0xff]
      %v401 = vld [vmem:[%s1 + $0x48] sm:$0xff]
      %v402 = vld [vmem:[%s1 + $0x50] sm:$0xff]
      %v403 = vld [vmem:[%s1 + $0x60] sm:$0xff]
      %v404 = vld [vmem:[%s1 + $0x68] sm:$0xff]
      %v405 = vld [vmem:[%s1 + $0x78] sm:$0xff]
      %v406 = vld [vmem:[%s1 + $0x80] sm:$0xff]
      %v407 = vld [vmem:[%s1 + $0x90] sm:$0xff]
      %v408 = vld [vmem:[%s1 + $0x98] sm:$0xff]
      %v409 = vld [vmem:[%s1 + $0xa8] sm:$0xff]
      %v410 = vld [vmem:[%s1 + $0xb0] sm:$0xff]
      %v411 = vld [vmem:[%s1 + $0xc0] sm:$0xff]
      %v412 = vld [vmem:[%s1 + $0xc8] sm:$0xff]
      %v413 = vld [vmem:[%s1 + $0xd8] sm:$0xff]
      %v414 = vld [vmem:[%s1 + $0xe0] sm:$0xff]
      %v415 = vld [vmem:[%s1 + $0xf0] sm:$0xff]
      %v416 = vld [vmem:[%s1 + $0xf8] sm:$0xff]
      %v417 = vld [vmem:[%s1 + $0x108] sm:$0xff]
      %v418 = vld [vmem:[%s1 + $0x110] sm:$0xff]
      %v419 = vld [vmem:[%s1 + $0x120] sm:$0xff]
      %v420 = vld [vmem:[%s1 + $0x128] sm:$0xff]
      %v421 = vld [vmem:[%s1 + $0x138] sm:$0xff]
      %v422 = vld [vmem:[%s1 + $0x140] sm:$0xff]
      %v423 = vld [vmem:[%s1 + $0x150] sm:$0xff]
      %v424 = vld [vmem:[%s1 + $0x158] sm:$0xff]
      %v425 = vld [vmem:[%s1 + $0x168] sm:$0xff]
      %v426 = vld [vmem:[%s1 + $0x170] sm:$0xff]
      %v428 = vperm.slane %v361, 0
      %v430 = vmul.f32 %v363, %v428
      %v431 = vmul.f32 %v364, %v428
      %v432 = vmul.f32 %v365, %v428
      %v433 = vmul.f32 %v366, %v428
      %v434 = vmul.f32 %v367, %v428
      %v435 = vmul.f32 %v368, %v428
      %v436 = vmul.f32 %v369, %v428
      %v437 = vmul.f32 %v370, %v428
      %v438 = vmul.f32 %v371, %v428
      %v439 = vmul.f32 %v372, %v428
      %v440 = vmul.f32 %v373, %v428
      %v441 = vmul.f32 %v374, %v428
      %v442 = vmul.f32 %v375, %v428
      %v443 = vmul.f32 %v376, %v428
      %v444 = vmul.f32 %v377, %v428
      %v445 = vmul.f32 %v378, %v428
      %v446 = vmul.f32 %v379, %v428
      %v447 = vmul.f32 %v380, %v428
      %v448 = vmul.f32 %v381, %v428
      %v449 = vmul.f32 %v382, %v428
      %v450 = vmul.f32 %v383, %v428
      %v451 = vmul.f32 %v384, %v428
      %v452 = vmul.f32 %v385, %v428
      %v453 = vmul.f32 %v386, %v428
      %v454 = vmul.f32 %v387, %v428
      %v455 = vmul.f32 %v388, %v428
      %v456 = vmul.f32 %v389, %v428
      %v457 = vmul.f32 %v390, %v428
      %v458 = vmul.f32 %v391, %v428
      %v459 = vmul.f32 %v392, %v428
      %v460 = vmul.f32 %v393, %v428
      %v461 = vmul.f32 %v394, %v428
      %v463 = vperm.slane %v362, 0
      %v465 = vadd.f32 %v430, %v463
      %v466 = vadd.f32 %v431, %v463
      %v467 = vadd.f32 %v432, %v463
      %v468 = vadd.f32 %v433, %v463
      %v469 = vadd.f32 %v434, %v463
      %v470 = vadd.f32 %v435, %v463
      %v471 = vadd.f32 %v436, %v463
      %v472 = vadd.f32 %v437, %v463
      %v473 = vadd.f32 %v438, %v463
      %v474 = vadd.f32 %v439, %v463
      %v475 = vadd.f32 %v440, %v463
      %v476 = vadd.f32 %v441, %v463
      %v477 = vadd.f32 %v442, %v463
      %v478 = vadd.f32 %v443, %v463
      %v479 = vadd.f32 %v444, %v463
      %v480 = vadd.f32 %v445, %v463
      %v481 = vadd.f32 %v446, %v463
      %v482 = vadd.f32 %v447, %v463
      %v483 = vadd.f32 %v448, %v463
      %v484 = vadd.f32 %v449, %v463
      %v485 = vadd.f32 %v450, %v463
      %v486 = vadd.f32 %v451, %v463
      %v487 = vadd.f32 %v452, %v463
      %v488 = vadd.f32 %v453, %v463
      %v489 = vadd.f32 %v454, %v463
      %v490 = vadd.f32 %v455, %v463
      %v491 = vadd.f32 %v456, %v463
      %v492 = vadd.f32 %v457, %v463
      %v493 = vadd.f32 %v458, %v463
      %v494 = vadd.f32 %v459, %v463
      %v495 = vadd.f32 %v460, %v463
      %v496 = vadd.f32 %v461, %v463
      %v497 = vmax.f32 %v465, 0.0
      %v498 = vmax.f32 %v466, 0.0
      %v499 = vmax.f32 %v467, 0.0
      %v500 = vmax.f32 %v468, 0.0
      %v501 = vmax.f32 %v469, 0.0
      %v502 = vmax.f32 %v470, 0.0
      %v503 = vmax.f32 %v471, 0.0
      %v504 = vmax.f32 %v472, 0.0
      %v505 = vmax.f32 %v473, 0.0
      %v506 = vmax.f32 %v474, 0.0
      %v507 = vmax.f32 %v475, 0.0
      %v508 = vmax.f32 %v476, 0.0
      %v509 = vmax.f32 %v477, 0.0
      %v510 = vmax.f32 %v478, 0.0
      %v511 = vmax.f32 %v479, 0.0
      %v512 = vmax.f32 %v480, 0.0
      %v513 = vmax.f32 %v481, 0.0
      %v514 = vmax.f32 %v482, 0.0
      %v515 = vmax.f32 %v483, 0.0
      %v516 = vmax.f32 %v484, 0.0
      %v517 = vmax.f32 %v485, 0.0
      %v518 = vmax.f32 %v486, 0.0
      %v519 = vmax.f32 %v487, 0.0
      %v520 = vmax.f32 %v488, 0.0
      %v521 = vmax.f32 %v489, 0.0
      %v522 = vmax.f32 %v490, 0.0
      %v523 = vmax.f32 %v491, 0.0
      %v524 = vmax.f32 %v492, 0.0
      %v525 = vmax.f32 %v493, 0.0
      %v526 = vmax.f32 %v494, 0.0
      %v527 = vmax.f32 %v495, 0.0
      %v528 = vmax.f32 %v496, 0.0
      %530 = vset.pattern.permute.xlu0 0
      %531 = vperm.xlu0 %530, %v395
      %v532 = vpop.permute.xlu0 %531
      %535 = vset.pattern.permute.xlu0 0
      %536 = vperm.xlu0 %535, %v396
      %v537 = vpop.permute.xlu0 %536
      %540 = vset.pattern.permute.xlu0 0
      %541 = vperm.xlu0 %540, %v397
      %v542 = vpop.permute.xlu0 %541
      %545 = vset.pattern.permute.xlu0 0
      %546 = vperm.xlu0 %545, %v398
      %v547 = vpop.permute.xlu0 %546
      %550 = vset.pattern.permute.xlu0 0
      %551 = vperm.xlu0 %550, %v399
      %v552 = vpop.permute.xlu0 %551
      %555 = vset.pattern.permute.xlu0 0
      %556 = vperm.xlu0 %555, %v400
      %v557 = vpop.permute.xlu0 %556
      %560 = vset.pattern.permute.xlu0 0
      %561 = vperm.xlu0 %560, %v401
      %v562 = vpop.permute.xlu0 %561
      %565 = vset.pattern.permute.xlu0 0
      %566 = vperm.xlu0 %565, %v402
      %v567 = vpop.permute.xlu0 %566
      %570 = vset.pattern.permute.xlu0 0
      %571 = vperm.xlu0 %570, %v403
      %v572 = vpop.permute.xlu0 %571
      %575 = vset.pattern.permute.xlu0 0
      %576 = vperm.xlu0 %575, %v404
      %v577 = vpop.permute.xlu0 %576
      %580 = vset.pattern.permute.xlu0 0
      %581 = vperm.xlu0 %580, %v405
      %v582 = vpop.permute.xlu0 %581
      %585 = vset.pattern.permute.xlu0 0
      %586 = vperm.xlu0 %585, %v406
      %v587 = vpop.permute.xlu0 %586
      %590 = vset.pattern.permute.xlu0 0
      %591 = vperm.xlu0 %590, %v407
      %v592 = vpop.permute.xlu0 %591
      %595 = vset.pattern.permute.xlu0 0
      %596 = vperm.xlu0 %595, %v408
      %v597 = vpop.permute.xlu0 %596
      %600 = vset.pattern.permute.xlu0 0
      %601 = vperm.xlu0 %600, %v409
      %v602 = vpop.permute.xlu0 %601
      %605 = vset.pattern.permute.xlu0 0
      %606 = vperm.xlu0 %605, %v410
      %v607 = vpop.permute.xlu0 %606
      %610 = vset.pattern.permute.xlu0 0
      %611 = vperm.xlu0 %610, %v411
      %v612 = vpop.permute.xlu0 %611
      %615 = vset.pattern.permute.xlu0 0
      %616 = vperm.xlu0 %615, %v412
      %v617 = vpop.permute.xlu0 %616
      %620 = vset.pattern.permute.xlu0 0
      %621 = vperm.xlu0 %620, %v413
      %v622 = vpop.permute.xlu0 %621
      %625 = vset.pattern.permute.xlu0 0
      %626 = vperm.xlu0 %625, %v414
      %v627 = vpop.permute.xlu0 %626
      %630 = vset.pattern.permute.xlu0 0
      %631 = vperm.xlu0 %630, %v415
      %v632 = vpop.permute.xlu0 %631
      %635 = vset.pattern.permute.xlu0 0
      %636 = vperm.xlu0 %635, %v416
      %v637 = vpop.permute.xlu0 %636
      %640 = vset.pattern.permute.xlu0 0
      %641 = vperm.xlu0 %640, %v417
      %v642 = vpop.permute.xlu0 %641
      %645 = vset.pattern.permute.xlu0 0
      %646 = vperm.xlu0 %645, %v418
      %v647 = vpop.permute.xlu0 %646
      %650 = vset.pattern.permute.xlu0 0
      %651 = vperm.xlu0 %650, %v419
      %v652 = vpop.permute.xlu0 %651
      %655 = vset.pattern.permute.xlu0 0
      %656 = vperm.xlu0 %655, %v420
      %v657 = vpop.permute.xlu0 %656
      %660 = vset.pattern.permute.xlu0 0
      %661 = vperm.xlu0 %660, %v421
      %v662 = vpop.permute.xlu0 %661
      %665 = vset.pattern.permute.xlu0 0
      %666 = vperm.xlu0 %665, %v422
      %v667 = vpop.permute.xlu0 %666
      %670 = vset.pattern.permute.xlu0 0
      %671 = vperm.xlu0 %670, %v423
      %v672 = vpop.permute.xlu0 %671
      %675 = vset.pattern.permute.xlu0 0
      %676 = vperm.xlu0 %675, %v424
      %v677 = vpop.permute.xlu0 %676
      %680 = vset.pattern.permute.xlu0 0
      %681 = vperm.xlu0 %680, %v425
      %v682 = vpop.permute.xlu0 %681
      %685 = vset.pattern.permute.xlu0 0
      %686 = vperm.xlu0 %685, %v426
      %v687 = vpop.permute.xlu0 %686
      %v689 = vmul.f32 %v497, %v532
      %v690 = vmul.f32 %v498, %v537
      %v691 = vmul.f32 %v499, %v542
      %v692 = vmul.f32 %v500, %v547
      %v693 = vmul.f32 %v501, %v552
      %v694 = vmul.f32 %v502, %v557
      %v695 = vmul.f32 %v503, %v562
      %v696 = vmul.f32 %v504, %v567
      %v697 = vmul.f32 %v505, %v572
      %v698 = vmul.f32 %v506, %v577
      %v699 = vmul.f32 %v507, %v582
      %v700 = vmul.f32 %v508, %v587
      %v701 = vmul.f32 %v509, %v592
      %v702 = vmul.f32 %v510, %v597
      %v703 = vmul.f32 %v511, %v602
      %v704 = vmul.f32 %v512, %v607
      %v705 = vmul.f32 %v513, %v612
      %v706 = vmul.f32 %v514, %v617
      %v707 = vmul.f32 %v515, %v622
      %v708 = vmul.f32 %v516, %v627
      %v709 = vmul.f32 %v517, %v632
      %v710 = vmul.f32 %v518, %v637
      %v711 = vmul.f32 %v519, %v642
      %v712 = vmul.f32 %v520, %v647
      %v713 = vmul.f32 %v521, %v652
      %v714 = vmul.f32 %v522, %v657
      %v715 = vmul.f32 %v523, %v662
      %v716 = vmul.f32 %v524, %v667
      %v717 = vmul.f32 %v525, %v672
      %v718 = vmul.f32 %v526, %v677
      %v719 = vmul.f32 %v527, %v682
      %v720 = vmul.f32 %v528, %v687
      %v721 = vpack.c.bf16 %v690, %v689
      %v722 = vpack.c.bf16 %v692, %v691
      %v723 = vpack.c.bf16 %v694, %v693
      %v724 = vpack.c.bf16 %v696, %v695
      %v725 = vpack.c.bf16 %v698, %v697
      %v726 = vpack.c.bf16 %v700, %v699
      %v727 = vpack.c.bf16 %v702, %v701
      %v728 = vpack.c.bf16 %v704, %v703
      %v729 = vpack.c.bf16 %v706, %v705
      %v730 = vpack.c.bf16 %v708, %v707
      %v731 = vpack.c.bf16 %v710, %v709
      %v732 = vpack.c.bf16 %v712, %v711
      %v733 = vpack.c.bf16 %v714, %v713
      %v734 = vpack.c.bf16 %v716, %v715
      %v735 = vpack.c.bf16 %v718, %v717
      %v736 = vpack.c.bf16 %v720, %v719
      %v737 = vld [vmem:[#allocation2] sm:$0xff]
      %v738 = vld [vmem:[#allocation2 + $0x8] sm:$0xff]
      %v739 = vld [vmem:[#allocation2 + $0x10] sm:$0xff]
      %v740 = vld [vmem:[#allocation2 + $0x18] sm:$0xff]
      %v741 = vld [vmem:[#allocation2 + $0x20] sm:$0xff]
      %v742 = vld [vmem:[#allocation2 + $0x28] sm:$0xff]
      %v743 = vld [vmem:[#allocation2 + $0x30] sm:$0xff]
      %v744 = vld [vmem:[#allocation2 + $0x38] sm:$0xff]
      %v745 = vld [vmem:[#allocation2 + $0x40] sm:$0xff]
      %v746 = vld [vmem:[#allocation2 + $0x48] sm:$0xff]
      %v747 = vld [vmem:[#allocation2 + $0x50] sm:$0xff]
      %v748 = vld [vmem:[#allocation2 + $0x58] sm:$0xff]
      %v749 = vld [vmem:[#allocation2 + $0x60] sm:$0xff]
      %v750 = vld [vmem:[#allocation2 + $0x68] sm:$0xff]
      %v751 = vld [vmem:[#allocation2 + $0x70] sm:$0xff]
      %v752 = vld [vmem:[#allocation2 + $0x78] sm:$0xff]
      %v753 = vld [vmem:[#allocation2 + $0x80] sm:$0xff]
      %v754 = vld [vmem:[#allocation2 + $0x88] sm:$0xff]
      %v755 = vld [vmem:[#allocation2 + $0x90] sm:$0xff]
      %v756 = vld [vmem:[#allocation2 + $0x98] sm:$0xff]
      %v757 = vld [vmem:[#allocation2 + $0xa0] sm:$0xff]
      %v758 = vld [vmem:[#allocation2 + $0xa8] sm:$0xff]
      %v759 = vld [vmem:[#allocation2 + $0xb0] sm:$0xff]
      %v760 = vld [vmem:[#allocation2 + $0xb8] sm:$0xff]
      %v761 = vld [vmem:[#allocation2 + $0xc0] sm:$0xff]
      %v762 = vld [vmem:[#allocation2 + $0xc8] sm:$0xff]
      %v763 = vld [vmem:[#allocation2 + $0xd0] sm:$0xff]
      %v764 = vld [vmem:[#allocation2 + $0xd8] sm:$0xff]
      %v765 = vld [vmem:[#allocation2 + $0xe0] sm:$0xff]
      %v766 = vld [vmem:[#allocation2 + $0xe8] sm:$0xff]
      %v767 = vld [vmem:[#allocation2 + $0xf0] sm:$0xff]
      %v768 = vld [vmem:[#allocation2 + $0xf8] sm:$0xff]
      %v769 = vld [vmem:[%s312] sm:$0xf]
      %v770 = vld [vmem:[%s312 + $0x4] sm:$0xf]
      %v771 = vld [vmem:[%s312 + $0x8] sm:$0xf]
      %v772 = vld [vmem:[%s312 + $0xc] sm:$0xf]
      %v773 = vld [vmem:[%s312 + $0x10] sm:$0xf]
      %v774 = vld [vmem:[%s312 + $0x14] sm:$0xf]
      %v775 = vld [vmem:[%s312 + $0x18] sm:$0xf]
      %v776 = vld [vmem:[%s312 + $0x1c] sm:$0xf]
      %v777 = vld [vmem:[%s312 + $0x20] sm:$0xf]
      %v778 = vld [vmem:[%s312 + $0x24] sm:$0xf]
      %v779 = vld [vmem:[%s312 + $0x28] sm:$0xf]
      %v780 = vld [vmem:[%s312 + $0x2c] sm:$0xf]
      %v781 = vld [vmem:[%s312 + $0x30] sm:$0xf]
      %v782 = vld [vmem:[%s312 + $0x34] sm:$0xf]
      %v783 = vld [vmem:[%s312 + $0x38] sm:$0xf]
      %v784 = vld [vmem:[%s312 + $0x3c] sm:$0xf]
      %v801 = vunpack.c.l.b16 %v769
      %v802 = vunpack.c.l.b16 %v770
      %v803 = vunpack.c.l.b16 %v771
      %v804 = vunpack.c.l.b16 %v772
      %v805 = vunpack.c.l.b16 %v773
      %v806 = vunpack.c.l.b16 %v774
      %v807 = vunpack.c.l.b16 %v775
      %v808 = vunpack.c.l.b16 %v776
      %v809 = vunpack.c.l.b16 %v777
      %v810 = vunpack.c.l.b16 %v778
      %v811 = vunpack.c.l.b16 %v779
      %v812 = vunpack.c.l.b16 %v780
      %v813 = vunpack.c.l.b16 %v781
      %v814 = vunpack.c.l.b16 %v782
      %v815 = vunpack.c.l.b16 %v783
      %v816 = vunpack.c.l.b16 %v784
      %v817 = vpack.c.b16 %v802, %v801
      %v818 = vpack.c.b16 %v804, %v803
      %v819 = vpack.c.b16 %v806, %v805
      %v820 = vpack.c.b16 %v808, %v807
      %v821 = vpack.c.b16 %v810, %v809
      %v822 = vpack.c.b16 %v812, %v811
      %v823 = vpack.c.b16 %v814, %v813
      %v824 = vpack.c.b16 %v816, %v815
      %833 = vmatpush.bf16.msra.mxu0 %v824
      %834 = vmatpush.bf16.msra.mxu0 %v823
      %835 = vmatpush.bf16.msra.mxu0 %v822
      %836 = vmatpush.bf16.msra.mxu0 %v821
      %837 = vmatpush.bf16.msra.mxu0 %v820
      %838 = vmatpush.bf16.msra.mxu0 %v819
      %839 = vmatpush.bf16.msra.mxu0 %v818
      %840 = vmatpush.bf16.msra.mxu0 %v817
      %841 = vmatmul.bf16.gmra.mxu0 %v721
      %v842 = vpop.f32.mrf.mxu0
      %v843 = vadd.f32 0.0, %v842
      %v844 = vpop.f32.mrf.mxu0
      %v845 = vadd.f32 0.0, %v844
      %846 = vmatmul.bf16.gmra.mxu0 %v722
      %v847 = vpop.f32.mrf.mxu0
      %v848 = vadd.f32 0.0, %v847
      %v849 = vpop.f32.mrf.mxu0
      %v850 = vadd.f32 0.0, %v849
      %851 = vmatmul.bf16.gmra.mxu0 %v723
      %v852 = vpop.f32.mrf.mxu0
      %v853 = vadd.f32 0.0, %v852
      %v854 = vpop.f32.mrf.mxu0
      %v855 = vadd.f32 0.0, %v854
      %856 = vmatmul.bf16.gmra.mxu0 %v724
      %v857 = vpop.f32.mrf.mxu0
      %v858 = vadd.f32 0.0, %v857
      %v859 = vpop.f32.mrf.mxu0
      %v860 = vadd.f32 0.0, %v859
      %861 = vmatmul.bf16.gmra.mxu0 %v725
      %v862 = vpop.f32.mrf.mxu0
      %v863 = vadd.f32 0.0, %v862
      %v864 = vpop.f32.mrf.mxu0
      %v865 = vadd.f32 0.0, %v864
      %866 = vmatmul.bf16.gmra.mxu0 %v726
      %v867 = vpop.f32.mrf.mxu0
      %v868 = vadd.f32 0.0, %v867
      %v869 = vpop.f32.mrf.mxu0
      %v870 = vadd.f32 0.0, %v869
      %871 = vmatmul.bf16.gmra.mxu0 %v727
      %v872 = vpop.f32.mrf.mxu0
      %v873 = vadd.f32 0.0, %v872
      %v874 = vpop.f32.mrf.mxu0
      %v875 = vadd.f32 0.0, %v874
      %876 = vmatmul.bf16.gmra.mxu0 %v728
      %v877 = vpop.f32.mrf.mxu0
      %v878 = vadd.f32 0.0, %v877
      %v879 = vpop.f32.mrf.mxu0
      %v880 = vadd.f32 0.0, %v879
      %881 = vmatmul.bf16.gmra.mxu0 %v729
      %v882 = vpop.f32.mrf.mxu0
      %v883 = vadd.f32 0.0, %v882
      %v884 = vpop.f32.mrf.mxu0
      %v885 = vadd.f32 0.0, %v884
      %886 = vmatmul.bf16.gmra.mxu0 %v730
      %v887 = vpop.f32.mrf.mxu0
      %v888 = vadd.f32 0.0, %v887
      %v889 = vpop.f32.mrf.mxu0
      %v890 = vadd.f32 0.0, %v889
      %891 = vmatmul.bf16.gmra.mxu0 %v731
      %v892 = vpop.f32.mrf.mxu0
      %v893 = vadd.f32 0.0, %v892
      %v894 = vpop.f32.mrf.mxu0
      %v895 = vadd.f32 0.0, %v894
      %896 = vmatmul.bf16.gmra.mxu0 %v732
      %v897 = vpop.f32.mrf.mxu0
      %v898 = vadd.f32 0.0, %v897
      %v899 = vpop.f32.mrf.mxu0
      %v900 = vadd.f32 0.0, %v899
      %901 = vmatmul.bf16.gmra.mxu0 %v733
      %v902 = vpop.f32.mrf.mxu0
      %v903 = vadd.f32 0.0, %v902
      %v904 = vpop.f32.mrf.mxu0
      %v905 = vadd.f32 0.0, %v904
      %906 = vmatmul.bf16.gmra.mxu0 %v734
      %v907 = vpop.f32.mrf.mxu0
      %v908 = vadd.f32 0.0, %v907
      %v909 = vpop.f32.mrf.mxu0
      %v910 = vadd.f32 0.0, %v909
      %911 = vmatmul.bf16.gmra.mxu0 %v735
      %v912 = vpop.f32.mrf.mxu0
      %v913 = vadd.f32 0.0, %v912
      %v914 = vpop.f32.mrf.mxu0
      %v915 = vadd.f32 0.0, %v914
      %916 = vmatmul.bf16.gmra.mxu0 %v736
      %v917 = vpop.f32.mrf.mxu0
      %v918 = vadd.f32 0.0, %v917
      %v919 = vpop.f32.mrf.mxu0
      %v920 = vadd.f32 0.0, %v919
      %921 = vdwg.mxu0
      %v922 = vadd.f32 %v737, %v843
      %v923 = vadd.f32 %v738, %v845
      %v924 = vadd.f32 %v739, %v848
      %v925 = vadd.f32 %v740, %v850
      %v926 = vadd.f32 %v741, %v853
      %v927 = vadd.f32 %v742, %v855
      %v928 = vadd.f32 %v743, %v858
      %v929 = vadd.f32 %v744, %v860
      %v930 = vadd.f32 %v745, %v863
      %v931 = vadd.f32 %v746, %v865
      %v932 = vadd.f32 %v747, %v868
      %v933 = vadd.f32 %v748, %v870
      %v934 = vadd.f32 %v749, %v873
      %v935 = vadd.f32 %v750, %v875
      %v936 = vadd.f32 %v751, %v878
      %v937 = vadd.f32 %v752, %v880
      %v938 = vadd.f32 %v753, %v883
      %v939 = vadd.f32 %v754, %v885
      %v940 = vadd.f32 %v755, %v888
      %v941 = vadd.f32 %v756, %v890
      %v942 = vadd.f32 %v757, %v893
      %v943 = vadd.f32 %v758, %v895
      %v944 = vadd.f32 %v759, %v898
      %v945 = vadd.f32 %v760, %v900
      %v946 = vadd.f32 %v761, %v903
      %v947 = vadd.f32 %v762, %v905
      %v948 = vadd.f32 %v763, %v908
      %v949 = vadd.f32 %v764, %v910
      %v950 = vadd.f32 %v765, %v913
      %v951 = vadd.f32 %v766, %v915
      %v952 = vadd.f32 %v767, %v918
      %v953 = vadd.f32 %v768, %v920
      %954 = vst [vmem:[#allocation2] sm:$0xff] %v922
      %955 = vst [vmem:[#allocation2 + $0x8] sm:$0xff] %v923
      %956 = vst [vmem:[#allocation2 + $0x10] sm:$0xff] %v924
      %957 = vst [vmem:[#allocation2 + $0x18] sm:$0xff] %v925
      %958 = vst [vmem:[#allocation2 + $0x20] sm:$0xff] %v926
      %959 = vst [vmem:[#allocation2 + $0x28] sm:$0xff] %v927
      %960 = vst [vmem:[#allocation2 + $0x30] sm:$0xff] %v928
      %961 = vst [vmem:[#allocation2 + $0x38] sm:$0xff] %v929
      %962 = vst [vmem:[#allocation2 + $0x40] sm:$0xff] %v930
      %963 = vst [vmem:[#allocation2 + $0x48] sm:$0xff] %v931
      %964 = vst [vmem:[#allocation2 + $0x50] sm:$0xff] %v932
      %965 = vst [vmem:[#allocation2 + $0x58] sm:$0xff] %v933
      %966 = vst [vmem:[#allocation2 + $0x60] sm:$0xff] %v934
      %967 = vst [vmem:[#allocation2 + $0x68] sm:$0xff] %v935
      %968 = vst [vmem:[#allocation2 + $0x70] sm:$0xff] %v936
      %969 = vst [vmem:[#allocation2 + $0x78] sm:$0xff] %v937
      %970 = vst [vmem:[#allocation2 + $0x80] sm:$0xff] %v938
      %971 = vst [vmem:[#allocation2 + $0x88] sm:$0xff] %v939
      %972 = vst [vmem:[#allocation2 + $0x90] sm:$0xff] %v940
      %973 = vst [vmem:[#allocation2 + $0x98] sm:$0xff] %v941
      %974 = vst [vmem:[#allocation2 + $0xa0] sm:$0xff] %v942
      %975 = vst [vmem:[#allocation2 + $0xa8] sm:$0xff] %v943
      %976 = vst [vmem:[#allocation2 + $0xb0] sm:$0xff] %v944
      %977 = vst [vmem:[#allocation2 + $0xb8] sm:$0xff] %v945
      %978 = vst [vmem:[#allocation2 + $0xc0] sm:$0xff] %v946
      %979 = vst [vmem:[#allocation2 + $0xc8] sm:$0xff] %v947
      %980 = vst [vmem:[#allocation2 + $0xd0] sm:$0xff] %v948
      %981 = vst [vmem:[#allocation2 + $0xd8] sm:$0xff] %v949
      %982 = vst [vmem:[#allocation2 + $0xe0] sm:$0xff] %v950
      %983 = vst [vmem:[#allocation2 + $0xe8] sm:$0xff] %v951
      %984 = vst [vmem:[#allocation2 + $0xf0] sm:$0xff] %v952
      %985 = vst [vmem:[#allocation2 + $0xf8] sm:$0xff] %v953
      %v986 = vld [vmem:[%s307 + $0x1] sm:$0xff]
      %v987 = vld [vmem:[%s307 + $0x9] sm:$0xff]
      %v988 = vld [vmem:[%s307 + $0x19] sm:$0xff]
      %v989 = vld [vmem:[%s307 + $0x21] sm:$0xff]
      %v990 = vld [vmem:[%s307 + $0x31] sm:$0xff]
      %v991 = vld [vmem:[%s307 + $0x39] sm:$0xff]
      %v992 = vld [vmem:[%s307 + $0x49] sm:$0xff]
      %v993 = vld [vmem:[%s307 + $0x51] sm:$0xff]
      %v994 = vld [vmem:[%s307 + $0x61] sm:$0xff]
      %v995 = vld [vmem:[%s307 + $0x69] sm:$0xff]
      %v996 = vld [vmem:[%s307 + $0x79] sm:$0xff]
      %v997 = vld [vmem:[%s307 + $0x81] sm:$0xff]
      %v998 = vld [vmem:[%s307 + $0x91] sm:$0xff]
      %v999 = vld [vmem:[%s307 + $0x99] sm:$0xff]
      %v1000 = vld [vmem:[%s307 + $0xa9] sm:$0xff]
      %v1001 = vld [vmem:[%s307 + $0xb1] sm:$0xff]
      %v1002 = vld [vmem:[%s307 + $0xc1] sm:$0xff]
      %v1003 = vld [vmem:[%s307 + $0xc9] sm:$0xff]
      %v1004 = vld [vmem:[%s307 + $0xd9] sm:$0xff]
      %v1005 = vld [vmem:[%s307 + $0xe1] sm:$0xff]
      %v1006 = vld [vmem:[%s307 + $0xf1] sm:$0xff]
      %v1007 = vld [vmem:[%s307 + $0xf9] sm:$0xff]
      %v1008 = vld [vmem:[%s307 + $0x109] sm:$0xff]
      %v1009 = vld [vmem:[%s307 + $0x111] sm:$0xff]
      %v1010 = vld [vmem:[%s307 + $0x121] sm:$0xff]
      %v1011 = vld [vmem:[%s307 + $0x129] sm:$0xff]
      %v1012 = vld [vmem:[%s307 + $0x139] sm:$0xff]
      %v1013 = vld [vmem:[%s307 + $0x141] sm:$0xff]
      %v1014 = vld [vmem:[%s307 + $0x151] sm:$0xff]
      %v1015 = vld [vmem:[%s307 + $0x159] sm:$0xff]
      %v1016 = vld [vmem:[%s307 + $0x169] sm:$0xff]
      %v1017 = vld [vmem:[%s307 + $0x171] sm:$0xff]
      %v1018 = vld [vmem:[%s1 + $0x1] sm:$0xff]
      %v1019 = vld [vmem:[%s1 + $0x9] sm:$0xff]
      %v1020 = vld [vmem:[%s1 + $0x19] sm:$0xff]
      %v1021 = vld [vmem:[%s1 + $0x21] sm:$0xff]
      %v1022 = vld [vmem:[%s1 + $0x31] sm:$0xff]
      %v1023 = vld [vmem:[%s1 + $0x39] sm:$0xff]
      %v1024 = vld [vmem:[%s1 + $0x49] sm:$0xff]
      %v1025 = vld [vmem:[%s1 + $0x51] sm:$0xff]
      %v1026 = vld [vmem:[%s1 + $0x61] sm:$0xff]
      %v1027 = vld [vmem:[%s1 + $0x69] sm:$0xff]
      %v1028 = vld [vmem:[%s1 + $0x79] sm:$0xff]
      %v1029 = vld [vmem:[%s1 + $0x81] sm:$0xff]
      %v1030 = vld [vmem:[%s1 + $0x91] sm:$0xff]
      %v1031 = vld [vmem:[%s1 + $0x99] sm:$0xff]
      %v1032 = vld [vmem:[%s1 + $0xa9] sm:$0xff]
      %v1033 = vld [vmem:[%s1 + $0xb1] sm:$0xff]
      %v1034 = vld [vmem:[%s1 + $0xc1] sm:$0xff]
      %v1035 = vld [vmem:[%s1 + $0xc9] sm:$0xff]
      %v1036 = vld [vmem:[%s1 + $0xd9] sm:$0xff]
      %v1037 = vld [vmem:[%s1 + $0xe1] sm:$0xff]
      %v1038 = vld [vmem:[%s1 + $0xf1] sm:$0xff]
      %v1039 = vld [vmem:[%s1 + $0xf9] sm:$0xff]
      %v1040 = vld [vmem:[%s1 + $0x109] sm:$0xff]
      %v1041 = vld [vmem:[%s1 + $0x111] sm:$0xff]
      %v1042 = vld [vmem:[%s1 + $0x121] sm:$0xff]
      %v1043 = vld [vmem:[%s1 + $0x129] sm:$0xff]
      %v1044 = vld [vmem:[%s1 + $0x139] sm:$0xff]
      %v1045 = vld [vmem:[%s1 + $0x141] sm:$0xff]
      %v1046 = vld [vmem:[%s1 + $0x151] sm:$0xff]
      %v1047 = vld [vmem:[%s1 + $0x159] sm:$0xff]
      %v1048 = vld [vmem:[%s1 + $0x169] sm:$0xff]
      %v1049 = vld [vmem:[%s1 + $0x171] sm:$0xff]
      %v1050 = vmul.f32 %v986, %v428
      %v1051 = vmul.f32 %v987, %v428
      %v1052 = vmul.f32 %v988, %v428
      %v1053 = vmul.f32 %v989, %v428
      %v1054 = vmul.f32 %v990, %v428
      %v1055 = vmul.f32 %v991, %v428
      %v1056 = vmul.f32 %v992, %v428
      %v1057 = vmul.f32 %v993, %v428
      %v1058 = vmul.f32 %v994, %v428
      %v1059 = vmul.f32 %v995, %v428
      %v1060 = vmul.f32 %v996, %v428
      %v1061 = vmul.f32 %v997, %v428
      %v1062 = vmul.f32 %v998, %v428
      %v1063 = vmul.f32 %v999, %v428
      %v1064 = vmul.f32 %v1000, %v428
      %v1065 = vmul.f32 %v1001, %v428
      %v1066 = vmul.f32 %v1002, %v428
      %v1067 = vmul.f32 %v1003, %v428
      %v1068 = vmul.f32 %v1004, %v428
      %v1069 = vmul.f32 %v1005, %v428
      %v1070 = vmul.f32 %v1006, %v428
      %v1071 = vmul.f32 %v1007, %v428
      %v1072 = vmul.f32 %v1008, %v428
      %v1073 = vmul.f32 %v1009, %v428
      %v1074 = vmul.f32 %v1010, %v428
      %v1075 = vmul.f32 %v1011, %v428
      %v1076 = vmul.f32 %v1012, %v428
      %v1077 = vmul.f32 %v1013, %v428
      %v1078 = vmul.f32 %v1014, %v428
      %v1079 = vmul.f32 %v1015, %v428
      %v1080 = vmul.f32 %v1016, %v428
      %v1081 = vmul.f32 %v1017, %v428
      %v1082 = vadd.f32 %v1050, %v463
      %v1083 = vadd.f32 %v1051, %v463
      %v1084 = vadd.f32 %v1052, %v463
      %v1085 = vadd.f32 %v1053, %v463
      %v1086 = vadd.f32 %v1054, %v463
      %v1087 = vadd.f32 %v1055, %v463
      %v1088 = vadd.f32 %v1056, %v463
      %v1089 = vadd.f32 %v1057, %v463
      %v1090 = vadd.f32 %v1058, %v463
      %v1091 = vadd.f32 %v1059, %v463
      %v1092 = vadd.f32 %v1060, %v463
      %v1093 = vadd.f32 %v1061, %v463
      %v1094 = vadd.f32 %v1062, %v463
      %v1095 = vadd.f32 %v1063, %v463
      %v1096 = vadd.f32 %v1064, %v463
      %v1097 = vadd.f32 %v1065, %v463
      %v1098 = vadd.f32 %v1066, %v463
      %v1099 = vadd.f32 %v1067, %v463
      %v1100 = vadd.f32 %v1068, %v463
      %v1101 = vadd.f32 %v1069, %v463
      %v1102 = vadd.f32 %v1070, %v463
      %v1103 = vadd.f32 %v1071, %v463
      %v1104 = vadd.f32 %v1072, %v463
      %v1105 = vadd.f32 %v1073, %v463
      %v1106 = vadd.f32 %v1074, %v463
      %v1107 = vadd.f32 %v1075, %v463
      %v1108 = vadd.f32 %v1076, %v463
      %v1109 = vadd.f32 %v1077, %v463
      %v1110 = vadd.f32 %v1078, %v463
      %v1111 = vadd.f32 %v1079, %v463
      %v1112 = vadd.f32 %v1080, %v463
      %v1113 = vadd.f32 %v1081, %v463
      %v1114 = vmax.f32 %v1082, 0.0
      %v1115 = vmax.f32 %v1083, 0.0
      %v1116 = vmax.f32 %v1084, 0.0
      %v1117 = vmax.f32 %v1085, 0.0
      %v1118 = vmax.f32 %v1086, 0.0
      %v1119 = vmax.f32 %v1087, 0.0
      %v1120 = vmax.f32 %v1088, 0.0
      %v1121 = vmax.f32 %v1089, 0.0
      %v1122 = vmax.f32 %v1090, 0.0
      %v1123 = vmax.f32 %v1091, 0.0
      %v1124 = vmax.f32 %v1092, 0.0
      %v1125 = vmax.f32 %v1093, 0.0
      %v1126 = vmax.f32 %v1094, 0.0
      %v1127 = vmax.f32 %v1095, 0.0
      %v1128 = vmax.f32 %v1096, 0.0
      %v1129 = vmax.f32 %v1097, 0.0
      %v1130 = vmax.f32 %v1098, 0.0
      %v1131 = vmax.f32 %v1099, 0.0
      %v1132 = vmax.f32 %v1100, 0.0
      %v1133 = vmax.f32 %v1101, 0.0
      %v1134 = vmax.f32 %v1102, 0.0
      %v1135 = vmax.f32 %v1103, 0.0
      %v1136 = vmax.f32 %v1104, 0.0
      %v1137 = vmax.f32 %v1105, 0.0
      %v1138 = vmax.f32 %v1106, 0.0
      %v1139 = vmax.f32 %v1107, 0.0
      %v1140 = vmax.f32 %v1108, 0.0
      %v1141 = vmax.f32 %v1109, 0.0
      %v1142 = vmax.f32 %v1110, 0.0
      %v1143 = vmax.f32 %v1111, 0.0
      %v1144 = vmax.f32 %v1112, 0.0
      %v1145 = vmax.f32 %v1113, 0.0
      %1147 = vset.pattern.permute.xlu0 0
      %1148 = vperm.xlu0 %1147, %v1018
      %v1149 = vpop.permute.xlu0 %1148
      %1152 = vset.pattern.permute.xlu0 0
      %1153 = vperm.xlu0 %1152, %v1019
      %v1154 = vpop.permute.xlu0 %1153
      %1157 = vset.pattern.permute.xlu0 0
      %1158 = vperm.xlu0 %1157, %v1020
      %v1159 = vpop.permute.xlu0 %1158
      %1162 = vset.pattern.permute.xlu0 0
      %1163 = vperm.xlu0 %1162, %v1021
      %v1164 = vpop.permute.xlu0 %1163
      %1167 = vset.pattern.permute.xlu0 0
      %1168 = vperm.xlu0 %1167, %v1022
      %v1169 = vpop.permute.xlu0 %1168
      %1172 = vset.pattern.permute.xlu0 0
      %1173 = vperm.xlu0 %1172, %v1023
      %v1174 = vpop.permute.xlu0 %1173
      %1177 = vset.pattern.permute.xlu0 0
      %1178 = vperm.xlu0 %1177, %v1024
      %v1179 = vpop.permute.xlu0 %1178
      %1182 = vset.pattern.permute.xlu0 0
      %1183 = vperm.xlu0 %1182, %v1025
      %v1184 = vpop.permute.xlu0 %1183
      %1187 = vset.pattern.permute.xlu0 0
      %1188 = vperm.xlu0 %1187, %v1026
      %v1189 = vpop.permute.xlu0 %1188
      %1192 = vset.pattern.permute.xlu0 0
      %1193 = vperm.xlu0 %1192, %v1027
      %v1194 = vpop.permute.xlu0 %1193
      %1197 = vset.pattern.permute.xlu0 0
      %1198 = vperm.xlu0 %1197, %v1028
      %v1199 = vpop.permute.xlu0 %1198
      %1202 = vset.pattern.permute.xlu0 0
      %1203 = vperm.xlu0 %1202, %v1029
      %v1204 = vpop.permute.xlu0 %1203
      %1207 = vset.pattern.permute.xlu0 0
      %1208 = vperm.xlu0 %1207, %v1030
      %v1209 = vpop.permute.xlu0 %1208
      %1212 = vset.pattern.permute.xlu0 0
      %1213 = vperm.xlu0 %1212, %v1031
      %v1214 = vpop.permute.xlu0 %1213
      %1217 = vset.pattern.permute.xlu0 0
      %1218 = vperm.xlu0 %1217, %v1032
      %v1219 = vpop.permute.xlu0 %1218
      %1222 = vset.pattern.permute.xlu0 0
      %1223 = vperm.xlu0 %1222, %v1033
      %v1224 = vpop.permute.xlu0 %1223
      %1227 = vset.pattern.permute.xlu0 0
      %1228 = vperm.xlu0 %1227, %v1034
      %v1229 = vpop.permute.xlu0 %1228
      %1232 = vset.pattern.permute.xlu0 0
      %1233 = vperm.xlu0 %1232, %v1035
      %v1234 = vpop.permute.xlu0 %1233
      %1237 = vset.pattern.permute.xlu0 0
      %1238 = vperm.xlu0 %1237, %v1036
      %v1239 = vpop.permute.xlu0 %1238
      %1242 = vset.pattern.permute.xlu0 0
      %1243 = vperm.xlu0 %1242, %v1037
      %v1244 = vpop.permute.xlu0 %1243
      %1247 = vset.pattern.permute.xlu0 0
      %1248 = vperm.xlu0 %1247, %v1038
      %v1249 = vpop.permute.xlu0 %1248
      %1252 = vset.pattern.permute.xlu0 0
      %1253 = vperm.xlu0 %1252, %v1039
      %v1254 = vpop.permute.xlu0 %1253
      %1257 = vset.pattern.permute.xlu0 0
      %1258 = vperm.xlu0 %1257, %v1040
      %v1259 = vpop.permute.xlu0 %1258
      %1262 = vset.pattern.permute.xlu0 0
      %1263 = vperm.xlu0 %1262, %v1041
      %v1264 = vpop.permute.xlu0 %1263
      %1267 = vset.pattern.permute.xlu0 0
      %1268 = vperm.xlu0 %1267, %v1042
      %v1269 = vpop.permute.xlu0 %1268
      %1272 = vset.pattern.permute.xlu0 0
      %1273 = vperm.xlu0 %1272, %v1043
      %v1274 = vpop.permute.xlu0 %1273
      %1277 = vset.pattern.permute.xlu0 0
      %1278 = vperm.xlu0 %1277, %v1044
      %v1279 = vpop.permute.xlu0 %1278
      %1282 = vset.pattern.permute.xlu0 0
      %1283 = vperm.xlu0 %1282, %v1045
      %v1284 = vpop.permute.xlu0 %1283
      %1287 = vset.pattern.permute.xlu0 0
      %1288 = vperm.xlu0 %1287, %v1046
      %v1289 = vpop.permute.xlu0 %1288
      %1292 = vset.pattern.permute.xlu0 0
      %1293 = vperm.xlu0 %1292, %v1047
      %v1294 = vpop.permute.xlu0 %1293
      %1297 = vset.pattern.permute.xlu0 0
      %1298 = vperm.xlu0 %1297, %v1048
      %v1299 = vpop.permute.xlu0 %1298
      %1302 = vset.pattern.permute.xlu0 0
      %1303 = vperm.xlu0 %1302, %v1049
      %v1304 = vpop.permute.xlu0 %1303
      %v1306 = vmul.f32 %v1114, %v1149
      %v1307 = vmul.f32 %v1115, %v1154
      %v1308 = vmul.f32 %v1116, %v1159
      %v1309 = vmul.f32 %v1117, %v1164
      %v1310 = vmul.f32 %v1118, %v1169
      %v1311 = vmul.f32 %v1119, %v1174
      %v1312 = vmul.f32 %v1120, %v1179
      %v1313 = vmul.f32 %v1121, %v1184
      %v1314 = vmul.f32 %v1122, %v1189
      %v1315 = vmul.f32 %v1123, %v1194
      %v1316 = vmul.f32 %v1124, %v1199
      %v1317 = vmul.f32 %v1125, %v1204
      %v1318 = vmul.f32 %v1126, %v1209
      %v1319 = vmul.f32 %v1127, %v1214
      %v1320 = vmul.f32 %v1128, %v1219
      %v1321 = vmul.f32 %v1129, %v1224
      %v1322 = vmul.f32 %v1130, %v1229
      %v1323 = vmul.f32 %v1131, %v1234
      %v1324 = vmul.f32 %v1132, %v1239
      %v1325 = vmul.f32 %v1133, %v1244
      %v1326 = vmul.f32 %v1134, %v1249
      %v1327 = vmul.f32 %v1135, %v1254
      %v1328 = vmul.f32 %v1136, %v1259
      %v1329 = vmul.f32 %v1137, %v1264
      %v1330 = vmul.f32 %v1138, %v1269
      %v1331 = vmul.f32 %v1139, %v1274
      %v1332 = vmul.f32 %v1140, %v1279
      %v1333 = vmul.f32 %v1141, %v1284
      %v1334 = vmul.f32 %v1142, %v1289
      %v1335 = vmul.f32 %v1143, %v1294
      %v1336 = vmul.f32 %v1144, %v1299
      %v1337 = vmul.f32 %v1145, %v1304
      %v1338 = vpack.c.bf16 %v1307, %v1306
      %v1339 = vpack.c.bf16 %v1309, %v1308
      %v1340 = vpack.c.bf16 %v1311, %v1310
      %v1341 = vpack.c.bf16 %v1313, %v1312
      %v1342 = vpack.c.bf16 %v1315, %v1314
      %v1343 = vpack.c.bf16 %v1317, %v1316
      %v1344 = vpack.c.bf16 %v1319, %v1318
      %v1345 = vpack.c.bf16 %v1321, %v1320
      %v1346 = vpack.c.bf16 %v1323, %v1322
      %v1347 = vpack.c.bf16 %v1325, %v1324
      %v1348 = vpack.c.bf16 %v1327, %v1326
      %v1349 = vpack.c.bf16 %v1329, %v1328
      %v1350 = vpack.c.bf16 %v1331, %v1330
      %v1351 = vpack.c.bf16 %v1333, %v1332
      %v1352 = vpack.c.bf16 %v1335, %v1334
      %v1353 = vpack.c.bf16 %v1337, %v1336
      %v1354 = vld [vmem:[#allocation2] sm:$0xff]
      %v1355 = vld [vmem:[#allocation2 + $0x8] sm:$0xff]
      %v1356 = vld [vmem:[#allocation2 + $0x10] sm:$0xff]
      %v1357 = vld [vmem:[#allocation2 + $0x18] sm:$0xff]
      %v1358 = vld [vmem:[#allocation2 + $0x20] sm:$0xff]
      %v1359 = vld [vmem:[#allocation2 + $0x28] sm:$0xff]
      %v1360 = vld [vmem:[#allocation2 + $0x30] sm:$0xff]
      %v1361 = vld [vmem:[#allocation2 + $0x38] sm:$0xff]
      %v1362 = vld [vmem:[#allocation2 + $0x40] sm:$0xff]
      %v1363 = vld [vmem:[#allocation2 + $0x48] sm:$0xff]
      %v1364 = vld [vmem:[#allocation2 + $0x50] sm:$0xff]
      %v1365 = vld [vmem:[#allocation2 + $0x58] sm:$0xff]
      %v1366 = vld [vmem:[#allocation2 + $0x60] sm:$0xff]
      %v1367 = vld [vmem:[#allocation2 + $0x68] sm:$0xff]
      %v1368 = vld [vmem:[#allocation2 + $0x70] sm:$0xff]
      %v1369 = vld [vmem:[#allocation2 + $0x78] sm:$0xff]
      %v1370 = vld [vmem:[#allocation2 + $0x80] sm:$0xff]
      %v1371 = vld [vmem:[#allocation2 + $0x88] sm:$0xff]
      %v1372 = vld [vmem:[#allocation2 + $0x90] sm:$0xff]
      %v1373 = vld [vmem:[#allocation2 + $0x98] sm:$0xff]
      %v1374 = vld [vmem:[#allocation2 + $0xa0] sm:$0xff]
      %v1375 = vld [vmem:[#allocation2 + $0xa8] sm:$0xff]
      %v1376 = vld [vmem:[#allocation2 + $0xb0] sm:$0xff]
      %v1377 = vld [vmem:[#allocation2 + $0xb8] sm:$0xff]
      %v1378 = vld [vmem:[#allocation2 + $0xc0] sm:$0xff]
      %v1379 = vld [vmem:[#allocation2 + $0xc8] sm:$0xff]
      %v1380 = vld [vmem:[#allocation2 + $0xd0] sm:$0xff]
      %v1381 = vld [vmem:[#allocation2 + $0xd8] sm:$0xff]
      %v1382 = vld [vmem:[#allocation2 + $0xe0] sm:$0xff]
      %v1383 = vld [vmem:[#allocation2 + $0xe8] sm:$0xff]
      %v1384 = vld [vmem:[#allocation2 + $0xf0] sm:$0xff]
      %v1385 = vld [vmem:[#allocation2 + $0xf8] sm:$0xff]
      %s1386 = scalar_lea.vmem %s312, 64
      %v1387 = vld [vmem:[%s1386] sm:$0xf]
      %v1388 = vld [vmem:[%s1386 + $0x4] sm:$0xf]
      %v1389 = vld [vmem:[%s1386 + $0x8] sm:$0xf]
      %v1390 = vld [vmem:[%s1386 + $0xc] sm:$0xf]
      %v1391 = vld [vmem:[%s1386 + $0x10] sm:$0xf]
      %v1392 = vld [vmem:[%s1386 + $0x14] sm:$0xf]
      %v1393 = vld [vmem:[%s1386 + $0x18] sm:$0xf]
      %v1394 = vld [vmem:[%s1386 + $0x1c] sm:$0xf]
      %v1395 = vld [vmem:[%s1386 + $0x20] sm:$0xf]
      %v1396 = vld [vmem:[%s1386 + $0x24] sm:$0xf]
      %v1397 = vld [vmem:[%s1386 + $0x28] sm:$0xf]
      %v1398 = vld [vmem:[%s1386 + $0x2c] sm:$0xf]
      %v1399 = vld [vmem:[%s1386 + $0x30] sm:$0xf]
      %v1400 = vld [vmem:[%s1386 + $0x34] sm:$0xf]
      %v1401 = vld [vmem:[%s1386 + $0x38] sm:$0xf]
      %v1402 = vld [vmem:[%s1386 + $0x3c] sm:$0xf]
      %v1419 = vunpack.c.l.b16 %v1387
      %v1420 = vunpack.c.l.b16 %v1388
      %v1421 = vunpack.c.l.b16 %v1389
      %v1422 = vunpack.c.l.b16 %v1390
      %v1423 = vunpack.c.l.b16 %v1391
      %v1424 = vunpack.c.l.b16 %v1392
      %v1425 = vunpack.c.l.b16 %v1393
      %v1426 = vunpack.c.l.b16 %v1394
      %v1427 = vunpack.c.l.b16 %v1395
      %v1428 = vunpack.c.l.b16 %v1396
      %v1429 = vunpack.c.l.b16 %v1397
      %v1430 = vunpack.c.l.b16 %v1398
      %v1431 = vunpack.c.l.b16 %v1399
      %v1432 = vunpack.c.l.b16 %v1400
      %v1433 = vunpack.c.l.b16 %v1401
      %v1434 = vunpack.c.l.b16 %v1402
      %v1435 = vpack.c.b16 %v1420, %v1419
      %v1436 = vpack.c.b16 %v1422, %v1421
      %v1437 = vpack.c.b16 %v1424, %v1423
      %v1438 = vpack.c.b16 %v1426, %v1425
      %v1439 = vpack.c.b16 %v1428, %v1427
      %v1440 = vpack.c.b16 %v1430, %v1429
      %v1441 = vpack.c.b16 %v1432, %v1431
      %v1442 = vpack.c.b16 %v1434, %v1433
      %1451 = vmatpush.bf16.msra.mxu0 %v1442
      %1452 = vmatpush.bf16.msra.mxu0 %v1441
      %1453 = vmatpush.bf16.msra.mxu0 %v1440
      %1454 = vmatpush.bf16.msra.mxu0 %v1439
      %1455 = vmatpush.bf16.msra.mxu0 %v1438
      %1456 = vmatpush.bf16.msra.mxu0 %v1437
      %1457 = vmatpush.bf16.msra.mxu0 %v1436
      %1458 = vmatpush.bf16.msra.mxu0 %v1435
      %1459 = vmatmul.bf16.gmra.mxu0 %v1338
      %v1460 = vpop.f32.mrf.mxu0
      %v1461 = vadd.f32 0.0, %v1460
      %v1462 = vpop.f32.mrf.mxu0
      %v1463 = vadd.f32 0.0, %v1462
      %1464 = vmatmul.bf16.gmra.mxu0 %v1339
      %v1465 = vpop.f32.mrf.mxu0
      %v1466 = vadd.f32 0.0, %v1465
      %v1467 = vpop.f32.mrf.mxu0
      %v1468 = vadd.f32 0.0, %v1467
      %1469 = vmatmul.bf16.gmra.mxu0 %v1340
      %v1470 = vpop.f32.mrf.mxu0
      %v1471 = vadd.f32 0.0, %v1470
      %v1472 = vpop.f32.mrf.mxu0
      %v1473 = vadd.f32 0.0, %v1472
      %1474 = vmatmul.bf16.gmra.mxu0 %v1341
      %v1475 = vpop.f32.mrf.mxu0
      %v1476 = vadd.f32 0.0, %v1475
      %v1477 = vpop.f32.mrf.mxu0
      %v1478 = vadd.f32 0.0, %v1477
      %1479 = vmatmul.bf16.gmra.mxu0 %v1342
      %v1480 = vpop.f32.mrf.mxu0
      %v1481 = vadd.f32 0.0, %v1480
      %v1482 = vpop.f32.mrf.mxu0
      %v1483 = vadd.f32 0.0, %v1482
      %1484 = vmatmul.bf16.gmra.mxu0 %v1343
      %v1485 = vpop.f32.mrf.mxu0
      %v1486 = vadd.f32 0.0, %v1485
      %v1487 = vpop.f32.mrf.mxu0
      %v1488 = vadd.f32 0.0, %v1487
      %1489 = vmatmul.bf16.gmra.mxu0 %v1344
      %v1490 = vpop.f32.mrf.mxu0
      %v1491 = vadd.f32 0.0, %v1490
      %v1492 = vpop.f32.mrf.mxu0
      %v1493 = vadd.f32 0.0, %v1492
      %1494 = vmatmul.bf16.gmra.mxu0 %v1345
      %v1495 = vpop.f32.mrf.mxu0
      %v1496 = vadd.f32 0.0, %v1495
      %v1497 = vpop.f32.mrf.mxu0
      %v1498 = vadd.f32 0.0, %v1497
      %1499 = vmatmul.bf16.gmra.mxu0 %v1346
      %v1500 = vpop.f32.mrf.mxu0
      %v1501 = vadd.f32 0.0, %v1500
      %v1502 = vpop.f32.mrf.mxu0
      %v1503 = vadd.f32 0.0, %v1502
      %1504 = vmatmul.bf16.gmra.mxu0 %v1347
      %v1505 = vpop.f32.mrf.mxu0
      %v1506 = vadd.f32 0.0, %v1505
      %v1507 = vpop.f32.mrf.mxu0
      %v1508 = vadd.f32 0.0, %v1507
      %1509 = vmatmul.bf16.gmra.mxu0 %v1348
      %v1510 = vpop.f32.mrf.mxu0
      %v1511 = vadd.f32 0.0, %v1510
      %v1512 = vpop.f32.mrf.mxu0
      %v1513 = vadd.f32 0.0, %v1512
      %1514 = vmatmul.bf16.gmra.mxu0 %v1349
      %v1515 = vpop.f32.mrf.mxu0
      %v1516 = vadd.f32 0.0, %v1515
      %v1517 = vpop.f32.mrf.mxu0
      %v1518 = vadd.f32 0.0, %v1517
      %1519 = vmatmul.bf16.gmra.mxu0 %v1350
      %v1520 = vpop.f32.mrf.mxu0
      %v1521 = vadd.f32 0.0, %v1520
      %v1522 = vpop.f32.mrf.mxu0
      %v1523 = vadd.f32 0.0, %v1522
      %1524 = vmatmul.bf16.gmra.mxu0 %v1351
      %v1525 = vpop.f32.mrf.mxu0
      %v1526 = vadd.f32 0.0, %v1525
      %v1527 = vpop.f32.mrf.mxu0
      %v1528 = vadd.f32 0.0, %v1527
      %1529 = vmatmul.bf16.gmra.mxu0 %v1352
      %v1530 = vpop.f32.mrf.mxu0
      %v1531 = vadd.f32 0.0, %v1530
      %v1532 = vpop.f32.mrf.mxu0
      %v1533 = vadd.f32 0.0, %v1532
      %1534 = vmatmul.bf16.gmra.mxu0 %v1353
      %v1535 = vpop.f32.mrf.mxu0
      %v1536 = vadd.f32 0.0, %v1535
      %v1537 = vpop.f32.mrf.mxu0
      %v1538 = vadd.f32 0.0, %v1537
      %1539 = vdwg.mxu0
      %v1540 = vadd.f32 %v1354, %v1461
      %v1541 = vadd.f32 %v1355, %v1463
      %v1542 = vadd.f32 %v1356, %v1466
      %v1543 = vadd.f32 %v1357, %v1468
      %v1544 = vadd.f32 %v1358, %v1471
      %v1545 = vadd.f32 %v1359, %v1473
      %v1546 = vadd.f32 %v1360, %v1476
      %v1547 = vadd.f32 %v1361, %v1478
      %v1548 = vadd.f32 %v1362, %v1481
      %v1549 = vadd.f32 %v1363, %v1483
      %v1550 = vadd.f32 %v1364, %v1486
      %v1551 = vadd.f32 %v1365, %v1488
      %v1552 = vadd.f32 %v1366, %v1491
      %v1553 = vadd.f32 %v1367, %v1493
      %v1554 = vadd.f32 %v1368, %v1496
      %v1555 = vadd.f32 %v1369, %v1498
      %v1556 = vadd.f32 %v1370, %v1501
      %v1557 = vadd.f32 %v1371, %v1503
      %v1558 = vadd.f32 %v1372, %v1506
      %v1559 = vadd.f32 %v1373, %v1508
      %v1560 = vadd.f32 %v1374, %v1511
      %v1561 = vadd.f32 %v1375, %v1513
      %v1562 = vadd.f32 %v1376, %v1516
      %v1563 = vadd.f32 %v1377, %v1518
      %v1564 = vadd.f32 %v1378, %v1521
      %v1565 = vadd.f32 %v1379, %v1523
      %v1566 = vadd.f32 %v1380, %v1526
      %v1567 = vadd.f32 %v1381, %v1528
      %v1568 = vadd.f32 %v1382, %v1531
      %v1569 = vadd.f32 %v1383, %v1533
      %v1570 = vadd.f32 %v1384, %v1536
      %v1571 = vadd.f32 %v1385, %v1538
      %1572 = vst [vmem:[#allocation2] sm:$0xff] %v1540
      %1573 = vst [vmem:[#allocation2 + $0x8] sm:$0xff] %v1541
      %1574 = vst [vmem:[#allocation2 + $0x10] sm:$0xff] %v1542
      %1575 = vst [vmem:[#allocation2 + $0x18] sm:$0xff] %v1543
      %1576 = vst [vmem:[#allocation2 + $0x20] sm:$0xff] %v1544
      %1577 = vst [vmem:[#allocation2 + $0x28] sm:$0xff] %v1545
      %1578 = vst [vmem:[#allocation2 + $0x30] sm:$0xff] %v1546
      %1579 = vst [vmem:[#allocation2 + $0x38] sm:$0xff] %v1547
      %1580 = vst [vmem:[#allocation2 + $0x40] sm:$0xff] %v1548
      %1581 = vst [vmem:[#allocation2 + $0x48] sm:$0xff] %v1549
      %1582 = vst [vmem:[#allocation2 + $0x50] sm:$0xff] %v1550
      %1583 = vst [vmem:[#allocation2 + $0x58] sm:$0xff] %v1551
      %1584 = vst [vmem:[#allocation2 + $0x60] sm:$0xff] %v1552
      %1585 = vst [vmem:[#allocation2 + $0x68] sm:$0xff] %v1553
      %1586 = vst [vmem:[#allocation2 + $0x70] sm:$0xff] %v1554
      %1587 = vst [vmem:[#allocation2 + $0x78] sm:$0xff] %v1555
      %1588 = vst [vmem:[#allocation2 + $0x80] sm:$0xff] %v1556
      %1589 = vst [vmem:[#allocation2 + $0x88] sm:$0xff] %v1557
      %1590 = vst [vmem:[#allocation2 + $0x90] sm:$0xff] %v1558
      %1591 = vst [vmem:[#allocation2 + $0x98] sm:$0xff] %v1559
      %1592 = vst [vmem:[#allocation2 + $0xa0] sm:$0xff] %v1560
      %1593 = vst [vmem:[#allocation2 + $0xa8] sm:$0xff] %v1561
      %1594 = vst [vmem:[#allocation2 + $0xb0] sm:$0xff] %v1562
      %1595 = vst [vmem:[#allocation2 + $0xb8] sm:$0xff] %v1563
      %1596 = vst [vmem:[#allocation2 + $0xc0] sm:$0xff] %v1564
      %1597 = vst [vmem:[#allocation2 + $0xc8] sm:$0xff] %v1565
      %1598 = vst [vmem:[#allocation2 + $0xd0] sm:$0xff] %v1566
      %1599 = vst [vmem:[#allocation2 + $0xd8] sm:$0xff] %v1567
      %1600 = vst [vmem:[#allocation2 + $0xe0] sm:$0xff] %v1568
      %1601 = vst [vmem:[#allocation2 + $0xe8] sm:$0xff] %v1569
      %1602 = vst [vmem:[#allocation2 + $0xf0] sm:$0xff] %v1570
      %1603 = vst [vmem:[#allocation2 + $0xf8] sm:$0xff] %v1571
      %v1604 = vld [vmem:[%s307 + $0x2] sm:$0xff]
      %v1605 = vld [vmem:[%s307 + $0xa] sm:$0xff]
      %v1606 = vld [vmem:[%s307 + $0x1a] sm:$0xff]
      %v1607 = vld [vmem:[%s307 + $0x22] sm:$0xff]
      %v1608 = vld [vmem:[%s307 + $0x32] sm:$0xff]
      %v1609 = vld [vmem:[%s307 + $0x3a] sm:$0xff]
      %v1610 = vld [vmem:[%s307 + $0x4a] sm:$0xff]
      %v1611 = vld [vmem:[%s307 + $0x52] sm:$0xff]
      %v1612 = vld [vmem:[%s307 + $0x62] sm:$0xff]
      %v1613 = vld [vmem:[%s307 + $0x6a] sm:$0xff]
      %v1614 = vld [vmem:[%s307 + $0x7a] sm:$0xff]
      %v1615 = vld [vmem:[%s307 + $0x82] sm:$0xff]
      %v1616 = vld [vmem:[%s307 + $0x92] sm:$0xff]
      %v1617 = vld [vmem:[%s307 + $0x9a] sm:$0xff]
      %v1618 = vld [vmem:[%s307 + $0xaa] sm:$0xff]
      %v1619 = vld [vmem:[%s307 + $0xb2] sm:$0xff]
      %v1620 = vld [vmem:[%s307 + $0xc2] sm:$0xff]
      %v1621 = vld [vmem:[%s307 + $0xca] sm:$0xff]
      %v1622 = vld [vmem:[%s307 + $0xda] sm:$0xff]
      %v1623 = vld [vmem:[%s307 + $0xe2] sm:$0xff]
      %v1624 = vld [vmem:[%s307 + $0xf2] sm:$0xff]
      %v1625 = vld [vmem:[%s307 + $0xfa] sm:$0xff]
      %v1626 = vld [vmem:[%s307 + $0x10a] sm:$0xff]
      %v1627 = vld [vmem:[%s307 + $0x112] sm:$0xff]
      %v1628 = vld [vmem:[%s307 + $0x122] sm:$0xff]
      %v1629 = vld [vmem:[%s307 + $0x12a] sm:$0xff]
      %v1630 = vld [vmem:[%s307 + $0x13a] sm:$0xff]
      %v1631 = vld [vmem:[%s307 + $0x142] sm:$0xff]
      %v1632 = vld [vmem:[%s307 + $0x152] sm:$0xff]
      %v1633 = vld [vmem:[%s307 + $0x15a] sm:$0xff]
      %v1634 = vld [vmem:[%s307 + $0x16a] sm:$0xff]
      %v1635 = vld [vmem:[%s307 + $0x172] sm:$0xff]
      %v1636 = vld [vmem:[%s1 + $0x2] sm:$0xff]
      %v1637 = vld [vmem:[%s1 + $0xa] sm:$0xff]
      %v1638 = vld [vmem:[%s1 + $0x1a] sm:$0xff]
      %v1639 = vld [vmem:[%s1 + $0x22] sm:$0xff]
      %v1640 = vld [vmem:[%s1 + $0x32] sm:$0xff]
      %v1641 = vld [vmem:[%s1 + $0x3a] sm:$0xff]
      %v1642 = vld [vmem:[%s1 + $0x4a] sm:$0xff]
      %v1643 = vld [vmem:[%s1 + $0x52] sm:$0xff]
      %v1644 = vld [vmem:[%s1 + $0x62] sm:$0xff]
      %v1645 = vld [vmem:[%s1 + $0x6a] sm:$0xff]
      %v1646 = vld [vmem:[%s1 + $0x7a] sm:$0xff]
      %v1647 = vld [vmem:[%s1 + $0x82] sm:$0xff]
      %v1648 = vld [vmem:[%s1 + $0x92] sm:$0xff]
      %v1649 = vld [vmem:[%s1 + $0x9a] sm:$0xff]
      %v1650 = vld [vmem:[%s1 + $0xaa] sm:$0xff]
      %v1651 = vld [vmem:[%s1 + $0xb2] sm:$0xff]
      %v1652 = vld [vmem:[%s1 + $0xc2] sm:$0xff]
      %v1653 = vld [vmem:[%s1 + $0xca] sm:$0xff]
      %v1654 = vld [vmem:[%s1 + $0xda] sm:$0xff]
      %v1655 = vld [vmem:[%s1 + $0xe2] sm:$0xff]
      %v1656 = vld [vmem:[%s1 + $0xf2] sm:$0xff]
      %v1657 = vld [vmem:[%s1 + $0xfa] sm:$0xff]
      %v1658 = vld [vmem:[%s1 + $0x10a] sm:$0xff]
      %v1659 = vld [vmem:[%s1 + $0x112] sm:$0xff]
      %v1660 = vld [vmem:[%s1 + $0x122] sm:$0xff]
      %v1661 = vld [vmem:[%s1 + $0x12a] sm:$0xff]
      %v1662 = vld [vmem:[%s1 + $0x13a] sm:$0xff]
      %v1663 = vld [vmem:[%s1 + $0x142] sm:$0xff]
      %v1664 = vld [vmem:[%s1 + $0x152] sm:$0xff]
      %v1665 = vld [vmem:[%s1 + $0x15a] sm:$0xff]
      %v1666 = vld [vmem:[%s1 + $0x16a] sm:$0xff]
      %v1667 = vld [vmem:[%s1 + $0x172] sm:$0xff]
      %v1668 = vmul.f32 %v1604, %v428
      %v1669 = vmul.f32 %v1605, %v428
      %v1670 = vmul.f32 %v1606, %v428
      %v1671 = vmul.f32 %v1607, %v428
      %v1672 = vmul.f32 %v1608, %v428
      %v1673 = vmul.f32 %v1609, %v428
      %v1674 = vmul.f32 %v1610, %v428
      %v1675 = vmul.f32 %v1611, %v428
      %v1676 = vmul.f32 %v1612, %v428
      %v1677 = vmul.f32 %v1613, %v428
      %v1678 = vmul.f32 %v1614, %v428
      %v1679 = vmul.f32 %v1615, %v428
      %v1680 = vmul.f32 %v1616, %v428
      %v1681 = vmul.f32 %v1617, %v428
      %v1682 = vmul.f32 %v1618, %v428
      %v1683 = vmul.f32 %v1619, %v428
      %v1684 = vmul.f32 %v1620, %v428
      %v1685 = vmul.f32 %v1621, %v428
      %v1686 = vmul.f32 %v1622, %v428
      %v1687 = vmul.f32 %v1623, %v428
      %v1688 = vmul.f32 %v1624, %v428
      %v1689 = vmul.f32 %v1625, %v428
      %v1690 = vmul.f32 %v1626, %v428
      %v1691 = vmul.f32 %v1627, %v428
      %v1692 = vmul.f32 %v1628, %v428
      %v1693 = vmul.f32 %v1629, %v428
      %v1694 = vmul.f32 %v1630, %v428
      %v1695 = vmul.f32 %v1631, %v428
      %v1696 = vmul.f32 %v1632, %v428
      %v1697 = vmul.f32 %v1633, %v428
      %v1698 = vmul.f32 %v1634, %v428
      %v1699 = vmul.f32 %v1635, %v428
      %v1700 = vadd.f32 %v1668, %v463
      %v1701 = vadd.f32 %v1669, %v463
      %v1702 = vadd.f32 %v1670, %v463
      %v1703 = vadd.f32 %v1671, %v463
      %v1704 = vadd.f32 %v1672, %v463
      %v1705 = vadd.f32 %v1673, %v463
      %v1706 = vadd.f32 %v1674, %v463
      %v1707 = vadd.f32 %v1675, %v463
      %v1708 = vadd.f32 %v1676, %v463
      %v1709 = vadd.f32 %v1677, %v463
      %v1710 = vadd.f32 %v1678, %v463
      %v1711 = vadd.f32 %v1679, %v463
      %v1712 = vadd.f32 %v1680, %v463
      %v1713 = vadd.f32 %v1681, %v463
      %v1714 = vadd.f32 %v1682, %v463
      %v1715 = vadd.f32 %v1683, %v463
      %v1716 = vadd.f32 %v1684, %v463
      %v1717 = vadd.f32 %v1685, %v463
      %v1718 = vadd.f32 %v1686, %v463
      %v1719 = vadd.f32 %v1687, %v463
      %v1720 = vadd.f32 %v1688, %v463
      %v1721 = vadd.f32 %v1689, %v463
      %v1722 = vadd.f32 %v1690, %v463
      %v1723 = vadd.f32 %v1691, %v463
      %v1724 = vadd.f32 %v1692, %v463
      %v1725 = vadd.f32 %v1693, %v463
      %v1726 = vadd.f32 %v1694, %v463
      %v1727 = vadd.f32 %v1695, %v463
      %v1728 = vadd.f32 %v1696, %v463
      %v1729 = vadd.f32 %v1697, %v463
      %v1730 = vadd.f32 %v1698, %v463
      %v1731 = vadd.f32 %v1699, %v463
      %v1732 = vmax.f32 %v1700, 0.0
      %v1733 = vmax.f32 %v1701, 0.0
      %v1734 = vmax.f32 %v1702, 0.0
      %v1735 = vmax.f32 %v1703, 0.0
      %v1736 = vmax.f32 %v1704, 0.0
      %v1737 = vmax.f32 %v1705, 0.0
      %v1738 = vmax.f32 %v1706, 0.0
      %v1739 = vmax.f32 %v1707, 0.0
      %v1740 = vmax.f32 %v1708, 0.0
      %v1741 = vmax.f32 %v1709, 0.0
      %v1742 = vmax.f32 %v1710, 0.0
      %v1743 = vmax.f32 %v1711, 0.0
      %v1744 = vmax.f32 %v1712, 0.0
      %v1745 = vmax.f32 %v1713, 0.0
      %v1746 = vmax.f32 %v1714, 0.0
      %v1747 = vmax.f32 %v1715, 0.0
      %v1748 = vmax.f32 %v1716, 0.0
      %v1749 = vmax.f32 %v1717, 0.0
      %v1750 = vmax.f32 %v1718, 0.0
      %v1751 = vmax.f32 %v1719, 0.0
      %v1752 = vmax.f32 %v1720, 0.0
      %v1753 = vmax.f32 %v1721, 0.0
      %v1754 = vmax.f32 %v1722, 0.0
      %v1755 = vmax.f32 %v1723, 0.0
      %v1756 = vmax.f32 %v1724, 0.0
      %v1757 = vmax.f32 %v1725, 0.0
      %v1758 = vmax.f32 %v1726, 0.0
      %v1759 = vmax.f32 %v1727, 0.0
      %v1760 = vmax.f32 %v1728, 0.0
      %v1761 = vmax.f32 %v1729, 0.0
      %v1762 = vmax.f32 %v1730, 0.0
      %v1763 = vmax.f32 %v1731, 0.0
      %1765 = vset.pattern.permute.xlu0 0
      %1766 = vperm.xlu0 %1765, %v1636
      %v1767 = vpop.permute.xlu0 %1766
      %1770 = vset.pattern.permute.xlu0 0
      %1771 = vperm.xlu0 %1770, %v1637
      %v1772 = vpop.permute.xlu0 %1771
      %1775 = vset.pattern.permute.xlu0 0
      %1776 = vperm.xlu0 %1775, %v1638
      %v1777 = vpop.permute.xlu0 %1776
      %1780 = vset.pattern.permute.xlu0 0
      %1781 = vperm.xlu0 %1780, %v1639
      %v1782 = vpop.permute.xlu0 %1781
      %1785 = vset.pattern.permute.xlu0 0
      %1786 = vperm.xlu0 %1785, %v1640
      %v1787 = vpop.permute.xlu0 %1786
      %1790 = vset.pattern.permute.xlu0 0
      %1791 = vperm.xlu0 %1790, %v1641
      %v1792 = vpop.permute.xlu0 %1791
      %1795 = vset.pattern.permute.xlu0 0
      %1796 = vperm.xlu0 %1795, %v1642
      %v1797 = vpop.permute.xlu0 %1796
      %1800 = vset.pattern.permute.xlu0 0
      %1801 = vperm.xlu0 %1800, %v1643
      %v1802 = vpop.permute.xlu0 %1801
      %1805 = vset.pattern.permute.xlu0 0
      %1806 = vperm.xlu0 %1805, %v1644
      %v1807 = vpop.permute.xlu0 %1806
      %1810 = vset.pattern.permute.xlu0 0
      %1811 = vperm.xlu0 %1810, %v1645
      %v1812 = vpop.permute.xlu0 %1811
      %1815 = vset.pattern.permute.xlu0 0
      %1816 = vperm.xlu0 %1815, %v1646
      %v1817 = vpop.permute.xlu0 %1816
      %1820 = vset.pattern.permute.xlu0 0
      %1821 = vperm.xlu0 %1820, %v1647
      %v1822 = vpop.permute.xlu0 %1821
      %1825 = vset.pattern.permute.xlu0 0
      %1826 = vperm.xlu0 %1825, %v1648
      %v1827 = vpop.permute.xlu0 %1826
      %1830 = vset.pattern.permute.xlu0 0
      %1831 = vperm.xlu0 %1830, %v1649
      %v1832 = vpop.permute.xlu0 %1831
      %1835 = vset.pattern.permute.xlu0 0
      %1836 = vperm.xlu0 %1835, %v1650
      %v1837 = vpop.permute.xlu0 %1836
      %1840 = vset.pattern.permute.xlu0 0
      %1841 = vperm.xlu0 %1840, %v1651
      %v1842 = vpop.permute.xlu0 %1841
      %1845 = vset.pattern.permute.xlu0 0
      %1846 = vperm.xlu0 %1845, %v1652
      %v1847 = vpop.permute.xlu0 %1846
      %1850 = vset.pattern.permute.xlu0 0
      %1851 = vperm.xlu0 %1850, %v1653
      %v1852 = vpop.permute.xlu0 %1851
      %1855 = vset.pattern.permute.xlu0 0
      %1856 = vperm.xlu0 %1855, %v1654
      %v1857 = vpop.permute.xlu0 %1856
      %1860 = vset.pattern.permute.xlu0 0
      %1861 = vperm.xlu0 %1860, %v1655
      %v1862 = vpop.permute.xlu0 %1861
      %1865 = vset.pattern.permute.xlu0 0
      %1866 = vperm.xlu0 %1865, %v1656
      %v1867 = vpop.permute.xlu0 %1866
      %1870 = vset.pattern.permute.xlu0 0
      %1871 = vperm.xlu0 %1870, %v1657
      %v1872 = vpop.permute.xlu0 %1871
      %1875 = vset.pattern.permute.xlu0 0
      %1876 = vperm.xlu0 %1875, %v1658
      %v1877 = vpop.permute.xlu0 %1876
      %1880 = vset.pattern.permute.xlu0 0
      %1881 = vperm.xlu0 %1880, %v1659
      %v1882 = vpop.permute.xlu0 %1881
      %1885 = vset.pattern.permute.xlu0 0
      %1886 = vperm.xlu0 %1885, %v1660
      %v1887 = vpop.permute.xlu0 %1886
      %1890 = vset.pattern.permute.xlu0 0
      %1891 = vperm.xlu0 %1890, %v1661
      %v1892 = vpop.permute.xlu0 %1891
      %1895 = vset.pattern.permute.xlu0 0
      %1896 = vperm.xlu0 %1895, %v1662
      %v1897 = vpop.permute.xlu0 %1896
      %1900 = vset.pattern.permute.xlu0 0
      %1901 = vperm.xlu0 %1900, %v1663
      %v1902 = vpop.permute.xlu0 %1901
      %1905 = vset.pattern.permute.xlu0 0
      %1906 = vperm.xlu0 %1905, %v1664
      %v1907 = vpop.permute.xlu0 %1906
      %1910 = vset.pattern.permute.xlu0 0
      %1911 = vperm.xlu0 %1910, %v1665
      %v1912 = vpop.permute.xlu0 %1911
      %1915 = vset.pattern.permute.xlu0 0
      %1916 = vperm.xlu0 %1915, %v1666
      %v1917 = vpop.permute.xlu0 %1916
      %1920 = vset.pattern.permute.xlu0 0
      %1921 = vperm.xlu0 %1920, %v1667
      %v1922 = vpop.permute.xlu0 %1921
      %v1924 = vmul.f32 %v1732, %v1767
      %v1925 = vmul.f32 %v1733, %v1772
      %v1926 = vmul.f32 %v1734, %v1777
      %v1927 = vmul.f32 %v1735, %v1782
      %v1928 = vmul.f32 %v1736, %v1787
      %v1929 = vmul.f32 %v1737, %v1792
      %v1930 = vmul.f32 %v1738, %v1797
      %v1931 = vmul.f32 %v1739, %v1802
      %v1932 = vmul.f32 %v1740, %v1807
      %v1933 = vmul.f32 %v1741, %v1812
      %v1934 = vmul.f32 %v1742, %v1817
      %v1935 = vmul.f32 %v1743, %v1822
      %v1936 = vmul.f32 %v1744, %v1827
      %v1937 = vmul.f32 %v1745, %v1832
      %v1938 = vmul.f32 %v1746, %v1837
      %v1939 = vmul.f32 %v1747, %v1842
      %v1940 = vmul.f32 %v1748, %v1847
      %v1941 = vmul.f32 %v1749, %v1852
      %v1942 = vmul.f32 %v1750, %v1857
      %v1943 = vmul.f32 %v1751, %v1862
      %v1944 = vmul.f32 %v1752, %v1867
      %v1945 = vmul.f32 %v1753, %v1872
      %v1946 = vmul.f32 %v1754, %v1877
      %v1947 = vmul.f32 %v1755, %v1882
      %v1948 = vmul.f32 %v1756, %v1887
      %v1949 = vmul.f32 %v1757, %v1892
      %v1950 = vmul.f32 %v1758, %v1897
      %v1951 = vmul.f32 %v1759, %v1902
      %v1952 = vmul.f32 %v1760, %v1907
      %v1953 = vmul.f32 %v1761, %v1912
      %v1954 = vmul.f32 %v1762, %v1917
      %v1955 = vmul.f32 %v1763, %v1922
      %v1956 = vpack.c.bf16 %v1925, %v1924
      %v1957 = vpack.c.bf16 %v1927, %v1926
      %v1958 = vpack.c.bf16 %v1929, %v1928
      %v1959 = vpack.c.bf16 %v1931, %v1930
      %v1960 = vpack.c.bf16 %v1933, %v1932
      %v1961 = vpack.c.bf16 %v1935, %v1934
      %v1962 = vpack.c.bf16 %v1937, %v1936
      %v1963 = vpack.c.bf16 %v1939, %v1938
      %v1964 = vpack.c.bf16 %v1941, %v1940
      %v1965 = vpack.c.bf16 %v1943, %v1942
      %v1966 = vpack.c.bf16 %v1945, %v1944
      %v1967 = vpack.c.bf16 %v1947, %v1946
      %v1968 = vpack.c.bf16 %v1949, %v1948
      %v1969 = vpack.c.bf16 %v1951, %v1950
      %v1970 = vpack.c.bf16 %v1953, %v1952
      %v1971 = vpack.c.bf16 %v1955, %v1954
      %v1972 = vld [vmem:[#allocation2] sm:$0xff]
      %v1973 = vld [vmem:[#allocation2 + $0x8] sm:$0xff]
      %v1974 = vld [vmem:[#allocation2 + $0x10] sm:$0xff]
      %v1975 = vld [vmem:[#allocation2 + $0x18] sm:$0xff]
      %v1976 = vld [vmem:[#allocation2 + $0x20] sm:$0xff]
      %v1977 = vld [vmem:[#allocation2 + $0x28] sm:$0xff]
      %v1978 = vld [vmem:[#allocation2 + $0x30] sm:$0xff]
      %v1979 = vld [vmem:[#allocation2 + $0x38] sm:$0xff]
      %v1980 = vld [vmem:[#allocation2 + $0x40] sm:$0xff]
      %v1981 = vld [vmem:[#allocation2 + $0x48] sm:$0xff]
      %v1982 = vld [vmem:[#allocation2 + $0x50] sm:$0xff]
      %v1983 = vld [vmem:[#allocation2 + $0x58] sm:$0xff]
      %v1984 = vld [vmem:[#allocation2 + $0x60] sm:$0xff]
      %v1985 = vld [vmem:[#allocation2 + $0x68] sm:$0xff]
      %v1986 = vld [vmem:[#allocation2 + $0x70] sm:$0xff]
      %v1987 = vld [vmem:[#allocation2 + $0x78] sm:$0xff]
      %v1988 = vld [vmem:[#allocation2 + $0x80] sm:$0xff]
      %v1989 = vld [vmem:[#allocation2 + $0x88] sm:$0xff]
      %v1990 = vld [vmem:[#allocation2 + $0x90] sm:$0xff]
      %v1991 = vld [vmem:[#allocation2 + $0x98] sm:$0xff]
      %v1992 = vld [vmem:[#allocation2 + $0xa0] sm:$0xff]
      %v1993 = vld [vmem:[#allocation2 + $0xa8] sm:$0xff]
      %v1994 = vld [vmem:[#allocation2 + $0xb0] sm:$0xff]
      %v1995 = vld [vmem:[#allocation2 + $0xb8] sm:$0xff]
      %v1996 = vld [vmem:[#allocation2 + $0xc0] sm:$0xff]
      %v1997 = vld [vmem:[#allocation2 + $0xc8] sm:$0xff]
      %v1998 = vld [vmem:[#allocation2 + $0xd0] sm:$0xff]
      %v1999 = vld [vmem:[#allocation2 + $0xd8] sm:$0xff]
      %v2000 = vld [vmem:[#allocation2 + $0xe0] sm:$0xff]
      %v2001 = vld [vmem:[#allocation2 + $0xe8] sm:$0xff]
      %v2002 = vld [vmem:[#allocation2 + $0xf0] sm:$0xff]
      %v2003 = vld [vmem:[#allocation2 + $0xf8] sm:$0xff]
      %s2004 = scalar_lea.vmem %s312, 128
      %v2005 = vld [vmem:[%s2004] sm:$0xf]
      %v2006 = vld [vmem:[%s2004 + $0x4] sm:$0xf]
      %v2007 = vld [vmem:[%s2004 + $0x8] sm:$0xf]
      %v2008 = vld [vmem:[%s2004 + $0xc] sm:$0xf]
      %v2009 = vld [vmem:[%s2004 + $0x10] sm:$0xf]
      %v2010 = vld [vmem:[%s2004 + $0x14] sm:$0xf]
      %v2011 = vld [vmem:[%s2004 + $0x18] sm:$0xf]
      %v2012 = vld [vmem:[%s2004 + $0x1c] sm:$0xf]
      %v2013 = vld [vmem:[%s2004 + $0x20] sm:$0xf]
      %v2014 = vld [vmem:[%s2004 + $0x24] sm:$0xf]
      %v2015 = vld [vmem:[%s2004 + $0x28] sm:$0xf]
      %v2016 = vld [vmem:[%s2004 + $0x2c] sm:$0xf]
      %v2017 = vld [vmem:[%s2004 + $0x30] sm:$0xf]
      %v2018 = vld [vmem:[%s2004 + $0x34] sm:$0xf]
      %v2019 = vld [vmem:[%s2004 + $0x38] sm:$0xf]
      %v2020 = vld [vmem:[%s2004 + $0x3c] sm:$0xf]
      %v2037 = vunpack.c.l.b16 %v2005
      %v2038 = vunpack.c.l.b16 %v2006
      %v2039 = vunpack.c.l.b16 %v2007
      %v2040 = vunpack.c.l.b16 %v2008
      %v2041 = vunpack.c.l.b16 %v2009
      %v2042 = vunpack.c.l.b16 %v2010
      %v2043 = vunpack.c.l.b16 %v2011
      %v2044 = vunpack.c.l.b16 %v2012
      %v2045 = vunpack.c.l.b16 %v2013
      %v2046 = vunpack.c.l.b16 %v2014
      %v2047 = vunpack.c.l.b16 %v2015
      %v2048 = vunpack.c.l.b16 %v2016
      %v2049 = vunpack.c.l.b16 %v2017
      %v2050 = vunpack.c.l.b16 %v2018
      %v2051 = vunpack.c.l.b16 %v2019
      %v2052 = vunpack.c.l.b16 %v2020
      %v2053 = vpack.c.b16 %v2038, %v2037
      %v2054 = vpack.c.b16 %v2040, %v2039
      %v2055 = vpack.c.b16 %v2042, %v2041
      %v2056 = vpack.c.b16 %v2044, %v2043
      %v2057 = vpack.c.b16 %v2046, %v2045
      %v2058 = vpack.c.b16 %v2048, %v2047
      %v2059 = vpack.c.b16 %v2050, %v2049
      %v2060 = vpack.c.b16 %v2052, %v2051
      %2069 = vmatpush.bf16.msra.mxu0 %v2060
      %2070 = vmatpush.bf16.msra.mxu0 %v2059
      %2071 = vmatpush.bf16.msra.mxu0 %v2058
      %2072 = vmatpush.bf16.msra.mxu0 %v2057
      %2073 = vmatpush.bf16.msra.mxu0 %v2056
      %2074 = vmatpush.bf16.msra.mxu0 %v2055
      %2075 = vmatpush.bf16.msra.mxu0 %v2054
      %2076 = vmatpush.bf16.msra.mxu0 %v2053
      %2077 = vmatmul.bf16.gmra.mxu0 %v1956
      %v2078 = vpop.f32.mrf.mxu0
      %v2079 = vadd.f32 0.0, %v2078
      %v2080 = vpop.f32.mrf.mxu0
      %v2081 = vadd.f32 0.0, %v2080
      %2082 = vmatmul.bf16.gmra.mxu0 %v1957
      %v2083 = vpop.f32.mrf.mxu0
      %v2084 = vadd.f32 0.0, %v2083
      %v2085 = vpop.f32.mrf.mxu0
      %v2086 = vadd.f32 0.0, %v2085
      %2087 = vmatmul.bf16.gmra.mxu0 %v1958
      %v2088 = vpop.f32.mrf.mxu0
      %v2089 = vadd.f32 0.0, %v2088
      %v2090 = vpop.f32.mrf.mxu0
      %v2091 = vadd.f32 0.0, %v2090
      %2092 = vmatmul.bf16.gmra.mxu0 %v1959
      %v2093 = vpop.f32.mrf.mxu0
      %v2094 = vadd.f32 0.0, %v2093
      %v2095 = vpop.f32.mrf.mxu0
      %v2096 = vadd.f32 0.0, %v2095
      %2097 = vmatmul.bf16.gmra.mxu0 %v1960
      %v2098 = vpop.f32.mrf.mxu0
      %v2099 = vadd.f32 0.0, %v2098
      %v2100 = vpop.f32.mrf.mxu0
      %v2101 = vadd.f32 0.0, %v2100
      %2102 = vmatmul.bf16.gmra.mxu0 %v1961
      %v2103 = vpop.f32.mrf.mxu0
      %v2104 = vadd.f32 0.0, %v2103
      %v2105 = vpop.f32.mrf.mxu0
      %v2106 = vadd.f32 0.0, %v2105
      %2107 = vmatmul.bf16.gmra.mxu0 %v1962
      %v2108 = vpop.f32.mrf.mxu0
      %v2109 = vadd.f32 0.0, %v2108
      %v2110 = vpop.f32.mrf.mxu0
      %v2111 = vadd.f32 0.0, %v2110
      %2112 = vmatmul.bf16.gmra.mxu0 %v1963
      %v2113 = vpop.f32.mrf.mxu0
      %v2114 = vadd.f32 0.0, %v2113
      %v2115 = vpop.f32.mrf.mxu0
      %v2116 = vadd.f32 0.0, %v2115
      %2117 = vmatmul.bf16.gmra.mxu0 %v1964
      %v2118 = vpop.f32.mrf.mxu0
      %v2119 = vadd.f32 0.0, %v2118
      %v2120 = vpop.f32.mrf.mxu0
      %v2121 = vadd.f32 0.0, %v2120
      %2122 = vmatmul.bf16.gmra.mxu0 %v1965
      %v2123 = vpop.f32.mrf.mxu0
      %v2124 = vadd.f32 0.0, %v2123
      %v2125 = vpop.f32.mrf.mxu0
      %v2126 = vadd.f32 0.0, %v2125
      %2127 = vmatmul.bf16.gmra.mxu0 %v1966
      %v2128 = vpop.f32.mrf.mxu0
      %v2129 = vadd.f32 0.0, %v2128
      %v2130 = vpop.f32.mrf.mxu0
      %v2131 = vadd.f32 0.0, %v2130
      %2132 = vmatmul.bf16.gmra.mxu0 %v1967
      %v2133 = vpop.f32.mrf.mxu0
      %v2134 = vadd.f32 0.0, %v2133
      %v2135 = vpop.f32.mrf.mxu0
      %v2136 = vadd.f32 0.0, %v2135
      %2137 = vmatmul.bf16.gmra.mxu0 %v1968
      %v2138 = vpop.f32.mrf.mxu0
      %v2139 = vadd.f32 0.0, %v2138
      %v2140 = vpop.f32.mrf.mxu0
      %v2141 = vadd.f32 0.0, %v2140
      %2142 = vmatmul.bf16.gmra.mxu0 %v1969
      %v2143 = vpop.f32.mrf.mxu0
      %v2144 = vadd.f32 0.0, %v2143
      %v2145 = vpop.f32.mrf.mxu0
      %v2146 = vadd.f32 0.0, %v2145
      %2147 = vmatmul.bf16.gmra.mxu0 %v1970
      %v2148 = vpop.f32.mrf.mxu0
      %v2149 = vadd.f32 0.0, %v2148
      %v2150 = vpop.f32.mrf.mxu0
      %v2151 = vadd.f32 0.0, %v2150
      %2152 = vmatmul.bf16.gmra.mxu0 %v1971
      %v2153 = vpop.f32.mrf.mxu0
      %v2154 = vadd.f32 0.0, %v2153
      %v2155 = vpop.f32.mrf.mxu0
      %v2156 = vadd.f32 0.0, %v2155
      %2157 = vdwg.mxu0
      %v2158 = vadd.f32 %v1972, %v2079
      %v2159 = vadd.f32 %v1973, %v2081
      %v2160 = vadd.f32 %v1974, %v2084
      %v2161 = vadd.f32 %v1975, %v2086
      %v2162 = vadd.f32 %v1976, %v2089
      %v2163 = vadd.f32 %v1977, %v2091
      %v2164 = vadd.f32 %v1978, %v2094
      %v2165 = vadd.f32 %v1979, %v2096
      %v2166 = vadd.f32 %v1980, %v2099
      %v2167 = vadd.f32 %v1981, %v2101
      %v2168 = vadd.f32 %v1982, %v2104
      %v2169 = vadd.f32 %v1983, %v2106
      %v2170 = vadd.f32 %v1984, %v2109
      %v2171 = vadd.f32 %v1985, %v2111
      %v2172 = vadd.f32 %v1986, %v2114
      %v2173 = vadd.f32 %v1987, %v2116
      %v2174 = vadd.f32 %v1988, %v2119
      %v2175 = vadd.f32 %v1989, %v2121
      %v2176 = vadd.f32 %v1990, %v2124
      %v2177 = vadd.f32 %v1991, %v2126
      %v2178 = vadd.f32 %v1992, %v2129
      %v2179 = vadd.f32 %v1993, %v2131
      %v2180 = vadd.f32 %v1994, %v2134
      %v2181 = vadd.f32 %v1995, %v2136
      %v2182 = vadd.f32 %v1996, %v2139
      %v2183 = vadd.f32 %v1997, %v2141
      %v2184 = vadd.f32 %v1998, %v2144
      %v2185 = vadd.f32 %v1999, %v2146
      %v2186 = vadd.f32 %v2000, %v2149
      %v2187 = vadd.f32 %v2001, %v2151
      %v2188 = vadd.f32 %v2002, %v2154
      %v2189 = vadd.f32 %v2003, %v2156
      %2190 = vst [vmem:[#allocation2] sm:$0xff] %v2158
      %2191 = vst [vmem:[#allocation2 + $0x8] sm:$0xff] %v2159
      %2192 = vst [vmem:[#allocation2 + $0x10] sm:$0xff] %v2160
      %2193 = vst [vmem:[#allocation2 + $0x18] sm:$0xff] %v2161
      %2194 = vst [vmem:[#allocation2 + $0x20] sm:$0xff] %v2162
      %2195 = vst [vmem:[#allocation2 + $0x28] sm:$0xff] %v2163
      %2196 = vst [vmem:[#allocation2 + $0x30] sm:$0xff] %v2164
      %2197 = vst [vmem:[#allocation2 + $0x38] sm:$0xff] %v2165
      %2198 = vst [vmem:[#allocation2 + $0x40] sm:$0xff] %v2166
      %2199 = vst [vmem:[#allocation2 + $0x48] sm:$0xff] %v2167
      %2200 = vst [vmem:[#allocation2 + $0x50] sm:$0xff] %v2168
      %2201 = vst [vmem:[#allocation2 + $0x58] sm:$0xff] %v2169
      %2202 = vst [vmem:[#allocation2 + $0x60] sm:$0xff] %v2170
      %2203 = vst [vmem:[#allocation2 + $0x68] sm:$0xff] %v2171
      %2204 = vst [vmem:[#allocation2 + $0x70] sm:$0xff] %v2172
      %2205 = vst [vmem:[#allocation2 + $0x78] sm:$0xff] %v2173
      %2206 = vst [vmem:[#allocation2 + $0x80] sm:$0xff] %v2174
      %2207 = vst [vmem:[#allocation2 + $0x88] sm:$0xff] %v2175
      %2208 = vst [vmem:[#allocation2 + $0x90] sm:$0xff] %v2176
      %2209 = vst [vmem:[#allocation2 + $0x98] sm:$0xff] %v2177
      %2210 = vst [vmem:[#allocation2 + $0xa0] sm:$0xff] %v2178
      %2211 = vst [vmem:[#allocation2 + $0xa8] sm:$0xff] %v2179
      %2212 = vst [vmem:[#allocation2 + $0xb0] sm:$0xff] %v2180
      %2213 = vst [vmem:[#allocation2 + $0xb8] sm:$0xff] %v2181
      %2214 = vst [vmem:[#allocation2 + $0xc0] sm:$0xff] %v2182
      %2215 = vst [vmem:[#allocation2 + $0xc8] sm:$0xff] %v2183
      %2216 = vst [vmem:[#allocation2 + $0xd0] sm:$0xff] %v2184
      %2217 = vst [vmem:[#allocation2 + $0xd8] sm:$0xff] %v2185
      %2218 = vst [vmem:[#allocation2 + $0xe0] sm:$0xff] %v2186
      %2219 = vst [vmem:[#allocation2 + $0xe8] sm:$0xff] %v2187
      %2220 = vst [vmem:[#allocation2 + $0xf0] sm:$0xff] %v2188
      %2221 = vst [vmem:[#allocation2 + $0xf8] sm:$0xff] %v2189
      %s2222 = scalar_lea.vmem %s307, 24
      %v2223 = vld [vmem:[%s2222] sm:$0xff]
      %v2224 = vld [vmem:[%s2222 + $0x8] sm:$0xff]
      %v2225 = vld [vmem:[%s2222 + $0x18] sm:$0xff]
      %v2226 = vld [vmem:[%s2222 + $0x20] sm:$0xff]
      %v2227 = vld [vmem:[%s2222 + $0x30] sm:$0xff]
      %v2228 = vld [vmem:[%s2222 + $0x38] sm:$0xff]
      %v2229 = vld [vmem:[%s2222 + $0x48] sm:$0xff]
      %v2230 = vld [vmem:[%s2222 + $0x50] sm:$0xff]
      %v2231 = vld [vmem:[%s2222 + $0x60] sm:$0xff]
      %v2232 = vld [vmem:[%s2222 + $0x68] sm:$0xff]
      %v2233 = vld [vmem:[%s2222 + $0x78] sm:$0xff]
      %v2234 = vld [vmem:[%s2222 + $0x80] sm:$0xff]
      %v2235 = vld [vmem:[%s2222 + $0x90] sm:$0xff]
      %v2236 = vld [vmem:[%s2222 + $0x98] sm:$0xff]
      %v2237 = vld [vmem:[%s2222 + $0xa8] sm:$0xff]
      %v2238 = vld [vmem:[%s2222 + $0xb0] sm:$0xff]
      %v2239 = vld [vmem:[%s2222 + $0xc0] sm:$0xff]
      %v2240 = vld [vmem:[%s2222 + $0xc8] sm:$0xff]
      %v2241 = vld [vmem:[%s2222 + $0xd8] sm:$0xff]
      %v2242 = vld [vmem:[%s2222 + $0xe0] sm:$0xff]
      %v2243 = vld [vmem:[%s2222 + $0xf0] sm:$0xff]
      %v2244 = vld [vmem:[%s2222 + $0xf8] sm:$0xff]
      %v2245 = vld [vmem:[%s2222 + $0x108] sm:$0xff]
      %v2246 = vld [vmem:[%s2222 + $0x110] sm:$0xff]
      %v2247 = vld [vmem:[%s2222 + $0x120] sm:$0xff]
      %v2248 = vld [vmem:[%s2222 + $0x128] sm:$0xff]
      %v2249 = vld [vmem:[%s2222 + $0x138] sm:$0xff]
      %v2250 = vld [vmem:[%s2222 + $0x140] sm:$0xff]
      %v2251 = vld [vmem:[%s2222 + $0x150] sm:$0xff]
      %v2252 = vld [vmem:[%s2222 + $0x158] sm:$0xff]
      %v2253 = vld [vmem:[%s2222 + $0x168] sm:$0xff]
      %v2254 = vld [vmem:[%s2222 + $0x170] sm:$0xff]
      %s2255 = scalar_lea.vmem %s1, 24
      %v2256 = vld [vmem:[%s2255] sm:$0xff]
      %v2257 = vld [vmem:[%s2255 + $0x8] sm:$0xff]
      %v2258 = vld [vmem:[%s2255 + $0x18] sm:$0xff]
      %v2259 = vld [vmem:[%s2255 + $0x20] sm:$0xff]
      %v2260 = vld [vmem:[%s2255 + $0x30] sm:$0xff]
      %v2261 = vld [vmem:[%s2255 + $0x38] sm:$0xff]
      %v2262 = vld [vmem:[%s2255 + $0x48] sm:$0xff]
      %v2263 = vld [vmem:[%s2255 + $0x50] sm:$0xff]
      %v2264 = vld [vmem:[%s2255 + $0x60] sm:$0xff]
      %v2265 = vld [vmem:[%s2255 + $0x68] sm:$0xff]
      %v2266 = vld [vmem:[%s2255 + $0x78] sm:$0xff]
      %v2267 = vld [vmem:[%s2255 + $0x80] sm:$0xff]
      %v2268 = vld [vmem:[%s2255 + $0x90] sm:$0xff]
      %v2269 = vld [vmem:[%s2255 + $0x98] sm:$0xff]
      %v2270 = vld [vmem:[%s2255 + $0xa8] sm:$0xff]
      %v2271 = vld [vmem:[%s2255 + $0xb0] sm:$0xff]
      %v2272 = vld [vmem:[%s2255 + $0xc0] sm:$0xff]
      %v2273 = vld [vmem:[%s2255 + $0xc8] sm:$0xff]
      %v2274 = vld [vmem:[%s2255 + $0xd8] sm:$0xff]
      %v2275 = vld [vmem:[%s2255 + $0xe0] sm:$0xff]
      %v2276 = vld [vmem:[%s2255 + $0xf0] sm:$0xff]
      %v2277 = vld [vmem:[%s2255 + $0xf8] sm:$0xff]
      %v2278 = vld [vmem:[%s2255 + $0x108] sm:$0xff]
      %v2279 = vld [vmem:[%s2255 + $0x110] sm:$0xff]
      %v2280 = vld [vmem:[%s2255 + $0x120] sm:$0xff]
      %v2281 = vld [vmem:[%s2255 + $0x128] sm:$0xff]
      %v2282 = vld [vmem:[%s2255 + $0x138] sm:$0xff]
      %v2283 = vld [vmem:[%s2255 + $0x140] sm:$0xff]
      %v2284 = vld [vmem:[%s2255 + $0x150] sm:$0xff]
      %v2285 = vld [vmem:[%s2255 + $0x158] sm:$0xff]
      %v2286 = vld [vmem:[%s2255 + $0x168] sm:$0xff]
      %v2287 = vld [vmem:[%s2255 + $0x170] sm:$0xff]
      %v2288 = vmul.f32 %v2223, %v428
      %v2289 = vmul.f32 %v2224, %v428
      %v2290 = vmul.f32 %v2225, %v428
      %v2291 = vmul.f32 %v2226, %v428
      %v2292 = vmul.f32 %v2227, %v428
      %v2293 = vmul.f32 %v2228, %v428
      %v2294 = vmul.f32 %v2229, %v428
      %v2295 = vmul.f32 %v2230, %v428
      %v2296 = vmul.f32 %v2231, %v428
      %v2297 = vmul.f32 %v2232, %v428
      %v2298 = vmul.f32 %v2233, %v428
      %v2299 = vmul.f32 %v2234, %v428
      %v2300 = vmul.f32 %v2235, %v428
      %v2301 = vmul.f32 %v2236, %v428
      %v2302 = vmul.f32 %v2237, %v428
      %v2303 = vmul.f32 %v2238, %v428
      %v2304 = vmul.f32 %v2239, %v428
      %v2305 = vmul.f32 %v2240, %v428
      %v2306 = vmul.f32 %v2241, %v428
      %v2307 = vmul.f32 %v2242, %v428
      %v2308 = vmul.f32 %v2243, %v428
      %v2309 = vmul.f32 %v2244, %v428
      %v2310 = vmul.f32 %v2245, %v428
      %v2311 = vmul.f32 %v2246, %v428
      %v2312 = vmul.f32 %v2247, %v428
      %v2313 = vmul.f32 %v2248, %v428
      %v2314 = vmul.f32 %v2249, %v428
      %v2315 = vmul.f32 %v2250, %v428
      %v2316 = vmul.f32 %v2251, %v428
      %v2317 = vmul.f32 %v2252, %v428
      %v2318 = vmul.f32 %v2253, %v428
      %v2319 = vmul.f32 %v2254, %v428
      %v2320 = vadd.f32 %v2288, %v463
      %v2321 = vadd.f32 %v2289, %v463
      %v2322 = vadd.f32 %v2290, %v463
      %v2323 = vadd.f32 %v2291, %v463
      %v2324 = vadd.f32 %v2292, %v463
      %v2325 = vadd.f32 %v2293, %v463
      %v2326 = vadd.f32 %v2294, %v463
      %v2327 = vadd.f32 %v2295, %v463
      %v2328 = vadd.f32 %v2296, %v463
      %v2329 = vadd.f32 %v2297, %v463
      %v2330 = vadd.f32 %v2298, %v463
      %v2331 = vadd.f32 %v2299, %v463
      %v2332 = vadd.f32 %v2300, %v463
      %v2333 = vadd.f32 %v2301, %v463
      %v2334 = vadd.f32 %v2302, %v463
      %v2335 = vadd.f32 %v2303, %v463
      %v2336 = vadd.f32 %v2304, %v463
      %v2337 = vadd.f32 %v2305, %v463
      %v2338 = vadd.f32 %v2306, %v463
      %v2339 = vadd.f32 %v2307, %v463
      %v2340 = vadd.f32 %v2308, %v463
      %v2341 = vadd.f32 %v2309, %v463
      %v2342 = vadd.f32 %v2310, %v463
      %v2343 = vadd.f32 %v2311, %v463
      %v2344 = vadd.f32 %v2312, %v463
      %v2345 = vadd.f32 %v2313, %v463
      %v2346 = vadd.f32 %v2314, %v463
      %v2347 = vadd.f32 %v2315, %v463
      %v2348 = vadd.f32 %v2316, %v463
      %v2349 = vadd.f32 %v2317, %v463
      %v2350 = vadd.f32 %v2318, %v463
      %v2351 = vadd.f32 %v2319, %v463
      %v2352 = vmax.f32 %v2320, 0.0
      %v2353 = vmax.f32 %v2321, 0.0
      %v2354 = vmax.f32 %v2322, 0.0
      %v2355 = vmax.f32 %v2323, 0.0
      %v2356 = vmax.f32 %v2324, 0.0
      %v2357 = vmax.f32 %v2325, 0.0
      %v2358 = vmax.f32 %v2326, 0.0
      %v2359 = vmax.f32 %v2327, 0.0
      %v2360 = vmax.f32 %v2328, 0.0
      %v2361 = vmax.f32 %v2329, 0.0
      %v2362 = vmax.f32 %v2330, 0.0
      %v2363 = vmax.f32 %v2331, 0.0
      %v2364 = vmax.f32 %v2332, 0.0
      %v2365 = vmax.f32 %v2333, 0.0
      %v2366 = vmax.f32 %v2334, 0.0
      %v2367 = vmax.f32 %v2335, 0.0
      %v2368 = vmax.f32 %v2336, 0.0
      %v2369 = vmax.f32 %v2337, 0.0
      %v2370 = vmax.f32 %v2338, 0.0
      %v2371 = vmax.f32 %v2339, 0.0
      %v2372 = vmax.f32 %v2340, 0.0
      %v2373 = vmax.f32 %v2341, 0.0
      %v2374 = vmax.f32 %v2342, 0.0
      %v2375 = vmax.f32 %v2343, 0.0
      %v2376 = vmax.f32 %v2344, 0.0
      %v2377 = vmax.f32 %v2345, 0.0
      %v2378 = vmax.f32 %v2346, 0.0
      %v2379 = vmax.f32 %v2347, 0.0
      %v2380 = vmax.f32 %v2348, 0.0
      %v2381 = vmax.f32 %v2349, 0.0
      %v2382 = vmax.f32 %v2350, 0.0
      %v2383 = vmax.f32 %v2351, 0.0
      %2385 = vset.pattern.permute.xlu0 0
      %2386 = vperm.xlu0 %2385, %v2256
      %v2387 = vpop.permute.xlu0 %2386
      %2390 = vset.pattern.permute.xlu0 0
      %2391 = vperm.xlu0 %2390, %v2257
      %v2392 = vpop.permute.xlu0 %2391
      %2395 = vset.pattern.permute.xlu0 0
      %2396 = vperm.xlu0 %2395, %v2258
      %v2397 = vpop.permute.xlu0 %2396
      %2400 = vset.pattern.permute.xlu0 0
      %2401 = vperm.xlu0 %2400, %v2259
      %v2402 = vpop.permute.xlu0 %2401
      %2405 = vset.pattern.permute.xlu0 0
      %2406 = vperm.xlu0 %2405, %v2260
      %v2407 = vpop.permute.xlu0 %2406
      %2410 = vset.pattern.permute.xlu0 0
      %2411 = vperm.xlu0 %2410, %v2261
      %v2412 = vpop.permute.xlu0 %2411
      %2415 = vset.pattern.permute.xlu0 0
      %2416 = vperm.xlu0 %2415, %v2262
      %v2417 = vpop.permute.xlu0 %2416
      %2420 = vset.pattern.permute.xlu0 0
      %2421 = vperm.xlu0 %2420, %v2263
      %v2422 = vpop.permute.xlu0 %2421
      %2425 = vset.pattern.permute.xlu0 0
      %2426 = vperm.xlu0 %2425, %v2264
      %v2427 = vpop.permute.xlu0 %2426
      %2430 = vset.pattern.permute.xlu0 0
      %2431 = vperm.xlu0 %2430, %v2265
      %v2432 = vpop.permute.xlu0 %2431
      %2435 = vset.pattern.permute.xlu0 0
      %2436 = vperm.xlu0 %2435, %v2266
      %v2437 = vpop.permute.xlu0 %2436
      %2440 = vset.pattern.permute.xlu0 0
      %2441 = vperm.xlu0 %2440, %v2267
      %v2442 = vpop.permute.xlu0 %2441
      %2445 = vset.pattern.permute.xlu0 0
      %2446 = vperm.xlu0 %2445, %v2268
      %v2447 = vpop.permute.xlu0 %2446
      %2450 = vset.pattern.permute.xlu0 0
      %2451 = vperm.xlu0 %2450, %v2269
      %v2452 = vpop.permute.xlu0 %2451
      %2455 = vset.pattern.permute.xlu0 0
      %2456 = vperm.xlu0 %2455, %v2270
      %v2457 = vpop.permute.xlu0 %2456
      %2460 = vset.pattern.permute.xlu0 0
      %2461 = vperm.xlu0 %2460, %v2271
      %v2462 = vpop.permute.xlu0 %2461
      %2465 = vset.pattern.permute.xlu0 0
      %2466 = vperm.xlu0 %2465, %v2272
      %v2467 = vpop.permute.xlu0 %2466
      %2470 = vset.pattern.permute.xlu0 0
      %2471 = vperm.xlu0 %2470, %v2273
      %v2472 = vpop.permute.xlu0 %2471
      %2475 = vset.pattern.permute.xlu0 0
      %2476 = vperm.xlu0 %2475, %v2274
      %v2477 = vpop.permute.xlu0 %2476
      %2480 = vset.pattern.permute.xlu0 0
      %2481 = vperm.xlu0 %2480, %v2275
      %v2482 = vpop.permute.xlu0 %2481
      %2485 = vset.pattern.permute.xlu0 0
      %2486 = vperm.xlu0 %2485, %v2276
      %v2487 = vpop.permute.xlu0 %2486
      %2490 = vset.pattern.permute.xlu0 0
      %2491 = vperm.xlu0 %2490, %v2277
      %v2492 = vpop.permute.xlu0 %2491
      %2495 = vset.pattern.permute.xlu0 0
      %2496 = vperm.xlu0 %2495, %v2278
      %v2497 = vpop.permute.xlu0 %2496
      %2500 = vset.pattern.permute.xlu0 0
      %2501 = vperm.xlu0 %2500, %v2279
      %v2502 = vpop.permute.xlu0 %2501
      %2505 = vset.pattern.permute.xlu0 0
      %2506 = vperm.xlu0 %2505, %v2280
      %v2507 = vpop.permute.xlu0 %2506
      %2510 = vset.pattern.permute.xlu0 0
      %2511 = vperm.xlu0 %2510, %v2281
      %v2512 = vpop.permute.xlu0 %2511
      %2515 = vset.pattern.permute.xlu0 0
      %2516 = vperm.xlu0 %2515, %v2282
      %v2517 = vpop.permute.xlu0 %2516
      %2520 = vset.pattern.permute.xlu0 0
      %2521 = vperm.xlu0 %2520, %v2283
      %v2522 = vpop.permute.xlu0 %2521
      %2525 = vset.pattern.permute.xlu0 0
      %2526 = vperm.xlu0 %2525, %v2284
      %v2527 = vpop.permute.xlu0 %2526
      %2530 = vset.pattern.permute.xlu0 0
      %2531 = vperm.xlu0 %2530, %v2285
      %v2532 = vpop.permute.xlu0 %2531
      %2535 = vset.pattern.permute.xlu0 0
      %2536 = vperm.xlu0 %2535, %v2286
      %v2537 = vpop.permute.xlu0 %2536
      %2540 = vset.pattern.permute.xlu0 0
      %2541 = vperm.xlu0 %2540, %v2287
      %v2542 = vpop.permute.xlu0 %2541
      %v2544 = vmul.f32 %v2352, %v2387
      %v2545 = vmul.f32 %v2353, %v2392
      %v2546 = vmul.f32 %v2354, %v2397
      %v2547 = vmul.f32 %v2355, %v2402
      %v2548 = vmul.f32 %v2356, %v2407
      %v2549 = vmul.f32 %v2357, %v2412
      %v2550 = vmul.f32 %v2358, %v2417
      %v2551 = vmul.f32 %v2359, %v2422
      %v2552 = vmul.f32 %v2360, %v2427
      %v2553 = vmul.f32 %v2361, %v2432
      %v2554 = vmul.f32 %v2362, %v2437
      %v2555 = vmul.f32 %v2363, %v2442
      %v2556 = vmul.f32 %v2364, %v2447
      %v2557 = vmul.f32 %v2365, %v2452
      %v2558 = vmul.f32 %v2366, %v2457
      %v2559 = vmul.f32 %v2367, %v2462
      %v2560 = vmul.f32 %v2368, %v2467
      %v2561 = vmul.f32 %v2369, %v2472
      %v2562 = vmul.f32 %v2370, %v2477
      %v2563 = vmul.f32 %v2371, %v2482
      %v2564 = vmul.f32 %v2372, %v2487
      %v2565 = vmul.f32 %v2373, %v2492
      %v2566 = vmul.f32 %v2374, %v2497
      %v2567 = vmul.f32 %v2375, %v2502
      %v2568 = vmul.f32 %v2376, %v2507
      %v2569 = vmul.f32 %v2377, %v2512
      %v2570 = vmul.f32 %v2378, %v2517
      %v2571 = vmul.f32 %v2379, %v2522
      %v2572 = vmul.f32 %v2380, %v2527
      %v2573 = vmul.f32 %v2381, %v2532
      %v2574 = vmul.f32 %v2382, %v2537
      %v2575 = vmul.f32 %v2383, %v2542
      %v2576 = vpack.c.bf16 %v2545, %v2544
      %v2577 = vpack.c.bf16 %v2547, %v2546
      %v2578 = vpack.c.bf16 %v2549, %v2548
      %v2579 = vpack.c.bf16 %v2551, %v2550
      %v2580 = vpack.c.bf16 %v2553, %v2552
      %v2581 = vpack.c.bf16 %v2555, %v2554
      %v2582 = vpack.c.bf16 %v2557, %v2556
      %v2583 = vpack.c.bf16 %v2559, %v2558
      %v2584 = vpack.c.bf16 %v2561, %v2560
      %v2585 = vpack.c.bf16 %v2563, %v2562
      %v2586 = vpack.c.bf16 %v2565, %v2564
      %v2587 = vpack.c.bf16 %v2567, %v2566
      %v2588 = vpack.c.bf16 %v2569, %v2568
      %v2589 = vpack.c.bf16 %v2571, %v2570
      %v2590 = vpack.c.bf16 %v2573, %v2572
      %v2591 = vpack.c.bf16 %v2575, %v2574
      %v2592 = vld [vmem:[#allocation2] sm:$0xff]
      %v2593 = vld [vmem:[#allocation2 + $0x8] sm:$0xff]
      %v2594 = vld [vmem:[#allocation2 + $0x10] sm:$0xff]
      %v2595 = vld [vmem:[#allocation2 + $0x18] sm:$0xff]
      %v2596 = vld [vmem:[#allocation2 + $0x20] sm:$0xff]
      %v2597 = vld [vmem:[#allocation2 + $0x28] sm:$0xff]
      %v2598 = vld [vmem:[#allocation2 + $0x30] sm:$0xff]
      %v2599 = vld [vmem:[#allocation2 + $0x38] sm:$0xff]
      %v2600 = vld [vmem:[#allocation2 + $0x40] sm:$0xff]
      %v2601 = vld [vmem:[#allocation2 + $0x48] sm:$0xff]
      %v2602 = vld [vmem:[#allocation2 + $0x50] sm:$0xff]
      %v2603 = vld [vmem:[#allocation2 + $0x58] sm:$0xff]
      %v2604 = vld [vmem:[#allocation2 + $0x60] sm:$0xff]
      %v2605 = vld [vmem:[#allocation2 + $0x68] sm:$0xff]
      %v2606 = vld [vmem:[#allocation2 + $0x70] sm:$0xff]
      %v2607 = vld [vmem:[#allocation2 + $0x78] sm:$0xff]
      %v2608 = vld [vmem:[#allocation2 + $0x80] sm:$0xff]
      %v2609 = vld [vmem:[#allocation2 + $0x88] sm:$0xff]
      %v2610 = vld [vmem:[#allocation2 + $0x90] sm:$0xff]
      %v2611 = vld [vmem:[#allocation2 + $0x98] sm:$0xff]
      %v2612 = vld [vmem:[#allocation2 + $0xa0] sm:$0xff]
      %v2613 = vld [vmem:[#allocation2 + $0xa8] sm:$0xff]
      %v2614 = vld [vmem:[#allocation2 + $0xb0] sm:$0xff]
      %v2615 = vld [vmem:[#allocation2 + $0xb8] sm:$0xff]
      %v2616 = vld [vmem:[#allocation2 + $0xc0] sm:$0xff]
      %v2617 = vld [vmem:[#allocation2 + $0xc8] sm:$0xff]
      %v2618 = vld [vmem:[#allocation2 + $0xd0] sm:$0xff]
      %v2619 = vld [vmem:[#allocation2 + $0xd8] sm:$0xff]
      %v2620 = vld [vmem:[#allocation2 + $0xe0] sm:$0xff]
      %v2621 = vld [vmem:[#allocation2 + $0xe8] sm:$0xff]
      %v2622 = vld [vmem:[#allocation2 + $0xf0] sm:$0xff]
      %v2623 = vld [vmem:[#allocation2 + $0xf8] sm:$0xff]
      %s2624 = scalar_lea.vmem %s312, 192
      %v2625 = vld [vmem:[%s2624] sm:$0xf]
      %v2626 = vld [vmem:[%s2624 + $0x4] sm:$0xf]
      %v2627 = vld [vmem:[%s2624 + $0x8] sm:$0xf]
      %v2628 = vld [vmem:[%s2624 + $0xc] sm:$0xf]
      %v2629 = vld [vmem:[%s2624 + $0x10] sm:$0xf]
      %v2630 = vld [vmem:[%s2624 + $0x14] sm:$0xf]
      %v2631 = vld [vmem:[%s2624 + $0x18] sm:$0xf]
      %v2632 = vld [vmem:[%s2624 + $0x1c] sm:$0xf]
      %v2633 = vld [vmem:[%s2624 + $0x20] sm:$0xf]
      %v2634 = vld [vmem:[%s2624 + $0x24] sm:$0xf]
      %v2635 = vld [vmem:[%s2624 + $0x28] sm:$0xf]
      %v2636 = vld [vmem:[%s2624 + $0x2c] sm:$0xf]
      %v2637 = vld [vmem:[%s2624 + $0x30] sm:$0xf]
      %v2638 = vld [vmem:[%s2624 + $0x34] sm:$0xf]
      %v2639 = vld [vmem:[%s2624 + $0x38] sm:$0xf]
      %v2640 = vld [vmem:[%s2624 + $0x3c] sm:$0xf]
      %v2657 = vunpack.c.l.b16 %v2625
      %v2658 = vunpack.c.l.b16 %v2626
      %v2659 = vunpack.c.l.b16 %v2627
      %v2660 = vunpack.c.l.b16 %v2628
      %v2661 = vunpack.c.l.b16 %v2629
      %v2662 = vunpack.c.l.b16 %v2630
      %v2663 = vunpack.c.l.b16 %v2631
      %v2664 = vunpack.c.l.b16 %v2632
      %v2665 = vunpack.c.l.b16 %v2633
      %v2666 = vunpack.c.l.b16 %v2634
      %v2667 = vunpack.c.l.b16 %v2635
      %v2668 = vunpack.c.l.b16 %v2636
      %v2669 = vunpack.c.l.b16 %v2637
      %v2670 = vunpack.c.l.b16 %v2638
      %v2671 = vunpack.c.l.b16 %v2639
      %v2672 = vunpack.c.l.b16 %v2640
      %v2673 = vpack.c.b16 %v2658, %v2657
      %v2674 = vpack.c.b16 %v2660, %v2659
      %v2675 = vpack.c.b16 %v2662, %v2661
      %v2676 = vpack.c.b16 %v2664, %v2663
      %v2677 = vpack.c.b16 %v2666, %v2665
      %v2678 = vpack.c.b16 %v2668, %v2667
      %v2679 = vpack.c.b16 %v2670, %v2669
      %v2680 = vpack.c.b16 %v2672, %v2671
      %2689 = vmatpush.bf16.msra.mxu0 %v2680
      %2690 = vmatpush.bf16.msra.mxu0 %v2679
      %2691 = vmatpush.bf16.msra.mxu0 %v2678
      %2692 = vmatpush.bf16.msra.mxu0 %v2677
      %2693 = vmatpush.bf16.msra.mxu0 %v2676
      %2694 = vmatpush.bf16.msra.mxu0 %v2675
      %2695 = vmatpush.bf16.msra.mxu0 %v2674
      %2696 = vmatpush.bf16.msra.mxu0 %v2673
      %2697 = vmatmul.bf16.gmra.mxu0 %v2576
      %v2698 = vpop.f32.mrf.mxu0
      %v2699 = vadd.f32 0.0, %v2698
      %v2700 = vpop.f32.mrf.mxu0
      %v2701 = vadd.f32 0.0, %v2700
      %2702 = vmatmul.bf16.gmra.mxu0 %v2577
      %v2703 = vpop.f32.mrf.mxu0
      %v2704 = vadd.f32 0.0, %v2703
      %v2705 = vpop.f32.mrf.mxu0
      %v2706 = vadd.f32 0.0, %v2705
      %2707 = vmatmul.bf16.gmra.mxu0 %v2578
      %v2708 = vpop.f32.mrf.mxu0
      %v2709 = vadd.f32 0.0, %v2708
      %v2710 = vpop.f32.mrf.mxu0
      %v2711 = vadd.f32 0.0, %v2710
      %2712 = vmatmul.bf16.gmra.mxu0 %v2579
      %v2713 = vpop.f32.mrf.mxu0
      %v2714 = vadd.f32 0.0, %v2713
      %v2715 = vpop.f32.mrf.mxu0
      %v2716 = vadd.f32 0.0, %v2715
      %2717 = vmatmul.bf16.gmra.mxu0 %v2580
      %v2718 = vpop.f32.mrf.mxu0
      %v2719 = vadd.f32 0.0, %v2718
      %v2720 = vpop.f32.mrf.mxu0
      %v2721 = vadd.f32 0.0, %v2720
      %2722 = vmatmul.bf16.gmra.mxu0 %v2581
      %v2723 = vpop.f32.mrf.mxu0
      %v2724 = vadd.f32 0.0, %v2723
      %v2725 = vpop.f32.mrf.mxu0
      %v2726 = vadd.f32 0.0, %v2725
      %2727 = vmatmul.bf16.gmra.mxu0 %v2582
      %v2728 = vpop.f32.mrf.mxu0
      %v2729 = vadd.f32 0.0, %v2728
      %v2730 = vpop.f32.mrf.mxu0
      %v2731 = vadd.f32 0.0, %v2730
      %2732 = vmatmul.bf16.gmra.mxu0 %v2583
      %v2733 = vpop.f32.mrf.mxu0
      %v2734 = vadd.f32 0.0, %v2733
      %v2735 = vpop.f32.mrf.mxu0
      %v2736 = vadd.f32 0.0, %v2735
      %2737 = vmatmul.bf16.gmra.mxu0 %v2584
      %v2738 = vpop.f32.mrf.mxu0
      %v2739 = vadd.f32 0.0, %v2738
      %v2740 = vpop.f32.mrf.mxu0
      %v2741 = vadd.f32 0.0, %v2740
      %2742 = vmatmul.bf16.gmra.mxu0 %v2585
      %v2743 = vpop.f32.mrf.mxu0
      %v2744 = vadd.f32 0.0, %v2743
      %v2745 = vpop.f32.mrf.mxu0
      %v2746 = vadd.f32 0.0, %v2745
      %2747 = vmatmul.bf16.gmra.mxu0 %v2586
      %v2748 = vpop.f32.mrf.mxu0
      %v2749 = vadd.f32 0.0, %v2748
      %v2750 = vpop.f32.mrf.mxu0
      %v2751 = vadd.f32 0.0, %v2750
      %2752 = vmatmul.bf16.gmra.mxu0 %v2587
      %v2753 = vpop.f32.mrf.mxu0
      %v2754 = vadd.f32 0.0, %v2753
      %v2755 = vpop.f32.mrf.mxu0
      %v2756 = vadd.f32 0.0, %v2755
      %2757 = vmatmul.bf16.gmra.mxu0 %v2588
      %v2758 = vpop.f32.mrf.mxu0
      %v2759 = vadd.f32 0.0, %v2758
      %v2760 = vpop.f32.mrf.mxu0
      %v2761 = vadd.f32 0.0, %v2760
      %2762 = vmatmul.bf16.gmra.mxu0 %v2589
      %v2763 = vpop.f32.mrf.mxu0
      %v2764 = vadd.f32 0.0, %v2763
      %v2765 = vpop.f32.mrf.mxu0
      %v2766 = vadd.f32 0.0, %v2765
      %2767 = vmatmul.bf16.gmra.mxu0 %v2590
      %v2768 = vpop.f32.mrf.mxu0
      %v2769 = vadd.f32 0.0, %v2768
      %v2770 = vpop.f32.mrf.mxu0
      %v2771 = vadd.f32 0.0, %v2770
      %2772 = vmatmul.bf16.gmra.mxu0 %v2591
      %v2773 = vpop.f32.mrf.mxu0
      %v2774 = vadd.f32 0.0, %v2773
      %v2775 = vpop.f32.mrf.mxu0
      %v2776 = vadd.f32 0.0, %v2775
      %2777 = vdwg.mxu0
      %v2778 = vadd.f32 %v2592, %v2699
      %v2779 = vadd.f32 %v2593, %v2701
      %v2780 = vadd.f32 %v2594, %v2704
      %v2781 = vadd.f32 %v2595, %v2706
      %v2782 = vadd.f32 %v2596, %v2709
      %v2783 = vadd.f32 %v2597, %v2711
      %v2784 = vadd.f32 %v2598, %v2714
      %v2785 = vadd.f32 %v2599, %v2716
      %v2786 = vadd.f32 %v2600, %v2719
      %v2787 = vadd.f32 %v2601, %v2721
      %v2788 = vadd.f32 %v2602, %v2724
      %v2789 = vadd.f32 %v2603, %v2726
      %v2790 = vadd.f32 %v2604, %v2729
      %v2791 = vadd.f32 %v2605, %v2731
      %v2792 = vadd.f32 %v2606, %v2734
      %v2793 = vadd.f32 %v2607, %v2736
      %v2794 = vadd.f32 %v2608, %v2739
      %v2795 = vadd.f32 %v2609, %v2741
      %v2796 = vadd.f32 %v2610, %v2744
      %v2797 = vadd.f32 %v2611, %v2746
      %v2798 = vadd.f32 %v2612, %v2749
      %v2799 = vadd.f32 %v2613, %v2751
      %v2800 = vadd.f32 %v2614, %v2754
      %v2801 = vadd.f32 %v2615, %v2756
      %v2802 = vadd.f32 %v2616, %v2759
      %v2803 = vadd.f32 %v2617, %v2761
      %v2804 = vadd.f32 %v2618, %v2764
      %v2805 = vadd.f32 %v2619, %v2766
      %v2806 = vadd.f32 %v2620, %v2769
      %v2807 = vadd.f32 %v2621, %v2771
      %v2808 = vadd.f32 %v2622, %v2774
      %v2809 = vadd.f32 %v2623, %v2776
      %2810 = vst [vmem:[#allocation2] sm:$0xff] %v2778
      %2811 = vst [vmem:[#allocation2 + $0x8] sm:$0xff] %v2779
      %2812 = vst [vmem:[#allocation2 + $0x10] sm:$0xff] %v2780
      %2813 = vst [vmem:[#allocation2 + $0x18] sm:$0xff] %v2781
      %2814 = vst [vmem:[#allocation2 + $0x20] sm:$0xff] %v2782
      %2815 = vst [vmem:[#allocation2 + $0x28] sm:$0xff] %v2783
      %2816 = vst [vmem:[#allocation2 + $0x30] sm:$0xff] %v2784
      %2817 = vst [vmem:[#allocation2 + $0x38] sm:$0xff] %v2785
      %2818 = vst [vmem:[#allocation2 + $0x40] sm:$0xff] %v2786
      %2819 = vst [vmem:[#allocation2 + $0x48] sm:$0xff] %v2787
      %2820 = vst [vmem:[#allocation2 + $0x50] sm:$0xff] %v2788
      %2821 = vst [vmem:[#allocation2 + $0x58] sm:$0xff] %v2789
      %2822 = vst [vmem:[#allocation2 + $0x60] sm:$0xff] %v2790
      %2823 = vst [vmem:[#allocation2 + $0x68] sm:$0xff] %v2791
      %2824 = vst [vmem:[#allocation2 + $0x70] sm:$0xff] %v2792
      %2825 = vst [vmem:[#allocation2 + $0x78] sm:$0xff] %v2793
      %2826 = vst [vmem:[#allocation2 + $0x80] sm:$0xff] %v2794
      %2827 = vst [vmem:[#allocation2 + $0x88] sm:$0xff] %v2795
      %2828 = vst [vmem:[#allocation2 + $0x90] sm:$0xff] %v2796
      %2829 = vst [vmem:[#allocation2 + $0x98] sm:$0xff] %v2797
      %2830 = vst [vmem:[#allocation2 + $0xa0] sm:$0xff] %v2798
      %2831 = vst [vmem:[#allocation2 + $0xa8] sm:$0xff] %v2799
      %2832 = vst [vmem:[#allocation2 + $0xb0] sm:$0xff] %v2800
      %2833 = vst [vmem:[#allocation2 + $0xb8] sm:$0xff] %v2801
      %2834 = vst [vmem:[#allocation2 + $0xc0] sm:$0xff] %v2802
      %2835 = vst [vmem:[#allocation2 + $0xc8] sm:$0xff] %v2803
      %2836 = vst [vmem:[#allocation2 + $0xd0] sm:$0xff] %v2804
      %2837 = vst [vmem:[#allocation2 + $0xd8] sm:$0xff] %v2805
      %2838 = vst [vmem:[#allocation2 + $0xe0] sm:$0xff] %v2806
      %2839 = vst [vmem:[#allocation2 + $0xe8] sm:$0xff] %v2807
      %2840 = vst [vmem:[#allocation2 + $0xf0] sm:$0xff] %v2808
      %2841 = vst [vmem:[#allocation2 + $0xf8] sm:$0xff] %v2809
      %v2842 = vld [vmem:[%s2222 + $0x1] sm:$0xff]
      %v2843 = vld [vmem:[%s2222 + $0x9] sm:$0xff]
      %v2844 = vld [vmem:[%s2222 + $0x19] sm:$0xff]
      %v2845 = vld [vmem:[%s2222 + $0x21] sm:$0xff]
      %v2846 = vld [vmem:[%s2222 + $0x31] sm:$0xff]
      %v2847 = vld [vmem:[%s2222 + $0x39] sm:$0xff]
      %v2848 = vld [vmem:[%s2222 + $0x49] sm:$0xff]
      %v2849 = vld [vmem:[%s2222 + $0x51] sm:$0xff]
      %v2850 = vld [vmem:[%s2222 + $0x61] sm:$0xff]
      %v2851 = vld [vmem:[%s2222 + $0x69] sm:$0xff]
      %v2852 = vld [vmem:[%s2222 + $0x79] sm:$0xff]
      %v2853 = vld [vmem:[%s2222 + $0x81] sm:$0xff]
      %v2854 = vld [vmem:[%s2222 + $0x91] sm:$0xff]
      %v2855 = vld [vmem:[%s2222 + $0x99] sm:$0xff]
      %v2856 = vld [vmem:[%s2222 + $0xa9] sm:$0xff]
      %v2857 = vld [vmem:[%s2222 + $0xb1] sm:$0xff]
      %v2858 = vld [vmem:[%s2222 + $0xc1] sm:$0xff]
      %v2859 = vld [vmem:[%s2222 + $0xc9] sm:$0xff]
      %v2860 = vld [vmem:[%s2222 + $0xd9] sm:$0xff]
      %v2861 = vld [vmem:[%s2222 + $0xe1] sm:$0xff]
      %v2862 = vld [vmem:[%s2222 + $0xf1] sm:$0xff]
      %v2863 = vld [vmem:[%s2222 + $0xf9] sm:$0xff]
      %v2864 = vld [vmem:[%s2222 + $0x109] sm:$0xff]
      %v2865 = vld [vmem:[%s2222 + $0x111] sm:$0xff]
      %v2866 = vld [vmem:[%s2222 + $0x121] sm:$0xff]
      %v2867 = vld [vmem:[%s2222 + $0x129] sm:$0xff]
      %v2868 = vld [vmem:[%s2222 + $0x139] sm:$0xff]
      %v2869 = vld [vmem:[%s2222 + $0x141] sm:$0xff]
      %v2870 = vld [vmem:[%s2222 + $0x151] sm:$0xff]
      %v2871 = vld [vmem:[%s2222 + $0x159] sm:$0xff]
      %v2872 = vld [vmem:[%s2222 + $0x169] sm:$0xff]
      %v2873 = vld [vmem:[%s2222 + $0x171] sm:$0xff]
      %v2874 = vld [vmem:[%s2255 + $0x1] sm:$0xff]
      %v2875 = vld [vmem:[%s2255 + $0x9] sm:$0xff]
      %v2876 = vld [vmem:[%s2255 + $0x19] sm:$0xff]
      %v2877 = vld [vmem:[%s2255 + $0x21] sm:$0xff]
      %v2878 = vld [vmem:[%s2255 + $0x31] sm:$0xff]
      %v2879 = vld [vmem:[%s2255 + $0x39] sm:$0xff]
      %v2880 = vld [vmem:[%s2255 + $0x49] sm:$0xff]
      %v2881 = vld [vmem:[%s2255 + $0x51] sm:$0xff]
      %v2882 = vld [vmem:[%s2255 + $0x61] sm:$0xff]
      %v2883 = vld [vmem:[%s2255 + $0x69] sm:$0xff]
      %v2884 = vld [vmem:[%s2255 + $0x79] sm:$0xff]
      %v2885 = vld [vmem:[%s2255 + $0x81] sm:$0xff]
      %v2886 = vld [vmem:[%s2255 + $0x91] sm:$0xff]
      %v2887 = vld [vmem:[%s2255 + $0x99] sm:$0xff]
      %v2888 = vld [vmem:[%s2255 + $0xa9] sm:$0xff]
      %v2889 = vld [vmem:[%s2255 + $0xb1] sm:$0xff]
      %v2890 = vld [vmem:[%s2255 + $0xc1] sm:$0xff]
      %v2891 = vld [vmem:[%s2255 + $0xc9] sm:$0xff]
      %v2892 = vld [vmem:[%s2255 + $0xd9] sm:$0xff]
      %v2893 = vld [vmem:[%s2255 + $0xe1] sm:$0xff]
      %v2894 = vld [vmem:[%s2255 + $0xf1] sm:$0xff]
      %v2895 = vld [vmem:[%s2255 + $0xf9] sm:$0xff]
      %v2896 = vld [vmem:[%s2255 + $0x109] sm:$0xff]
      %v2897 = vld [vmem:[%s2255 + $0x111] sm:$0xff]
      %v2898 = vld [vmem:[%s2255 + $0x121] sm:$0xff]
      %v2899 = vld [vmem:[%s2255 + $0x129] sm:$0xff]
      %v2900 = vld [vmem:[%s2255 + $0x139] sm:$0xff]
      %v2901 = vld [vmem:[%s2255 + $0x141] sm:$0xff]
      %v2902 = vld [vmem:[%s2255 + $0x151] sm:$0xff]
      %v2903 = vld [vmem:[%s2255 + $0x159] sm:$0xff]
      %v2904 = vld [vmem:[%s2255 + $0x169] sm:$0xff]
      %v2905 = vld [vmem:[%s2255 + $0x171] sm:$0xff]
      %v2906 = vmul.f32 %v2842, %v428
      %v2907 = vmul.f32 %v2843, %v428
      %v2908 = vmul.f32 %v2844, %v428
      %v2909 = vmul.f32 %v2845, %v428
      %v2910 = vmul.f32 %v2846, %v428
      %v2911 = vmul.f32 %v2847, %v428
      %v2912 = vmul.f32 %v2848, %v428
      %v2913 = vmul.f32 %v2849, %v428
      %v2914 = vmul.f32 %v2850, %v428
      %v2915 = vmul.f32 %v2851, %v428
      %v2916 = vmul.f32 %v2852, %v428
      %v2917 = vmul.f32 %v2853, %v428
      %v2918 = vmul.f32 %v2854, %v428
      %v2919 = vmul.f32 %v2855, %v428
      %v2920 = vmul.f32 %v2856, %v428
      %v2921 = vmul.f32 %v2857, %v428
      %v2922 = vmul.f32 %v2858, %v428
      %v2923 = vmul.f32 %v2859, %v428
      %v2924 = vmul.f32 %v2860, %v428
      %v2925 = vmul.f32 %v2861, %v428
      %v2926 = vmul.f32 %v2862, %v428
      %v2927 = vmul.f32 %v2863, %v428
      %v2928 = vmul.f32 %v2864, %v428
      %v2929 = vmul.f32 %v2865, %v428
      %v2930 = vmul.f32 %v2866, %v428
      %v2931 = vmul.f32 %v2867, %v428
      %v2932 = vmul.f32 %v2868, %v428
      %v2933 = vmul.f32 %v2869, %v428
      %v2934 = vmul.f32 %v2870, %v428
      %v2935 = vmul.f32 %v2871, %v428
      %v2936 = vmul.f32 %v2872, %v428
      %v2937 = vmul.f32 %v2873, %v428
      %v2938 = vadd.f32 %v2906, %v463
      %v2939 = vadd.f32 %v2907, %v463
      %v2940 = vadd.f32 %v2908, %v463
      %v2941 = vadd.f32 %v2909, %v463
      %v2942 = vadd.f32 %v2910, %v463
      %v2943 = vadd.f32 %v2911, %v463
      %v2944 = vadd.f32 %v2912, %v463
      %v2945 = vadd.f32 %v2913, %v463
      %v2946 = vadd.f32 %v2914, %v463
      %v2947 = vadd.f32 %v2915, %v463
      %v2948 = vadd.f32 %v2916, %v463
      %v2949 = vadd.f32 %v2917, %v463
      %v2950 = vadd.f32 %v2918, %v463
      %v2951 = vadd.f32 %v2919, %v463
      %v2952 = vadd.f32 %v2920, %v463
      %v2953 = vadd.f32 %v2921, %v463
      %v2954 = vadd.f32 %v2922, %v463
      %v2955 = vadd.f32 %v2923, %v463
      %v2956 = vadd.f32 %v2924, %v463
      %v2957 = vadd.f32 %v2925, %v463
      %v2958 = vadd.f32 %v2926, %v463
      %v2959 = vadd.f32 %v2927, %v463
      %v2960 = vadd.f32 %v2928, %v463
      %v2961 = vadd.f32 %v2929, %v463
      %v2962 = vadd.f32 %v2930, %v463
      %v2963 = vadd.f32 %v2931, %v463
      %v2964 = vadd.f32 %v2932, %v463
      %v2965 = vadd.f32 %v2933, %v463
      %v2966 = vadd.f32 %v2934, %v463
      %v2967 = vadd.f32 %v2935, %v463
      %v2968 = vadd.f32 %v2936, %v463
      %v2969 = vadd.f32 %v2937, %v463
      %v2970 = vmax.f32 %v2938, 0.0
      %v2971 = vmax.f32 %v2939, 0.0
      %v2972 = vmax.f32 %v2940, 0.0
      %v2973 = vmax.f32 %v2941, 0.0
      %v2974 = vmax.f32 %v2942, 0.0
      %v2975 = vmax.f32 %v2943, 0.0
      %v2976 = vmax.f32 %v2944, 0.0
      %v2977 = vmax.f32 %v2945, 0.0
      %v2978 = vmax.f32 %v2946, 0.0
      %v2979 = vmax.f32 %v2947, 0.0
      %v2980 = vmax.f32 %v2948, 0.0
      %v2981 = vmax.f32 %v2949, 0.0
      %v2982 = vmax.f32 %v2950, 0.0
      %v2983 = vmax.f32 %v2951, 0.0
      %v2984 = vmax.f32 %v2952, 0.0
      %v2985 = vmax.f32 %v2953, 0.0
      %v2986 = vmax.f32 %v2954, 0.0
      %v2987 = vmax.f32 %v2955, 0.0
      %v2988 = vmax.f32 %v2956, 0.0
      %v2989 = vmax.f32 %v2957, 0.0
      %v2990 = vmax.f32 %v2958, 0.0
      %v2991 = vmax.f32 %v2959, 0.0
      %v2992 = vmax.f32 %v2960, 0.0
      %v2993 = vmax.f32 %v2961, 0.0
      %v2994 = vmax.f32 %v2962, 0.0
      %v2995 = vmax.f32 %v2963, 0.0
      %v2996 = vmax.f32 %v2964, 0.0
      %v2997 = vmax.f32 %v2965, 0.0
      %v2998 = vmax.f32 %v2966, 0.0
      %v2999 = vmax.f32 %v2967, 0.0
      %v3000 = vmax.f32 %v2968, 0.0
      %v3001 = vmax.f32 %v2969, 0.0
      %3003 = vset.pattern.permute.xlu0 0
      %3004 = vperm.xlu0 %3003, %v2874
      %v3005 = vpop.permute.xlu0 %3004
      %3008 = vset.pattern.permute.xlu0 0
      %3009 = vperm.xlu0 %3008, %v2875
      %v3010 = vpop.permute.xlu0 %3009
      %3013 = vset.pattern.permute.xlu0 0
      %3014 = vperm.xlu0 %3013, %v2876
      %v3015 = vpop.permute.xlu0 %3014
      %3018 = vset.pattern.permute.xlu0 0
      %3019 = vperm.xlu0 %3018, %v2877
      %v3020 = vpop.permute.xlu0 %3019
      %3023 = vset.pattern.permute.xlu0 0
      %3024 = vperm.xlu0 %3023, %v2878
      %v3025 = vpop.permute.xlu0 %3024
      %3028 = vset.pattern.permute.xlu0 0
      %3029 = vperm.xlu0 %3028, %v2879
      %v3030 = vpop.permute.xlu0 %3029
      %3033 = vset.pattern.permute.xlu0 0
      %3034 = vperm.xlu0 %3033, %v2880
      %v3035 = vpop.permute.xlu0 %3034
      %3038 = vset.pattern.permute.xlu0 0
      %3039 = vperm.xlu0 %3038, %v2881
      %v3040 = vpop.permute.xlu0 %3039
      %3043 = vset.pattern.permute.xlu0 0
      %3044 = vperm.xlu0 %3043, %v2882
      %v3045 = vpop.permute.xlu0 %3044
      %3048 = vset.pattern.permute.xlu0 0
      %3049 = vperm.xlu0 %3048, %v2883
      %v3050 = vpop.permute.xlu0 %3049
      %3053 = vset.pattern.permute.xlu0 0
      %3054 = vperm.xlu0 %3053, %v2884
      %v3055 = vpop.permute.xlu0 %3054
      %3058 = vset.pattern.permute.xlu0 0
      %3059 = vperm.xlu0 %3058, %v2885
      %v3060 = vpop.permute.xlu0 %3059
      %3063 = vset.pattern.permute.xlu0 0
      %3064 = vperm.xlu0 %3063, %v2886
      %v3065 = vpop.permute.xlu0 %3064
      %3068 = vset.pattern.permute.xlu0 0
      %3069 = vperm.xlu0 %3068, %v2887
      %v3070 = vpop.permute.xlu0 %3069
      %3073 = vset.pattern.permute.xlu0 0
      %3074 = vperm.xlu0 %3073, %v2888
      %v3075 = vpop.permute.xlu0 %3074
      %3078 = vset.pattern.permute.xlu0 0
      %3079 = vperm.xlu0 %3078, %v2889
      %v3080 = vpop.permute.xlu0 %3079
      %3083 = vset.pattern.permute.xlu0 0
      %3084 = vperm.xlu0 %3083, %v2890
      %v3085 = vpop.permute.xlu0 %3084
      %3088 = vset.pattern.permute.xlu0 0
      %3089 = vperm.xlu0 %3088, %v2891
      %v3090 = vpop.permute.xlu0 %3089
      %3093 = vset.pattern.permute.xlu0 0
      %3094 = vperm.xlu0 %3093, %v2892
      %v3095 = vpop.permute.xlu0 %3094
      %3098 = vset.pattern.permute.xlu0 0
      %3099 = vperm.xlu0 %3098, %v2893
      %v3100 = vpop.permute.xlu0 %3099
      %3103 = vset.pattern.permute.xlu0 0
      %3104 = vperm.xlu0 %3103, %v2894
      %v3105 = vpop.permute.xlu0 %3104
      %3108 = vset.pattern.permute.xlu0 0
      %3109 = vperm.xlu0 %3108, %v2895
      %v3110 = vpop.permute.xlu0 %3109
      %3113 = vset.pattern.permute.xlu0 0
      %3114 = vperm.xlu0 %3113, %v2896
      %v3115 = vpop.permute.xlu0 %3114
      %3118 = vset.pattern.permute.xlu0 0
      %3119 = vperm.xlu0 %3118, %v2897
      %v3120 = vpop.permute.xlu0 %3119
      %3123 = vset.pattern.permute.xlu0 0
      %3124 = vperm.xlu0 %3123, %v2898
      %v3125 = vpop.permute.xlu0 %3124
      %3128 = vset.pattern.permute.xlu0 0
      %3129 = vperm.xlu0 %3128, %v2899
      %v3130 = vpop.permute.xlu0 %3129
      %3133 = vset.pattern.permute.xlu0 0
      %3134 = vperm.xlu0 %3133, %v2900
      %v3135 = vpop.permute.xlu0 %3134
      %3138 = vset.pattern.permute.xlu0 0
      %3139 = vperm.xlu0 %3138, %v2901
      %v3140 = vpop.permute.xlu0 %3139
      %3143 = vset.pattern.permute.xlu0 0
      %3144 = vperm.xlu0 %3143, %v2902
      %v3145 = vpop.permute.xlu0 %3144
      %3148 = vset.pattern.permute.xlu0 0
      %3149 = vperm.xlu0 %3148, %v2903
      %v3150 = vpop.permute.xlu0 %3149
      %3153 = vset.pattern.permute.xlu0 0
      %3154 = vperm.xlu0 %3153, %v2904
      %v3155 = vpop.permute.xlu0 %3154
      %3158 = vset.pattern.permute.xlu0 0
      %3159 = vperm.xlu0 %3158, %v2905
      %v3160 = vpop.permute.xlu0 %3159
      %v3162 = vmul.f32 %v2970, %v3005
      %v3163 = vmul.f32 %v2971, %v3010
      %v3164 = vmul.f32 %v2972, %v3015
      %v3165 = vmul.f32 %v2973, %v3020
      %v3166 = vmul.f32 %v2974, %v3025
      %v3167 = vmul.f32 %v2975, %v3030
      %v3168 = vmul.f32 %v2976, %v3035
      %v3169 = vmul.f32 %v2977, %v3040
      %v3170 = vmul.f32 %v2978, %v3045
      %v3171 = vmul.f32 %v2979, %v3050
      %v3172 = vmul.f32 %v2980, %v3055
      %v3173 = vmul.f32 %v2981, %v3060
      %v3174 = vmul.f32 %v2982, %v3065
      %v3175 = vmul.f32 %v2983, %v3070
      %v3176 = vmul.f32 %v2984, %v3075
      %v3177 = vmul.f32 %v2985, %v3080
      %v3178 = vmul.f32 %v2986, %v3085
      %v3179 = vmul.f32 %v2987, %v3090
      %v3180 = vmul.f32 %v2988, %v3095
      %v3181 = vmul.f32 %v2989, %v3100
      %v3182 = vmul.f32 %v2990, %v3105
      %v3183 = vmul.f32 %v2991, %v3110
      %v3184 = vmul.f32 %v2992, %v3115
      %v3185 = vmul.f32 %v2993, %v3120
      %v3186 = vmul.f32 %v2994, %v3125
      %v3187 = vmul.f32 %v2995, %v3130
      %v3188 = vmul.f32 %v2996, %v3135
      %v3189 = vmul.f32 %v2997, %v3140
      %v3190 = vmul.f32 %v2998, %v3145
      %v3191 = vmul.f32 %v2999, %v3150
      %v3192 = vmul.f32 %v3000, %v3155
      %v3193 = vmul.f32 %v3001, %v3160
      %v3194 = vpack.c.bf16 %v3163, %v3162
      %v3195 = vpack.c.bf16 %v3165, %v3164
      %v3196 = vpack.c.bf16 %v3167, %v3166
      %v3197 = vpack.c.bf16 %v3169, %v3168
      %v3198 = vpack.c.bf16 %v3171, %v3170
      %v3199 = vpack.c.bf16 %v3173, %v3172
      %v3200 = vpack.c.bf16 %v3175, %v3174
      %v3201 = vpack.c.bf16 %v3177, %v3176
      %v3202 = vpack.c.bf16 %v3179, %v3178
      %v3203 = vpack.c.bf16 %v3181, %v3180
      %v3204 = vpack.c.bf16 %v3183, %v3182
      %v3205 = vpack.c.bf16 %v3185, %v3184
      %v3206 = vpack.c.bf16 %v3187, %v3186
      %v3207 = vpack.c.bf16 %v3189, %v3188
      %v3208 = vpack.c.bf16 %v3191, %v3190
      %v3209 = vpack.c.bf16 %v3193, %v3192
      %v3210 = vld [vmem:[#allocation2] sm:$0xff]
      %v3211 = vld [vmem:[#allocation2 + $0x8] sm:$0xff]
      %v3212 = vld [vmem:[#allocation2 + $0x10] sm:$0xff]
      %v3213 = vld [vmem:[#allocation2 + $0x18] sm:$0xff]
      %v3214 = vld [vmem:[#allocation2 + $0x20] sm:$0xff]
      %v3215 = vld [vmem:[#allocation2 + $0x28] sm:$0xff]
      %v3216 = vld [vmem:[#allocation2 + $0x30] sm:$0xff]
      %v3217 = vld [vmem:[#allocation2 + $0x38] sm:$0xff]
      %v3218 = vld [vmem:[#allocation2 + $0x40] sm:$0xff]
      %v3219 = vld [vmem:[#allocation2 + $0x48] sm:$0xff]
      %v3220 = vld [vmem:[#allocation2 + $0x50] sm:$0xff]
      %v3221 = vld [vmem:[#allocation2 + $0x58] sm:$0xff]
      %v3222 = vld [vmem:[#allocation2 + $0x60] sm:$0xff]
      %v3223 = vld [vmem:[#allocation2 + $0x68] sm:$0xff]
      %v3224 = vld [vmem:[#allocation2 + $0x70] sm:$0xff]
      %v3225 = vld [vmem:[#allocation2 + $0x78] sm:$0xff]
      %v3226 = vld [vmem:[#allocation2 + $0x80] sm:$0xff]
      %v3227 = vld [vmem:[#allocation2 + $0x88] sm:$0xff]
      %v3228 = vld [vmem:[#allocation2 + $0x90] sm:$0xff]
      %v3229 = vld [vmem:[#allocation2 + $0x98] sm:$0xff]
      %v3230 = vld [vmem:[#allocation2 + $0xa0] sm:$0xff]
      %v3231 = vld [vmem:[#allocation2 + $0xa8] sm:$0xff]
      %v3232 = vld [vmem:[#allocation2 + $0xb0] sm:$0xff]
      %v3233 = vld [vmem:[#allocation2 + $0xb8] sm:$0xff]
      %v3234 = vld [vmem:[#allocation2 + $0xc0] sm:$0xff]
      %v3235 = vld [vmem:[#allocation2 + $0xc8] sm:$0xff]
      %v3236 = vld [vmem:[#allocation2 + $0xd0] sm:$0xff]
      %v3237 = vld [vmem:[#allocation2 + $0xd8] sm:$0xff]
      %v3238 = vld [vmem:[#allocation2 + $0xe0] sm:$0xff]
      %v3239 = vld [vmem:[#allocation2 + $0xe8] sm:$0xff]
      %v3240 = vld [vmem:[#allocation2 + $0xf0] sm:$0xff]
      %v3241 = vld [vmem:[#allocation2 + $0xf8] sm:$0xff]
      %s3242 = scalar_lea.vmem %s312, 256
      %v3243 = vld [vmem:[%s3242] sm:$0xf]
      %v3244 = vld [vmem:[%s3242 + $0x4] sm:$0xf]
      %v3245 = vld [vmem:[%s3242 + $0x8] sm:$0xf]
      %v3246 = vld [vmem:[%s3242 + $0xc] sm:$0xf]
      %v3247 = vld [vmem:[%s3242 + $0x10] sm:$0xf]
      %v3248 = vld [vmem:[%s3242 + $0x14] sm:$0xf]
      %v3249 = vld [vmem:[%s3242 + $0x18] sm:$0xf]
      %v3250 = vld [vmem:[%s3242 + $0x1c] sm:$0xf]
      %v3251 = vld [vmem:[%s3242 + $0x20] sm:$0xf]
      %v3252 = vld [vmem:[%s3242 + $0x24] sm:$0xf]
      %v3253 = vld [vmem:[%s3242 + $0x28] sm:$0xf]
      %v3254 = vld [vmem:[%s3242 + $0x2c] sm:$0xf]
      %v3255 = vld [vmem:[%s3242 + $0x30] sm:$0xf]
      %v3256 = vld [vmem:[%s3242 + $0x34] sm:$0xf]
      %v3257 = vld [vmem:[%s3242 + $0x38] sm:$0xf]
      %v3258 = vld [vmem:[%s3242 + $0x3c] sm:$0xf]
      %v3275 = vunpack.c.l.b16 %v3243
      %v3276 = vunpack.c.l.b16 %v3244
      %v3277 = vunpack.c.l.b16 %v3245
      %v3278 = vunpack.c.l.b16 %v3246
      %v3279 = vunpack.c.l.b16 %v3247
      %v3280 = vunpack.c.l.b16 %v3248
      %v3281 = vunpack.c.l.b16 %v3249
      %v3282 = vunpack.c.l.b16 %v3250
      %v3283 = vunpack.c.l.b16 %v3251
      %v3284 = vunpack.c.l.b16 %v3252
      %v3285 = vunpack.c.l.b16 %v3253
      %v3286 = vunpack.c.l.b16 %v3254
      %v3287 = vunpack.c.l.b16 %v3255
      %v3288 = vunpack.c.l.b16 %v3256
      %v3289 = vunpack.c.l.b16 %v3257
      %v3290 = vunpack.c.l.b16 %v3258
      %v3291 = vpack.c.b16 %v3276, %v3275
      %v3292 = vpack.c.b16 %v3278, %v3277
      %v3293 = vpack.c.b16 %v3280, %v3279
      %v3294 = vpack.c.b16 %v3282, %v3281
      %v3295 = vpack.c.b16 %v3284, %v3283
      %v3296 = vpack.c.b16 %v3286, %v3285
      %v3297 = vpack.c.b16 %v3288, %v3287
      %v3298 = vpack.c.b16 %v3290, %v3289
      %3307 = vmatpush.bf16.msra.mxu0 %v3298
      %3308 = vmatpush.bf16.msra.mxu0 %v3297
      %3309 = vmatpush.bf16.msra.mxu0 %v3296
      %3310 = vmatpush.bf16.msra.mxu0 %v3295
      %3311 = vmatpush.bf16.msra.mxu0 %v3294
      %3312 = vmatpush.bf16.msra.mxu0 %v3293
      %3313 = vmatpush.bf16.msra.mxu0 %v3292
      %3314 = vmatpush.bf16.msra.mxu0 %v3291
      %3315 = vmatmul.bf16.gmra.mxu0 %v3194
      %v3316 = vpop.f32.mrf.mxu0
      %v3317 = vadd.f32 0.0, %v3316
      %v3318 = vpop.f32.mrf.mxu0
      %v3319 = vadd.f32 0.0, %v3318
      %3320 = vmatmul.bf16.gmra.mxu0 %v3195
      %v3321 = vpop.f32.mrf.mxu0
      %v3322 = vadd.f32 0.0, %v3321
      %v3323 = vpop.f32.mrf.mxu0
      %v3324 = vadd.f32 0.0, %v3323
      %3325 = vmatmul.bf16.gmra.mxu0 %v3196
      %v3326 = vpop.f32.mrf.mxu0
      %v3327 = vadd.f32 0.0, %v3326
      %v3328 = vpop.f32.mrf.mxu0
      %v3329 = vadd.f32 0.0, %v3328
      %3330 = vmatmul.bf16.gmra.mxu0 %v3197
      %v3331 = vpop.f32.mrf.mxu0
      %v3332 = vadd.f32 0.0, %v3331
      %v3333 = vpop.f32.mrf.mxu0
      %v3334 = vadd.f32 0.0, %v3333
      %3335 = vmatmul.bf16.gmra.mxu0 %v3198
      %v3336 = vpop.f32.mrf.mxu0
      %v3337 = vadd.f32 0.0, %v3336
      %v3338 = vpop.f32.mrf.mxu0
      %v3339 = vadd.f32 0.0, %v3338
      %3340 = vmatmul.bf16.gmra.mxu0 %v3199
      %v3341 = vpop.f32.mrf.mxu0
      %v3342 = vadd.f32 0.0, %v3341
      %v3343 = vpop.f32.mrf.mxu0
      %v3344 = vadd.f32 0.0, %v3343
      %3345 = vmatmul.bf16.gmra.mxu0 %v3200
      %v3346 = vpop.f32.mrf.mxu0
      %v3347 = vadd.f32 0.0, %v3346
      %v3348 = vpop.f32.mrf.mxu0
      %v3349 = vadd.f32 0.0, %v3348
      %3350 = vmatmul.bf16.gmra.mxu0 %v3201
      %v3351 = vpop.f32.mrf.mxu0
      %v3352 = vadd.f32 0.0, %v3351
      %v3353 = vpop.f32.mrf.mxu0
      %v3354 = vadd.f32 0.0, %v3353
      %3355 = vmatmul.bf16.gmra.mxu0 %v3202
      %v3356 = vpop.f32.mrf.mxu0
      %v3357 = vadd.f32 0.0, %v3356
      %v3358 = vpop.f32.mrf.mxu0
      %v3359 = vadd.f32 0.0, %v3358
      %3360 = vmatmul.bf16.gmra.mxu0 %v3203
      %v3361 = vpop.f32.mrf.mxu0
      %v3362 = vadd.f32 0.0, %v3361
      %v3363 = vpop.f32.mrf.mxu0
      %v3364 = vadd.f32 0.0, %v3363
      %3365 = vmatmul.bf16.gmra.mxu0 %v3204
      %v3366 = vpop.f32.mrf.mxu0
      %v3367 = vadd.f32 0.0, %v3366
      %v3368 = vpop.f32.mrf.mxu0
      %v3369 = vadd.f32 0.0, %v3368
      %3370 = vmatmul.bf16.gmra.mxu0 %v3205
      %v3371 = vpop.f32.mrf.mxu0
      %v3372 = vadd.f32 0.0, %v3371
      %v3373 = vpop.f32.mrf.mxu0
      %v3374 = vadd.f32 0.0, %v3373
      %3375 = vmatmul.bf16.gmra.mxu0 %v3206
      %v3376 = vpop.f32.mrf.mxu0
      %v3377 = vadd.f32 0.0, %v3376
      %v3378 = vpop.f32.mrf.mxu0
      %v3379 = vadd.f32 0.0, %v3378
      %3380 = vmatmul.bf16.gmra.mxu0 %v3207
      %v3381 = vpop.f32.mrf.mxu0
      %v3382 = vadd.f32 0.0, %v3381
      %v3383 = vpop.f32.mrf.mxu0
      %v3384 = vadd.f32 0.0, %v3383
      %3385 = vmatmul.bf16.gmra.mxu0 %v3208
      %v3386 = vpop.f32.mrf.mxu0
      %v3387 = vadd.f32 0.0, %v3386
      %v3388 = vpop.f32.mrf.mxu0
      %v3389 = vadd.f32 0.0, %v3388
      %3390 = vmatmul.bf16.gmra.mxu0 %v3209
      %v3391 = vpop.f32.mrf.mxu0
      %v3392 = vadd.f32 0.0, %v3391
      %v3393 = vpop.f32.mrf.mxu0
      %v3394 = vadd.f32 0.0, %v3393
      %3395 = vdwg.mxu0
      %v3396 = vadd.f32 %v3210, %v3317
      %v3397 = vadd.f32 %v3211, %v3319
      %v3398 = vadd.f32 %v3212, %v3322
      %v3399 = vadd.f32 %v3213, %v3324
      %v3400 = vadd.f32 %v3214, %v3327
      %v3401 = vadd.f32 %v3215, %v3329
      %v3402 = vadd.f32 %v3216, %v3332
      %v3403 = vadd.f32 %v3217, %v3334
      %v3404 = vadd.f32 %v3218, %v3337
      %v3405 = vadd.f32 %v3219, %v3339
      %v3406 = vadd.f32 %v3220, %v3342
      %v3407 = vadd.f32 %v3221, %v3344
      %v3408 = vadd.f32 %v3222, %v3347
      %v3409 = vadd.f32 %v3223, %v3349
      %v3410 = vadd.f32 %v3224, %v3352
      %v3411 = vadd.f32 %v3225, %v3354
      %v3412 = vadd.f32 %v3226, %v3357
      %v3413 = vadd.f32 %v3227, %v3359
      %v3414 = vadd.f32 %v3228, %v3362
      %v3415 = vadd.f32 %v3229, %v3364
      %v3416 = vadd.f32 %v3230, %v3367
      %v3417 = vadd.f32 %v3231, %v3369
      %v3418 = vadd.f32 %v3232, %v3372
      %v3419 = vadd.f32 %v3233, %v3374
      %v3420 = vadd.f32 %v3234, %v3377
      %v3421 = vadd.f32 %v3235, %v3379
      %v3422 = vadd.f32 %v3236, %v3382
      %v3423 = vadd.f32 %v3237, %v3384
      %v3424 = vadd.f32 %v3238, %v3387
      %v3425 = vadd.f32 %v3239, %v3389
      %v3426 = vadd.f32 %v3240, %v3392
      %v3427 = vadd.f32 %v3241, %v3394
      %3428 = vst [vmem:[#allocation2] sm:$0xff] %v3396
      %3429 = vst [vmem:[#allocation2 + $0x8] sm:$0xff] %v3397
      %3430 = vst [vmem:[#allocation2 + $0x10] sm:$0xff] %v3398
      %3431 = vst [vmem:[#allocation2 + $0x18] sm:$0xff] %v3399
      %3432 = vst [vmem:[#allocation2 + $0x20] sm:$0xff] %v3400
      %3433 = vst [vmem:[#allocation2 + $0x28] sm:$0xff] %v3401
      %3434 = vst [vmem:[#allocation2 + $0x30] sm:$0xff] %v3402
      %3435 = vst [vmem:[#allocation2 + $0x38] sm:$0xff] %v3403
      %3436 = vst [vmem:[#allocation2 + $0x40] sm:$0xff] %v3404
      %3437 = vst [vmem:[#allocation2 + $0x48] sm:$0xff] %v3405
      %3438 = vst [vmem:[#allocation2 + $0x50] sm:$0xff] %v3406
      %3439 = vst [vmem:[#allocation2 + $0x58] sm:$0xff] %v3407
      %3440 = vst [vmem:[#allocation2 + $0x60] sm:$0xff] %v3408
      %3441 = vst [vmem:[#allocation2 + $0x68] sm:$0xff] %v3409
      %3442 = vst [vmem:[#allocation2 + $0x70] sm:$0xff] %v3410
      %3443 = vst [vmem:[#allocation2 + $0x78] sm:$0xff] %v3411
      %3444 = vst [vmem:[#allocation2 + $0x80] sm:$0xff] %v3412
      %3445 = vst [vmem:[#allocation2 + $0x88] sm:$0xff] %v3413
      %3446 = vst [vmem:[#allocation2 + $0x90] sm:$0xff] %v3414
      %3447 = vst [vmem:[#allocation2 + $0x98] sm:$0xff] %v3415
      %3448 = vst [vmem:[#allocation2 + $0xa0] sm:$0xff] %v3416
      %3449 = vst [vmem:[#allocation2 + $0xa8] sm:$0xff] %v3417
      %3450 = vst [vmem:[#allocation2 + $0xb0] sm:$0xff] %v3418
      %3451 = vst [vmem:[#allocation2 + $0xb8] sm:$0xff] %v3419
      %3452 = vst [vmem:[#allocation2 + $0xc0] sm:$0xff] %v3420
      %3453 = vst [vmem:[#allocation2 + $0xc8] sm:$0xff] %v3421
      %3454 = vst [vmem:[#allocation2 + $0xd0] sm:$0xff] %v3422
      %3455 = vst [vmem:[#allocation2 + $0xd8] sm:$0xff] %v3423
      %3456 = vst [vmem:[#allocation2 + $0xe0] sm:$0xff] %v3424
      %3457 = vst [vmem:[#allocation2 + $0xe8] sm:$0xff] %v3425
      %3458 = vst [vmem:[#allocation2 + $0xf0] sm:$0xff] %v3426
      %3459 = vst [vmem:[#allocation2 + $0xf8] sm:$0xff] %v3427
      %v3460 = vld [vmem:[%s2222 + $0x2] sm:$0xff]
      %v3461 = vld [vmem:[%s2222 + $0xa] sm:$0xff]
      %v3462 = vld [vmem:[%s2222 + $0x1a] sm:$0xff]
      %v3463 = vld [vmem:[%s2222 + $0x22] sm:$0xff]
      %v3464 = vld [vmem:[%s2222 + $0x32] sm:$0xff]
      %v3465 = vld [vmem:[%s2222 + $0x3a] sm:$0xff]
      %v3466 = vld [vmem:[%s2222 + $0x4a] sm:$0xff]
      %v3467 = vld [vmem:[%s2222 + $0x52] sm:$0xff]
      %v3468 = vld [vmem:[%s2222 + $0x62] sm:$0xff]
      %v3469 = vld [vmem:[%s2222 + $0x6a] sm:$0xff]
      %v3470 = vld [vmem:[%s2222 + $0x7a] sm:$0xff]
      %v3471 = vld [vmem:[%s2222 + $0x82] sm:$0xff]
      %v3472 = vld [vmem:[%s2222 + $0x92] sm:$0xff]
      %v3473 = vld [vmem:[%s2222 + $0x9a] sm:$0xff]
      %v3474 = vld [vmem:[%s2222 + $0xaa] sm:$0xff]
      %v3475 = vld [vmem:[%s2222 + $0xb2] sm:$0xff]
      %v3476 = vld [vmem:[%s2222 + $0xc2] sm:$0xff]
      %v3477 = vld [vmem:[%s2222 + $0xca] sm:$0xff]
      %v3478 = vld [vmem:[%s2222 + $0xda] sm:$0xff]
      %v3479 = vld [vmem:[%s2222 + $0xe2] sm:$0xff]
      %v3480 = vld [vmem:[%s2222 + $0xf2] sm:$0xff]
      %v3481 = vld [vmem:[%s2222 + $0xfa] sm:$0xff]
      %v3482 = vld [vmem:[%s2222 + $0x10a] sm:$0xff]
      %v3483 = vld [vmem:[%s2222 + $0x112] sm:$0xff]
      %v3484 = vld [vmem:[%s2222 + $0x122] sm:$0xff]
      %v3485 = vld [vmem:[%s2222 + $0x12a] sm:$0xff]
      %v3486 = vld [vmem:[%s2222 + $0x13a] sm:$0xff]
      %v3487 = vld [vmem:[%s2222 + $0x142] sm:$0xff]
      %v3488 = vld [vmem:[%s2222 + $0x152] sm:$0xff]
      %v3489 = vld [vmem:[%s2222 + $0x15a] sm:$0xff]
      %v3490 = vld [vmem:[%s2222 + $0x16a] sm:$0xff]
      %v3491 = vld [vmem:[%s2222 + $0x172] sm:$0xff]
      %v3492 = vld [vmem:[%s2255 + $0x2] sm:$0xff]
      %v3493 = vld [vmem:[%s2255 + $0xa] sm:$0xff]
      %v3494 = vld [vmem:[%s2255 + $0x1a] sm:$0xff]
      %v3495 = vld [vmem:[%s2255 + $0x22] sm:$0xff]
      %v3496 = vld [vmem:[%s2255 + $0x32] sm:$0xff]
      %v3497 = vld [vmem:[%s2255 + $0x3a] sm:$0xff]
      %v3498 = vld [vmem:[%s2255 + $0x4a] sm:$0xff]
      %v3499 = vld [vmem:[%s2255 + $0x52] sm:$0xff]
      %v3500 = vld [vmem:[%s2255 + $0x62] sm:$0xff]
      %v3501 = vld [vmem:[%s2255 + $0x6a] sm:$0xff]
      %v3502 = vld [vmem:[%s2255 + $0x7a] sm:$0xff]
      %v3503 = vld [vmem:[%s2255 + $0x82] sm:$0xff]
      %v3504 = vld [vmem:[%s2255 + $0x92] sm:$0xff]
      %v3505 = vld [vmem:[%s2255 + $0x9a] sm:$0xff]
      %v3506 = vld [vmem:[%s2255 + $0xaa] sm:$0xff]
      %v3507 = vld [vmem:[%s2255 + $0xb2] sm:$0xff]
      %v3508 = vld [vmem:[%s2255 + $0xc2] sm:$0xff]
      %v3509 = vld [vmem:[%s2255 + $0xca] sm:$0xff]
      %v3510 = vld [vmem:[%s2255 + $0xda] sm:$0xff]
      %v3511 = vld [vmem:[%s2255 + $0xe2] sm:$0xff]
      %v3512 = vld [vmem:[%s2255 + $0xf2] sm:$0xff]
      %v3513 = vld [vmem:[%s2255 + $0xfa] sm:$0xff]
      %v3514 = vld [vmem:[%s2255 + $0x10a] sm:$0xff]
      %v3515 = vld [vmem:[%s2255 + $0x112] sm:$0xff]
      %v3516 = vld [vmem:[%s2255 + $0x122] sm:$0xff]
      %v3517 = vld [vmem:[%s2255 + $0x12a] sm:$0xff]
      %v3518 = vld [vmem:[%s2255 + $0x13a] sm:$0xff]
      %v3519 = vld [vmem:[%s2255 + $0x142] sm:$0xff]
      %v3520 = vld [vmem:[%s2255 + $0x152] sm:$0xff]
      %v3521 = vld [vmem:[%s2255 + $0x15a] sm:$0xff]
      %v3522 = vld [vmem:[%s2255 + $0x16a] sm:$0xff]
      %v3523 = vld [vmem:[%s2255 + $0x172] sm:$0xff]
      %v3524 = vmul.f32 %v3460, %v428
      %v3525 = vmul.f32 %v3461, %v428
      %v3526 = vmul.f32 %v3462, %v428
      %v3527 = vmul.f32 %v3463, %v428
      %v3528 = vmul.f32 %v3464, %v428
      %v3529 = vmul.f32 %v3465, %v428
      %v3530 = vmul.f32 %v3466, %v428
      %v3531 = vmul.f32 %v3467, %v428
      %v3532 = vmul.f32 %v3468, %v428
      %v3533 = vmul.f32 %v3469, %v428
      %v3534 = vmul.f32 %v3470, %v428
      %v3535 = vmul.f32 %v3471, %v428
      %v3536 = vmul.f32 %v3472, %v428
      %v3537 = vmul.f32 %v3473, %v428
      %v3538 = vmul.f32 %v3474, %v428
      %v3539 = vmul.f32 %v3475, %v428
      %v3540 = vmul.f32 %v3476, %v428
      %v3541 = vmul.f32 %v3477, %v428
      %v3542 = vmul.f32 %v3478, %v428
      %v3543 = vmul.f32 %v3479, %v428
      %v3544 = vmul.f32 %v3480, %v428
      %v3545 = vmul.f32 %v3481, %v428
      %v3546 = vmul.f32 %v3482, %v428
      %v3547 = vmul.f32 %v3483, %v428
      %v3548 = vmul.f32 %v3484, %v428
      %v3549 = vmul.f32 %v3485, %v428
      %v3550 = vmul.f32 %v3486, %v428
      %v3551 = vmul.f32 %v3487, %v428
      %v3552 = vmul.f32 %v3488, %v428
      %v3553 = vmul.f32 %v3489, %v428
      %v3554 = vmul.f32 %v3490, %v428
      %v3555 = vmul.f32 %v3491, %v428
      %v3556 = vadd.f32 %v3524, %v463
      %v3557 = vadd.f32 %v3525, %v463
      %v3558 = vadd.f32 %v3526, %v463
      %v3559 = vadd.f32 %v3527, %v463
      %v3560 = vadd.f32 %v3528, %v463
      %v3561 = vadd.f32 %v3529, %v463
      %v3562 = vadd.f32 %v3530, %v463
      %v3563 = vadd.f32 %v3531, %v463
      %v3564 = vadd.f32 %v3532, %v463
      %v3565 = vadd.f32 %v3533, %v463
      %v3566 = vadd.f32 %v3534, %v463
      %v3567 = vadd.f32 %v3535, %v463
      %v3568 = vadd.f32 %v3536, %v463
      %v3569 = vadd.f32 %v3537, %v463
      %v3570 = vadd.f32 %v3538, %v463
      %v3571 = vadd.f32 %v3539, %v463
      %v3572 = vadd.f32 %v3540, %v463
      %v3573 = vadd.f32 %v3541, %v463
      %v3574 = vadd.f32 %v3542, %v463
      %v3575 = vadd.f32 %v3543, %v463
      %v3576 = vadd.f32 %v3544, %v463
      %v3577 = vadd.f32 %v3545, %v463
      %v3578 = vadd.f32 %v3546, %v463
      %v3579 = vadd.f32 %v3547, %v463
      %v3580 = vadd.f32 %v3548, %v463
      %v3581 = vadd.f32 %v3549, %v463
      %v3582 = vadd.f32 %v3550, %v463
      %v3583 = vadd.f32 %v3551, %v463
      %v3584 = vadd.f32 %v3552, %v463
      %v3585 = vadd.f32 %v3553, %v463
      %v3586 = vadd.f32 %v3554, %v463
      %v3587 = vadd.f32 %v3555, %v463
      %v3588 = vmax.f32 %v3556, 0.0
      %v3589 = vmax.f32 %v3557, 0.0
      %v3590 = vmax.f32 %v3558, 0.0
      %v3591 = vmax.f32 %v3559, 0.0
      %v3592 = vmax.f32 %v3560, 0.0
      %v3593 = vmax.f32 %v3561, 0.0
      %v3594 = vmax.f32 %v3562, 0.0
      %v3595 = vmax.f32 %v3563, 0.0
      %v3596 = vmax.f32 %v3564, 0.0
      %v3597 = vmax.f32 %v3565, 0.0
      %v3598 = vmax.f32 %v3566, 0.0
      %v3599 = vmax.f32 %v3567, 0.0
      %v3600 = vmax.f32 %v3568, 0.0
      %v3601 = vmax.f32 %v3569, 0.0
      %v3602 = vmax.f32 %v3570, 0.0
      %v3603 = vmax.f32 %v3571, 0.0
      %v3604 = vmax.f32 %v3572, 0.0
      %v3605 = vmax.f32 %v3573, 0.0
      %v3606 = vmax.f32 %v3574, 0.0
      %v3607 = vmax.f32 %v3575, 0.0
      %v3608 = vmax.f32 %v3576, 0.0
      %v3609 = vmax.f32 %v3577, 0.0
      %v3610 = vmax.f32 %v3578, 0.0
      %v3611 = vmax.f32 %v3579, 0.0
      %v3612 = vmax.f32 %v3580, 0.0
      %v3613 = vmax.f32 %v3581, 0.0
      %v3614 = vmax.f32 %v3582, 0.0
      %v3615 = vmax.f32 %v3583, 0.0
      %v3616 = vmax.f32 %v3584, 0.0
      %v3617 = vmax.f32 %v3585, 0.0
      %v3618 = vmax.f32 %v3586, 0.0
      %v3619 = vmax.f32 %v3587, 0.0
      %3621 = vset.pattern.permute.xlu0 0
      %3622 = vperm.xlu0 %3621, %v3492
      %v3623 = vpop.permute.xlu0 %3622
      %3626 = vset.pattern.permute.xlu0 0
      %3627 = vperm.xlu0 %3626, %v3493
      %v3628 = vpop.permute.xlu0 %3627
      %3631 = vset.pattern.permute.xlu0 0
      %3632 = vperm.xlu0 %3631, %v3494
      %v3633 = vpop.permute.xlu0 %3632
      %3636 = vset.pattern.permute.xlu0 0
      %3637 = vperm.xlu0 %3636, %v3495
      %v3638 = vpop.permute.xlu0 %3637
      %3641 = vset.pattern.permute.xlu0 0
      %3642 = vperm.xlu0 %3641, %v3496
      %v3643 = vpop.permute.xlu0 %3642
      %3646 = vset.pattern.permute.xlu0 0
      %3647 = vperm.xlu0 %3646, %v3497
      %v3648 = vpop.permute.xlu0 %3647
      %3651 = vset.pattern.permute.xlu0 0
      %3652 = vperm.xlu0 %3651, %v3498
      %v3653 = vpop.permute.xlu0 %3652
      %3656 = vset.pattern.permute.xlu0 0
      %3657 = vperm.xlu0 %3656, %v3499
      %v3658 = vpop.permute.xlu0 %3657
      %3661 = vset.pattern.permute.xlu0 0
      %3662 = vperm.xlu0 %3661, %v3500
      %v3663 = vpop.permute.xlu0 %3662
      %3666 = vset.pattern.permute.xlu0 0
      %3667 = vperm.xlu0 %3666, %v3501
      %v3668 = vpop.permute.xlu0 %3667
      %3671 = vset.pattern.permute.xlu0 0
      %3672 = vperm.xlu0 %3671, %v3502
      %v3673 = vpop.permute.xlu0 %3672
      %3676 = vset.pattern.permute.xlu0 0
      %3677 = vperm.xlu0 %3676, %v3503
      %v3678 = vpop.permute.xlu0 %3677
      %3681 = vset.pattern.permute.xlu0 0
      %3682 = vperm.xlu0 %3681, %v3504
      %v3683 = vpop.permute.xlu0 %3682
      %3686 = vset.pattern.permute.xlu0 0
      %3687 = vperm.xlu0 %3686, %v3505
      %v3688 = vpop.permute.xlu0 %3687
      %3691 = vset.pattern.permute.xlu0 0
      %3692 = vperm.xlu0 %3691, %v3506
      %v3693 = vpop.permute.xlu0 %3692
      %3696 = vset.pattern.permute.xlu0 0
      %3697 = vperm.xlu0 %3696, %v3507
      %v3698 = vpop.permute.xlu0 %3697
      %3701 = vset.pattern.permute.xlu0 0
      %3702 = vperm.xlu0 %3701, %v3508
      %v3703 = vpop.permute.xlu0 %3702
      %3706 = vset.pattern.permute.xlu0 0
      %3707 = vperm.xlu0 %3706, %v3509
      %v3708 = vpop.permute.xlu0 %3707
      %3711 = vset.pattern.permute.xlu0 0
      %3712 = vperm.xlu0 %3711, %v3510
      %v3713 = vpop.permute.xlu0 %3712
      %3716 = vset.pattern.permute.xlu0 0
      %3717 = vperm.xlu0 %3716, %v3511
      %v3718 = vpop.permute.xlu0 %3717
      %3721 = vset.pattern.permute.xlu0 0
      %3722 = vperm.xlu0 %3721, %v3512
      %v3723 = vpop.permute.xlu0 %3722
      %3726 = vset.pattern.permute.xlu0 0
      %3727 = vperm.xlu0 %3726, %v3513
      %v3728 = vpop.permute.xlu0 %3727
      %3731 = vset.pattern.permute.xlu0 0
      %3732 = vperm.xlu0 %3731, %v3514
      %v3733 = vpop.permute.xlu0 %3732
      %3736 = vset.pattern.permute.xlu0 0
      %3737 = vperm.xlu0 %3736, %v3515
      %v3738 = vpop.permute.xlu0 %3737
      %3741 = vset.pattern.permute.xlu0 0
      %3742 = vperm.xlu0 %3741, %v3516
      %v3743 = vpop.permute.xlu0 %3742
      %3746 = vset.pattern.permute.xlu0 0
      %3747 = vperm.xlu0 %3746, %v3517
      %v3748 = vpop.permute.xlu0 %3747
      %3751 = vset.pattern.permute.xlu0 0
      %3752 = vperm.xlu0 %3751, %v3518
      %v3753 = vpop.permute.xlu0 %3752
      %3756 = vset.pattern.permute.xlu0 0
      %3757 = vperm.xlu0 %3756, %v3519
      %v3758 = vpop.permute.xlu0 %3757
      %3761 = vset.pattern.permute.xlu0 0
      %3762 = vperm.xlu0 %3761, %v3520
      %v3763 = vpop.permute.xlu0 %3762
      %3766 = vset.pattern.permute.xlu0 0
      %3767 = vperm.xlu0 %3766, %v3521
      %v3768 = vpop.permute.xlu0 %3767
      %3771 = vset.pattern.permute.xlu0 0
      %3772 = vperm.xlu0 %3771, %v3522
      %v3773 = vpop.permute.xlu0 %3772
      %3776 = vset.pattern.permute.xlu0 0
      %3777 = vperm.xlu0 %3776, %v3523
      %v3778 = vpop.permute.xlu0 %3777
      %v3780 = vmul.f32 %v3588, %v3623
      %v3781 = vmul.f32 %v3589, %v3628
      %v3782 = vmul.f32 %v3590, %v3633
      %v3783 = vmul.f32 %v3591, %v3638
      %v3784 = vmul.f32 %v3592, %v3643
      %v3785 = vmul.f32 %v3593, %v3648
      %v3786 = vmul.f32 %v3594, %v3653
      %v3787 = vmul.f32 %v3595, %v3658
      %v3788 = vmul.f32 %v3596, %v3663
      %v3789 = vmul.f32 %v3597, %v3668
      %v3790 = vmul.f32 %v3598, %v3673
      %v3791 = vmul.f32 %v3599, %v3678
      %v3792 = vmul.f32 %v3600, %v3683
      %v3793 = vmul.f32 %v3601, %v3688
      %v3794 = vmul.f32 %v3602, %v3693
      %v3795 = vmul.f32 %v3603, %v3698
      %v3796 = vmul.f32 %v3604, %v3703
      %v3797 = vmul.f32 %v3605, %v3708
      %v3798 = vmul.f32 %v3606, %v3713
      %v3799 = vmul.f32 %v3607, %v3718
      %v3800 = vmul.f32 %v3608, %v3723
      %v3801 = vmul.f32 %v3609, %v3728
      %v3802 = vmul.f32 %v3610, %v3733
      %v3803 = vmul.f32 %v3611, %v3738
      %v3804 = vmul.f32 %v3612, %v3743
      %v3805 = vmul.f32 %v3613, %v3748
      %v3806 = vmul.f32 %v3614, %v3753
      %v3807 = vmul.f32 %v3615, %v3758
      %v3808 = vmul.f32 %v3616, %v3763
      %v3809 = vmul.f32 %v3617, %v3768
      %v3810 = vmul.f32 %v3618, %v3773
      %v3811 = vmul.f32 %v3619, %v3778
      %v3812 = vpack.c.bf16 %v3781, %v3780
      %v3813 = vpack.c.bf16 %v3783, %v3782
      %v3814 = vpack.c.bf16 %v3785, %v3784
      %v3815 = vpack.c.bf16 %v3787, %v3786
      %v3816 = vpack.c.bf16 %v3789, %v3788
      %v3817 = vpack.c.bf16 %v3791, %v3790
      %v3818 = vpack.c.bf16 %v3793, %v3792
      %v3819 = vpack.c.bf16 %v3795, %v3794
      %v3820 = vpack.c.bf16 %v3797, %v3796
      %v3821 = vpack.c.bf16 %v3799, %v3798
      %v3822 = vpack.c.bf16 %v3801, %v3800
      %v3823 = vpack.c.bf16 %v3803, %v3802
      %v3824 = vpack.c.bf16 %v3805, %v3804
      %v3825 = vpack.c.bf16 %v3807, %v3806
      %v3826 = vpack.c.bf16 %v3809, %v3808
      %v3827 = vpack.c.bf16 %v3811, %v3810
      %v3828 = vld [vmem:[#allocation2] sm:$0xff]
      %v3829 = vld [vmem:[#allocation2 + $0x8] sm:$0xff]
      %v3830 = vld [vmem:[#allocation2 + $0x10] sm:$0xff]
      %v3831 = vld [vmem:[#allocation2 + $0x18] sm:$0xff]
      %v3832 = vld [vmem:[#allocation2 + $0x20] sm:$0xff]
      %v3833 = vld [vmem:[#allocation2 + $0x28] sm:$0xff]
      %v3834 = vld [vmem:[#allocation2 + $0x30] sm:$0xff]
      %v3835 = vld [vmem:[#allocation2 + $0x38] sm:$0xff]
      %v3836 = vld [vmem:[#allocation2 + $0x40] sm:$0xff]
      %v3837 = vld [vmem:[#allocation2 + $0x48] sm:$0xff]
      %v3838 = vld [vmem:[#allocation2 + $0x50] sm:$0xff]
      %v3839 = vld [vmem:[#allocation2 + $0x58] sm:$0xff]
      %v3840 = vld [vmem:[#allocation2 + $0x60] sm:$0xff]
      %v3841 = vld [vmem:[#allocation2 + $0x68] sm:$0xff]
      %v3842 = vld [vmem:[#allocation2 + $0x70] sm:$0xff]
      %v3843 = vld [vmem:[#allocation2 + $0x78] sm:$0xff]
      %v3844 = vld [vmem:[#allocation2 + $0x80] sm:$0xff]
      %v3845 = vld [vmem:[#allocation2 + $0x88] sm:$0xff]
      %v3846 = vld [vmem:[#allocation2 + $0x90] sm:$0xff]
      %v3847 = vld [vmem:[#allocation2 + $0x98] sm:$0xff]
      %v3848 = vld [vmem:[#allocation2 + $0xa0] sm:$0xff]
      %v3849 = vld [vmem:[#allocation2 + $0xa8] sm:$0xff]
      %v3850 = vld [vmem:[#allocation2 + $0xb0] sm:$0xff]
      %v3851 = vld [vmem:[#allocation2 + $0xb8] sm:$0xff]
      %v3852 = vld [vmem:[#allocation2 + $0xc0] sm:$0xff]
      %v3853 = vld [vmem:[#allocation2 + $0xc8] sm:$0xff]
      %v3854 = vld [vmem:[#allocation2 + $0xd0] sm:$0xff]
      %v3855 = vld [vmem:[#allocation2 + $0xd8] sm:$0xff]
      %v3856 = vld [vmem:[#allocation2 + $0xe0] sm:$0xff]
      %v3857 = vld [vmem:[#allocation2 + $0xe8] sm:$0xff]
      %v3858 = vld [vmem:[#allocation2 + $0xf0] sm:$0xff]
      %v3859 = vld [vmem:[#allocation2 + $0xf8] sm:$0xff]
      %s3860 = scalar_lea.vmem %s312, 320
      %v3861 = vld [vmem:[%s3860] sm:$0xf]
      %v3862 = vld [vmem:[%s3860 + $0x4] sm:$0xf]
      %v3863 = vld [vmem:[%s3860 + $0x8] sm:$0xf]
      %v3864 = vld [vmem:[%s3860 + $0xc] sm:$0xf]
      %v3865 = vld [vmem:[%s3860 + $0x10] sm:$0xf]
      %v3866 = vld [vmem:[%s3860 + $0x14] sm:$0xf]
      %v3867 = vld [vmem:[%s3860 + $0x18] sm:$0xf]
      %v3868 = vld [vmem:[%s3860 + $0x1c] sm:$0xf]
      %v3869 = vld [vmem:[%s3860 + $0x20] sm:$0xf]
      %v3870 = vld [vmem:[%s3860 + $0x24] sm:$0xf]
      %v3871 = vld [vmem:[%s3860 + $0x28] sm:$0xf]
      %v3872 = vld [vmem:[%s3860 + $0x2c] sm:$0xf]
      %v3873 = vld [vmem:[%s3860 + $0x30] sm:$0xf]
      %v3874 = vld [vmem:[%s3860 + $0x34] sm:$0xf]
      %v3875 = vld [vmem:[%s3860 + $0x38] sm:$0xf]
      %v3876 = vld [vmem:[%s3860 + $0x3c] sm:$0xf]
      %v3893 = vunpack.c.l.b16 %v3861
      %v3894 = vunpack.c.l.b16 %v3862
      %v3895 = vunpack.c.l.b16 %v3863
      %v3896 = vunpack.c.l.b16 %v3864
      %v3897 = vunpack.c.l.b16 %v3865
      %v3898 = vunpack.c.l.b16 %v3866
      %v3899 = vunpack.c.l.b16 %v3867
      %v3900 = vunpack.c.l.b16 %v3868
      %v3901 = vunpack.c.l.b16 %v3869
      %v3902 = vunpack.c.l.b16 %v3870
      %v3903 = vunpack.c.l.b16 %v3871
      %v3904 = vunpack.c.l.b16 %v3872
      %v3905 = vunpack.c.l.b16 %v3873
      %v3906 = vunpack.c.l.b16 %v3874
      %v3907 = vunpack.c.l.b16 %v3875
      %v3908 = vunpack.c.l.b16 %v3876
      %v3909 = vpack.c.b16 %v3894, %v3893
      %v3910 = vpack.c.b16 %v3896, %v3895
      %v3911 = vpack.c.b16 %v3898, %v3897
      %v3912 = vpack.c.b16 %v3900, %v3899
      %v3913 = vpack.c.b16 %v3902, %v3901
      %v3914 = vpack.c.b16 %v3904, %v3903
      %v3915 = vpack.c.b16 %v3906, %v3905
      %v3916 = vpack.c.b16 %v3908, %v3907
      %3925 = vmatpush.bf16.msra.mxu0 %v3916
      %3926 = vmatpush.bf16.msra.mxu0 %v3915
      %3927 = vmatpush.bf16.msra.mxu0 %v3914
      %3928 = vmatpush.bf16.msra.mxu0 %v3913
      %3929 = vmatpush.bf16.msra.mxu0 %v3912
      %3930 = vmatpush.bf16.msra.mxu0 %v3911
      %3931 = vmatpush.bf16.msra.mxu0 %v3910
      %3932 = vmatpush.bf16.msra.mxu0 %v3909
      %3933 = vmatmul.bf16.gmra.mxu0 %v3812
      %v3934 = vpop.f32.mrf.mxu0
      %v3935 = vadd.f32 0.0, %v3934
      %v3936 = vpop.f32.mrf.mxu0
      %v3937 = vadd.f32 0.0, %v3936
      %3938 = vmatmul.bf16.gmra.mxu0 %v3813
      %v3939 = vpop.f32.mrf.mxu0
      %v3940 = vadd.f32 0.0, %v3939
      %v3941 = vpop.f32.mrf.mxu0
      %v3942 = vadd.f32 0.0, %v3941
      %3943 = vmatmul.bf16.gmra.mxu0 %v3814
      %v3944 = vpop.f32.mrf.mxu0
      %v3945 = vadd.f32 0.0, %v3944
      %v3946 = vpop.f32.mrf.mxu0
      %v3947 = vadd.f32 0.0, %v3946
      %3948 = vmatmul.bf16.gmra.mxu0 %v3815
      %v3949 = vpop.f32.mrf.mxu0
      %v3950 = vadd.f32 0.0, %v3949
      %v3951 = vpop.f32.mrf.mxu0
      %v3952 = vadd.f32 0.0, %v3951
      %3953 = vmatmul.bf16.gmra.mxu0 %v3816
      %v3954 = vpop.f32.mrf.mxu0
      %v3955 = vadd.f32 0.0, %v3954
      %v3956 = vpop.f32.mrf.mxu0
      %v3957 = vadd.f32 0.0, %v3956
      %3958 = vmatmul.bf16.gmra.mxu0 %v3817
      %v3959 = vpop.f32.mrf.mxu0
      %v3960 = vadd.f32 0.0, %v3959
      %v3961 = vpop.f32.mrf.mxu0
      %v3962 = vadd.f32 0.0, %v3961
      %3963 = vmatmul.bf16.gmra.mxu0 %v3818
      %v3964 = vpop.f32.mrf.mxu0
      %v3965 = vadd.f32 0.0, %v3964
      %v3966 = vpop.f32.mrf.mxu0
      %v3967 = vadd.f32 0.0, %v3966
      %3968 = vmatmul.bf16.gmra.mxu0 %v3819
      %v3969 = vpop.f32.mrf.mxu0
      %v3970 = vadd.f32 0.0, %v3969
      %v3971 = vpop.f32.mrf.mxu0
      %v3972 = vadd.f32 0.0, %v3971
      %3973 = vmatmul.bf16.gmra.mxu0 %v3820
      %v3974 = vpop.f32.mrf.mxu0
      %v3975 = vadd.f32 0.0, %v3974
      %v3976 = vpop.f32.mrf.mxu0
      %v3977 = vadd.f32 0.0, %v3976
      %3978 = vmatmul.bf16.gmra.mxu0 %v3821
      %v3979 = vpop.f32.mrf.mxu0
      %v3980 = vadd.f32 0.0, %v3979
      %v3981 = vpop.f32.mrf.mxu0
      %v3982 = vadd.f32 0.0, %v3981
      %3983 = vmatmul.bf16.gmra.mxu0 %v3822
      %v3984 = vpop.f32.mrf.mxu0
      %v3985 = vadd.f32 0.0, %v3984
      %v3986 = vpop.f32.mrf.mxu0
      %v3987 = vadd.f32 0.0, %v3986
      %3988 = vmatmul.bf16.gmra.mxu0 %v3823
      %v3989 = vpop.f32.mrf.mxu0
      %v3990 = vadd.f32 0.0, %v3989
      %v3991 = vpop.f32.mrf.mxu0
      %v3992 = vadd.f32 0.0, %v3991
      %3993 = vmatmul.bf16.gmra.mxu0 %v3824
      %v3994 = vpop.f32.mrf.mxu0
      %v3995 = vadd.f32 0.0, %v3994
      %v3996 = vpop.f32.mrf.mxu0
      %v3997 = vadd.f32 0.0, %v3996
      %3998 = vmatmul.bf16.gmra.mxu0 %v3825
      %v3999 = vpop.f32.mrf.mxu0
      %v4000 = vadd.f32 0.0, %v3999
      %v4001 = vpop.f32.mrf.mxu0
      %v4002 = vadd.f32 0.0, %v4001
      %4003 = vmatmul.bf16.gmra.mxu0 %v3826
      %v4004 = vpop.f32.mrf.mxu0
      %v4005 = vadd.f32 0.0, %v4004
      %v4006 = vpop.f32.mrf.mxu0
      %v4007 = vadd.f32 0.0, %v4006
      %4008 = vmatmul.bf16.gmra.mxu0 %v3827
      %v4009 = vpop.f32.mrf.mxu0
      %v4010 = vadd.f32 0.0, %v4009
      %v4011 = vpop.f32.mrf.mxu0
      %v4012 = vadd.f32 0.0, %v4011
      %4013 = vdwg.mxu0
      %v4014 = vadd.f32 %v3828, %v3935
      %v4015 = vadd.f32 %v3829, %v3937
      %v4016 = vadd.f32 %v3830, %v3940
      %v4017 = vadd.f32 %v3831, %v3942
      %v4018 = vadd.f32 %v3832, %v3945
      %v4019 = vadd.f32 %v3833, %v3947
      %v4020 = vadd.f32 %v3834, %v3950
      %v4021 = vadd.f32 %v3835, %v3952
      %v4022 = vadd.f32 %v3836, %v3955
      %v4023 = vadd.f32 %v3837, %v3957
      %v4024 = vadd.f32 %v3838, %v3960
      %v4025 = vadd.f32 %v3839, %v3962
      %v4026 = vadd.f32 %v3840, %v3965
      %v4027 = vadd.f32 %v3841, %v3967
      %v4028 = vadd.f32 %v3842, %v3970
      %v4029 = vadd.f32 %v3843, %v3972
      %v4030 = vadd.f32 %v3844, %v3975
      %v4031 = vadd.f32 %v3845, %v3977
      %v4032 = vadd.f32 %v3846, %v3980
      %v4033 = vadd.f32 %v3847, %v3982
      %v4034 = vadd.f32 %v3848, %v3985
      %v4035 = vadd.f32 %v3849, %v3987
      %v4036 = vadd.f32 %v3850, %v3990
      %v4037 = vadd.f32 %v3851, %v3992
      %v4038 = vadd.f32 %v3852, %v3995
      %v4039 = vadd.f32 %v3853, %v3997
      %v4040 = vadd.f32 %v3854, %v4000
      %v4041 = vadd.f32 %v3855, %v4002
      %v4042 = vadd.f32 %v3856, %v4005
      %v4043 = vadd.f32 %v3857, %v4007
      %v4044 = vadd.f32 %v3858, %v4010
      %v4045 = vadd.f32 %v3859, %v4012
      %4046 = vst [vmem:[#allocation2] sm:$0xff] %v4014
      %4047 = vst [vmem:[#allocation2 + $0x8] sm:$0xff] %v4015
      %4048 = vst [vmem:[#allocation2 + $0x10] sm:$0xff] %v4016
      %4049 = vst [vmem:[#allocation2 + $0x18] sm:$0xff] %v4017
      %4050 = vst [vmem:[#allocation2 + $0x20] sm:$0xff] %v4018
      %4051 = vst [vmem:[#allocation2 + $0x28] sm:$0xff] %v4019
      %4052 = vst [vmem:[#allocation2 + $0x30] sm:$0xff] %v4020
      %4053 = vst [vmem:[#allocation2 + $0x38] sm:$0xff] %v4021
      %4054 = vst [vmem:[#allocation2 + $0x40] sm:$0xff] %v4022
      %4055 = vst [vmem:[#allocation2 + $0x48] sm:$0xff] %v4023
      %4056 = vst [vmem:[#allocation2 + $0x50] sm:$0xff] %v4024
      %4057 = vst [vmem:[#allocation2 + $0x58] sm:$0xff] %v4025
      %4058 = vst [vmem:[#allocation2 + $0x60] sm:$0xff] %v4026
      %4059 = vst [vmem:[#allocation2 + $0x68] sm:$0xff] %v4027
      %4060 = vst [vmem:[#allocation2 + $0x70] sm:$0xff] %v4028
      %4061 = vst [vmem:[#allocation2 + $0x78] sm:$0xff] %v4029
      %4062 = vst [vmem:[#allocation2 + $0x80] sm:$0xff] %v4030
      %4063 = vst [vmem:[#allocation2 + $0x88] sm:$0xff] %v4031
      %4064 = vst [vmem:[#allocation2 + $0x90] sm:$0xff] %v4032
      %4065 = vst [vmem:[#allocation2 + $0x98] sm:$0xff] %v4033
      %4066 = vst [vmem:[#allocation2 + $0xa0] sm:$0xff] %v4034
      %4067 = vst [vmem:[#allocation2 + $0xa8] sm:$0xff] %v4035
      %4068 = vst [vmem:[#allocation2 + $0xb0] sm:$0xff] %v4036
      %4069 = vst [vmem:[#allocation2 + $0xb8] sm:$0xff] %v4037
      %4070 = vst [vmem:[#allocation2 + $0xc0] sm:$0xff] %v4038
      %4071 = vst [vmem:[#allocation2 + $0xc8] sm:$0xff] %v4039
      %4072 = vst [vmem:[#allocation2 + $0xd0] sm:$0xff] %v4040
      %4073 = vst [vmem:[#allocation2 + $0xd8] sm:$0xff] %v4041
      %4074 = vst [vmem:[#allocation2 + $0xe0] sm:$0xff] %v4042
      %4075 = vst [vmem:[#allocation2 + $0xe8] sm:$0xff] %v4043
      %4076 = vst [vmem:[#allocation2 + $0xf0] sm:$0xff] %v4044
      %4077 = vst [vmem:[#allocation2 + $0xf8] sm:$0xff] %v4045
      %s4078 = scalar_lea.vmem %s307, 48
      %v4079 = vld [vmem:[%s4078] sm:$0xff]
      %v4080 = vld [vmem:[%s4078 + $0x8] sm:$0xff]
      %v4081 = vld [vmem:[%s4078 + $0x18] sm:$0xff]
      %v4082 = vld [vmem:[%s4078 + $0x20] sm:$0xff]
      %v4083 = vld [vmem:[%s4078 + $0x30] sm:$0xff]
      %v4084 = vld [vmem:[%s4078 + $0x38] sm:$0xff]
      %v4085 = vld [vmem:[%s4078 + $0x48] sm:$0xff]
      %v4086 = vld [vmem:[%s4078 + $0x50] sm:$0xff]
      %v4087 = vld [vmem:[%s4078 + $0x60] sm:$0xff]
      %v4088 = vld [vmem:[%s4078 + $0x68] sm:$0xff]
      %v4089 = vld [vmem:[%s4078 + $0x78] sm:$0xff]
      %v4090 = vld [vmem:[%s4078 + $0x80] sm:$0xff]
      %v4091 = vld [vmem:[%s4078 + $0x90] sm:$0xff]
      %v4092 = vld [vmem:[%s4078 + $0x98] sm:$0xff]
      %v4093 = vld [vmem:[%s4078 + $0xa8] sm:$0xff]
      %v4094 = vld [vmem:[%s4078 + $0xb0] sm:$0xff]
      %v4095 = vld [vmem:[%s4078 + $0xc0] sm:$0xff]
      %v4096 = vld [vmem:[%s4078 + $0xc8] sm:$0xff]
      %v4097 = vld [vmem:[%s4078 + $0xd8] sm:$0xff]
      %v4098 = vld [vmem:[%s4078 + $0xe0] sm:$0xff]
      %v4099 = vld [vmem:[%s4078 + $0xf0] sm:$0xff]
      %v4100 = vld [vmem:[%s4078 + $0xf8] sm:$0xff]
      %v4101 = vld [vmem:[%s4078 + $0x108] sm:$0xff]
      %v4102 = vld [vmem:[%s4078 + $0x110] sm:$0xff]
      %v4103 = vld [vmem:[%s4078 + $0x120] sm:$0xff]
      %v4104 = vld [vmem:[%s4078 + $0x128] sm:$0xff]
      %v4105 = vld [vmem:[%s4078 + $0x138] sm:$0xff]
      %v4106 = vld [vmem:[%s4078 + $0x140] sm:$0xff]
      %v4107 = vld [vmem:[%s4078 + $0x150] sm:$0xff]
      %v4108 = vld [vmem:[%s4078 + $0x158] sm:$0xff]
      %v4109 = vld [vmem:[%s4078 + $0x168] sm:$0xff]
      %v4110 = vld [vmem:[%s4078 + $0x170] sm:$0xff]
      %s4111 = scalar_lea.vmem %s1, 48
      %v4112 = vld [vmem:[%s4111] sm:$0xff]
      %v4113 = vld [vmem:[%s4111 + $0x8] sm:$0xff]
      %v4114 = vld [vmem:[%s4111 + $0x18] sm:$0xff]
      %v4115 = vld [vmem:[%s4111 + $0x20] sm:$0xff]
      %v4116 = vld [vmem:[%s4111 + $0x30] sm:$0xff]
      %v4117 = vld [vmem:[%s4111 + $0x38] sm:$0xff]
      %v4118 = vld [vmem:[%s4111 + $0x48] sm:$0xff]
      %v4119 = vld [vmem:[%s4111 + $0x50] sm:$0xff]
      %v4120 = vld [vmem:[%s4111 + $0x60] sm:$0xff]
      %v4121 = vld [vmem:[%s4111 + $0x68] sm:$0xff]
      %v4122 = vld [vmem:[%s4111 + $0x78] sm:$0xff]
      %v4123 = vld [vmem:[%s4111 + $0x80] sm:$0xff]
      %v4124 = vld [vmem:[%s4111 + $0x90] sm:$0xff]
      %v4125 = vld [vmem:[%s4111 + $0x98] sm:$0xff]
      %v4126 = vld [vmem:[%s4111 + $0xa8] sm:$0xff]
      %v4127 = vld [vmem:[%s4111 + $0xb0] sm:$0xff]
      %v4128 = vld [vmem:[%s4111 + $0xc0] sm:$0xff]
      %v4129 = vld [vmem:[%s4111 + $0xc8] sm:$0xff]
      %v4130 = vld [vmem:[%s4111 + $0xd8] sm:$0xff]
      %v4131 = vld [vmem:[%s4111 + $0xe0] sm:$0xff]
      %v4132 = vld [vmem:[%s4111 + $0xf0] sm:$0xff]
      %v4133 = vld [vmem:[%s4111 + $0xf8] sm:$0xff]
      %v4134 = vld [vmem:[%s4111 + $0x108] sm:$0xff]
      %v4135 = vld [vmem:[%s4111 + $0x110] sm:$0xff]
      %v4136 = vld [vmem:[%s4111 + $0x120] sm:$0xff]
      %v4137 = vld [vmem:[%s4111 + $0x128] sm:$0xff]
      %v4138 = vld [vmem:[%s4111 + $0x138] sm:$0xff]
      %v4139 = vld [vmem:[%s4111 + $0x140] sm:$0xff]
      %v4140 = vld [vmem:[%s4111 + $0x150] sm:$0xff]
      %v4141 = vld [vmem:[%s4111 + $0x158] sm:$0xff]
      %v4142 = vld [vmem:[%s4111 + $0x168] sm:$0xff]
      %v4143 = vld [vmem:[%s4111 + $0x170] sm:$0xff]
      %v4144 = vmul.f32 %v4079, %v428
      %v4145 = vmul.f32 %v4080, %v428
      %v4146 = vmul.f32 %v4081, %v428
      %v4147 = vmul.f32 %v4082, %v428
      %v4148 = vmul.f32 %v4083, %v428
      %v4149 = vmul.f32 %v4084, %v428
      %v4150 = vmul.f32 %v4085, %v428
      %v4151 = vmul.f32 %v4086, %v428
      %v4152 = vmul.f32 %v4087, %v428
      %v4153 = vmul.f32 %v4088, %v428
      %v4154 = vmul.f32 %v4089, %v428
      %v4155 = vmul.f32 %v4090, %v428
      %v4156 = vmul.f32 %v4091, %v428
      %v4157 = vmul.f32 %v4092, %v428
      %v4158 = vmul.f32 %v4093, %v428
      %v4159 = vmul.f32 %v4094, %v428
      %v4160 = vmul.f32 %v4095, %v428
      %v4161 = vmul.f32 %v4096, %v428
      %v4162 = vmul.f32 %v4097, %v428
      %v4163 = vmul.f32 %v4098, %v428
      %v4164 = vmul.f32 %v4099, %v428
      %v4165 = vmul.f32 %v4100, %v428
      %v4166 = vmul.f32 %v4101, %v428
      %v4167 = vmul.f32 %v4102, %v428
      %v4168 = vmul.f32 %v4103, %v428
      %v4169 = vmul.f32 %v4104, %v428
      %v4170 = vmul.f32 %v4105, %v428
      %v4171 = vmul.f32 %v4106, %v428
      %v4172 = vmul.f32 %v4107, %v428
      %v4173 = vmul.f32 %v4108, %v428
      %v4174 = vmul.f32 %v4109, %v428
      %v4175 = vmul.f32 %v4110, %v428
      %v4176 = vadd.f32 %v4144, %v463
      %v4177 = vadd.f32 %v4145, %v463
      %v4178 = vadd.f32 %v4146, %v463
      %v4179 = vadd.f32 %v4147, %v463
      %v4180 = vadd.f32 %v4148, %v463
      %v4181 = vadd.f32 %v4149, %v463
      %v4182 = vadd.f32 %v4150, %v463
      %v4183 = vadd.f32 %v4151, %v463
      %v4184 = vadd.f32 %v4152, %v463
      %v4185 = vadd.f32 %v4153, %v463
      %v4186 = vadd.f32 %v4154, %v463
      %v4187 = vadd.f32 %v4155, %v463
      %v4188 = vadd.f32 %v4156, %v463
      %v4189 = vadd.f32 %v4157, %v463
      %v4190 = vadd.f32 %v4158, %v463
      %v4191 = vadd.f32 %v4159, %v463
      %v4192 = vadd.f32 %v4160, %v463
      %v4193 = vadd.f32 %v4161, %v463
      %v4194 = vadd.f32 %v4162, %v463
      %v4195 = vadd.f32 %v4163, %v463
      %v4196 = vadd.f32 %v4164, %v463
      %v4197 = vadd.f32 %v4165, %v463
      %v4198 = vadd.f32 %v4166, %v463
      %v4199 = vadd.f32 %v4167, %v463
      %v4200 = vadd.f32 %v4168, %v463
      %v4201 = vadd.f32 %v4169, %v463
      %v4202 = vadd.f32 %v4170, %v463
      %v4203 = vadd.f32 %v4171, %v463
      %v4204 = vadd.f32 %v4172, %v463
      %v4205 = vadd.f32 %v4173, %v463
      %v4206 = vadd.f32 %v4174, %v463
      %v4207 = vadd.f32 %v4175, %v463
      %v4208 = vmax.f32 %v4176, 0.0
      %v4209 = vmax.f32 %v4177, 0.0
      %v4210 = vmax.f32 %v4178, 0.0
      %v4211 = vmax.f32 %v4179, 0.0
      %v4212 = vmax.f32 %v4180, 0.0
      %v4213 = vmax.f32 %v4181, 0.0
      %v4214 = vmax.f32 %v4182, 0.0
      %v4215 = vmax.f32 %v4183, 0.0
      %v4216 = vmax.f32 %v4184, 0.0
      %v4217 = vmax.f32 %v4185, 0.0
      %v4218 = vmax.f32 %v4186, 0.0
      %v4219 = vmax.f32 %v4187, 0.0
      %v4220 = vmax.f32 %v4188, 0.0
      %v4221 = vmax.f32 %v4189, 0.0
      %v4222 = vmax.f32 %v4190, 0.0
      %v4223 = vmax.f32 %v4191, 0.0
      %v4224 = vmax.f32 %v4192, 0.0
      %v4225 = vmax.f32 %v4193, 0.0
      %v4226 = vmax.f32 %v4194, 0.0
      %v4227 = vmax.f32 %v4195, 0.0
      %v4228 = vmax.f32 %v4196, 0.0
      %v4229 = vmax.f32 %v4197, 0.0
      %v4230 = vmax.f32 %v4198, 0.0
      %v4231 = vmax.f32 %v4199, 0.0
      %v4232 = vmax.f32 %v4200, 0.0
      %v4233 = vmax.f32 %v4201, 0.0
      %v4234 = vmax.f32 %v4202, 0.0
      %v4235 = vmax.f32 %v4203, 0.0
      %v4236 = vmax.f32 %v4204, 0.0
      %v4237 = vmax.f32 %v4205, 0.0
      %v4238 = vmax.f32 %v4206, 0.0
      %v4239 = vmax.f32 %v4207, 0.0
      %4241 = vset.pattern.permute.xlu0 0
      %4242 = vperm.xlu0 %4241, %v4112
      %v4243 = vpop.permute.xlu0 %4242
      %4246 = vset.pattern.permute.xlu0 0
      %4247 = vperm.xlu0 %4246, %v4113
      %v4248 = vpop.permute.xlu0 %4247
      %4251 = vset.pattern.permute.xlu0 0
      %4252 = vperm.xlu0 %4251, %v4114
      %v4253 = vpop.permute.xlu0 %4252
      %4256 = vset.pattern.permute.xlu0 0
      %4257 = vperm.xlu0 %4256, %v4115
      %v4258 = vpop.permute.xlu0 %4257
      %4261 = vset.pattern.permute.xlu0 0
      %4262 = vperm.xlu0 %4261, %v4116
      %v4263 = vpop.permute.xlu0 %4262
      %4266 = vset.pattern.permute.xlu0 0
      %4267 = vperm.xlu0 %4266, %v4117
      %v4268 = vpop.permute.xlu0 %4267
      %4271 = vset.pattern.permute.xlu0 0
      %4272 = vperm.xlu0 %4271, %v4118
      %v4273 = vpop.permute.xlu0 %4272
      %4276 = vset.pattern.permute.xlu0 0
      %4277 = vperm.xlu0 %4276, %v4119
      %v4278 = vpop.permute.xlu0 %4277
      %4281 = vset.pattern.permute.xlu0 0
      %4282 = vperm.xlu0 %4281, %v4120
      %v4283 = vpop.permute.xlu0 %4282
      %4286 = vset.pattern.permute.xlu0 0
      %4287 = vperm.xlu0 %4286, %v4121
      %v4288 = vpop.permute.xlu0 %4287
      %4291 = vset.pattern.permute.xlu0 0
      %4292 = vperm.xlu0 %4291, %v4122
      %v4293 = vpop.permute.xlu0 %4292
      %4296 = vset.pattern.permute.xlu0 0
      %4297 = vperm.xlu0 %4296, %v4123
      %v4298 = vpop.permute.xlu0 %4297
      %4301 = vset.pattern.permute.xlu0 0
      %4302 = vperm.xlu0 %4301, %v4124
      %v4303 = vpop.permute.xlu0 %4302
      %4306 = vset.pattern.permute.xlu0 0
      %4307 = vperm.xlu0 %4306, %v4125
      %v4308 = vpop.permute.xlu0 %4307
      %4311 = vset.pattern.permute.xlu0 0
      %4312 = vperm.xlu0 %4311, %v4126
      %v4313 = vpop.permute.xlu0 %4312
      %4316 = vset.pattern.permute.xlu0 0
      %4317 = vperm.xlu0 %4316, %v4127
      %v4318 = vpop.permute.xlu0 %4317
      %4321 = vset.pattern.permute.xlu0 0
      %4322 = vperm.xlu0 %4321, %v4128
      %v4323 = vpop.permute.xlu0 %4322
      %4326 = vset.pattern.permute.xlu0 0
      %4327 = vperm.xlu0 %4326, %v4129
      %v4328 = vpop.permute.xlu0 %4327
      %4331 = vset.pattern.permute.xlu0 0
      %4332 = vperm.xlu0 %4331, %v4130
      %v4333 = vpop.permute.xlu0 %4332
      %4336 = vset.pattern.permute.xlu0 0
      %4337 = vperm.xlu0 %4336, %v4131
      %v4338 = vpop.permute.xlu0 %4337
      %4341 = vset.pattern.permute.xlu0 0
      %4342 = vperm.xlu0 %4341, %v4132
      %v4343 = vpop.permute.xlu0 %4342
      %4346 = vset.pattern.permute.xlu0 0
      %4347 = vperm.xlu0 %4346, %v4133
      %v4348 = vpop.permute.xlu0 %4347
      %4351 = vset.pattern.permute.xlu0 0
      %4352 = vperm.xlu0 %4351, %v4134
      %v4353 = vpop.permute.xlu0 %4352
      %4356 = vset.pattern.permute.xlu0 0
      %4357 = vperm.xlu0 %4356, %v4135
      %v4358 = vpop.permute.xlu0 %4357
      %4361 = vset.pattern.permute.xlu0 0
      %4362 = vperm.xlu0 %4361, %v4136
      %v4363 = vpop.permute.xlu0 %4362
      %4366 = vset.pattern.permute.xlu0 0
      %4367 = vperm.xlu0 %4366, %v4137
      %v4368 = vpop.permute.xlu0 %4367
      %4371 = vset.pattern.permute.xlu0 0
      %4372 = vperm.xlu0 %4371, %v4138
      %v4373 = vpop.permute.xlu0 %4372
      %4376 = vset.pattern.permute.xlu0 0
      %4377 = vperm.xlu0 %4376, %v4139
      %v4378 = vpop.permute.xlu0 %4377
      %4381 = vset.pattern.permute.xlu0 0
      %4382 = vperm.xlu0 %4381, %v4140
      %v4383 = vpop.permute.xlu0 %4382
      %4386 = vset.pattern.permute.xlu0 0
      %4387 = vperm.xlu0 %4386, %v4141
      %v4388 = vpop.permute.xlu0 %4387
      %4391 = vset.pattern.permute.xlu0 0
      %4392 = vperm.xlu0 %4391, %v4142
      %v4393 = vpop.permute.xlu0 %4392
      %4396 = vset.pattern.permute.xlu0 0
      %4397 = vperm.xlu0 %4396, %v4143
      %v4398 = vpop.permute.xlu0 %4397
      %v4400 = vmul.f32 %v4208, %v4243
      %v4401 = vmul.f32 %v4209, %v4248
      %v4402 = vmul.f32 %v4210, %v4253
      %v4403 = vmul.f32 %v4211, %v4258
      %v4404 = vmul.f32 %v4212, %v4263
      %v4405 = vmul.f32 %v4213, %v4268
      %v4406 = vmul.f32 %v4214, %v4273
      %v4407 = vmul.f32 %v4215, %v4278
      %v4408 = vmul.f32 %v4216, %v4283
      %v4409 = vmul.f32 %v4217, %v4288
      %v4410 = vmul.f32 %v4218, %v4293
      %v4411 = vmul.f32 %v4219, %v4298
      %v4412 = vmul.f32 %v4220, %v4303
      %v4413 = vmul.f32 %v4221, %v4308
      %v4414 = vmul.f32 %v4222, %v4313
      %v4415 = vmul.f32 %v4223, %v4318
      %v4416 = vmul.f32 %v4224, %v4323
      %v4417 = vmul.f32 %v4225, %v4328
      %v4418 = vmul.f32 %v4226, %v4333
      %v4419 = vmul.f32 %v4227, %v4338
      %v4420 = vmul.f32 %v4228, %v4343
      %v4421 = vmul.f32 %v4229, %v4348
      %v4422 = vmul.f32 %v4230, %v4353
      %v4423 = vmul.f32 %v4231, %v4358
      %v4424 = vmul.f32 %v4232, %v4363
      %v4425 = vmul.f32 %v4233, %v4368
      %v4426 = vmul.f32 %v4234, %v4373
      %v4427 = vmul.f32 %v4235, %v4378
      %v4428 = vmul.f32 %v4236, %v4383
      %v4429 = vmul.f32 %v4237, %v4388
      %v4430 = vmul.f32 %v4238, %v4393
      %v4431 = vmul.f32 %v4239, %v4398
      %v4432 = vpack.c.bf16 %v4401, %v4400
      %v4433 = vpack.c.bf16 %v4403, %v4402
      %v4434 = vpack.c.bf16 %v4405, %v4404
      %v4435 = vpack.c.bf16 %v4407, %v4406
      %v4436 = vpack.c.bf16 %v4409, %v4408
      %v4437 = vpack.c.bf16 %v4411, %v4410
      %v4438 = vpack.c.bf16 %v4413, %v4412
      %v4439 = vpack.c.bf16 %v4415, %v4414
      %v4440 = vpack.c.bf16 %v4417, %v4416
      %v4441 = vpack.c.bf16 %v4419, %v4418
      %v4442 = vpack.c.bf16 %v4421, %v4420
      %v4443 = vpack.c.bf16 %v4423, %v4422
      %v4444 = vpack.c.bf16 %v4425, %v4424
      %v4445 = vpack.c.bf16 %v4427, %v4426
      %v4446 = vpack.c.bf16 %v4429, %v4428
      %v4447 = vpack.c.bf16 %v4431, %v4430
      %v4448 = vld [vmem:[#allocation2] sm:$0xff]
      %v4449 = vld [vmem:[#allocation2 + $0x8] sm:$0xff]
      %v4450 = vld [vmem:[#allocation2 + $0x10] sm:$0xff]
      %v4451 = vld [vmem:[#allocation2 + $0x18] sm:$0xff]
      %v4452 = vld [vmem:[#allocation2 + $0x20] sm:$0xff]
      %v4453 = vld [vmem:[#allocation2 + $0x28] sm:$0xff]
      %v4454 = vld [vmem:[#allocation2 + $0x30] sm:$0xff]
      %v4455 = vld [vmem:[#allocation2 + $0x38] sm:$0xff]
      %v4456 = vld [vmem:[#allocation2 + $0x40] sm:$0xff]
      %v4457 = vld [vmem:[#allocation2 + $0x48] sm:$0xff]
      %v4458 = vld [vmem:[#allocation2 + $0x50] sm:$0xff]
      %v4459 = vld [vmem:[#allocation2 + $0x58] sm:$0xff]
      %v4460 = vld [vmem:[#allocation2 + $0x60] sm:$0xff]
      %v4461 = vld [vmem:[#allocation2 + $0x68] sm:$0xff]
      %v4462 = vld [vmem:[#allocation2 + $0x70] sm:$0xff]
      %v4463 = vld [vmem:[#allocation2 + $0x78] sm:$0xff]
      %v4464 = vld [vmem:[#allocation2 + $0x80] sm:$0xff]
      %v4465 = vld [vmem:[#allocation2 + $0x88] sm:$0xff]
      %v4466 = vld [vmem:[#allocation2 + $0x90] sm:$0xff]
      %v4467 = vld [vmem:[#allocation2 + $0x98] sm:$0xff]
      %v4468 = vld [vmem:[#allocation2 + $0xa0] sm:$0xff]
      %v4469 = vld [vmem:[#allocation2 + $0xa8] sm:$0xff]
      %v4470 = vld [vmem:[#allocation2 + $0xb0] sm:$0xff]
      %v4471 = vld [vmem:[#allocation2 + $0xb8] sm:$0xff]
      %v4472 = vld [vmem:[#allocation2 + $0xc0] sm:$0xff]
      %v4473 = vld [vmem:[#allocation2 + $0xc8] sm:$0xff]
      %v4474 = vld [vmem:[#allocation2 + $0xd0] sm:$0xff]
      %v4475 = vld [vmem:[#allocation2 + $0xd8] sm:$0xff]
      %v4476 = vld [vmem:[#allocation2 + $0xe0] sm:$0xff]
      %v4477 = vld [vmem:[#allocation2 + $0xe8] sm:$0xff]
      %v4478 = vld [vmem:[#allocation2 + $0xf0] sm:$0xff]
      %v4479 = vld [vmem:[#allocation2 + $0xf8] sm:$0xff]
      %s4480 = scalar_lea.vmem %s312, 384
      %v4481 = vld [vmem:[%s4480] sm:$0xf]
      %v4482 = vld [vmem:[%s4480 + $0x4] sm:$0xf]
      %v4483 = vld [vmem:[%s4480 + $0x8] sm:$0xf]
      %v4484 = vld [vmem:[%s4480 + $0xc] sm:$0xf]
      %v4485 = vld [vmem:[%s4480 + $0x10] sm:$0xf]
      %v4486 = vld [vmem:[%s4480 + $0x14] sm:$0xf]
      %v4487 = vld [vmem:[%s4480 + $0x18] sm:$0xf]
      %v4488 = vld [vmem:[%s4480 + $0x1c] sm:$0xf]
      %v4489 = vld [vmem:[%s4480 + $0x20] sm:$0xf]
      %v4490 = vld [vmem:[%s4480 + $0x24] sm:$0xf]
      %v4491 = vld [vmem:[%s4480 + $0x28] sm:$0xf]
      %v4492 = vld [vmem:[%s4480 + $0x2c] sm:$0xf]
      %v4493 = vld [vmem:[%s4480 + $0x30] sm:$0xf]
      %v4494 = vld [vmem:[%s4480 + $0x34] sm:$0xf]
      %v4495 = vld [vmem:[%s4480 + $0x38] sm:$0xf]
      %v4496 = vld [vmem:[%s4480 + $0x3c] sm:$0xf]
      %v4513 = vunpack.c.l.b16 %v4481
      %v4514 = vunpack.c.l.b16 %v4482
      %v4515 = vunpack.c.l.b16 %v4483
      %v4516 = vunpack.c.l.b16 %v4484
      %v4517 = vunpack.c.l.b16 %v4485
      %v4518 = vunpack.c.l.b16 %v4486
      %v4519 = vunpack.c.l.b16 %v4487
      %v4520 = vunpack.c.l.b16 %v4488
      %v4521 = vunpack.c.l.b16 %v4489
      %v4522 = vunpack.c.l.b16 %v4490
      %v4523 = vunpack.c.l.b16 %v4491
      %v4524 = vunpack.c.l.b16 %v4492
      %v4525 = vunpack.c.l.b16 %v4493
      %v4526 = vunpack.c.l.b16 %v4494
      %v4527 = vunpack.c.l.b16 %v4495
      %v4528 = vunpack.c.l.b16 %v4496
      %v4529 = vpack.c.b16 %v4514, %v4513
      %v4530 = vpack.c.b16 %v4516, %v4515
      %v4531 = vpack.c.b16 %v4518, %v4517
      %v4532 = vpack.c.b16 %v4520, %v4519
      %v4533 = vpack.c.b16 %v4522, %v4521
      %v4534 = vpack.c.b16 %v4524, %v4523
      %v4535 = vpack.c.b16 %v4526, %v4525
      %v4536 = vpack.c.b16 %v4528, %v4527
      %4545 = vmatpush.bf16.msra.mxu0 %v4536
      %4546 = vmatpush.bf16.msra.mxu0 %v4535
      %4547 = vmatpush.bf16.msra.mxu0 %v4534
      %4548 = vmatpush.bf16.msra.mxu0 %v4533
      %4549 = vmatpush.bf16.msra.mxu0 %v4532
      %4550 = vmatpush.bf16.msra.mxu0 %v4531
      %4551 = vmatpush.bf16.msra.mxu0 %v4530
      %4552 = vmatpush.bf16.msra.mxu0 %v4529
      %4553 = vmatmul.bf16.gmra.mxu0 %v4432
      %v4554 = vpop.f32.mrf.mxu0
      %v4555 = vadd.f32 0.0, %v4554
      %v4556 = vpop.f32.mrf.mxu0
      %v4557 = vadd.f32 0.0, %v4556
      %4558 = vmatmul.bf16.gmra.mxu0 %v4433
      %v4559 = vpop.f32.mrf.mxu0
      %v4560 = vadd.f32 0.0, %v4559
      %v4561 = vpop.f32.mrf.mxu0
      %v4562 = vadd.f32 0.0, %v4561
      %4563 = vmatmul.bf16.gmra.mxu0 %v4434
      %v4564 = vpop.f32.mrf.mxu0
      %v4565 = vadd.f32 0.0, %v4564
      %v4566 = vpop.f32.mrf.mxu0
      %v4567 = vadd.f32 0.0, %v4566
      %4568 = vmatmul.bf16.gmra.mxu0 %v4435
      %v4569 = vpop.f32.mrf.mxu0
      %v4570 = vadd.f32 0.0, %v4569
      %v4571 = vpop.f32.mrf.mxu0
      %v4572 = vadd.f32 0.0, %v4571
      %4573 = vmatmul.bf16.gmra.mxu0 %v4436
      %v4574 = vpop.f32.mrf.mxu0
      %v4575 = vadd.f32 0.0, %v4574
      %v4576 = vpop.f32.mrf.mxu0
      %v4577 = vadd.f32 0.0, %v4576
      %4578 = vmatmul.bf16.gmra.mxu0 %v4437
      %v4579 = vpop.f32.mrf.mxu0
      %v4580 = vadd.f32 0.0, %v4579
      %v4581 = vpop.f32.mrf.mxu0
      %v4582 = vadd.f32 0.0, %v4581
      %4583 = vmatmul.bf16.gmra.mxu0 %v4438
      %v4584 = vpop.f32.mrf.mxu0
      %v4585 = vadd.f32 0.0, %v4584
      %v4586 = vpop.f32.mrf.mxu0
      %v4587 = vadd.f32 0.0, %v4586
      %4588 = vmatmul.bf16.gmra.mxu0 %v4439
      %v4589 = vpop.f32.mrf.mxu0
      %v4590 = vadd.f32 0.0, %v4589
      %v4591 = vpop.f32.mrf.mxu0
      %v4592 = vadd.f32 0.0, %v4591
      %4593 = vmatmul.bf16.gmra.mxu0 %v4440
      %v4594 = vpop.f32.mrf.mxu0
      %v4595 = vadd.f32 0.0, %v4594
      %v4596 = vpop.f32.mrf.mxu0
      %v4597 = vadd.f32 0.0, %v4596
      %4598 = vmatmul.bf16.gmra.mxu0 %v4441
      %v4599 = vpop.f32.mrf.mxu0
      %v4600 = vadd.f32 0.0, %v4599
      %v4601 = vpop.f32.mrf.mxu0
      %v4602 = vadd.f32 0.0, %v4601
      %4603 = vmatmul.bf16.gmra.mxu0 %v4442
      %v4604 = vpop.f32.mrf.mxu0
      %v4605 = vadd.f32 0.0, %v4604
      %v4606 = vpop.f32.mrf.mxu0
      %v4607 = vadd.f32 0.0, %v4606
      %4608 = vmatmul.bf16.gmra.mxu0 %v4443
      %v4609 = vpop.f32.mrf.mxu0
      %v4610 = vadd.f32 0.0, %v4609
      %v4611 = vpop.f32.mrf.mxu0
      %v4612 = vadd.f32 0.0, %v4611
      %4613 = vmatmul.bf16.gmra.mxu0 %v4444
      %v4614 = vpop.f32.mrf.mxu0
      %v4615 = vadd.f32 0.0, %v4614
      %v4616 = vpop.f32.mrf.mxu0
      %v4617 = vadd.f32 0.0, %v4616
      %4618 = vmatmul.bf16.gmra.mxu0 %v4445
      %v4619 = vpop.f32.mrf.mxu0
      %v4620 = vadd.f32 0.0, %v4619
      %v4621 = vpop.f32.mrf.mxu0
      %v4622 = vadd.f32 0.0, %v4621
      %4623 = vmatmul.bf16.gmra.mxu0 %v4446
      %v4624 = vpop.f32.mrf.mxu0
      %v4625 = vadd.f32 0.0, %v4624
      %v4626 = vpop.f32.mrf.mxu0
      %v4627 = vadd.f32 0.0, %v4626
      %4628 = vmatmul.bf16.gmra.mxu0 %v4447
      %v4629 = vpop.f32.mrf.mxu0
      %v4630 = vadd.f32 0.0, %v4629
      %v4631 = vpop.f32.mrf.mxu0
      %v4632 = vadd.f32 0.0, %v4631
      %4633 = vdwg.mxu0
      %v4634 = vadd.f32 %v4448, %v4555
      %v4635 = vadd.f32 %v4449, %v4557
      %v4636 = vadd.f32 %v4450, %v4560
      %v4637 = vadd.f32 %v4451, %v4562
      %v4638 = vadd.f32 %v4452, %v4565
      %v4639 = vadd.f32 %v4453, %v4567
      %v4640 = vadd.f32 %v4454, %v4570
      %v4641 = vadd.f32 %v4455, %v4572
      %v4642 = vadd.f32 %v4456, %v4575
      %v4643 = vadd.f32 %v4457, %v4577
      %v4644 = vadd.f32 %v4458, %v4580
      %v4645 = vadd.f32 %v4459, %v4582
      %v4646 = vadd.f32 %v4460, %v4585
      %v4647 = vadd.f32 %v4461, %v4587
      %v4648 = vadd.f32 %v4462, %v4590
      %v4649 = vadd.f32 %v4463, %v4592
      %v4650 = vadd.f32 %v4464, %v4595
      %v4651 = vadd.f32 %v4465, %v4597
      %v4652 = vadd.f32 %v4466, %v4600
      %v4653 = vadd.f32 %v4467, %v4602
      %v4654 = vadd.f32 %v4468, %v4605
      %v4655 = vadd.f32 %v4469, %v4607
      %v4656 = vadd.f32 %v4470, %v4610
      %v4657 = vadd.f32 %v4471, %v4612
      %v4658 = vadd.f32 %v4472, %v4615
      %v4659 = vadd.f32 %v4473, %v4617
      %v4660 = vadd.f32 %v4474, %v4620
      %v4661 = vadd.f32 %v4475, %v4622
      %v4662 = vadd.f32 %v4476, %v4625
      %v4663 = vadd.f32 %v4477, %v4627
      %v4664 = vadd.f32 %v4478, %v4630
      %v4665 = vadd.f32 %v4479, %v4632
      %4666 = vst [vmem:[#allocation2] sm:$0xff] %v4634
      %4667 = vst [vmem:[#allocation2 + $0x8] sm:$0xff] %v4635
      %4668 = vst [vmem:[#allocation2 + $0x10] sm:$0xff] %v4636
      %4669 = vst [vmem:[#allocation2 + $0x18] sm:$0xff] %v4637
      %4670 = vst [vmem:[#allocation2 + $0x20] sm:$0xff] %v4638
      %4671 = vst [vmem:[#allocation2 + $0x28] sm:$0xff] %v4639
      %4672 = vst [vmem:[#allocation2 + $0x30] sm:$0xff] %v4640
      %4673 = vst [vmem:[#allocation2 + $0x38] sm:$0xff] %v4641
      %4674 = vst [vmem:[#allocation2 + $0x40] sm:$0xff] %v4642
      %4675 = vst [vmem:[#allocation2 + $0x48] sm:$0xff] %v4643
      %4676 = vst [vmem:[#allocation2 + $0x50] sm:$0xff] %v4644
      %4677 = vst [vmem:[#allocation2 + $0x58] sm:$0xff] %v4645
      %4678 = vst [vmem:[#allocation2 + $0x60] sm:$0xff] %v4646
      %4679 = vst [vmem:[#allocation2 + $0x68] sm:$0xff] %v4647
      %4680 = vst [vmem:[#allocation2 + $0x70] sm:$0xff] %v4648
      %4681 = vst [vmem:[#allocation2 + $0x78] sm:$0xff] %v4649
      %4682 = vst [vmem:[#allocation2 + $0x80] sm:$0xff] %v4650
      %4683 = vst [vmem:[#allocation2 + $0x88] sm:$0xff] %v4651
      %4684 = vst [vmem:[#allocation2 + $0x90] sm:$0xff] %v4652
      %4685 = vst [vmem:[#allocation2 + $0x98] sm:$0xff] %v4653
      %4686 = vst [vmem:[#allocation2 + $0xa0] sm:$0xff] %v4654
      %4687 = vst [vmem:[#allocation2 + $0xa8] sm:$0xff] %v4655
      %4688 = vst [vmem:[#allocation2 + $0xb0] sm:$0xff] %v4656
      %4689 = vst [vmem:[#allocation2 + $0xb8] sm:$0xff] %v4657
      %4690 = vst [vmem:[#allocation2 + $0xc0] sm:$0xff] %v4658
      %4691 = vst [vmem:[#allocation2 + $0xc8] sm:$0xff] %v4659
      %4692 = vst [vmem:[#allocation2 + $0xd0] sm:$0xff] %v4660
      %4693 = vst [vmem:[#allocation2 + $0xd8] sm:$0xff] %v4661
      %4694 = vst [vmem:[#allocation2 + $0xe0] sm:$0xff] %v4662
      %4695 = vst [vmem:[#allocation2 + $0xe8] sm:$0xff] %v4663
      %4696 = vst [vmem:[#allocation2 + $0xf0] sm:$0xff] %v4664
      %4697 = vst [vmem:[#allocation2 + $0xf8] sm:$0xff] %v4665
      %v4698 = vld [vmem:[%s4078 + $0x1] sm:$0xff]
      %v4699 = vld [vmem:[%s4078 + $0x9] sm:$0xff]
      %v4700 = vld [vmem:[%s4078 + $0x19] sm:$0xff]
      %v4701 = vld [vmem:[%s4078 + $0x21] sm:$0xff]
      %v4702 = vld [vmem:[%s4078 + $0x31] sm:$0xff]
      %v4703 = vld [vmem:[%s4078 + $0x39] sm:$0xff]
      %v4704 = vld [vmem:[%s4078 + $0x49] sm:$0xff]
      %v4705 = vld [vmem:[%s4078 + $0x51] sm:$0xff]
      %v4706 = vld [vmem:[%s4078 + $0x61] sm:$0xff]
      %v4707 = vld [vmem:[%s4078 + $0x69] sm:$0xff]
      %v4708 = vld [vmem:[%s4078 + $0x79] sm:$0xff]
      %v4709 = vld [vmem:[%s4078 + $0x81] sm:$0xff]
      %v4710 = vld [vmem:[%s4078 + $0x91] sm:$0xff]
      %v4711 = vld [vmem:[%s4078 + $0x99] sm:$0xff]
      %v4712 = vld [vmem:[%s4078 + $0xa9] sm:$0xff]
      %v4713 = vld [vmem:[%s4078 + $0xb1] sm:$0xff]
      %v4714 = vld [vmem:[%s4078 + $0xc1] sm:$0xff]
      %v4715 = vld [vmem:[%s4078 + $0xc9] sm:$0xff]
      %v4716 = vld [vmem:[%s4078 + $0xd9] sm:$0xff]
      %v4717 = vld [vmem:[%s4078 + $0xe1] sm:$0xff]
      %v4718 = vld [vmem:[%s4078 + $0xf1] sm:$0xff]
      %v4719 = vld [vmem:[%s4078 + $0xf9] sm:$0xff]
      %v4720 = vld [vmem:[%s4078 + $0x109] sm:$0xff]
      %v4721 = vld [vmem:[%s4078 + $0x111] sm:$0xff]
      %v4722 = vld [vmem:[%s4078 + $0x121] sm:$0xff]
      %v4723 = vld [vmem:[%s4078 + $0x129] sm:$0xff]
      %v4724 = vld [vmem:[%s4078 + $0x139] sm:$0xff]
      %v4725 = vld [vmem:[%s4078 + $0x141] sm:$0xff]
      %v4726 = vld [vmem:[%s4078 + $0x151] sm:$0xff]
      %v4727 = vld [vmem:[%s4078 + $0x159] sm:$0xff]
      %v4728 = vld [vmem:[%s4078 + $0x169] sm:$0xff]
      %v4729 = vld [vmem:[%s4078 + $0x171] sm:$0xff]
      %v4730 = vld [vmem:[%s4111 + $0x1] sm:$0xff]
      %v4731 = vld [vmem:[%s4111 + $0x9] sm:$0xff]
      %v4732 = vld [vmem:[%s4111 + $0x19] sm:$0xff]
      %v4733 = vld [vmem:[%s4111 + $0x21] sm:$0xff]
      %v4734 = vld [vmem:[%s4111 + $0x31] sm:$0xff]
      %v4735 = vld [vmem:[%s4111 + $0x39] sm:$0xff]
      %v4736 = vld [vmem:[%s4111 + $0x49] sm:$0xff]
      %v4737 = vld [vmem:[%s4111 + $0x51] sm:$0xff]
      %v4738 = vld [vmem:[%s4111 + $0x61] sm:$0xff]
      %v4739 = vld [vmem:[%s4111 + $0x69] sm:$0xff]
      %v4740 = vld [vmem:[%s4111 + $0x79] sm:$0xff]
      %v4741 = vld [vmem:[%s4111 + $0x81] sm:$0xff]
      %v4742 = vld [vmem:[%s4111 + $0x91] sm:$0xff]
      %v4743 = vld [vmem:[%s4111 + $0x99] sm:$0xff]
      %v4744 = vld [vmem:[%s4111 + $0xa9] sm:$0xff]
      %v4745 = vld [vmem:[%s4111 + $0xb1] sm:$0xff]
      %v4746 = vld [vmem:[%s4111 + $0xc1] sm:$0xff]
      %v4747 = vld [vmem:[%s4111 + $0xc9] sm:$0xff]
      %v4748 = vld [vmem:[%s4111 + $0xd9] sm:$0xff]
      %v4749 = vld [vmem:[%s4111 + $0xe1] sm:$0xff]
      %v4750 = vld [vmem:[%s4111 + $0xf1] sm:$0xff]
      %v4751 = vld [vmem:[%s4111 + $0xf9] sm:$0xff]
      %v4752 = vld [vmem:[%s4111 + $0x109] sm:$0xff]
      %v4753 = vld [vmem:[%s4111 + $0x111] sm:$0xff]
      %v4754 = vld [vmem:[%s4111 + $0x121] sm:$0xff]
      %v4755 = vld [vmem:[%s4111 + $0x129] sm:$0xff]
      %v4756 = vld [vmem:[%s4111 + $0x139] sm:$0xff]
      %v4757 = vld [vmem:[%s4111 + $0x141] sm:$0xff]
      %v4758 = vld [vmem:[%s4111 + $0x151] sm:$0xff]
      %v4759 = vld [vmem:[%s4111 + $0x159] sm:$0xff]
      %v4760 = vld [vmem:[%s4111 + $0x169] sm:$0xff]
      %v4761 = vld [vmem:[%s4111 + $0x171] sm:$0xff]
      %v4762 = vmul.f32 %v4698, %v428
      %v4763 = vmul.f32 %v4699, %v428
      %v4764 = vmul.f32 %v4700, %v428
      %v4765 = vmul.f32 %v4701, %v428
      %v4766 = vmul.f32 %v4702, %v428
      %v4767 = vmul.f32 %v4703, %v428
      %v4768 = vmul.f32 %v4704, %v428
      %v4769 = vmul.f32 %v4705, %v428
      %v4770 = vmul.f32 %v4706, %v428
      %v4771 = vmul.f32 %v4707, %v428
      %v4772 = vmul.f32 %v4708, %v428
      %v4773 = vmul.f32 %v4709, %v428
      %v4774 = vmul.f32 %v4710, %v428
      %v4775 = vmul.f32 %v4711, %v428
      %v4776 = vmul.f32 %v4712, %v428
      %v4777 = vmul.f32 %v4713, %v428
      %v4778 = vmul.f32 %v4714, %v428
      %v4779 = vmul.f32 %v4715, %v428
      %v4780 = vmul.f32 %v4716, %v428
      %v4781 = vmul.f32 %v4717, %v428
      %v4782 = vmul.f32 %v4718, %v428
      %v4783 = vmul.f32 %v4719, %v428
      %v4784 = vmul.f32 %v4720, %v428
      %v4785 = vmul.f32 %v4721, %v428
      %v4786 = vmul.f32 %v4722, %v428
      %v4787 = vmul.f32 %v4723, %v428
      %v4788 = vmul.f32 %v4724, %v428
      %v4789 = vmul.f32 %v4725, %v428
      %v4790 = vmul.f32 %v4726, %v428
      %v4791 = vmul.f32 %v4727, %v428
      %v4792 = vmul.f32 %v4728, %v428
      %v4793 = vmul.f32 %v4729, %v428
      %v4794 = vadd.f32 %v4762, %v463
      %v4795 = vadd.f32 %v4763, %v463
      %v4796 = vadd.f32 %v4764, %v463
      %v4797 = vadd.f32 %v4765, %v463
      %v4798 = vadd.f32 %v4766, %v463
      %v4799 = vadd.f32 %v4767, %v463
      %v4800 = vadd.f32 %v4768, %v463
      %v4801 = vadd.f32 %v4769, %v463
      %v4802 = vadd.f32 %v4770, %v463
      %v4803 = vadd.f32 %v4771, %v463
      %v4804 = vadd.f32 %v4772, %v463
      %v4805 = vadd.f32 %v4773, %v463
      %v4806 = vadd.f32 %v4774, %v463
      %v4807 = vadd.f32 %v4775, %v463
      %v4808 = vadd.f32 %v4776, %v463
      %v4809 = vadd.f32 %v4777, %v463
      %v4810 = vadd.f32 %v4778, %v463
      %v4811 = vadd.f32 %v4779, %v463
      %v4812 = vadd.f32 %v4780, %v463
      %v4813 = vadd.f32 %v4781, %v463
      %v4814 = vadd.f32 %v4782, %v463
      %v4815 = vadd.f32 %v4783, %v463
      %v4816 = vadd.f32 %v4784, %v463
      %v4817 = vadd.f32 %v4785, %v463
      %v4818 = vadd.f32 %v4786, %v463
      %v4819 = vadd.f32 %v4787, %v463
      %v4820 = vadd.f32 %v4788, %v463
      %v4821 = vadd.f32 %v4789, %v463
      %v4822 = vadd.f32 %v4790, %v463
      %v4823 = vadd.f32 %v4791, %v463
      %v4824 = vadd.f32 %v4792, %v463
      %v4825 = vadd.f32 %v4793, %v463
      %v4826 = vmax.f32 %v4794, 0.0
      %v4827 = vmax.f32 %v4795, 0.0
      %v4828 = vmax.f32 %v4796, 0.0
      %v4829 = vmax.f32 %v4797, 0.0
      %v4830 = vmax.f32 %v4798, 0.0
      %v4831 = vmax.f32 %v4799, 0.0
      %v4832 = vmax.f32 %v4800, 0.0
      %v4833 = vmax.f32 %v4801, 0.0
      %v4834 = vmax.f32 %v4802, 0.0
      %v4835 = vmax.f32 %v4803, 0.0
      %v4836 = vmax.f32 %v4804, 0.0
      %v4837 = vmax.f32 %v4805, 0.0
      %v4838 = vmax.f32 %v4806, 0.0
      %v4839 = vmax.f32 %v4807, 0.0
      %v4840 = vmax.f32 %v4808, 0.0
      %v4841 = vmax.f32 %v4809, 0.0
      %v4842 = vmax.f32 %v4810, 0.0
      %v4843 = vmax.f32 %v4811, 0.0
      %v4844 = vmax.f32 %v4812, 0.0
      %v4845 = vmax.f32 %v4813, 0.0
      %v4846 = vmax.f32 %v4814, 0.0
      %v4847 = vmax.f32 %v4815, 0.0
      %v4848 = vmax.f32 %v4816, 0.0
      %v4849 = vmax.f32 %v4817, 0.0
      %v4850 = vmax.f32 %v4818, 0.0
      %v4851 = vmax.f32 %v4819, 0.0
      %v4852 = vmax.f32 %v4820, 0.0
      %v4853 = vmax.f32 %v4821, 0.0
      %v4854 = vmax.f32 %v4822, 0.0
      %v4855 = vmax.f32 %v4823, 0.0
      %v4856 = vmax.f32 %v4824, 0.0
      %v4857 = vmax.f32 %v4825, 0.0
      %4859 = vset.pattern.permute.xlu0 0
      %4860 = vperm.xlu0 %4859, %v4730
      %v4861 = vpop.permute.xlu0 %4860
      %4864 = vset.pattern.permute.xlu0 0
      %4865 = vperm.xlu0 %4864, %v4731
      %v4866 = vpop.permute.xlu0 %4865
      %4869 = vset.pattern.permute.xlu0 0
      %4870 = vperm.xlu0 %4869, %v4732
      %v4871 = vpop.permute.xlu0 %4870
      %4874 = vset.pattern.permute.xlu0 0
      %4875 = vperm.xlu0 %4874, %v4733
      %v4876 = vpop.permute.xlu0 %4875
      %4879 = vset.pattern.permute.xlu0 0
      %4880 = vperm.xlu0 %4879, %v4734
      %v4881 = vpop.permute.xlu0 %4880
      %4884 = vset.pattern.permute.xlu0 0
      %4885 = vperm.xlu0 %4884, %v4735
      %v4886 = vpop.permute.xlu0 %4885
      %4889 = vset.pattern.permute.xlu0 0
      %4890 = vperm.xlu0 %4889, %v4736
      %v4891 = vpop.permute.xlu0 %4890
      %4894 = vset.pattern.permute.xlu0 0
      %4895 = vperm.xlu0 %4894, %v4737
      %v4896 = vpop.permute.xlu0 %4895
      %4899 = vset.pattern.permute.xlu0 0
      %4900 = vperm.xlu0 %4899, %v4738
      %v4901 = vpop.permute.xlu0 %4900
      %4904 = vset.pattern.permute.xlu0 0
      %4905 = vperm.xlu0 %4904, %v4739
      %v4906 = vpop.permute.xlu0 %4905
      %4909 = vset.pattern.permute.xlu0 0
      %4910 = vperm.xlu0 %4909, %v4740
      %v4911 = vpop.permute.xlu0 %4910
      %4914 = vset.pattern.permute.xlu0 0
      %4915 = vperm.xlu0 %4914, %v4741
      %v4916 = vpop.permute.xlu0 %4915
      %4919 = vset.pattern.permute.xlu0 0
      %4920 = vperm.xlu0 %4919, %v4742
      %v4921 = vpop.permute.xlu0 %4920
      %4924 = vset.pattern.permute.xlu0 0
      %4925 = vperm.xlu0 %4924, %v4743
      %v4926 = vpop.permute.xlu0 %4925
      %4929 = vset.pattern.permute.xlu0 0
      %4930 = vperm.xlu0 %4929, %v4744
      %v4931 = vpop.permute.xlu0 %4930
      %4934 = vset.pattern.permute.xlu0 0
      %4935 = vperm.xlu0 %4934, %v4745
      %v4936 = vpop.permute.xlu0 %4935
      %4939 = vset.pattern.permute.xlu0 0
      %4940 = vperm.xlu0 %4939, %v4746
      %v4941 = vpop.permute.xlu0 %4940
      %4944 = vset.pattern.permute.xlu0 0
      %4945 = vperm.xlu0 %4944, %v4747
      %v4946 = vpop.permute.xlu0 %4945
      %4949 = vset.pattern.permute.xlu0 0
      %4950 = vperm.xlu0 %4949, %v4748
      %v4951 = vpop.permute.xlu0 %4950
      %4954 = vset.pattern.permute.xlu0 0
      %4955 = vperm.xlu0 %4954, %v4749
      %v4956 = vpop.permute.xlu0 %4955
      %4959 = vset.pattern.permute.xlu0 0
      %4960 = vperm.xlu0 %4959, %v4750
      %v4961 = vpop.permute.xlu0 %4960
      %4964 = vset.pattern.permute.xlu0 0
      %4965 = vperm.xlu0 %4964, %v4751
      %v4966 = vpop.permute.xlu0 %4965
      %4969 = vset.pattern.permute.xlu0 0
      %4970 = vperm.xlu0 %4969, %v4752
      %v4971 = vpop.permute.xlu0 %4970
      %4974 = vset.pattern.permute.xlu0 0
      %4975 = vperm.xlu0 %4974, %v4753
      %v4976 = vpop.permute.xlu0 %4975
      %4979 = vset.pattern.permute.xlu0 0
      %4980 = vperm.xlu0 %4979, %v4754
      %v4981 = vpop.permute.xlu0 %4980
      %4984 = vset.pattern.permute.xlu0 0
      %4985 = vperm.xlu0 %4984, %v4755
      %v4986 = vpop.permute.xlu0 %4985
      %4989 = vset.pattern.permute.xlu0 0
      %4990 = vperm.xlu0 %4989, %v4756
      %v4991 = vpop.permute.xlu0 %4990
      %4994 = vset.pattern.permute.xlu0 0
      %4995 = vperm.xlu0 %4994, %v4757
      %v4996 = vpop.permute.xlu0 %4995
      %4999 = vset.pattern.permute.xlu0 0
      %5000 = vperm.xlu0 %4999, %v4758
      %v5001 = vpop.permute.xlu0 %5000
      %5004 = vset.pattern.permute.xlu0 0
      %5005 = vperm.xlu0 %5004, %v4759
      %v5006 = vpop.permute.xlu0 %5005
      %5009 = vset.pattern.permute.xlu0 0
      %5010 = vperm.xlu0 %5009, %v4760
      %v5011 = vpop.permute.xlu0 %5010
      %5014 = vset.pattern.permute.xlu0 0
      %5015 = vperm.xlu0 %5014, %v4761
      %v5016 = vpop.permute.xlu0 %5015
      %v5018 = vmul.f32 %v4826, %v4861
      %v5019 = vmul.f32 %v4827, %v4866
      %v5020 = vmul.f32 %v4828, %v4871
      %v5021 = vmul.f32 %v4829, %v4876
      %v5022 = vmul.f32 %v4830, %v4881
      %v5023 = vmul.f32 %v4831, %v4886
      %v5024 = vmul.f32 %v4832, %v4891
      %v5025 = vmul.f32 %v4833, %v4896
      %v5026 = vmul.f32 %v4834, %v4901
      %v5027 = vmul.f32 %v4835, %v4906
      %v5028 = vmul.f32 %v4836, %v4911
      %v5029 = vmul.f32 %v4837, %v4916
      %v5030 = vmul.f32 %v4838, %v4921
      %v5031 = vmul.f32 %v4839, %v4926
      %v5032 = vmul.f32 %v4840, %v4931
      %v5033 = vmul.f32 %v4841, %v4936
      %v5034 = vmul.f32 %v4842, %v4941
      %v5035 = vmul.f32 %v4843, %v4946
      %v5036 = vmul.f32 %v4844, %v4951
      %v5037 = vmul.f32 %v4845, %v4956
      %v5038 = vmul.f32 %v4846, %v4961
      %v5039 = vmul.f32 %v4847, %v4966
      %v5040 = vmul.f32 %v4848, %v4971
      %v5041 = vmul.f32 %v4849, %v4976
      %v5042 = vmul.f32 %v4850, %v4981
      %v5043 = vmul.f32 %v4851, %v4986
      %v5044 = vmul.f32 %v4852, %v4991
      %v5045 = vmul.f32 %v4853, %v4996
      %v5046 = vmul.f32 %v4854, %v5001
      %v5047 = vmul.f32 %v4855, %v5006
      %v5048 = vmul.f32 %v4856, %v5011
      %v5049 = vmul.f32 %v4857, %v5016
      %v5050 = vpack.c.bf16 %v5019, %v5018
      %v5051 = vpack.c.bf16 %v5021, %v5020
      %v5052 = vpack.c.bf16 %v5023, %v5022
      %v5053 = vpack.c.bf16 %v5025, %v5024
      %v5054 = vpack.c.bf16 %v5027, %v5026
      %v5055 = vpack.c.bf16 %v5029, %v5028
      %v5056 = vpack.c.bf16 %v5031, %v5030
      %v5057 = vpack.c.bf16 %v5033, %v5032
      %v5058 = vpack.c.bf16 %v5035, %v5034
      %v5059 = vpack.c.bf16 %v5037, %v5036
      %v5060 = vpack.c.bf16 %v5039, %v5038
      %v5061 = vpack.c.bf16 %v5041, %v5040
      %v5062 = vpack.c.bf16 %v5043, %v5042
      %v5063 = vpack.c.bf16 %v5045, %v5044
      %v5064 = vpack.c.bf16 %v5047, %v5046
      %v5065 = vpack.c.bf16 %v5049, %v5048
      %v5066 = vld [vmem:[#allocation2] sm:$0xff]
      %v5067 = vld [vmem:[#allocation2 + $0x8] sm:$0xff]
      %v5068 = vld [vmem:[#allocation2 + $0x10] sm:$0xff]
      %v5069 = vld [vmem:[#allocation2 + $0x18] sm:$0xff]
      %v5070 = vld [vmem:[#allocation2 + $0x20] sm:$0xff]
      %v5071 = vld [vmem:[#allocation2 + $0x28] sm:$0xff]
      %v5072 = vld [vmem:[#allocation2 + $0x30] sm:$0xff]
      %v5073 = vld [vmem:[#allocation2 + $0x38] sm:$0xff]
      %v5074 = vld [vmem:[#allocation2 + $0x40] sm:$0xff]
      %v5075 = vld [vmem:[#allocation2 + $0x48] sm:$0xff]
      %v5076 = vld [vmem:[#allocation2 + $0x50] sm:$0xff]
      %v5077 = vld [vmem:[#allocation2 + $0x58] sm:$0xff]
      %v5078 = vld [vmem:[#allocation2 + $0x60] sm:$0xff]
      %v5079 = vld [vmem:[#allocation2 + $0x68] sm:$0xff]
      %v5080 = vld [vmem:[#allocation2 + $0x70] sm:$0xff]
      %v5081 = vld [vmem:[#allocation2 + $0x78] sm:$0xff]
      %v5082 = vld [vmem:[#allocation2 + $0x80] sm:$0xff]
      %v5083 = vld [vmem:[#allocation2 + $0x88] sm:$0xff]
      %v5084 = vld [vmem:[#allocation2 + $0x90] sm:$0xff]
      %v5085 = vld [vmem:[#allocation2 + $0x98] sm:$0xff]
      %v5086 = vld [vmem:[#allocation2 + $0xa0] sm:$0xff]
      %v5087 = vld [vmem:[#allocation2 + $0xa8] sm:$0xff]
      %v5088 = vld [vmem:[#allocation2 + $0xb0] sm:$0xff]
      %v5089 = vld [vmem:[#allocation2 + $0xb8] sm:$0xff]
      %v5090 = vld [vmem:[#allocation2 + $0xc0] sm:$0xff]
      %v5091 = vld [vmem:[#allocation2 + $0xc8] sm:$0xff]
      %v5092 = vld [vmem:[#allocation2 + $0xd0] sm:$0xff]
      %v5093 = vld [vmem:[#allocation2 + $0xd8] sm:$0xff]
      %v5094 = vld [vmem:[#allocation2 + $0xe0] sm:$0xff]
      %v5095 = vld [vmem:[#allocation2 + $0xe8] sm:$0xff]
      %v5096 = vld [vmem:[#allocation2 + $0xf0] sm:$0xff]
      %v5097 = vld [vmem:[#allocation2 + $0xf8] sm:$0xff]
      %s5098 = scalar_lea.vmem %s312, 448
      %v5099 = vld [vmem:[%s5098] sm:$0xf]
      %v5100 = vld [vmem:[%s5098 + $0x4] sm:$0xf]
      %v5101 = vld [vmem:[%s5098 + $0x8] sm:$0xf]
      %v5102 = vld [vmem:[%s5098 + $0xc] sm:$0xf]
      %v5103 = vld [vmem:[%s5098 + $0x10] sm:$0xf]
      %v5104 = vld [vmem:[%s5098 + $0x14] sm:$0xf]
      %v5105 = vld [vmem:[%s5098 + $0x18] sm:$0xf]
      %v5106 = vld [vmem:[%s5098 + $0x1c] sm:$0xf]
      %v5107 = vld [vmem:[%s5098 + $0x20] sm:$0xf]
      %v5108 = vld [vmem:[%s5098 + $0x24] sm:$0xf]
      %v5109 = vld [vmem:[%s5098 + $0x28] sm:$0xf]
      %v5110 = vld [vmem:[%s5098 + $0x2c] sm:$0xf]
      %v5111 = vld [vmem:[%s5098 + $0x30] sm:$0xf]
      %v5112 = vld [vmem:[%s5098 + $0x34] sm:$0xf]
      %v5113 = vld [vmem:[%s5098 + $0x38] sm:$0xf]
      %v5114 = vld [vmem:[%s5098 + $0x3c] sm:$0xf]
      %v5131 = vunpack.c.l.b16 %v5099
      %v5132 = vunpack.c.l.b16 %v5100
      %v5133 = vunpack.c.l.b16 %v5101
      %v5134 = vunpack.c.l.b16 %v5102
      %v5135 = vunpack.c.l.b16 %v5103
      %v5136 = vunpack.c.l.b16 %v5104
      %v5137 = vunpack.c.l.b16 %v5105
      %v5138 = vunpack.c.l.b16 %v5106
      %v5139 = vunpack.c.l.b16 %v5107
      %v5140 = vunpack.c.l.b16 %v5108
      %v5141 = vunpack.c.l.b16 %v5109
      %v5142 = vunpack.c.l.b16 %v5110
      %v5143 = vunpack.c.l.b16 %v5111
      %v5144 = vunpack.c.l.b16 %v5112
      %v5145 = vunpack.c.l.b16 %v5113
      %v5146 = vunpack.c.l.b16 %v5114
      %v5147 = vpack.c.b16 %v5132, %v5131
      %v5148 = vpack.c.b16 %v5134, %v5133
      %v5149 = vpack.c.b16 %v5136, %v5135
      %v5150 = vpack.c.b16 %v5138, %v5137
      %v5151 = vpack.c.b16 %v5140, %v5139
      %v5152 = vpack.c.b16 %v5142, %v5141
      %v5153 = vpack.c.b16 %v5144, %v5143
      %v5154 = vpack.c.b16 %v5146, %v5145
      %5163 = vmatpush.bf16.msra.mxu0 %v5154
      %5164 = vmatpush.bf16.msra.mxu0 %v5153
      %5165 = vmatpush.bf16.msra.mxu0 %v5152
      %5166 = vmatpush.bf16.msra.mxu0 %v5151
      %5167 = vmatpush.bf16.msra.mxu0 %v5150
      %5168 = vmatpush.bf16.msra.mxu0 %v5149
      %5169 = vmatpush.bf16.msra.mxu0 %v5148
      %5170 = vmatpush.bf16.msra.mxu0 %v5147
      %5171 = vmatmul.bf16.gmra.mxu0 %v5050
      %v5172 = vpop.f32.mrf.mxu0
      %v5173 = vadd.f32 0.0, %v5172
      %v5174 = vpop.f32.mrf.mxu0
      %v5175 = vadd.f32 0.0, %v5174
      %5176 = vmatmul.bf16.gmra.mxu0 %v5051
      %v5177 = vpop.f32.mrf.mxu0
      %v5178 = vadd.f32 0.0, %v5177
      %v5179 = vpop.f32.mrf.mxu0
      %v5180 = vadd.f32 0.0, %v5179
      %5181 = vmatmul.bf16.gmra.mxu0 %v5052
      %v5182 = vpop.f32.mrf.mxu0
      %v5183 = vadd.f32 0.0, %v5182
      %v5184 = vpop.f32.mrf.mxu0
      %v5185 = vadd.f32 0.0, %v5184
      %5186 = vmatmul.bf16.gmra.mxu0 %v5053
      %v5187 = vpop.f32.mrf.mxu0
      %v5188 = vadd.f32 0.0, %v5187
      %v5189 = vpop.f32.mrf.mxu0
      %v5190 = vadd.f32 0.0, %v5189
      %5191 = vmatmul.bf16.gmra.mxu0 %v5054
      %v5192 = vpop.f32.mrf.mxu0
      %v5193 = vadd.f32 0.0, %v5192
      %v5194 = vpop.f32.mrf.mxu0
      %v5195 = vadd.f32 0.0, %v5194
      %5196 = vmatmul.bf16.gmra.mxu0 %v5055
      %v5197 = vpop.f32.mrf.mxu0
      %v5198 = vadd.f32 0.0, %v5197
      %v5199 = vpop.f32.mrf.mxu0
      %v5200 = vadd.f32 0.0, %v5199
      %5201 = vmatmul.bf16.gmra.mxu0 %v5056
      %v5202 = vpop.f32.mrf.mxu0
      %v5203 = vadd.f32 0.0, %v5202
      %v5204 = vpop.f32.mrf.mxu0
      %v5205 = vadd.f32 0.0, %v5204
      %5206 = vmatmul.bf16.gmra.mxu0 %v5057
      %v5207 = vpop.f32.mrf.mxu0
      %v5208 = vadd.f32 0.0, %v5207
      %v5209 = vpop.f32.mrf.mxu0
      %v5210 = vadd.f32 0.0, %v5209
      %5211 = vmatmul.bf16.gmra.mxu0 %v5058
      %v5212 = vpop.f32.mrf.mxu0
      %v5213 = vadd.f32 0.0, %v5212
      %v5214 = vpop.f32.mrf.mxu0
      %v5215 = vadd.f32 0.0, %v5214
      %5216 = vmatmul.bf16.gmra.mxu0 %v5059
      %v5217 = vpop.f32.mrf.mxu0
      %v5218 = vadd.f32 0.0, %v5217
      %v5219 = vpop.f32.mrf.mxu0
      %v5220 = vadd.f32 0.0, %v5219
      %5221 = vmatmul.bf16.gmra.mxu0 %v5060
      %v5222 = vpop.f32.mrf.mxu0
      %v5223 = vadd.f32 0.0, %v5222
      %v5224 = vpop.f32.mrf.mxu0
      %v5225 = vadd.f32 0.0, %v5224
      %5226 = vmatmul.bf16.gmra.mxu0 %v5061
      %v5227 = vpop.f32.mrf.mxu0
      %v5228 = vadd.f32 0.0, %v5227
      %v5229 = vpop.f32.mrf.mxu0
      %v5230 = vadd.f32 0.0, %v5229
      %5231 = vmatmul.bf16.gmra.mxu0 %v5062
      %v5232 = vpop.f32.mrf.mxu0
      %v5233 = vadd.f32 0.0, %v5232
      %v5234 = vpop.f32.mrf.mxu0
      %v5235 = vadd.f32 0.0, %v5234
      %5236 = vmatmul.bf16.gmra.mxu0 %v5063
      %v5237 = vpop.f32.mrf.mxu0
      %v5238 = vadd.f32 0.0, %v5237
      %v5239 = vpop.f32.mrf.mxu0
      %v5240 = vadd.f32 0.0, %v5239
      %5241 = vmatmul.bf16.gmra.mxu0 %v5064
      %v5242 = vpop.f32.mrf.mxu0
      %v5243 = vadd.f32 0.0, %v5242
      %v5244 = vpop.f32.mrf.mxu0
      %v5245 = vadd.f32 0.0, %v5244
      %5246 = vmatmul.bf16.gmra.mxu0 %v5065
      %v5247 = vpop.f32.mrf.mxu0
      %v5248 = vadd.f32 0.0, %v5247
      %v5249 = vpop.f32.mrf.mxu0
      %v5250 = vadd.f32 0.0, %v5249
      %5251 = vdwg.mxu0
      %v5252 = vadd.f32 %v5066, %v5173
      %v5253 = vadd.f32 %v5067, %v5175
      %v5254 = vadd.f32 %v5068, %v5178
      %v5255 = vadd.f32 %v5069, %v5180
      %v5256 = vadd.f32 %v5070, %v5183
      %v5257 = vadd.f32 %v5071, %v5185
      %v5258 = vadd.f32 %v5072, %v5188
      %v5259 = vadd.f32 %v5073, %v5190
      %v5260 = vadd.f32 %v5074, %v5193
      %v5261 = vadd.f32 %v5075, %v5195
      %v5262 = vadd.f32 %v5076, %v5198
      %v5263 = vadd.f32 %v5077, %v5200
      %v5264 = vadd.f32 %v5078, %v5203
      %v5265 = vadd.f32 %v5079, %v5205
      %v5266 = vadd.f32 %v5080, %v5208
      %v5267 = vadd.f32 %v5081, %v5210
      %v5268 = vadd.f32 %v5082, %v5213
      %v5269 = vadd.f32 %v5083, %v5215
      %v5270 = vadd.f32 %v5084, %v5218
      %v5271 = vadd.f32 %v5085, %v5220
      %v5272 = vadd.f32 %v5086, %v5223
      %v5273 = vadd.f32 %v5087, %v5225
      %v5274 = vadd.f32 %v5088, %v5228
      %v5275 = vadd.f32 %v5089, %v5230
      %v5276 = vadd.f32 %v5090, %v5233
      %v5277 = vadd.f32 %v5091, %v5235
      %v5278 = vadd.f32 %v5092, %v5238
      %v5279 = vadd.f32 %v5093, %v5240
      %v5280 = vadd.f32 %v5094, %v5243
      %v5281 = vadd.f32 %v5095, %v5245
      %v5282 = vadd.f32 %v5096, %v5248
      %v5283 = vadd.f32 %v5097, %v5250
      %5284 = vst [vmem:[#allocation2] sm:$0xff] %v5252
      %5285 = vst [vmem:[#allocation2 + $0x8] sm:$0xff] %v5253
      %5286 = vst [vmem:[#allocation2 + $0x10] sm:$0xff] %v5254
      %5287 = vst [vmem:[#allocation2 + $0x18] sm:$0xff] %v5255
      %5288 = vst [vmem:[#allocation2 + $0x20] sm:$0xff] %v5256
      %5289 = vst [vmem:[#allocation2 + $0x28] sm:$0xff] %v5257
      %5290 = vst [vmem:[#allocation2 + $0x30] sm:$0xff] %v5258
      %5291 = vst [vmem:[#allocation2 + $0x38] sm:$0xff] %v5259
      %5292 = vst [vmem:[#allocation2 + $0x40] sm:$0xff] %v5260
      %5293 = vst [vmem:[#allocation2 + $0x48] sm:$0xff] %v5261
      %5294 = vst [vmem:[#allocation2 + $0x50] sm:$0xff] %v5262
      %5295 = vst [vmem:[#allocation2 + $0x58] sm:$0xff] %v5263
      %5296 = vst [vmem:[#allocation2 + $0x60] sm:$0xff] %v5264
      %5297 = vst [vmem:[#allocation2 + $0x68] sm:$0xff] %v5265
      %5298 = vst [vmem:[#allocation2 + $0x70] sm:$0xff] %v5266
      %5299 = vst [vmem:[#allocation2 + $0x78] sm:$0xff] %v5267
      %5300 = vst [vmem:[#allocation2 + $0x80] sm:$0xff] %v5268
      %5301 = vst [vmem:[#allocation2 + $0x88] sm:$0xff] %v5269
      %5302 = vst [vmem:[#allocation2 + $0x90] sm:$0xff] %v5270
      %5303 = vst [vmem:[#allocation2 + $0x98] sm:$0xff] %v5271
      %5304 = vst [vmem:[#allocation2 + $0xa0] sm:$0xff] %v5272
      %5305 = vst [vmem:[#allocation2 + $0xa8] sm:$0xff] %v5273
      %5306 = vst [vmem:[#allocation2 + $0xb0] sm:$0xff] %v5274
      %5307 = vst [vmem:[#allocation2 + $0xb8] sm:$0xff] %v5275
      %5308 = vst [vmem:[#allocation2 + $0xc0] sm:$0xff] %v5276
      %5309 = vst [vmem:[#allocation2 + $0xc8] sm:$0xff] %v5277
      %5310 = vst [vmem:[#allocation2 + $0xd0] sm:$0xff] %v5278
      %5311 = vst [vmem:[#allocation2 + $0xd8] sm:$0xff] %v5279
      %5312 = vst [vmem:[#allocation2 + $0xe0] sm:$0xff] %v5280
      %5313 = vst [vmem:[#allocation2 + $0xe8] sm:$0xff] %v5281
      %5314 = vst [vmem:[#allocation2 + $0xf0] sm:$0xff] %v5282
      %5315 = vst [vmem:[#allocation2 + $0xf8] sm:$0xff] %v5283
      %v5316 = vld [vmem:[%s4078 + $0x2] sm:$0xff]
      %v5317 = vld [vmem:[%s4078 + $0xa] sm:$0xff]
      %v5318 = vld [vmem:[%s4078 + $0x1a] sm:$0xff]
      %v5319 = vld [vmem:[%s4078 + $0x22] sm:$0xff]
      %v5320 = vld [vmem:[%s4078 + $0x32] sm:$0xff]
      %v5321 = vld [vmem:[%s4078 + $0x3a] sm:$0xff]
      %v5322 = vld [vmem:[%s4078 + $0x4a] sm:$0xff]
      %v5323 = vld [vmem:[%s4078 + $0x52] sm:$0xff]
      %v5324 = vld [vmem:[%s4078 + $0x62] sm:$0xff]
      %v5325 = vld [vmem:[%s4078 + $0x6a] sm:$0xff]
      %v5326 = vld [vmem:[%s4078 + $0x7a] sm:$0xff]
      %v5327 = vld [vmem:[%s4078 + $0x82] sm:$0xff]
      %v5328 = vld [vmem:[%s4078 + $0x92] sm:$0xff]
      %v5329 = vld [vmem:[%s4078 + $0x9a] sm:$0xff]
      %v5330 = vld [vmem:[%s4078 + $0xaa] sm:$0xff]
      %v5331 = vld [vmem:[%s4078 + $0xb2] sm:$0xff]
      %v5332 = vld [vmem:[%s4078 + $0xc2] sm:$0xff]
      %v5333 = vld [vmem:[%s4078 + $0xca] sm:$0xff]
      %v5334 = vld [vmem:[%s4078 + $0xda] sm:$0xff]
      %v5335 = vld [vmem:[%s4078 + $0xe2] sm:$0xff]
      %v5336 = vld [vmem:[%s4078 + $0xf2] sm:$0xff]
      %v5337 = vld [vmem:[%s4078 + $0xfa] sm:$0xff]
      %v5338 = vld [vmem:[%s4078 + $0x10a] sm:$0xff]
      %v5339 = vld [vmem:[%s4078 + $0x112] sm:$0xff]
      %v5340 = vld [vmem:[%s4078 + $0x122] sm:$0xff]
      %v5341 = vld [vmem:[%s4078 + $0x12a] sm:$0xff]
      %v5342 = vld [vmem:[%s4078 + $0x13a] sm:$0xff]
      %v5343 = vld [vmem:[%s4078 + $0x142] sm:$0xff]
      %v5344 = vld [vmem:[%s4078 + $0x152] sm:$0xff]
      %v5345 = vld [vmem:[%s4078 + $0x15a] sm:$0xff]
      %v5346 = vld [vmem:[%s4078 + $0x16a] sm:$0xff]
      %v5347 = vld [vmem:[%s4078 + $0x172] sm:$0xff]
      %v5348 = vld [vmem:[%s4111 + $0x2] sm:$0xff]
      %v5349 = vld [vmem:[%s4111 + $0xa] sm:$0xff]
      %v5350 = vld [vmem:[%s4111 + $0x1a] sm:$0xff]
      %v5351 = vld [vmem:[%s4111 + $0x22] sm:$0xff]
      %v5352 = vld [vmem:[%s4111 + $0x32] sm:$0xff]
      %v5353 = vld [vmem:[%s4111 + $0x3a] sm:$0xff]
      %v5354 = vld [vmem:[%s4111 + $0x4a] sm:$0xff]
      %v5355 = vld [vmem:[%s4111 + $0x52] sm:$0xff]
      %v5356 = vld [vmem:[%s4111 + $0x62] sm:$0xff]
      %v5357 = vld [vmem:[%s4111 + $0x6a] sm:$0xff]
      %v5358 = vld [vmem:[%s4111 + $0x7a] sm:$0xff]
      %v5359 = vld [vmem:[%s4111 + $0x82] sm:$0xff]
      %v5360 = vld [vmem:[%s4111 + $0x92] sm:$0xff]
      %v5361 = vld [vmem:[%s4111 + $0x9a] sm:$0xff]
      %v5362 = vld [vmem:[%s4111 + $0xaa] sm:$0xff]
      %v5363 = vld [vmem:[%s4111 + $0xb2] sm:$0xff]
      %v5364 = vld [vmem:[%s4111 + $0xc2] sm:$0xff]
      %v5365 = vld [vmem:[%s4111 + $0xca] sm:$0xff]
      %v5366 = vld [vmem:[%s4111 + $0xda] sm:$0xff]
      %v5367 = vld [vmem:[%s4111 + $0xe2] sm:$0xff]
      %v5368 = vld [vmem:[%s4111 + $0xf2] sm:$0xff]
      %v5369 = vld [vmem:[%s4111 + $0xfa] sm:$0xff]
      %v5370 = vld [vmem:[%s4111 + $0x10a] sm:$0xff]
      %v5371 = vld [vmem:[%s4111 + $0x112] sm:$0xff]
      %v5372 = vld [vmem:[%s4111 + $0x122] sm:$0xff]
      %v5373 = vld [vmem:[%s4111 + $0x12a] sm:$0xff]
      %v5374 = vld [vmem:[%s4111 + $0x13a] sm:$0xff]
      %v5375 = vld [vmem:[%s4111 + $0x142] sm:$0xff]
      %v5376 = vld [vmem:[%s4111 + $0x152] sm:$0xff]
      %v5377 = vld [vmem:[%s4111 + $0x15a] sm:$0xff]
      %v5378 = vld [vmem:[%s4111 + $0x16a] sm:$0xff]
      %v5379 = vld [vmem:[%s4111 + $0x172] sm:$0xff]
      %v5380 = vmul.f32 %v5316, %v428
      %v5381 = vmul.f32 %v5317, %v428
      %v5382 = vmul.f32 %v5318, %v428
      %v5383 = vmul.f32 %v5319, %v428
      %v5384 = vmul.f32 %v5320, %v428
      %v5385 = vmul.f32 %v5321, %v428
      %v5386 = vmul.f32 %v5322, %v428
      %v5387 = vmul.f32 %v5323, %v428
      %v5388 = vmul.f32 %v5324, %v428
      %v5389 = vmul.f32 %v5325, %v428
      %v5390 = vmul.f32 %v5326, %v428
      %v5391 = vmul.f32 %v5327, %v428
      %v5392 = vmul.f32 %v5328, %v428
      %v5393 = vmul.f32 %v5329, %v428
      %v5394 = vmul.f32 %v5330, %v428
      %v5395 = vmul.f32 %v5331, %v428
      %v5396 = vmul.f32 %v5332, %v428
      %v5397 = vmul.f32 %v5333, %v428
      %v5398 = vmul.f32 %v5334, %v428
      %v5399 = vmul.f32 %v5335, %v428
      %v5400 = vmul.f32 %v5336, %v428
      %v5401 = vmul.f32 %v5337, %v428
      %v5402 = vmul.f32 %v5338, %v428
      %v5403 = vmul.f32 %v5339, %v428
      %v5404 = vmul.f32 %v5340, %v428
      %v5405 = vmul.f32 %v5341, %v428
      %v5406 = vmul.f32 %v5342, %v428
      %v5407 = vmul.f32 %v5343, %v428
      %v5408 = vmul.f32 %v5344, %v428
      %v5409 = vmul.f32 %v5345, %v428
      %v5410 = vmul.f32 %v5346, %v428
      %v5411 = vmul.f32 %v5347, %v428
      %v5412 = vadd.f32 %v5380, %v463
      %v5413 = vadd.f32 %v5381, %v463
      %v5414 = vadd.f32 %v5382, %v463
      %v5415 = vadd.f32 %v5383, %v463
      %v5416 = vadd.f32 %v5384, %v463
      %v5417 = vadd.f32 %v5385, %v463
      %v5418 = vadd.f32 %v5386, %v463
      %v5419 = vadd.f32 %v5387, %v463
      %v5420 = vadd.f32 %v5388, %v463
      %v5421 = vadd.f32 %v5389, %v463
      %v5422 = vadd.f32 %v5390, %v463
      %v5423 = vadd.f32 %v5391, %v463
      %v5424 = vadd.f32 %v5392, %v463
      %v5425 = vadd.f32 %v5393, %v463
      %v5426 = vadd.f32 %v5394, %v463
      %v5427 = vadd.f32 %v5395, %v463
      %v5428 = vadd.f32 %v5396, %v463
      %v5429 = vadd.f32 %v5397, %v463
      %v5430 = vadd.f32 %v5398, %v463
      %v5431 = vadd.f32 %v5399, %v463
      %v5432 = vadd.f32 %v5400, %v463
      %v5433 = vadd.f32 %v5401, %v463
      %v5434 = vadd.f32 %v5402, %v463
      %v5435 = vadd.f32 %v5403, %v463
      %v5436 = vadd.f32 %v5404, %v463
      %v5437 = vadd.f32 %v5405, %v463
      %v5438 = vadd.f32 %v5406, %v463
      %v5439 = vadd.f32 %v5407, %v463
      %v5440 = vadd.f32 %v5408, %v463
      %v5441 = vadd.f32 %v5409, %v463
      %v5442 = vadd.f32 %v5410, %v463
      %v5443 = vadd.f32 %v5411, %v463
      %v5444 = vmax.f32 %v5412, 0.0
      %v5445 = vmax.f32 %v5413, 0.0
      %v5446 = vmax.f32 %v5414, 0.0
      %v5447 = vmax.f32 %v5415, 0.0
      %v5448 = vmax.f32 %v5416, 0.0
      %v5449 = vmax.f32 %v5417, 0.0
      %v5450 = vmax.f32 %v5418, 0.0
      %v5451 = vmax.f32 %v5419, 0.0
      %v5452 = vmax.f32 %v5420, 0.0
      %v5453 = vmax.f32 %v5421, 0.0
      %v5454 = vmax.f32 %v5422, 0.0
      %v5455 = vmax.f32 %v5423, 0.0
      %v5456 = vmax.f32 %v5424, 0.0
      %v5457 = vmax.f32 %v5425, 0.0
      %v5458 = vmax.f32 %v5426, 0.0
      %v5459 = vmax.f32 %v5427, 0.0
      %v5460 = vmax.f32 %v5428, 0.0
      %v5461 = vmax.f32 %v5429, 0.0
      %v5462 = vmax.f32 %v5430, 0.0
      %v5463 = vmax.f32 %v5431, 0.0
      %v5464 = vmax.f32 %v5432, 0.0
      %v5465 = vmax.f32 %v5433, 0.0
      %v5466 = vmax.f32 %v5434, 0.0
      %v5467 = vmax.f32 %v5435, 0.0
      %v5468 = vmax.f32 %v5436, 0.0
      %v5469 = vmax.f32 %v5437, 0.0
      %v5470 = vmax.f32 %v5438, 0.0
      %v5471 = vmax.f32 %v5439, 0.0
      %v5472 = vmax.f32 %v5440, 0.0
      %v5473 = vmax.f32 %v5441, 0.0
      %v5474 = vmax.f32 %v5442, 0.0
      %v5475 = vmax.f32 %v5443, 0.0
      %5477 = vset.pattern.permute.xlu0 0
      %5478 = vperm.xlu0 %5477, %v5348
      %v5479 = vpop.permute.xlu0 %5478
      %5482 = vset.pattern.permute.xlu0 0
      %5483 = vperm.xlu0 %5482, %v5349
      %v5484 = vpop.permute.xlu0 %5483
      %5487 = vset.pattern.permute.xlu0 0
      %5488 = vperm.xlu0 %5487, %v5350
      %v5489 = vpop.permute.xlu0 %5488
      %5492 = vset.pattern.permute.xlu0 0
      %5493 = vperm.xlu0 %5492, %v5351
      %v5494 = vpop.permute.xlu0 %5493
      %5497 = vset.pattern.permute.xlu0 0
      %5498 = vperm.xlu0 %5497, %v5352
      %v5499 = vpop.permute.xlu0 %5498
      %5502 = vset.pattern.permute.xlu0 0
      %5503 = vperm.xlu0 %5502, %v5353
      %v5504 = vpop.permute.xlu0 %5503
      %5507 = vset.pattern.permute.xlu0 0
      %5508 = vperm.xlu0 %5507, %v5354
      %v5509 = vpop.permute.xlu0 %5508
      %5512 = vset.pattern.permute.xlu0 0
      %5513 = vperm.xlu0 %5512, %v5355
      %v5514 = vpop.permute.xlu0 %5513
      %5517 = vset.pattern.permute.xlu0 0
      %5518 = vperm.xlu0 %5517, %v5356
      %v5519 = vpop.permute.xlu0 %5518
      %5522 = vset.pattern.permute.xlu0 0
      %5523 = vperm.xlu0 %5522, %v5357
      %v5524 = vpop.permute.xlu0 %5523
      %5527 = vset.pattern.permute.xlu0 0
      %5528 = vperm.xlu0 %5527, %v5358
      %v5529 = vpop.permute.xlu0 %5528
      %5532 = vset.pattern.permute.xlu0 0
      %5533 = vperm.xlu0 %5532, %v5359
      %v5534 = vpop.permute.xlu0 %5533
      %5537 = vset.pattern.permute.xlu0 0
      %5538 = vperm.xlu0 %5537, %v5360
      %v5539 = vpop.permute.xlu0 %5538
      %5542 = vset.pattern.permute.xlu0 0
      %5543 = vperm.xlu0 %5542, %v5361
      %v5544 = vpop.permute.xlu0 %5543
      %5547 = vset.pattern.permute.xlu0 0
      %5548 = vperm.xlu0 %5547, %v5362
      %v5549 = vpop.permute.xlu0 %5548
      %5552 = vset.pattern.permute.xlu0 0
      %5553 = vperm.xlu0 %5552, %v5363
      %v5554 = vpop.permute.xlu0 %5553
      %5557 = vset.pattern.permute.xlu0 0
      %5558 = vperm.xlu0 %5557, %v5364
      %v5559 = vpop.permute.xlu0 %5558
      %5562 = vset.pattern.permute.xlu0 0
      %5563 = vperm.xlu0 %5562, %v5365
      %v5564 = vpop.permute.xlu0 %5563
      %5567 = vset.pattern.permute.xlu0 0
      %5568 = vperm.xlu0 %5567, %v5366
      %v5569 = vpop.permute.xlu0 %5568
      %5572 = vset.pattern.permute.xlu0 0
      %5573 = vperm.xlu0 %5572, %v5367
      %v5574 = vpop.permute.xlu0 %5573
      %5577 = vset.pattern.permute.xlu0 0
      %5578 = vperm.xlu0 %5577, %v5368
      %v5579 = vpop.permute.xlu0 %5578
      %5582 = vset.pattern.permute.xlu0 0
      %5583 = vperm.xlu0 %5582, %v5369
      %v5584 = vpop.permute.xlu0 %5583
      %5587 = vset.pattern.permute.xlu0 0
      %5588 = vperm.xlu0 %5587, %v5370
      %v5589 = vpop.permute.xlu0 %5588
      %5592 = vset.pattern.permute.xlu0 0
      %5593 = vperm.xlu0 %5592, %v5371
      %v5594 = vpop.permute.xlu0 %5593
      %5597 = vset.pattern.permute.xlu0 0
      %5598 = vperm.xlu0 %5597, %v5372
      %v5599 = vpop.permute.xlu0 %5598
      %5602 = vset.pattern.permute.xlu0 0
      %5603 = vperm.xlu0 %5602, %v5373
      %v5604 = vpop.permute.xlu0 %5603
      %5607 = vset.pattern.permute.xlu0 0
      %5608 = vperm.xlu0 %5607, %v5374
      %v5609 = vpop.permute.xlu0 %5608
      %5612 = vset.pattern.permute.xlu0 0
      %5613 = vperm.xlu0 %5612, %v5375
      %v5614 = vpop.permute.xlu0 %5613
      %5617 = vset.pattern.permute.xlu0 0
      %5618 = vperm.xlu0 %5617, %v5376
      %v5619 = vpop.permute.xlu0 %5618
      %5622 = vset.pattern.permute.xlu0 0
      %5623 = vperm.xlu0 %5622, %v5377
      %v5624 = vpop.permute.xlu0 %5623
      %5627 = vset.pattern.permute.xlu0 0
      %5628 = vperm.xlu0 %5627, %v5378
      %v5629 = vpop.permute.xlu0 %5628
      %5632 = vset.pattern.permute.xlu0 0
      %5633 = vperm.xlu0 %5632, %v5379
      %v5634 = vpop.permute.xlu0 %5633
      %v5636 = vmul.f32 %v5444, %v5479
      %v5637 = vmul.f32 %v5445, %v5484
      %v5638 = vmul.f32 %v5446, %v5489
      %v5639 = vmul.f32 %v5447, %v5494
      %v5640 = vmul.f32 %v5448, %v5499
      %v5641 = vmul.f32 %v5449, %v5504
      %v5642 = vmul.f32 %v5450, %v5509
      %v5643 = vmul.f32 %v5451, %v5514
      %v5644 = vmul.f32 %v5452, %v5519
      %v5645 = vmul.f32 %v5453, %v5524
      %v5646 = vmul.f32 %v5454, %v5529
      %v5647 = vmul.f32 %v5455, %v5534
      %v5648 = vmul.f32 %v5456, %v5539
      %v5649 = vmul.f32 %v5457, %v5544
      %v5650 = vmul.f32 %v5458, %v5549
      %v5651 = vmul.f32 %v5459, %v5554
      %v5652 = vmul.f32 %v5460, %v5559
      %v5653 = vmul.f32 %v5461, %v5564
      %v5654 = vmul.f32 %v5462, %v5569
      %v5655 = vmul.f32 %v5463, %v5574
      %v5656 = vmul.f32 %v5464, %v5579
      %v5657 = vmul.f32 %v5465, %v5584
      %v5658 = vmul.f32 %v5466, %v5589
      %v5659 = vmul.f32 %v5467, %v5594
      %v5660 = vmul.f32 %v5468, %v5599
      %v5661 = vmul.f32 %v5469, %v5604
      %v5662 = vmul.f32 %v5470, %v5609
      %v5663 = vmul.f32 %v5471, %v5614
      %v5664 = vmul.f32 %v5472, %v5619
      %v5665 = vmul.f32 %v5473, %v5624
      %v5666 = vmul.f32 %v5474, %v5629
      %v5667 = vmul.f32 %v5475, %v5634
      %v5668 = vpack.c.bf16 %v5637, %v5636
      %v5669 = vpack.c.bf16 %v5639, %v5638
      %v5670 = vpack.c.bf16 %v5641, %v5640
      %v5671 = vpack.c.bf16 %v5643, %v5642
      %v5672 = vpack.c.bf16 %v5645, %v5644
      %v5673 = vpack.c.bf16 %v5647, %v5646
      %v5674 = vpack.c.bf16 %v5649, %v5648
      %v5675 = vpack.c.bf16 %v5651, %v5650
      %v5676 = vpack.c.bf16 %v5653, %v5652
      %v5677 = vpack.c.bf16 %v5655, %v5654
      %v5678 = vpack.c.bf16 %v5657, %v5656
      %v5679 = vpack.c.bf16 %v5659, %v5658
      %v5680 = vpack.c.bf16 %v5661, %v5660
      %v5681 = vpack.c.bf16 %v5663, %v5662
      %v5682 = vpack.c.bf16 %v5665, %v5664
      %v5683 = vpack.c.bf16 %v5667, %v5666
      %v5684 = vld [vmem:[#allocation2] sm:$0xff]
      %v5685 = vld [vmem:[#allocation2 + $0x8] sm:$0xff]
      %v5686 = vld [vmem:[#allocation2 + $0x10] sm:$0xff]
      %v5687 = vld [vmem:[#allocation2 + $0x18] sm:$0xff]
      %v5688 = vld [vmem:[#allocation2 + $0x20] sm:$0xff]
      %v5689 = vld [vmem:[#allocation2 + $0x28] sm:$0xff]
      %v5690 = vld [vmem:[#allocation2 + $0x30] sm:$0xff]
      %v5691 = vld [vmem:[#allocation2 + $0x38] sm:$0xff]
      %v5692 = vld [vmem:[#allocation2 + $0x40] sm:$0xff]
      %v5693 = vld [vmem:[#allocation2 + $0x48] sm:$0xff]
      %v5694 = vld [vmem:[#allocation2 + $0x50] sm:$0xff]
      %v5695 = vld [vmem:[#allocation2 + $0x58] sm:$0xff]
      %v5696 = vld [vmem:[#allocation2 + $0x60] sm:$0xff]
      %v5697 = vld [vmem:[#allocation2 + $0x68] sm:$0xff]
      %v5698 = vld [vmem:[#allocation2 + $0x70] sm:$0xff]
      %v5699 = vld [vmem:[#allocation2 + $0x78] sm:$0xff]
      %v5700 = vld [vmem:[#allocation2 + $0x80] sm:$0xff]
      %v5701 = vld [vmem:[#allocation2 + $0x88] sm:$0xff]
      %v5702 = vld [vmem:[#allocation2 + $0x90] sm:$0xff]
      %v5703 = vld [vmem:[#allocation2 + $0x98] sm:$0xff]
      %v5704 = vld [vmem:[#allocation2 + $0xa0] sm:$0xff]
      %v5705 = vld [vmem:[#allocation2 + $0xa8] sm:$0xff]
      %v5706 = vld [vmem:[#allocation2 + $0xb0] sm:$0xff]
      %v5707 = vld [vmem:[#allocation2 + $0xb8] sm:$0xff]
      %v5708 = vld [vmem:[#allocation2 + $0xc0] sm:$0xff]
      %v5709 = vld [vmem:[#allocation2 + $0xc8] sm:$0xff]
      %v5710 = vld [vmem:[#allocation2 + $0xd0] sm:$0xff]
      %v5711 = vld [vmem:[#allocation2 + $0xd8] sm:$0xff]
      %v5712 = vld [vmem:[#allocation2 + $0xe0] sm:$0xff]
      %v5713 = vld [vmem:[#allocation2 + $0xe8] sm:$0xff]
      %v5714 = vld [vmem:[#allocation2 + $0xf0] sm:$0xff]
      %v5715 = vld [vmem:[#allocation2 + $0xf8] sm:$0xff]
      %s5716 = scalar_lea.vmem %s312, 512
      %v5717 = vld [vmem:[%s5716] sm:$0xf]
      %v5718 = vld [vmem:[%s5716 + $0x4] sm:$0xf]
      %v5719 = vld [vmem:[%s5716 + $0x8] sm:$0xf]
      %v5720 = vld [vmem:[%s5716 + $0xc] sm:$0xf]
      %v5721 = vld [vmem:[%s5716 + $0x10] sm:$0xf]
      %v5722 = vld [vmem:[%s5716 + $0x14] sm:$0xf]
      %v5723 = vld [vmem:[%s5716 + $0x18] sm:$0xf]
      %v5724 = vld [vmem:[%s5716 + $0x1c] sm:$0xf]
      %v5725 = vld [vmem:[%s5716 + $0x20] sm:$0xf]
      %v5726 = vld [vmem:[%s5716 + $0x24] sm:$0xf]
      %v5727 = vld [vmem:[%s5716 + $0x28] sm:$0xf]
      %v5728 = vld [vmem:[%s5716 + $0x2c] sm:$0xf]
      %v5729 = vld [vmem:[%s5716 + $0x30] sm:$0xf]
      %v5730 = vld [vmem:[%s5716 + $0x34] sm:$0xf]
      %v5731 = vld [vmem:[%s5716 + $0x38] sm:$0xf]
      %v5732 = vld [vmem:[%s5716 + $0x3c] sm:$0xf]
      %v5749 = vunpack.c.l.b16 %v5717
      %v5750 = vunpack.c.l.b16 %v5718
      %v5751 = vunpack.c.l.b16 %v5719
      %v5752 = vunpack.c.l.b16 %v5720
      %v5753 = vunpack.c.l.b16 %v5721
      %v5754 = vunpack.c.l.b16 %v5722
      %v5755 = vunpack.c.l.b16 %v5723
      %v5756 = vunpack.c.l.b16 %v5724
      %v5757 = vunpack.c.l.b16 %v5725
      %v5758 = vunpack.c.l.b16 %v5726
      %v5759 = vunpack.c.l.b16 %v5727
      %v5760 = vunpack.c.l.b16 %v5728
      %v5761 = vunpack.c.l.b16 %v5729
      %v5762 = vunpack.c.l.b16 %v5730
      %v5763 = vunpack.c.l.b16 %v5731
      %v5764 = vunpack.c.l.b16 %v5732
      %v5765 = vpack.c.b16 %v5750, %v5749
      %v5766 = vpack.c.b16 %v5752, %v5751
      %v5767 = vpack.c.b16 %v5754, %v5753
      %v5768 = vpack.c.b16 %v5756, %v5755
      %v5769 = vpack.c.b16 %v5758, %v5757
      %v5770 = vpack.c.b16 %v5760, %v5759
      %v5771 = vpack.c.b16 %v5762, %v5761
      %v5772 = vpack.c.b16 %v5764, %v5763
      %5781 = vmatpush.bf16.msra.mxu0 %v5772
      %5782 = vmatpush.bf16.msra.mxu0 %v5771
      %5783 = vmatpush.bf16.msra.mxu0 %v5770
      %5784 = vmatpush.bf16.msra.mxu0 %v5769
      %5785 = vmatpush.bf16.msra.mxu0 %v5768
      %5786 = vmatpush.bf16.msra.mxu0 %v5767
      %5787 = vmatpush.bf16.msra.mxu0 %v5766
      %5788 = vmatpush.bf16.msra.mxu0 %v5765
      %5789 = vmatmul.bf16.gmra.mxu0 %v5668
      %v5790 = vpop.f32.mrf.mxu0
      %v5791 = vadd.f32 0.0, %v5790
      %v5792 = vpop.f32.mrf.mxu0
      %v5793 = vadd.f32 0.0, %v5792
      %5794 = vmatmul.bf16.gmra.mxu0 %v5669
      %v5795 = vpop.f32.mrf.mxu0
      %v5796 = vadd.f32 0.0, %v5795
      %v5797 = vpop.f32.mrf.mxu0
      %v5798 = vadd.f32 0.0, %v5797
      %5799 = vmatmul.bf16.gmra.mxu0 %v5670
      %v5800 = vpop.f32.mrf.mxu0
      %v5801 = vadd.f32 0.0, %v5800
      %v5802 = vpop.f32.mrf.mxu0
      %v5803 = vadd.f32 0.0, %v5802
      %5804 = vmatmul.bf16.gmra.mxu0 %v5671
      %v5805 = vpop.f32.mrf.mxu0
      %v5806 = vadd.f32 0.0, %v5805
      %v5807 = vpop.f32.mrf.mxu0
      %v5808 = vadd.f32 0.0, %v5807
      %5809 = vmatmul.bf16.gmra.mxu0 %v5672
      %v5810 = vpop.f32.mrf.mxu0
      %v5811 = vadd.f32 0.0, %v5810
      %v5812 = vpop.f32.mrf.mxu0
      %v5813 = vadd.f32 0.0, %v5812
      %5814 = vmatmul.bf16.gmra.mxu0 %v5673
      %v5815 = vpop.f32.mrf.mxu0
      %v5816 = vadd.f32 0.0, %v5815
      %v5817 = vpop.f32.mrf.mxu0
      %v5818 = vadd.f32 0.0, %v5817
      %5819 = vmatmul.bf16.gmra.mxu0 %v5674
      %v5820 = vpop.f32.mrf.mxu0
      %v5821 = vadd.f32 0.0, %v5820
      %v5822 = vpop.f32.mrf.mxu0
      %v5823 = vadd.f32 0.0, %v5822
      %5824 = vmatmul.bf16.gmra.mxu0 %v5675
      %v5825 = vpop.f32.mrf.mxu0
      %v5826 = vadd.f32 0.0, %v5825
      %v5827 = vpop.f32.mrf.mxu0
      %v5828 = vadd.f32 0.0, %v5827
      %5829 = vmatmul.bf16.gmra.mxu0 %v5676
      %v5830 = vpop.f32.mrf.mxu0
      %v5831 = vadd.f32 0.0, %v5830
      %v5832 = vpop.f32.mrf.mxu0
      %v5833 = vadd.f32 0.0, %v5832
      %5834 = vmatmul.bf16.gmra.mxu0 %v5677
      %v5835 = vpop.f32.mrf.mxu0
      %v5836 = vadd.f32 0.0, %v5835
      %v5837 = vpop.f32.mrf.mxu0
      %v5838 = vadd.f32 0.0, %v5837
      %5839 = vmatmul.bf16.gmra.mxu0 %v5678
      %v5840 = vpop.f32.mrf.mxu0
      %v5841 = vadd.f32 0.0, %v5840
      %v5842 = vpop.f32.mrf.mxu0
      %v5843 = vadd.f32 0.0, %v5842
      %5844 = vmatmul.bf16.gmra.mxu0 %v5679
      %v5845 = vpop.f32.mrf.mxu0
      %v5846 = vadd.f32 0.0, %v5845
      %v5847 = vpop.f32.mrf.mxu0
      %v5848 = vadd.f32 0.0, %v5847
      %5849 = vmatmul.bf16.gmra.mxu0 %v5680
      %v5850 = vpop.f32.mrf.mxu0
      %v5851 = vadd.f32 0.0, %v5850
      %v5852 = vpop.f32.mrf.mxu0
      %v5853 = vadd.f32 0.0, %v5852
      %5854 = vmatmul.bf16.gmra.mxu0 %v5681
      %v5855 = vpop.f32.mrf.mxu0
      %v5856 = vadd.f32 0.0, %v5855
      %v5857 = vpop.f32.mrf.mxu0
      %v5858 = vadd.f32 0.0, %v5857
      %5859 = vmatmul.bf16.gmra.mxu0 %v5682
      %v5860 = vpop.f32.mrf.mxu0
      %v5861 = vadd.f32 0.0, %v5860
      %v5862 = vpop.f32.mrf.mxu0
      %v5863 = vadd.f32 0.0, %v5862
      %5864 = vmatmul.bf16.gmra.mxu0 %v5683
      %v5865 = vpop.f32.mrf.mxu0
      %v5866 = vadd.f32 0.0, %v5865
      %v5867 = vpop.f32.mrf.mxu0
      %v5868 = vadd.f32 0.0, %v5867
      %5869 = vdwg.mxu0
      %v5870 = vadd.f32 %v5684, %v5791
      %v5871 = vadd.f32 %v5685, %v5793
      %v5872 = vadd.f32 %v5686, %v5796
      %v5873 = vadd.f32 %v5687, %v5798
      %v5874 = vadd.f32 %v5688, %v5801
      %v5875 = vadd.f32 %v5689, %v5803
      %v5876 = vadd.f32 %v5690, %v5806
      %v5877 = vadd.f32 %v5691, %v5808
      %v5878 = vadd.f32 %v5692, %v5811
      %v5879 = vadd.f32 %v5693, %v5813
      %v5880 = vadd.f32 %v5694, %v5816
      %v5881 = vadd.f32 %v5695, %v5818
      %v5882 = vadd.f32 %v5696, %v5821
      %v5883 = vadd.f32 %v5697, %v5823
      %v5884 = vadd.f32 %v5698, %v5826
      %v5885 = vadd.f32 %v5699, %v5828
      %v5886 = vadd.f32 %v5700, %v5831
      %v5887 = vadd.f32 %v5701, %v5833
      %v5888 = vadd.f32 %v5702, %v5836
      %v5889 = vadd.f32 %v5703, %v5838
      %v5890 = vadd.f32 %v5704, %v5841
      %v5891 = vadd.f32 %v5705, %v5843
      %v5892 = vadd.f32 %v5706, %v5846
      %v5893 = vadd.f32 %v5707, %v5848
      %v5894 = vadd.f32 %v5708, %v5851
      %v5895 = vadd.f32 %v5709, %v5853
      %v5896 = vadd.f32 %v5710, %v5856
      %v5897 = vadd.f32 %v5711, %v5858
      %v5898 = vadd.f32 %v5712, %v5861
      %v5899 = vadd.f32 %v5713, %v5863
      %v5900 = vadd.f32 %v5714, %v5866
      %v5901 = vadd.f32 %v5715, %v5868
      %5902 = vst [vmem:[#allocation2] sm:$0xff] %v5870
      %5903 = vst [vmem:[#allocation2 + $0x8] sm:$0xff] %v5871
      %5904 = vst [vmem:[#allocation2 + $0x10] sm:$0xff] %v5872
      %5905 = vst [vmem:[#allocation2 + $0x18] sm:$0xff] %v5873
      %5906 = vst [vmem:[#allocation2 + $0x20] sm:$0xff] %v5874
      %5907 = vst [vmem:[#allocation2 + $0x28] sm:$0xff] %v5875
      %5908 = vst [vmem:[#allocation2 + $0x30] sm:$0xff] %v5876
      %5909 = vst [vmem:[#allocation2 + $0x38] sm:$0xff] %v5877
      %5910 = vst [vmem:[#allocation2 + $0x40] sm:$0xff] %v5878
      %5911 = vst [vmem:[#allocation2 + $0x48] sm:$0xff] %v5879
      %5912 = vst [vmem:[#allocation2 + $0x50] sm:$0xff] %v5880
      %5913 = vst [vmem:[#allocation2 + $0x58] sm:$0xff] %v5881
      %5914 = vst [vmem:[#allocation2 + $0x60] sm:$0xff] %v5882
      %5915 = vst [vmem:[#allocation2 + $0x68] sm:$0xff] %v5883
      %5916 = vst [vmem:[#allocation2 + $0x70] sm:$0xff] %v5884
      %5917 = vst [vmem:[#allocation2 + $0x78] sm:$0xff] %v5885
      %5918 = vst [vmem:[#allocation2 + $0x80] sm:$0xff] %v5886
      %5919 = vst [vmem:[#allocation2 + $0x88] sm:$0xff] %v5887
      %5920 = vst [vmem:[#allocation2 + $0x90] sm:$0xff] %v5888
      %5921 = vst [vmem:[#allocation2 + $0x98] sm:$0xff] %v5889
      %5922 = vst [vmem:[#allocation2 + $0xa0] sm:$0xff] %v5890
      %5923 = vst [vmem:[#allocation2 + $0xa8] sm:$0xff] %v5891
      %5924 = vst [vmem:[#allocation2 + $0xb0] sm:$0xff] %v5892
      %5925 = vst [vmem:[#allocation2 + $0xb8] sm:$0xff] %v5893
      %5926 = vst [vmem:[#allocation2 + $0xc0] sm:$0xff] %v5894
      %5927 = vst [vmem:[#allocation2 + $0xc8] sm:$0xff] %v5895
      %5928 = vst [vmem:[#allocation2 + $0xd0] sm:$0xff] %v5896
      %5929 = vst [vmem:[#allocation2 + $0xd8] sm:$0xff] %v5897
      %5930 = vst [vmem:[#allocation2 + $0xe0] sm:$0xff] %v5898
      %5931 = vst [vmem:[#allocation2 + $0xe8] sm:$0xff] %v5899
      %5932 = vst [vmem:[#allocation2 + $0xf0] sm:$0xff] %v5900
      %5933 = vst [vmem:[#allocation2 + $0xf8] sm:$0xff] %v5901
      // Predicated region
      $region49: #{fwd.2} parent=43 // pred_check
        %p5934 = pneg %p325
      $region50: #{fwd.2} parent=43 // pred_check_branch
        %5936 = sbr.rel (%p5934) target = $region52
      $region51: #{fwd.2} parent=43 // pred_region
        %v5937 = vld [vmem:[#allocation2] sm:$0xff]
        %v5938 = vld [vmem:[#allocation2 + $0x8] sm:$0xff]
        %v5939 = vld [vmem:[#allocation2 + $0x10] sm:$0xff]
        %v5940 = vld [vmem:[#allocation2 + $0x18] sm:$0xff]
        %v5941 = vld [vmem:[#allocation2 + $0x20] sm:$0xff]
        %v5942 = vld [vmem:[#allocation2 + $0x28] sm:$0xff]
        %v5943 = vld [vmem:[#allocation2 + $0x30] sm:$0xff]
        %v5944 = vld [vmem:[#allocation2 + $0x38] sm:$0xff]
        %v5945 = vld [vmem:[#allocation2 + $0x40] sm:$0xff]
        %v5946 = vld [vmem:[#allocation2 + $0x48] sm:$0xff]
        %v5947 = vld [vmem:[#allocation2 + $0x50] sm:$0xff]
        %v5948 = vld [vmem:[#allocation2 + $0x58] sm:$0xff]
        %v5949 = vld [vmem:[#allocation2 + $0x60] sm:$0xff]
        %v5950 = vld [vmem:[#allocation2 + $0x68] sm:$0xff]
        %v5951 = vld [vmem:[#allocation2 + $0x70] sm:$0xff]
        %v5952 = vld [vmem:[#allocation2 + $0x78] sm:$0xff]
        %v5953 = vld [vmem:[#allocation2 + $0x80] sm:$0xff]
        %v5954 = vld [vmem:[#allocation2 + $0x88] sm:$0xff]
        %v5955 = vld [vmem:[#allocation2 + $0x90] sm:$0xff]
        %v5956 = vld [vmem:[#allocation2 + $0x98] sm:$0xff]
        %v5957 = vld [vmem:[#allocation2 + $0xa0] sm:$0xff]
        %v5958 = vld [vmem:[#allocation2 + $0xa8] sm:$0xff]
        %v5959 = vld [vmem:[#allocation2 + $0xb0] sm:$0xff]
        %v5960 = vld [vmem:[#allocation2 + $0xb8] sm:$0xff]
        %v5961 = vld [vmem:[#allocation2 + $0xc0] sm:$0xff]
        %v5962 = vld [vmem:[#allocation2 + $0xc8] sm:$0xff]
        %v5963 = vld [vmem:[#allocation2 + $0xd0] sm:$0xff]
        %v5964 = vld [vmem:[#allocation2 + $0xd8] sm:$0xff]
        %v5965 = vld [vmem:[#allocation2 + $0xe0] sm:$0xff]
        %v5966 = vld [vmem:[#allocation2 + $0xe8] sm:$0xff]
        %v5967 = vld [vmem:[#allocation2 + $0xf0] sm:$0xff]
        %v5968 = vld [vmem:[#allocation2 + $0xf8] sm:$0xff]
        %v5969 = vld [vmem:[%s5] sm:$0x1]
        %v5971 = vperm.slane %v5969, 0
        %v5973 = vadd.f32 %v5937, %v5971
        %v5974 = vadd.f32 %v5938, %v5971
        %v5975 = vadd.f32 %v5939, %v5971
        %v5976 = vadd.f32 %v5940, %v5971
        %v5977 = vadd.f32 %v5941, %v5971
        %v5978 = vadd.f32 %v5942, %v5971
        %v5979 = vadd.f32 %v5943, %v5971
        %v5980 = vadd.f32 %v5944, %v5971
        %v5981 = vadd.f32 %v5945, %v5971
        %v5982 = vadd.f32 %v5946, %v5971
        %v5983 = vadd.f32 %v5947, %v5971
        %v5984 = vadd.f32 %v5948, %v5971
        %v5985 = vadd.f32 %v5949, %v5971
        %v5986 = vadd.f32 %v5950, %v5971
        %v5987 = vadd.f32 %v5951, %v5971
        %v5988 = vadd.f32 %v5952, %v5971
        %v5989 = vadd.f32 %v5953, %v5971
        %v5990 = vadd.f32 %v5954, %v5971
        %v5991 = vadd.f32 %v5955, %v5971
        %v5992 = vadd.f32 %v5956, %v5971
        %v5993 = vadd.f32 %v5957, %v5971
        %v5994 = vadd.f32 %v5958, %v5971
        %v5995 = vadd.f32 %v5959, %v5971
        %v5996 = vadd.f32 %v5960, %v5971
        %v5997 = vadd.f32 %v5961, %v5971
        %v5998 = vadd.f32 %v5962, %v5971
        %v5999 = vadd.f32 %v5963, %v5971
        %v6000 = vadd.f32 %v5964, %v5971
        %v6001 = vadd.f32 %v5965, %v5971
        %v6002 = vadd.f32 %v5966, %v5971
        %v6003 = vadd.f32 %v5967, %v5971
        %v6004 = vadd.f32 %v5968, %v5971
        %6005 = vst [vmem:[%s324] sm:$0xff] %v5973
        %6006 = vst [vmem:[%s324 + $0x8] sm:$0xff] %v5974
        %6007 = vst [vmem:[%s324 + $0x10] sm:$0xff] %v5975
        %6008 = vst [vmem:[%s324 + $0x18] sm:$0xff] %v5976
        %6009 = vst [vmem:[%s324 + $0x20] sm:$0xff] %v5977
        %6010 = vst [vmem:[%s324 + $0x28] sm:$0xff] %v5978
        %6011 = vst [vmem:[%s324 + $0x30] sm:$0xff] %v5979
        %6012 = vst [vmem:[%s324 + $0x38] sm:$0xff] %v5980
        %6013 = vst [vmem:[%s324 + $0x40] sm:$0xff] %v5981
        %6014 = vst [vmem:[%s324 + $0x48] sm:$0xff] %v5982
        %6015 = vst [vmem:[%s324 + $0x50] sm:$0xff] %v5983
        %6016 = vst [vmem:[%s324 + $0x58] sm:$0xff] %v5984
        %6017 = vst [vmem:[%s324 + $0x60] sm:$0xff] %v5985
        %6018 = vst [vmem:[%s324 + $0x68] sm:$0xff] %v5986
        %6019 = vst [vmem:[%s324 + $0x70] sm:$0xff] %v5987
        %6020 = vst [vmem:[%s324 + $0x78] sm:$0xff] %v5988
        %6021 = vst [vmem:[%s324 + $0x80] sm:$0xff] %v5989
        %6022 = vst [vmem:[%s324 + $0x88] sm:$0xff] %v5990
        %6023 = vst [vmem:[%s324 + $0x90] sm:$0xff] %v5991
        %6024 = vst [vmem:[%s324 + $0x98] sm:$0xff] %v5992
        %6025 = vst [vmem:[%s324 + $0xa0] sm:$0xff] %v5993
        %6026 = vst [vmem:[%s324 + $0xa8] sm:$0xff] %v5994
        %6027 = vst [vmem:[%s324 + $0xb0] sm:$0xff] %v5995
        %6028 = vst [vmem:[%s324 + $0xb8] sm:$0xff] %v5996
        %6029 = vst [vmem:[%s324 + $0xc0] sm:$0xff] %v5997
        %6030 = vst [vmem:[%s324 + $0xc8] sm:$0xff] %v5998
        %6031 = vst [vmem:[%s324 + $0xd0] sm:$0xff] %v5999
        %6032 = vst [vmem:[%s324 + $0xd8] sm:$0xff] %v6000
        %6033 = vst [vmem:[%s324 + $0xe0] sm:$0xff] %v6001
        %6034 = vst [vmem:[%s324 + $0xe8] sm:$0xff] %v6002
        %6035 = vst [vmem:[%s324 + $0xf0] sm:$0xff] %v6003
        %6036 = vst [vmem:[%s324 + $0xf8] sm:$0xff] %v6004
      $region52: #{fwd.2} parent=43 // pred_fallthru
        _
      %p6037 = scmp.lt.s32.totalorder %s21, 1
      %s6038 = scalar_select %p6037, %s21, 1
      %s6039 = smul.addr %s6038, 32
      %s6040 = smul.addr %s6039, 8
      %s6041 = scalar_lea.vmem %s6, %s6040
      // Predicated region
      $region53: #{fwd.2} parent=43 // pred_check
        %p6042 = pneg %p195
      $region54: #{fwd.2} parent=43 // pred_check_branch
        %6044 = sbr.rel (%p6042) target = $region56
      $region55: #{fwd.2} parent=43 // pred_region
        _
      $region56: #{fwd.2} parent=43 // pred_fallthru
        _
    $region44: #{fwd.2} parent=5 // pred_fallthru
      _
    %p6045 = scmp.le.s32.totalorder 2, %s12
    // Predicated region
    $region57: #{fwd.2} parent=5 // pred_check
      %p6046 = pneg %p6045
    $region58: #{fwd.2} parent=5 // pred_check_branch
      %6048 = sbr.rel (%p6046) target = $region60
    $region59: #{fwd.2} parent=5 // pred_region
      %s6049 = ssub.s32 %s12, 2
      // Predicated region
      $region61: #{fwd.2} parent=59 // pred_check
        %p6050 = pneg %p201
      $region62: #{fwd.2} parent=59 // pred_check_branch
        %6052 = sbr.rel (%p6050) target = $region64
      $region63: #{fwd.2} parent=59 // pred_region
        %p6053 = scmp.lt.s32.totalorder %s23, 1
        %s6054 = scalar_select %p6053, %s23, 1
        %s6055 = smul.addr %s6054, 32
        %s6056 = smul.addr %s6055, 8
        %s6057 = scalar_lea.vmem %s6, %s6056
      $region64: #{fwd.2} parent=59 // pred_fallthru
        _
    $region60: #{fwd.2} parent=5 // pred_fallthru
      _
  $region6: #{fwd.2} parent=0 // loop_footer
    %s16 = sadd.s32 1, %s12
  $region7: #{fwd.2} parent=0 // loop_footer_branch
    %11 = sbr.rel target = $region3
  $region8: #{fwd.2} parent=0 // loop_exit
    _

</llo_original>
